<compile_context>
chip_gen: v5e
topology: v5e:2x2
jax: 0.10.0
libtpu: 0.0.40
codegen_flags: <defaults>
</compile_context>

<pallas_src>
import functools

import jax
import jax.numpy as jnp
from jax.experimental import pallas as pl
from jax.experimental.pallas import tpu as pltpu

_TM = 1024  # row tile for the 1x1 (matmul) kernels


def _round_up(x, m):
    return ((x + m - 1) // m) * m


def _pick_th(H, W, budget_rows=2048):
    """Row-tile height for the 3x3 conv: divides H, keeps the flattened
    (th*W, Cout) output block sublane-aligned and per-tile VMEM bounded,
    and prefers >=2 H-tiles per image (pipelining / megacore, incl. B=1)."""
    cands = [t for t in range(1, H + 1)
             if H % t == 0 and (t * W) % 8 == 0 and t * W <= budget_rows]
    proper = [t for t in cands if t < H]
    if proper:
        return max(proper)
    if cands:
        return max(cands)
    return H


def _pick_hw_tile(HW, budget=4096):
    """HW tile for the softmax-combine passes (divides HW, multiple of 8)."""
    if HW <= budget:
        return HW
    for t in range(budget - budget % 8, 7, -8):
        if HW % t == 0:
            return t
    return HW


def _apply_act(y, act):
    if act == "relu":
        return jnp.maximum(y, 0.0)
    if act == "silu":
        # y * sigmoid(y); divide moved to the EUP slot (approx reciprocal)
        return y * pl.reciprocal(1.0 + jnp.exp(-y), approx=True)
    return y


# ---------------------------------------------------------------------------
# Pallas kernels
# ---------------------------------------------------------------------------
def _cv1_split_kernel(x_ref, w0_ref, w1_ref, sb0_ref, sb1_ref, o0_ref, o1_ref):
    """C2f.cv1 (1x1 + BN + SiLU) emitting the two chunk(2) halves directly."""
    xb = x_ref[...]                                           # bf16
    for w_ref, sb_ref, o_ref in ((w0_ref, sb0_ref, o0_ref),
                                 (w1_ref, sb1_ref, o1_ref)):
        y = jnp.dot(xb, w_ref[...], preferred_element_type=jnp.float32)
        sb = sb_ref[...]
        y = _apply_act(y * sb[0:1] + sb[1:2], "silu")
        o_ref[...] = y.astype(o_ref.dtype)


def _conv3x3_kernel(xc_ref, xt_ref, xb_ref, w_ref, sb_ref, o_ref, *, act):
    """3x3 conv + BN + act on an H-tile with one-row halos.

    The 9 taps are folded into the contraction dim (single dot, K = 9*Cin);
    grouped convs arrive as block-diagonal dense weights."""
    i = pl.program_id(1)
    n_h = pl.num_programs(1)
    th, W, cin = xc_ref.shape[1], xc_ref.shape[2], xc_ref.shape[3]

    center = xc_ref[0]                                        # (th, W, Cin)
    top = xt_ref[0] * (i > 0).astype(xt_ref.dtype)            # zero pad @ top
    bot = xb_ref[0] * (i < n_h - 1).astype(xb_ref.dtype)      # zero pad @ bottom
    slab = jnp.concatenate([top, center, bot], axis=0)        # (th+2, W, Cin)
    zcol = jnp.zeros((th + 2, 1, cin), slab.dtype)
    slab = jnp.concatenate([zcol, slab, zcol], axis=1)        # (th+2, W+2, Cin)

    # im2col in VMEM: one (th*W, 9*Cin) operand -> one MXU dot
    cols = [slab[dy:dy + th, dx:dx + W, :].reshape(th * W, cin)
            for dy in range(3) for dx in range(3)]
    xcol = jnp.concatenate(cols, axis=-1)                     # (th*W, 9*Cin) bf16

    y = jnp.dot(xcol, w_ref[...], preferred_element_type=jnp.float32)
    sb = sb_ref[...]
    y = _apply_act(y * sb[0:1] + sb[1:2], act)
    o_ref[0] = y.astype(o_ref.dtype)                          # (th*W, Cout)


def _cot_attn_value_kernel(k1_ref, x_ref, wak_ref, wax_ref, wv_ref, w2_ref,
                           sba_ref, sbv_ref, b2_ref, v_ref, att_ref):
    """Fused value_embed + attention_embed (9-tap mean folded into the weight).

    cat([k1, x]) never materialises: the first 1x1 conv is split into two dots."""
    k1 = k1_ref[...]                                          # bf16
    x = x_ref[...]                                            # bf16
    a = jnp.dot(k1, wak_ref[...], preferred_element_type=jnp.float32)
    a = a + jnp.dot(x, wax_ref[...], preferred_element_type=jnp.float32)
    sba = sba_ref[...]
    a = jnp.maximum(a * sba[0:1] + sba[1:2], 0.0)             # BN + ReLU
    att = jnp.dot(a.astype(jnp.bfloat16), w2_ref[...],
                  preferred_element_type=jnp.float32) + b2_ref[...]
    v = jnp.dot(x, wv_ref[...], preferred_element_type=jnp.float32)
    sbv = sbv_ref[...]
    v = v * sbv[0:1] + sbv[1:2]                               # BN, no act
    v_ref[...] = v.astype(v_ref.dtype)                        # bf16 store
    att_ref[...] = att.astype(att_ref.dtype)                  # f32 (softmax)


def _softmax_stats_kernel(att_ref, m_ref, l_ref, m_sc, l_sc):
    """Pass 1 of the CoT combine: online max / sum-exp over the H*W axis."""
    k = pl.program_id(2)

    @pl.when(k == 0)
    def _():
        m_sc[...] = jnp.full_like(m_sc, -jnp.inf)
        l_sc[...] = jnp.zeros_like(l_sc)

    a = att_ref[0]                                            # (thw, tc) f32
    bm = jnp.max(a, axis=0, keepdims=True)
    m_new = jnp.maximum(m_sc[...], bm)
    l_sc[...] = (l_sc[...] * jnp.exp(m_sc[...] - m_new)
                 + jnp.sum(jnp.exp(a - m_new), axis=0, keepdims=True))
    m_sc[...] = m_new

    @pl.when(k == pl.num_programs(2) - 1)
    def _():
        m_ref[0] = m_sc[...]
        l_ref[0] = l_sc[...]


def _softmax_combine_kernel(k1_ref, v_ref, att_ref, m_ref, l_ref, o_ref):
    """Pass 2: out = k1 + softmax_hw(att) * v on a (1, thw, tc) tile."""
    p = jnp.exp(att_ref[0] - m_ref[0]) * pl.reciprocal(l_ref[0], approx=True)
    out = k1_ref[0].astype(jnp.float32) + p * v_ref[0].astype(jnp.float32)
    o_ref[0] = out.astype(o_ref.dtype)


def _cv2_fused_kernel(y0_ref, y1_ref, y2_ref, w0_ref, w1_ref, w2_ref, sb_ref,
                      o_ref):
    """C2f.cv2 on cat([y0, y1, y2]) as a sum of three dots + BN + SiLU."""
    acc = jnp.dot(y0_ref[...], w0_ref[...], preferred_element_type=jnp.float32)
    acc = acc + jnp.dot(y1_ref[...], w1_ref[...],
                        preferred_element_type=jnp.float32)
    acc = acc + jnp.dot(y2_ref[...], w2_ref[...],
                        preferred_element_type=jnp.float32)
    sb = sb_ref[...]
    o_ref[...] = _apply_act(acc * sb[0:1] + sb[1:2], "silu").astype(o_ref.dtype)


# ---------------------------------------------------------------------------
# pallas_call wrappers
# ---------------------------------------------------------------------------
def cv1_split(x2d, w0, w1, sb0, sb1):
    M, K = x2d.shape
    c = w0.shape[1]
    tm = min(_TM, _round_up(M, 8))
    return pl.pallas_call(
        _cv1_split_kernel,
        out_shape=(jax.ShapeDtypeStruct((M, c), jnp.bfloat16),
                   jax.ShapeDtypeStruct((M, c), jnp.bfloat16)),
        grid=(pl.cdiv(M, tm),),
        in_specs=[
            pl.BlockSpec((tm, K), lambda i: (i, 0)),
            pl.BlockSpec((K, c), lambda i: (0, 0)),
            pl.BlockSpec((K, c), lambda i: (0, 0)),
            pl.BlockSpec((2, c), lambda i: (0, 0)),
            pl.BlockSpec((2, c), lambda i: (0, 0)),
        ],
        out_specs=(pl.BlockSpec((tm, c), lambda i: (i, 0)),
                   pl.BlockSpec((tm, c), lambda i: (i, 0))),
        compiler_params=pltpu.CompilerParams(dimension_semantics=("parallel",)),
    )(x2d, w0, w1, sb0, sb1)


def conv3x3(x_nhwc, w, sb, act):
    """x: (B, H, W, Cin) bf16; w: (9*Cin, Cout) bf16 (taps folded into K,
    grouped convs pre-expanded to block-diagonal).  Returns (B, H*W, Cout) bf16."""
    B, H, W, Cin = x_nhwc.shape
    Cout = w.shape[1]
    th = _pick_th(H, W)          # tiles sized to fit the v5e 16 MiB scoped VMEM
    n_h = H // th
    return pl.pallas_call(
        functools.partial(_conv3x3_kernel, act=act),
        out_shape=jax.ShapeDtypeStruct((B, H * W, Cout), jnp.bfloat16),
        grid=(B, n_h),
        in_specs=[
            # centre rows of the H-tile
            pl.BlockSpec((1, th, W, Cin), lambda b, i: (b, i, 0, 0)),
            # one-row halos above / below; clamped at the image border and
            # zero-masked inside the kernel (zero padding, no HBM jnp.pad)
            pl.BlockSpec((1, 1, W, Cin),
                         lambda b, i: (b, jnp.maximum(i * th - 1, 0), 0, 0)),
            pl.BlockSpec((1, 1, W, Cin),
                         lambda b, i: (b, jnp.minimum((i + 1) * th, H - 1), 0, 0)),
            pl.BlockSpec((9 * Cin, Cout), lambda b, i: (0, 0)),
            pl.BlockSpec((2, Cout), lambda b, i: (0, 0)),
        ],
        out_specs=pl.BlockSpec((1, th * W, Cout), lambda b, i: (b, i, 0)),
        compiler_params=pltpu.CompilerParams(
            dimension_semantics=("parallel", "parallel")),
    )(x_nhwc, x_nhwc, x_nhwc, w, sb)


def cot_attn_value(k1_flat, x_flat, p):
    M, c = x_flat.shape
    na = p["ae1_wk"].shape[1]
    tm = min(_TM, _round_up(M, 8))
    return pl.pallas_call(
        _cot_attn_value_kernel,
        out_shape=(jax.ShapeDtypeStruct((M, c), jnp.bfloat16),   # v
                   jax.ShapeDtypeStruct((M, c), jnp.float32)),   # att
        grid=(pl.cdiv(M, tm),),
        in_specs=[
            pl.BlockSpec((tm, c), lambda i: (i, 0)),   # k1
            pl.BlockSpec((tm, c), lambda i: (i, 0)),   # x (= h)
            pl.BlockSpec((c, na), lambda i: (0, 0)),   # ae1 weight (k1 rows)
            pl.BlockSpec((c, na), lambda i: (0, 0)),   # ae1 weight (x rows)
            pl.BlockSpec((c, c), lambda i: (0, 0)),    # value_embed weight
            pl.BlockSpec((na, c), lambda i: (0, 0)),   # ae2 weight (mean-folded)
            pl.BlockSpec((2, na), lambda i: (0, 0)),   # ae1 BN scale/bias
            pl.BlockSpec((2, c), lambda i: (0, 0)),    # ve BN scale/bias
            pl.BlockSpec((1, c), lambda i: (0, 0)),    # ae2 bias (mean-folded)
        ],
        out_specs=(pl.BlockSpec((tm, c), lambda i: (i, 0)),
                   pl.BlockSpec((tm, c), lambda i: (i, 0))),
        compiler_params=pltpu.CompilerParams(dimension_semantics=("parallel",)),
    )(k1_flat, x_flat, p["ae1_wk"], p["ae1_wx"], p["ve_w"], p["ae2_w"],
      p["ae1_sb"], p["ve_sb"], p["ae2_b"])


def cot_combine(k1, v, att):
    """k1, v: (B, HW, C) bf16; att: (B, HW, C) f32.
    out = k1 + softmax_hw(att) * v, via two tiled passes (bounded VMEM)."""
    B, HW, C = k1.shape
    tc = 128 if C % 128 == 0 else C          # lane-dense when C allows it
    thw = _pick_hw_tile(HW)
    n_c, n_hw = C // tc, HW // thw

    # pass 1: online running max / sum-exp over HW (reduction axis last)
    m, l = pl.pallas_call(
        _softmax_stats_kernel,
        out_shape=(jax.ShapeDtypeStruct((B, 1, C), jnp.float32),
                   jax.ShapeDtypeStruct((B, 1, C), jnp.float32)),
        grid=(B, n_c, n_hw),
        in_specs=[pl.BlockSpec((1, thw, tc), lambda b, j, k: (b, k, j))],
        out_specs=(pl.BlockSpec((1, 1, tc), lambda b, j, k: (b, 0, j)),
                   pl.BlockSpec((1, 1, tc), lambda b, j, k: (b, 0, j))),
        scratch_shapes=[pltpu.VMEM((1, tc), jnp.float32),
                        pltpu.VMEM((1, tc), jnp.float32)],
        compiler_params=pltpu.CompilerParams(
            dimension_semantics=("parallel", "parallel", "arbitrary")),
    )(att)

    # pass 2: normalise and combine
    return pl.pallas_call(
        _softmax_combine_kernel,
        out_shape=jax.ShapeDtypeStruct((B, HW, C), jnp.bfloat16),
        grid=(B, n_c, n_hw),
        in_specs=[
            pl.BlockSpec((1, thw, tc), lambda b, j, k: (b, k, j)),  # k1
            pl.BlockSpec((1, thw, tc), lambda b, j, k: (b, k, j)),  # v
            pl.BlockSpec((1, thw, tc), lambda b, j, k: (b, k, j)),  # att
            pl.BlockSpec((1, 1, tc), lambda b, j, k: (b, 0, j)),    # max
            pl.BlockSpec((1, 1, tc), lambda b, j, k: (b, 0, j)),    # sum-exp
        ],
        out_specs=pl.BlockSpec((1, thw, tc), lambda b, j, k: (b, k, j)),
        compiler_params=pltpu.CompilerParams(
            dimension_semantics=("parallel", "parallel", "parallel")),
    )(k1, v, att, m, l)


def cv2_fused(y0, y1, y2, w0, w1, w2, sb):
    M, c = y0.shape
    c2 = sb.shape[1]
    tm = min(_TM, _round_up(M, 8))
    return pl.pallas_call(
        _cv2_fused_kernel,
        out_shape=jax.ShapeDtypeStruct((M, c2), jnp.float32),
        grid=(pl.cdiv(M, tm),),
        in_specs=[
            pl.BlockSpec((tm, c), lambda i: (i, 0)),
            pl.BlockSpec((tm, c), lambda i: (i, 0)),
            pl.BlockSpec((tm, c), lambda i: (i, 0)),
            pl.BlockSpec((c, c2), lambda i: (0, 0)),
            pl.BlockSpec((c, c2), lambda i: (0, 0)),
            pl.BlockSpec((c, c2), lambda i: (0, 0)),
            pl.BlockSpec((2, c2), lambda i: (0, 0)),
        ],
        out_specs=pl.BlockSpec((tm, c2), lambda i: (i, 0)),
        compiler_params=pltpu.CompilerParams(dimension_semantics=("parallel",)),
    )(y0, y1, y2, w0, w1, w2, sb)


# ---------------------------------------------------------------------------
# Forward pass (C2f_CoTAttention, n=1, shortcut=False)
# ---------------------------------------------------------------------------
def c2f_cot_attention_forward(x_nchw, p, c):
    B, C1, H, W = x_nchw.shape
    M = B * H * W
    # TODO(synk): fold this NCHW->NHWC entry transpose (and the exit one) into
    # the cv1 / cv2 kernels to save two full-tensor HBM round trips.
    x = jnp.transpose(x_nchw, (0, 2, 3, 1)).astype(jnp.bfloat16)
    # C2f.cv1 (1x1 + BN + SiLU) -> the two chunk(2) halves, no HBM slice
    y0, y1 = cv1_split(x.reshape(M, C1), p["cv1_w0"], p["cv1_w1"],
                       p["cv1_sb0"], p["cv1_sb1"])            # (M, c) bf16 each
    # CoT_Bottleneck_: two 3x3 Convs (BN + SiLU)
    h = conv3x3(y1.reshape(B, H, W, c), p["m_cv1_w"], p["m_cv1_sb"], act="silu")
    h = conv3x3(h.reshape(B, H, W, c), p["m_cv2_w"], p["m_cv2_sb"], act="silu")
    # CoTAttention
    k1 = conv3x3(h.reshape(B, H, W, c), p["ke_w"], p["ke_sb"], act="relu")
    v, att = cot_attn_value(k1.reshape(M, c), h.reshape(M, c), p)
    y2 = cot_combine(k1, v.reshape(B, H * W, c), att.reshape(B, H * W, c))
    # C2f.cv2 on cat([y0, y1, y2]) as a sum of three dots (no HBM concat)
    out = cv2_fused(y0, y1, y2.reshape(M, c),
                    p["cv2_w0"], p["cv2_w1"], p["cv2_w2"], p["cv2_sb"])
    return jnp.transpose(out.reshape(B, H, W, -1), (0, 3, 1, 2))  # -> NCHW


# ---------------------------------------------------------------------------
# Deterministic synthetic parameters (BatchNorm eval-mode, folded)
# ---------------------------------------------------------------------------
def init_params(key, c1, c2, n=1):
    c = int(c2 * 0.5)
    na = 2 * c // 4
    keys = iter(jax.random.split(key, 64))

    def nrm(shape, s=0.1):
        return s * jax.random.normal(next(keys), shape, jnp.float32)

    def bn(cc):
        gamma = 1.0 + 0.1 * jax.random.normal(next(keys), (cc,), jnp.float32)
        beta = 0.1 * jax.random.normal(next(keys), (cc,), jnp.float32)
        mean = 0.1 * jax.random.normal(next(keys), (cc,), jnp.float32)
        var = 1.0 + 0.1 * jnp.abs(jax.random.normal(next(keys), (cc,), jnp.float32))
        s = gamma / jnp.sqrt(var + 1e-5)
        return jnp.stack([s, beta - mean * s])                # (2, cc) f32

    def pack3x3(w):
        # torch (Cout, Cin, 3, 3) -> (9*Cin, Cout), rows tap-major
        # ((dy*3+dx)*Cin + ci) to match the in-kernel im2col layout.
        return jnp.transpose(w, (2, 3, 1, 0)).reshape(-1, w.shape[0]).astype(jnp.bfloat16)

    def pack3x3_grouped(w, groups):
        # torch (Cout, Cin/g, 3, 3) -> block-diagonal dense (9*Cin, Cout)
        cout, cin_g = w.shape[0], w.shape[1]
        cout_g = cout // groups
        dense = jnp.zeros((cout, cin_g * groups, 3, 3), w.dtype)
        for g in range(groups):
            dense = dense.at[g * cout_g:(g + 1) * cout_g,
                             g * cin_g:(g + 1) * cin_g].set(
                w[g * cout_g:(g + 1) * cout_g])
        return pack3x3(dense)

    def pack1x1(w):
        return jnp.transpose(w.reshape(w.shape[0], w.shape[1])).astype(jnp.bfloat16)

    p = {}
    # C2f.cv1: Conv(c1, 2c, 1), split into the two chunk(2) halves
    cv1 = nrm((2 * c, c1, 1, 1))
    cv1_sb = bn(2 * c)
    p["cv1_w0"] = pack1x1(cv1[:c]); p["cv1_w1"] = pack1x1(cv1[c:])
    p["cv1_sb0"] = cv1_sb[:, :c];   p["cv1_sb1"] = cv1_sb[:, c:]
    # CoT_Bottleneck_.cv1 / cv2: Conv(c, c, 3)
    p["m_cv1_w"] = pack3x3(nrm((c, c, 3, 3))); p["m_cv1_sb"] = bn(c)
    p["m_cv2_w"] = pack3x3(nrm((c, c, 3, 3))); p["m_cv2_sb"] = bn(c)
    # CoTAttention(dim=c, kernel=3)
    p["ke_w"] = pack3x3_grouped(nrm((c, c // 4, 3, 3)), 4); p["ke_sb"] = bn(c)
    p["ve_w"] = pack1x1(nrm((c, c, 1, 1))); p["ve_sb"] = bn(c)
    ae1 = nrm((na, 2 * c, 1, 1)).reshape(na, 2 * c)
    p["ae1_wk"] = ae1[:, :c].T.astype(jnp.bfloat16)
    p["ae1_wx"] = ae1[:, c:].T.astype(jnp.bfloat16)
    p["ae1_sb"] = bn(na)
    ae2 = nrm((9 * c, na, 1, 1)).reshape(9 * c, na)
    ae2_bias = nrm((9 * c,))
    # fold the .reshape(bs, c, 9, h, w).mean(2) into the weights (exact: linear)
    p["ae2_w"] = ae2.reshape(c, 9, na).mean(axis=1).T.astype(jnp.bfloat16)   # (na, c)
    p["ae2_b"] = ae2_bias.reshape(c, 9).mean(axis=1).reshape(1, c)           # (1, c)
    # C2f.cv2: Conv((2+n)*c, c2, 1), split per concat source
    cv2 = nrm((c2, (2 + n) * c, 1, 1)).reshape(c2, (2 + n) * c)
    p["cv2_w0"] = cv2[:, :c].T.astype(jnp.bfloat16)
    p["cv2_w1"] = cv2[:, c:2 * c].T.astype(jnp.bfloat16)
    p["cv2_w2"] = cv2[:, 2 * c:].T.astype(jnp.bfloat16)
    p["cv2_sb"] = bn(c2)
    return p, c


if __name__ == "__main__":
    B, C1, C2, H, W = 2, 16, 16, 16, 16
    key = jax.random.PRNGKey(0)
    kx, kp = jax.random.split(key)
    x = jax.random.normal(kx, (B, C1, H, W), jnp.float32)
    params, c = init_params(kp, C1, C2, n=1)

    fwd = jax.jit(functools.partial(c2f_cot_attention_forward, c=c))
    out = fwd(x, params)
    jax.block_until_ready(out)
    assert out.shape == (B, C2, H, W), out.shape
    assert bool(jnp.all(jnp.isfinite(out)))
    print("KERNEL_OK")
</pallas_src>

<mosaic_0001>
module attributes {stable_mosaic.version = 11 : i64} {
  func.func @_cv1_split_kernel(%arg0: i32, %arg1: memref<512x16xbf16, #tpu.memory_space<vmem>>, %arg2: memref<16x8xbf16, #tpu.memory_space<vmem>>, %arg3: memref<16x8xbf16, #tpu.memory_space<vmem>>, %arg4: memref<2x8xf32, #tpu.memory_space<vmem>>, %arg5: memref<2x8xf32, #tpu.memory_space<vmem>>, %arg6: memref<512x8xbf16, #tpu.memory_space<vmem>>, %arg7: memref<512x8xbf16, #tpu.memory_space<vmem>>) attributes {dimension_semantics = [#tpu.dimension_semantics<parallel>], iteration_bounds = array<i64: 1>, scalar_prefetch = 0 : i64, scratch_operands = 0 : i64, tpu.core_type = #tpu.core_type<tc>, window_params = [{transform_indices = @transform_0, window_bounds = array<i64: 512, 16>}, {pipeline_mode = #tpu.pipeline_mode<synchronous>, transform_indices = @transform_1, window_bounds = array<i64: 16, 8>}, {pipeline_mode = #tpu.pipeline_mode<synchronous>, transform_indices = @transform_2, window_bounds = array<i64: 16, 8>}, {pipeline_mode = #tpu.pipeline_mode<synchronous>, transform_indices = @transform_3, window_bounds = array<i64: 2, 8>}, {pipeline_mode = #tpu.pipeline_mode<synchronous>, transform_indices = @transform_4, window_bounds = array<i64: 2, 8>}, {transform_indices = @transform_5, window_bounds = array<i64: 512, 8>}, {transform_indices = @transform_6, window_bounds = array<i64: 512, 8>}]} {
    %c0 = arith.constant 0 : index
    %c0_0 = arith.constant 0 : index
    %0 = vector.load %arg1[%c0, %c0_0] : memref<512x16xbf16, #tpu.memory_space<vmem>>, vector<512x16xbf16>
    %c0_1 = arith.constant 0 : index
    %c0_2 = arith.constant 0 : index
    %1 = vector.load %arg2[%c0_1, %c0_2] : memref<16x8xbf16, #tpu.memory_space<vmem>>, vector<16x8xbf16>
    %cst = arith.constant dense<0.000000e+00> : vector<512x8xf32>
    %2 = tpu.matmul %0, %1, %cst {dimension_numbers = #tpu.dot_dimension_numbers<[1], [0], [0], [1], [0, 0, 1, 1], [], []>} : vector<512x16xbf16>, vector<16x8xbf16>, vector<512x8xf32> -> vector<512x8xf32>
    %c0_3 = arith.constant 0 : index
    %c0_4 = arith.constant 0 : index
    %3 = vector.load %arg4[%c0_3, %c0_4] : memref<2x8xf32, #tpu.memory_space<vmem>>, vector<2x8xf32>
    %4 = vector.extract_strided_slice %3 {offsets = [0, 0], sizes = [1, 8], strides = [1, 1]} : vector<2x8xf32> to vector<1x8xf32>
    %5 = vector.broadcast %4 : vector<1x8xf32> to vector<512x8xf32>
    %6 = arith.mulf %2, %5 : vector<512x8xf32>
    %7 = vector.extract_strided_slice %3 {offsets = [1, 0], sizes = [1, 8], strides = [1, 1]} : vector<2x8xf32> to vector<1x8xf32>
    %8 = vector.broadcast %7 : vector<1x8xf32> to vector<512x8xf32>
    %9 = arith.addf %6, %8 : vector<512x8xf32>
    %cst_5 = arith.constant 0.000000e+00 : f32
    %10 = vector.broadcast %cst_5 : f32 to vector<512x8xf32>
    %11 = arith.subf %10, %9 : vector<512x8xf32>
    %12 = math.exp %11 : vector<512x8xf32>
    %cst_6 = arith.constant 1.000000e+00 : f32
    %13 = vector.broadcast %cst_6 : f32 to vector<512x8xf32>
    %14 = arith.addf %13, %12 : vector<512x8xf32>
    %15 = tpu.reciprocal %14 {approx = true} : vector<512x8xf32> -> vector<512x8xf32>
    %16 = arith.mulf %9, %15 : vector<512x8xf32>
    %17 = arith.truncf %16 : vector<512x8xf32> to vector<512x8xbf16>
    %c0_7 = arith.constant 0 : index
    %c0_8 = arith.constant 0 : index
    %18 = vector.load %arg6[%c0_7, %c0_8] : memref<512x8xbf16, #tpu.memory_space<vmem>>, vector<512x8xbf16>
    tpu.vector_store %arg6[%c0_7, %c0_8], %17 {strides = array<i32>} : memref<512x8xbf16, #tpu.memory_space<vmem>>, vector<512x8xbf16>,
    %c0_9 = arith.constant 0 : index
    %c0_10 = arith.constant 0 : index
    %19 = vector.load %arg3[%c0_9, %c0_10] : memref<16x8xbf16, #tpu.memory_space<vmem>>, vector<16x8xbf16>
    %cst_11 = arith.constant dense<0.000000e+00> : vector<512x8xf32>
    %20 = tpu.matmul %0, %19, %cst_11 {dimension_numbers = #tpu.dot_dimension_numbers<[1], [0], [0], [1], [0, 0, 1, 1], [], []>} : vector<512x16xbf16>, vector<16x8xbf16>, vector<512x8xf32> -> vector<512x8xf32>
    %c0_12 = arith.constant 0 : index
    %c0_13 = arith.constant 0 : index
    %21 = vector.load %arg5[%c0_12, %c0_13] : memref<2x8xf32, #tpu.memory_space<vmem>>, vector<2x8xf32>
    %22 = vector.extract_strided_slice %21 {offsets = [0, 0], sizes = [1, 8], strides = [1, 1]} : vector<2x8xf32> to vector<1x8xf32>
    %23 = vector.broadcast %22 : vector<1x8xf32> to vector<512x8xf32>
    %24 = arith.mulf %20, %23 : vector<512x8xf32>
    %25 = vector.extract_strided_slice %21 {offsets = [1, 0], sizes = [1, 8], strides = [1, 1]} : vector<2x8xf32> to vector<1x8xf32>
    %26 = vector.broadcast %25 : vector<1x8xf32> to vector<512x8xf32>
    %27 = arith.addf %24, %26 : vector<512x8xf32>
    %cst_14 = arith.constant 0.000000e+00 : f32
    %28 = vector.broadcast %cst_14 : f32 to vector<512x8xf32>
    %29 = arith.subf %28, %27 : vector<512x8xf32>
    %30 = math.exp %29 : vector<512x8xf32>
    %cst_15 = arith.constant 1.000000e+00 : f32
    %31 = vector.broadcast %cst_15 : f32 to vector<512x8xf32>
    %32 = arith.addf %31, %30 : vector<512x8xf32>
    %33 = tpu.reciprocal %32 {approx = true} : vector<512x8xf32> -> vector<512x8xf32>
    %34 = arith.mulf %27, %33 : vector<512x8xf32>
    %35 = arith.truncf %34 : vector<512x8xf32> to vector<512x8xbf16>
    %c0_16 = arith.constant 0 : index
    %c0_17 = arith.constant 0 : index
    %36 = vector.load %arg7[%c0_16, %c0_17] : memref<512x8xbf16, #tpu.memory_space<vmem>>, vector<512x8xbf16>
    tpu.vector_store %arg7[%c0_16, %c0_17], %35 {strides = array<i32>} : memref<512x8xbf16, #tpu.memory_space<vmem>>, vector<512x8xbf16>,
    return
  }
  func.func @transform_0(%arg0: i32) -> (i32, i32) {
    %c0_i32 = arith.constant 0 : i32
    %c0_i32_0 = arith.constant 0 : i32
    return %arg0, %c0_i32 : i32, i32
  }
  func.func @transform_1(%arg0: i32) -> (i32, i32) {
    %c0_i32 = arith.constant 0 : i32
    %c0_i32_0 = arith.constant 0 : i32
    %c0_i32_1 = arith.constant 0 : i32
    return %c0_i32, %c0_i32_0 : i32, i32
  }
  func.func @transform_2(%arg0: i32) -> (i32, i32) {
    %c0_i32 = arith.constant 0 : i32
    %c0_i32_0 = arith.constant 0 : i32
    %c0_i32_1 = arith.constant 0 : i32
    return %c0_i32, %c0_i32_0 : i32, i32
  }
  func.func @transform_3(%arg0: i32) -> (i32, i32) {
    %c0_i32 = arith.constant 0 : i32
    %c0_i32_0 = arith.constant 0 : i32
    %c0_i32_1 = arith.constant 0 : i32
    return %c0_i32, %c0_i32_0 : i32, i32
  }
  func.func @transform_4(%arg0: i32) -> (i32, i32) {
    %c0_i32 = arith.constant 0 : i32
    %c0_i32_0 = arith.constant 0 : i32
    %c0_i32_1 = arith.constant 0 : i32
    return %c0_i32, %c0_i32_0 : i32, i32
  }
  func.func @transform_5(%arg0: i32) -> (i32, i32) {
    %c0_i32 = arith.constant 0 : i32
    %c0_i32_0 = arith.constant 0 : i32
    return %arg0, %c0_i32 : i32, i32
  }
  func.func @transform_6(%arg0: i32) -> (i32, i32) {
    %c0_i32 = arith.constant 0 : i32
    %c0_i32_0 = arith.constant 0 : i32
    return %arg0, %c0_i32 : i32, i32
  }
}

module attributes {stable_mosaic.version = 11 : i64} {
  func.func @_conv3x3_kernel(%arg0: i32, %arg1: i32, %arg2: memref<1x8x16x8xbf16, #tpu.memory_space<vmem>>, %arg3: memref<1x1x16x8xbf16, #tpu.memory_space<vmem>>, %arg4: memref<1x1x16x8xbf16, #tpu.memory_space<vmem>>, %arg5: memref<72x8xbf16, #tpu.memory_space<vmem>>, %arg6: memref<2x8xf32, #tpu.memory_space<vmem>>, %arg7: memref<1x128x8xbf16, #tpu.memory_space<vmem>>) attributes {dimension_semantics = [#tpu.dimension_semantics<parallel>, #tpu.dimension_semantics<parallel>], iteration_bounds = array<i64: 2, 2>, scalar_prefetch = 0 : i64, scratch_operands = 0 : i64, tpu.core_type = #tpu.core_type<tc>, window_params = [{transform_indices = @transform_0, window_bounds = array<i64: 1, 8, 16, 8>}, {transform_indices = @transform_1, window_bounds = array<i64: 1, 1, 16, 8>}, {transform_indices = @transform_2, window_bounds = array<i64: 1, 1, 16, 8>}, {pipeline_mode = #tpu.pipeline_mode<synchronous>, transform_indices = @transform_3, window_bounds = array<i64: 72, 8>}, {pipeline_mode = #tpu.pipeline_mode<synchronous>, transform_indices = @transform_4, window_bounds = array<i64: 2, 8>}, {transform_indices = @transform_5, window_bounds = array<i64: 1, 128, 8>}]} {
    %c0 = arith.constant 0 : index
    %c0_0 = arith.constant 0 : index
    %c0_1 = arith.constant 0 : index
    %c0_2 = arith.constant 0 : index
    %0 = vector.load %arg2[%c0, %c0_0, %c0_1, %c0_2] : memref<1x8x16x8xbf16, #tpu.memory_space<vmem>>, vector<1x8x16x8xbf16>
    %1 = vector.shape_cast %0 : vector<1x8x16x8xbf16> to vector<8x16x8xbf16>
    %c0_3 = arith.constant 0 : index
    %c0_4 = arith.constant 0 : index
    %c0_5 = arith.constant 0 : index
    %c0_6 = arith.constant 0 : index
    %2 = vector.load %arg3[%c0_3, %c0_4, %c0_5, %c0_6] : memref<1x1x16x8xbf16, #tpu.memory_space<vmem>>, vector<1x1x16x8xbf16>
    %3 = vector.shape_cast %2 : vector<1x1x16x8xbf16> to vector<1x16x8xbf16>
    %c0_i32 = arith.constant 0 : i32
    %4 = arith.cmpi sgt, %arg1, %c0_i32 : i32
    %5 = arith.extui %4 : i1 to i32
    %6 = arith.sitofp %5 : i32 to f32
    %7 = arith.truncf %6 : f32 to bf16
    %8 = vector.broadcast %7 : bf16 to vector<1x16x8xbf16>
    %9 = arith.mulf %3, %8 : vector<1x16x8xbf16>
    %c0_7 = arith.constant 0 : index
    %c0_8 = arith.constant 0 : index
    %c0_9 = arith.constant 0 : index
    %c0_10 = arith.constant 0 : index
    %10 = vector.load %arg4[%c0_7, %c0_8, %c0_9, %c0_10] : memref<1x1x16x8xbf16, #tpu.memory_space<vmem>>, vector<1x1x16x8xbf16>
    %11 = vector.shape_cast %10 : vector<1x1x16x8xbf16> to vector<1x16x8xbf16>
    %c1_i32 = arith.constant 1 : i32
    %12 = arith.cmpi slt, %arg1, %c1_i32 : i32
    %13 = arith.extui %12 : i1 to i32
    %14 = arith.sitofp %13 : i32 to f32
    %15 = arith.truncf %14 : f32 to bf16
    %16 = vector.broadcast %15 : bf16 to vector<1x16x8xbf16>
    %17 = arith.mulf %11, %16 : vector<1x16x8xbf16>
    %18 = tpu.concatenate %9, %1, %17 in 0 : vector<1x16x8xbf16>, vector<8x16x8xbf16>, vector<1x16x8xbf16> -> vector<10x16x8xbf16>
    %cst = arith.constant 0.000000e+00 : bf16
    %19 = vector.broadcast %cst : bf16 to vector<10x1x8xbf16>
    %20 = tpu.concatenate %19, %18, %19 in 1 : vector<10x1x8xbf16>, vector<10x16x8xbf16>, vector<10x1x8xbf16> -> vector<10x18x8xbf16>
    %21 = vector.extract_strided_slice %20 {offsets = [0, 0, 0], sizes = [8, 16, 8], strides = [1, 1, 1]} : vector<10x18x8xbf16> to vector<8x16x8xbf16>
    %22 = vector.shape_cast %21 : vector<8x16x8xbf16> to vector<128x8xbf16>
    %23 = vector.extract_strided_slice %20 {offsets = [0, 1, 0], sizes = [8, 16, 8], strides = [1, 1, 1]} : vector<10x18x8xbf16> to vector<8x16x8xbf16>
    %24 = vector.shape_cast %23 : vector<8x16x8xbf16> to vector<128x8xbf16>
    %25 = vector.extract_strided_slice %20 {offsets = [0, 2, 0], sizes = [8, 16, 8], strides = [1, 1, 1]} : vector<10x18x8xbf16> to vector<8x16x8xbf16>
    %26 = vector.shape_cast %25 : vector<8x16x8xbf16> to vector<128x8xbf16>
    %27 = vector.extract_strided_slice %20 {offsets = [1, 0, 0], sizes = [8, 16, 8], strides = [1, 1, 1]} : vector<10x18x8xbf16> to vector<8x16x8xbf16>
    %28 = vector.shape_cast %27 : vector<8x16x8xbf16> to vector<128x8xbf16>
    %29 = vector.extract_strided_slice %20 {offsets = [1, 1, 0], sizes = [8, 16, 8], strides = [1, 1, 1]} : vector<10x18x8xbf16> to vector<8x16x8xbf16>
    %30 = vector.shape_cast %29 : vector<8x16x8xbf16> to vector<128x8xbf16>
    %31 = vector.extract_strided_slice %20 {offsets = [1, 2, 0], sizes = [8, 16, 8], strides = [1, 1, 1]} : vector<10x18x8xbf16> to vector<8x16x8xbf16>
    %32 = vector.shape_cast %31 : vector<8x16x8xbf16> to vector<128x8xbf16>
    %33 = vector.extract_strided_slice %20 {offsets = [2, 0, 0], sizes = [8, 16, 8], strides = [1, 1, 1]} : vector<10x18x8xbf16> to vector<8x16x8xbf16>
    %34 = vector.shape_cast %33 : vector<8x16x8xbf16> to vector<128x8xbf16>
    %35 = vector.extract_strided_slice %20 {offsets = [2, 1, 0], sizes = [8, 16, 8], strides = [1, 1, 1]} : vector<10x18x8xbf16> to vector<8x16x8xbf16>
    %36 = vector.shape_cast %35 : vector<8x16x8xbf16> to vector<128x8xbf16>
    %37 = vector.extract_strided_slice %20 {offsets = [2, 2, 0], sizes = [8, 16, 8], strides = [1, 1, 1]} : vector<10x18x8xbf16> to vector<8x16x8xbf16>
    %38 = vector.shape_cast %37 : vector<8x16x8xbf16> to vector<128x8xbf16>
    %39 = tpu.concatenate %22, %24, %26, %28, %30, %32, %34, %36, %38 in 1 : vector<128x8xbf16>, vector<128x8xbf16>, vector<128x8xbf16>, vector<128x8xbf16>, vector<128x8xbf16>, vector<128x8xbf16>, vector<128x8xbf16>, vector<128x8xbf16>, vector<128x8xbf16> -> vector<128x72xbf16>
    %c0_11 = arith.constant 0 : index
    %c0_12 = arith.constant 0 : index
    %40 = vector.load %arg5[%c0_11, %c0_12] : memref<72x8xbf16, #tpu.memory_space<vmem>>, vector<72x8xbf16>
    %cst_13 = arith.constant dense<0.000000e+00> : vector<128x8xf32>
    %41 = tpu.matmul %39, %40, %cst_13 {dimension_numbers = #tpu.dot_dimension_numbers<[1], [0], [0], [1], [0, 0, 1, 1], [], []>} : vector<128x72xbf16>, vector<72x8xbf16>, vector<128x8xf32> -> vector<128x8xf32>
    %c0_14 = arith.constant 0 : index
    %c0_15 = arith.constant 0 : index
    %42 = vector.load %arg6[%c0_14, %c0_15] : memref<2x8xf32, #tpu.memory_space<vmem>>, vector<2x8xf32>
    %43 = vector.extract_strided_slice %42 {offsets = [0, 0], sizes = [1, 8], strides = [1, 1]} : vector<2x8xf32> to vector<1x8xf32>
    %44 = vector.broadcast %43 : vector<1x8xf32> to vector<128x8xf32>
    %45 = arith.mulf %41, %44 : vector<128x8xf32>
    %46 = vector.extract_strided_slice %42 {offsets = [1, 0], sizes = [1, 8], strides = [1, 1]} : vector<2x8xf32> to vector<1x8xf32>
    %47 = vector.broadcast %46 : vector<1x8xf32> to vector<128x8xf32>
    %48 = arith.addf %45, %47 : vector<128x8xf32>
    %cst_16 = arith.constant 0.000000e+00 : f32
    %49 = vector.broadcast %cst_16 : f32 to vector<128x8xf32>
    %50 = arith.subf %49, %48 : vector<128x8xf32>
    %51 = math.exp %50 : vector<128x8xf32>
    %cst_17 = arith.constant 1.000000e+00 : f32
    %52 = vector.broadcast %cst_17 : f32 to vector<128x8xf32>
    %53 = arith.addf %52, %51 : vector<128x8xf32>
    %54 = tpu.reciprocal %53 {approx = true} : vector<128x8xf32> -> vector<128x8xf32>
    %55 = arith.mulf %48, %54 : vector<128x8xf32>
    %56 = arith.truncf %55 : vector<128x8xf32> to vector<128x8xbf16>
    %c0_18 = arith.constant 0 : index
    %c0_19 = arith.constant 0 : index
    %c0_20 = arith.constant 0 : index
    %57 = vector.load %arg7[%c0_18, %c0_19, %c0_20] : memref<1x128x8xbf16, #tpu.memory_space<vmem>>, vector<1x128x8xbf16>
    %58 = vector.shape_cast %57 : vector<1x128x8xbf16> to vector<128x8xbf16>
    %59 = vector.shape_cast %56 : vector<128x8xbf16> to vector<1x128x8xbf16>
    tpu.vector_store %arg7[%c0_18, %c0_19, %c0_20], %59 {strides = array<i32>} : memref<1x128x8xbf16, #tpu.memory_space<vmem>>, vector<1x128x8xbf16>,
    return
  }
  func.func @transform_0(%arg0: i32, %arg1: i32) -> (i32, i32, i32, i32) {
    %c0_i32 = arith.constant 0 : i32
    %c0_i32_0 = arith.constant 0 : i32
    %c0_i32_1 = arith.constant 0 : i32
    return %arg0, %arg1, %c0_i32, %c0_i32_0 : i32, i32, i32, i32
  }
  func.func @transform_1(%arg0: i32, %arg1: i32) -> (i32, i32, i32, i32) {
    %c8_i32 = arith.constant 8 : i32
    %0 = arith.muli %arg1, %c8_i32 : i32
    %c1_i32 = arith.constant 1 : i32
    %1 = arith.subi %0, %c1_i32 : i32
    %c0_i32 = arith.constant 0 : i32
    %2 = arith.maxsi %1, %c0_i32 : i32
    %c0_i32_0 = arith.constant 0 : i32
    %c0_i32_1 = arith.constant 0 : i32
    %c0_i32_2 = arith.constant 0 : i32
    return %arg0, %2, %c0_i32_0, %c0_i32_1 : i32, i32, i32, i32
  }
  func.func @transform_2(%arg0: i32, %arg1: i32) -> (i32, i32, i32, i32) {
    %c1_i32 = arith.constant 1 : i32
    %0 = arith.addi %arg1, %c1_i32 : i32
    %c8_i32 = arith.constant 8 : i32
    %1 = arith.muli %0, %c8_i32 : i32
    %c15_i32 = arith.constant 15 : i32
    %2 = arith.minsi %1, %c15_i32 : i32
    %c0_i32 = arith.constant 0 : i32
    %c0_i32_0 = arith.constant 0 : i32
    %c0_i32_1 = arith.constant 0 : i32
    return %arg0, %2, %c0_i32, %c0_i32_0 : i32, i32, i32, i32
  }
  func.func @transform_3(%arg0: i32, %arg1: i32) -> (i32, i32) {
    %c0_i32 = arith.constant 0 : i32
    %c0_i32_0 = arith.constant 0 : i32
    %c0_i32_1 = arith.constant 0 : i32
    return %c0_i32, %c0_i32_0 : i32, i32
  }
  func.func @transform_4(%arg0: i32, %arg1: i32) -> (i32, i32) {
    %c0_i32 = arith.constant 0 : i32
    %c0_i32_0 = arith.constant 0 : i32
    %c0_i32_1 = arith.constant 0 : i32
    return %c0_i32, %c0_i32_0 : i32, i32
  }
  func.func @transform_5(%arg0: i32, %arg1: i32) -> (i32, i32, i32) {
    %c0_i32 = arith.constant 0 : i32
    %c0_i32_0 = arith.constant 0 : i32
    return %arg0, %arg1, %c0_i32 : i32, i32, i32
  }
}

module attributes {stable_mosaic.version = 11 : i64} {
  func.func @_conv3x3_kernel(%arg0: i32, %arg1: i32, %arg2: memref<1x8x16x8xbf16, #tpu.memory_space<vmem>>, %arg3: memref<1x1x16x8xbf16, #tpu.memory_space<vmem>>, %arg4: memref<1x1x16x8xbf16, #tpu.memory_space<vmem>>, %arg5: memref<72x8xbf16, #tpu.memory_space<vmem>>, %arg6: memref<2x8xf32, #tpu.memory_space<vmem>>, %arg7: memref<1x128x8xbf16, #tpu.memory_space<vmem>>) attributes {dimension_semantics = [#tpu.dimension_semantics<parallel>, #tpu.dimension_semantics<parallel>], iteration_bounds = array<i64: 2, 2>, scalar_prefetch = 0 : i64, scratch_operands = 0 : i64, tpu.core_type = #tpu.core_type<tc>, window_params = [{transform_indices = @transform_0, window_bounds = array<i64: 1, 8, 16, 8>}, {transform_indices = @transform_1, window_bounds = array<i64: 1, 1, 16, 8>}, {transform_indices = @transform_2, window_bounds = array<i64: 1, 1, 16, 8>}, {pipeline_mode = #tpu.pipeline_mode<synchronous>, transform_indices = @transform_3, window_bounds = array<i64: 72, 8>}, {pipeline_mode = #tpu.pipeline_mode<synchronous>, transform_indices = @transform_4, window_bounds = array<i64: 2, 8>}, {transform_indices = @transform_5, window_bounds = array<i64: 1, 128, 8>}]} {
    %c0 = arith.constant 0 : index
    %c0_0 = arith.constant 0 : index
    %c0_1 = arith.constant 0 : index
    %c0_2 = arith.constant 0 : index
    %0 = vector.load %arg2[%c0, %c0_0, %c0_1, %c0_2] : memref<1x8x16x8xbf16, #tpu.memory_space<vmem>>, vector<1x8x16x8xbf16>
    %1 = vector.shape_cast %0 : vector<1x8x16x8xbf16> to vector<8x16x8xbf16>
    %c0_3 = arith.constant 0 : index
    %c0_4 = arith.constant 0 : index
    %c0_5 = arith.constant 0 : index
    %c0_6 = arith.constant 0 : index
    %2 = vector.load %arg3[%c0_3, %c0_4, %c0_5, %c0_6] : memref<1x1x16x8xbf16, #tpu.memory_space<vmem>>, vector<1x1x16x8xbf16>
    %3 = vector.shape_cast %2 : vector<1x1x16x8xbf16> to vector<1x16x8xbf16>
    %c0_i32 = arith.constant 0 : i32
    %4 = arith.cmpi sgt, %arg1, %c0_i32 : i32
    %5 = arith.extui %4 : i1 to i32
    %6 = arith.sitofp %5 : i32 to f32
    %7 = arith.truncf %6 : f32 to bf16
    %8 = vector.broadcast %7 : bf16 to vector<1x16x8xbf16>
    %9 = arith.mulf %3, %8 : vector<1x16x8xbf16>
    %c0_7 = arith.constant 0 : index
    %c0_8 = arith.constant 0 : index
    %c0_9 = arith.constant 0 : index
    %c0_10 = arith.constant 0 : index
    %10 = vector.load %arg4[%c0_7, %c0_8, %c0_9, %c0_10] : memref<1x1x16x8xbf16, #tpu.memory_space<vmem>>, vector<1x1x16x8xbf16>
    %11 = vector.shape_cast %10 : vector<1x1x16x8xbf16> to vector<1x16x8xbf16>
    %c1_i32 = arith.constant 1 : i32
    %12 = arith.cmpi slt, %arg1, %c1_i32 : i32
    %13 = arith.extui %12 : i1 to i32
    %14 = arith.sitofp %13 : i32 to f32
    %15 = arith.truncf %14 : f32 to bf16
    %16 = vector.broadcast %15 : bf16 to vector<1x16x8xbf16>
    %17 = arith.mulf %11, %16 : vector<1x16x8xbf16>
    %18 = tpu.concatenate %9, %1, %17 in 0 : vector<1x16x8xbf16>, vector<8x16x8xbf16>, vector<1x16x8xbf16> -> vector<10x16x8xbf16>
    %cst = arith.constant 0.000000e+00 : bf16
    %19 = vector.broadcast %cst : bf16 to vector<10x1x8xbf16>
    %20 = tpu.concatenate %19, %18, %19 in 1 : vector<10x1x8xbf16>, vector<10x16x8xbf16>, vector<10x1x8xbf16> -> vector<10x18x8xbf16>
    %21 = vector.extract_strided_slice %20 {offsets = [0, 0, 0], sizes = [8, 16, 8], strides = [1, 1, 1]} : vector<10x18x8xbf16> to vector<8x16x8xbf16>
    %22 = vector.shape_cast %21 : vector<8x16x8xbf16> to vector<128x8xbf16>
    %23 = vector.extract_strided_slice %20 {offsets = [0, 1, 0], sizes = [8, 16, 8], strides = [1, 1, 1]} : vector<10x18x8xbf16> to vector<8x16x8xbf16>
    %24 = vector.shape_cast %23 : vector<8x16x8xbf16> to vector<128x8xbf16>
    %25 = vector.extract_strided_slice %20 {offsets = [0, 2, 0], sizes = [8, 16, 8], strides = [1, 1, 1]} : vector<10x18x8xbf16> to vector<8x16x8xbf16>
    %26 = vector.shape_cast %25 : vector<8x16x8xbf16> to vector<128x8xbf16>
    %27 = vector.extract_strided_slice %20 {offsets = [1, 0, 0], sizes = [8, 16, 8], strides = [1, 1, 1]} : vector<10x18x8xbf16> to vector<8x16x8xbf16>
    %28 = vector.shape_cast %27 : vector<8x16x8xbf16> to vector<128x8xbf16>
    %29 = vector.extract_strided_slice %20 {offsets = [1, 1, 0], sizes = [8, 16, 8], strides = [1, 1, 1]} : vector<10x18x8xbf16> to vector<8x16x8xbf16>
    %30 = vector.shape_cast %29 : vector<8x16x8xbf16> to vector<128x8xbf16>
    %31 = vector.extract_strided_slice %20 {offsets = [1, 2, 0], sizes = [8, 16, 8], strides = [1, 1, 1]} : vector<10x18x8xbf16> to vector<8x16x8xbf16>
    %32 = vector.shape_cast %31 : vector<8x16x8xbf16> to vector<128x8xbf16>
    %33 = vector.extract_strided_slice %20 {offsets = [2, 0, 0], sizes = [8, 16, 8], strides = [1, 1, 1]} : vector<10x18x8xbf16> to vector<8x16x8xbf16>
    %34 = vector.shape_cast %33 : vector<8x16x8xbf16> to vector<128x8xbf16>
    %35 = vector.extract_strided_slice %20 {offsets = [2, 1, 0], sizes = [8, 16, 8], strides = [1, 1, 1]} : vector<10x18x8xbf16> to vector<8x16x8xbf16>
    %36 = vector.shape_cast %35 : vector<8x16x8xbf16> to vector<128x8xbf16>
    %37 = vector.extract_strided_slice %20 {offsets = [2, 2, 0], sizes = [8, 16, 8], strides = [1, 1, 1]} : vector<10x18x8xbf16> to vector<8x16x8xbf16>
    %38 = vector.shape_cast %37 : vector<8x16x8xbf16> to vector<128x8xbf16>
    %39 = tpu.concatenate %22, %24, %26, %28, %30, %32, %34, %36, %38 in 1 : vector<128x8xbf16>, vector<128x8xbf16>, vector<128x8xbf16>, vector<128x8xbf16>, vector<128x8xbf16>, vector<128x8xbf16>, vector<128x8xbf16>, vector<128x8xbf16>, vector<128x8xbf16> -> vector<128x72xbf16>
    %c0_11 = arith.constant 0 : index
    %c0_12 = arith.constant 0 : index
    %40 = vector.load %arg5[%c0_11, %c0_12] : memref<72x8xbf16, #tpu.memory_space<vmem>>, vector<72x8xbf16>
    %cst_13 = arith.constant dense<0.000000e+00> : vector<128x8xf32>
    %41 = tpu.matmul %39, %40, %cst_13 {dimension_numbers = #tpu.dot_dimension_numbers<[1], [0], [0], [1], [0, 0, 1, 1], [], []>} : vector<128x72xbf16>, vector<72x8xbf16>, vector<128x8xf32> -> vector<128x8xf32>
    %c0_14 = arith.constant 0 : index
    %c0_15 = arith.constant 0 : index
    %42 = vector.load %arg6[%c0_14, %c0_15] : memref<2x8xf32, #tpu.memory_space<vmem>>, vector<2x8xf32>
    %43 = vector.extract_strided_slice %42 {offsets = [0, 0], sizes = [1, 8], strides = [1, 1]} : vector<2x8xf32> to vector<1x8xf32>
    %44 = vector.broadcast %43 : vector<1x8xf32> to vector<128x8xf32>
    %45 = arith.mulf %41, %44 : vector<128x8xf32>
    %46 = vector.extract_strided_slice %42 {offsets = [1, 0], sizes = [1, 8], strides = [1, 1]} : vector<2x8xf32> to vector<1x8xf32>
    %47 = vector.broadcast %46 : vector<1x8xf32> to vector<128x8xf32>
    %48 = arith.addf %45, %47 : vector<128x8xf32>
    %cst_16 = arith.constant 0.000000e+00 : f32
    %49 = vector.broadcast %cst_16 : f32 to vector<128x8xf32>
    %50 = arith.maximumf %48, %49 : vector<128x8xf32>
    %51 = arith.truncf %50 : vector<128x8xf32> to vector<128x8xbf16>
    %c0_17 = arith.constant 0 : index
    %c0_18 = arith.constant 0 : index
    %c0_19 = arith.constant 0 : index
    %52 = vector.load %arg7[%c0_17, %c0_18, %c0_19] : memref<1x128x8xbf16, #tpu.memory_space<vmem>>, vector<1x128x8xbf16>
    %53 = vector.shape_cast %52 : vector<1x128x8xbf16> to vector<128x8xbf16>
    %54 = vector.shape_cast %51 : vector<128x8xbf16> to vector<1x128x8xbf16>
    tpu.vector_store %arg7[%c0_17, %c0_18, %c0_19], %54 {strides = array<i32>} : memref<1x128x8xbf16, #tpu.memory_space<vmem>>, vector<1x128x8xbf16>,
    return
  }
  func.func @transform_0(%arg0: i32, %arg1: i32) -> (i32, i32, i32, i32) {
    %c0_i32 = arith.constant 0 : i32
    %c0_i32_0 = arith.constant 0 : i32
    %c0_i32_1 = arith.constant 0 : i32
    return %arg0, %arg1, %c0_i32, %c0_i32_0 : i32, i32, i32, i32
  }
  func.func @transform_1(%arg0: i32, %arg1: i32) -> (i32, i32, i32, i32) {
    %c8_i32 = arith.constant 8 : i32
    %0 = arith.muli %arg1, %c8_i32 : i32
    %c1_i32 = arith.constant 1 : i32
    %1 = arith.subi %0, %c1_i32 : i32
    %c0_i32 = arith.constant 0 : i32
    %2 = arith.maxsi %1, %c0_i32 : i32
    %c0_i32_0 = arith.constant 0 : i32
    %c0_i32_1 = arith.constant 0 : i32
    %c0_i32_2 = arith.constant 0 : i32
    return %arg0, %2, %c0_i32_0, %c0_i32_1 : i32, i32, i32, i32
  }
  func.func @transform_2(%arg0: i32, %arg1: i32) -> (i32, i32, i32, i32) {
    %c1_i32 = arith.constant 1 : i32
    %0 = arith.addi %arg1, %c1_i32 : i32
    %c8_i32 = arith.constant 8 : i32
    %1 = arith.muli %0, %c8_i32 : i32
    %c15_i32 = arith.constant 15 : i32
    %2 = arith.minsi %1, %c15_i32 : i32
    %c0_i32 = arith.constant 0 : i32
    %c0_i32_0 = arith.constant 0 : i32
    %c0_i32_1 = arith.constant 0 : i32
    return %arg0, %2, %c0_i32, %c0_i32_0 : i32, i32, i32, i32
  }
  func.func @transform_3(%arg0: i32, %arg1: i32) -> (i32, i32) {
    %c0_i32 = arith.constant 0 : i32
    %c0_i32_0 = arith.constant 0 : i32
    %c0_i32_1 = arith.constant 0 : i32
    return %c0_i32, %c0_i32_0 : i32, i32
  }
  func.func @transform_4(%arg0: i32, %arg1: i32) -> (i32, i32) {
    %c0_i32 = arith.constant 0 : i32
    %c0_i32_0 = arith.constant 0 : i32
    %c0_i32_1 = arith.constant 0 : i32
    return %c0_i32, %c0_i32_0 : i32, i32
  }
  func.func @transform_5(%arg0: i32, %arg1: i32) -> (i32, i32, i32) {
    %c0_i32 = arith.constant 0 : i32
    %c0_i32_0 = arith.constant 0 : i32
    return %arg0, %arg1, %c0_i32 : i32, i32, i32
  }
}

module attributes {stable_mosaic.version = 11 : i64} {
  func.func @_cot_attn_value_kernel(%arg0: i32, %arg1: memref<512x8xbf16, #tpu.memory_space<vmem>>, %arg2: memref<512x8xbf16, #tpu.memory_space<vmem>>, %arg3: memref<8x4xbf16, #tpu.memory_space<vmem>>, %arg4: memref<8x4xbf16, #tpu.memory_space<vmem>>, %arg5: memref<8x8xbf16, #tpu.memory_space<vmem>>, %arg6: memref<4x8xbf16, #tpu.memory_space<vmem>>, %arg7: memref<2x4xf32, #tpu.memory_space<vmem>>, %arg8: memref<2x8xf32, #tpu.memory_space<vmem>>, %arg9: memref<1x8xf32, #tpu.memory_space<vmem>>, %arg10: memref<512x8xbf16, #tpu.memory_space<vmem>>, %arg11: memref<512x8xf32, #tpu.memory_space<vmem>>) attributes {dimension_semantics = [#tpu.dimension_semantics<parallel>], iteration_bounds = array<i64: 1>, scalar_prefetch = 0 : i64, scratch_operands = 0 : i64, tpu.core_type = #tpu.core_type<tc>, window_params = [{transform_indices = @transform_0, window_bounds = array<i64: 512, 8>}, {transform_indices = @transform_1, window_bounds = array<i64: 512, 8>}, {pipeline_mode = #tpu.pipeline_mode<synchronous>, transform_indices = @transform_2, window_bounds = array<i64: 8, 4>}, {pipeline_mode = #tpu.pipeline_mode<synchronous>, transform_indices = @transform_3, window_bounds = array<i64: 8, 4>}, {pipeline_mode = #tpu.pipeline_mode<synchronous>, transform_indices = @transform_4, window_bounds = array<i64: 8, 8>}, {pipeline_mode = #tpu.pipeline_mode<synchronous>, transform_indices = @transform_5, window_bounds = array<i64: 4, 8>}, {pipeline_mode = #tpu.pipeline_mode<synchronous>, transform_indices = @transform_6, window_bounds = array<i64: 2, 4>}, {pipeline_mode = #tpu.pipeline_mode<synchronous>, transform_indices = @transform_7, window_bounds = array<i64: 2, 8>}, {pipeline_mode = #tpu.pipeline_mode<synchronous>, transform_indices = @transform_8, window_bounds = array<i64: 1, 8>}, {transform_indices = @transform_9, window_bounds = array<i64: 512, 8>}, {transform_indices = @transform_10, window_bounds = array<i64: 512, 8>}]} {
    %c0 = arith.constant 0 : index
    %c0_0 = arith.constant 0 : index
    %0 = vector.load %arg1[%c0, %c0_0] : memref<512x8xbf16, #tpu.memory_space<vmem>>, vector<512x8xbf16>
    %c0_1 = arith.constant 0 : index
    %c0_2 = arith.constant 0 : index
    %1 = vector.load %arg2[%c0_1, %c0_2] : memref<512x8xbf16, #tpu.memory_space<vmem>>, vector<512x8xbf16>
    %c0_3 = arith.constant 0 : index
    %c0_4 = arith.constant 0 : index
    %2 = vector.load %arg3[%c0_3, %c0_4] : memref<8x4xbf16, #tpu.memory_space<vmem>>, vector<8x4xbf16>
    %cst = arith.constant dense<0.000000e+00> : vector<512x4xf32>
    %3 = tpu.matmul %0, %2, %cst {dimension_numbers = #tpu.dot_dimension_numbers<[1], [0], [0], [1], [0, 0, 1, 1], [], []>} : vector<512x8xbf16>, vector<8x4xbf16>, vector<512x4xf32> -> vector<512x4xf32>
    %c0_5 = arith.constant 0 : index
    %c0_6 = arith.constant 0 : index
    %4 = vector.load %arg4[%c0_5, %c0_6] : memref<8x4xbf16, #tpu.memory_space<vmem>>, vector<8x4xbf16>
    %cst_7 = arith.constant dense<0.000000e+00> : vector<512x4xf32>
    %5 = tpu.matmul %1, %4, %cst_7 {dimension_numbers = #tpu.dot_dimension_numbers<[1], [0], [0], [1], [0, 0, 1, 1], [], []>} : vector<512x8xbf16>, vector<8x4xbf16>, vector<512x4xf32> -> vector<512x4xf32>
    %6 = arith.addf %3, %5 : vector<512x4xf32>
    %c0_8 = arith.constant 0 : index
    %c0_9 = arith.constant 0 : index
    %7 = vector.load %arg7[%c0_8, %c0_9] : memref<2x4xf32, #tpu.memory_space<vmem>>, vector<2x4xf32>
    %8 = vector.extract_strided_slice %7 {offsets = [0, 0], sizes = [1, 4], strides = [1, 1]} : vector<2x4xf32> to vector<1x4xf32>
    %9 = vector.broadcast %8 : vector<1x4xf32> to vector<512x4xf32>
    %10 = arith.mulf %6, %9 : vector<512x4xf32>
    %11 = vector.extract_strided_slice %7 {offsets = [1, 0], sizes = [1, 4], strides = [1, 1]} : vector<2x4xf32> to vector<1x4xf32>
    %12 = vector.broadcast %11 : vector<1x4xf32> to vector<512x4xf32>
    %13 = arith.addf %10, %12 : vector<512x4xf32>
    %cst_10 = arith.constant 0.000000e+00 : f32
    %14 = vector.broadcast %cst_10 : f32 to vector<512x4xf32>
    %15 = arith.maximumf %13, %14 : vector<512x4xf32>
    %16 = arith.truncf %15 : vector<512x4xf32> to vector<512x4xbf16>
    %c0_11 = arith.constant 0 : index
    %c0_12 = arith.constant 0 : index
    %17 = vector.load %arg6[%c0_11, %c0_12] : memref<4x8xbf16, #tpu.memory_space<vmem>>, vector<4x8xbf16>
    %cst_13 = arith.constant dense<0.000000e+00> : vector<512x8xf32>
    %18 = tpu.matmul %16, %17, %cst_13 {dimension_numbers = #tpu.dot_dimension_numbers<[1], [0], [0], [1], [0, 0, 1, 1], [], []>} : vector<512x4xbf16>, vector<4x8xbf16>, vector<512x8xf32> -> vector<512x8xf32>
    %c0_14 = arith.constant 0 : index
    %c0_15 = arith.constant 0 : index
    %19 = vector.load %arg9[%c0_14, %c0_15] : memref<1x8xf32, #tpu.memory_space<vmem>>, vector<1x8xf32>
    %20 = vector.broadcast %19 : vector<1x8xf32> to vector<512x8xf32>
    %21 = arith.addf %18, %20 : vector<512x8xf32>
    %c0_16 = arith.constant 0 : index
    %c0_17 = arith.constant 0 : index
    %22 = vector.load %arg5[%c0_16, %c0_17] : memref<8x8xbf16, #tpu.memory_space<vmem>>, vector<8x8xbf16>
    %cst_18 = arith.constant dense<0.000000e+00> : vector<512x8xf32>
    %23 = tpu.matmul %1, %22, %cst_18 {dimension_numbers = #tpu.dot_dimension_numbers<[1], [0], [0], [1], [0, 0, 1, 1], [], []>} : vector<512x8xbf16>, vector<8x8xbf16>, vector<512x8xf32> -> vector<512x8xf32>
    %c0_19 = arith.constant 0 : index
    %c0_20 = arith.constant 0 : index
    %24 = vector.load %arg8[%c0_19, %c0_20] : memref<2x8xf32, #tpu.memory_space<vmem>>, vector<2x8xf32>
    %25 = vector.extract_strided_slice %24 {offsets = [0, 0], sizes = [1, 8], strides = [1, 1]} : vector<2x8xf32> to vector<1x8xf32>
    %26 = vector.broadcast %25 : vector<1x8xf32> to vector<512x8xf32>
    %27 = arith.mulf %23, %26 : vector<512x8xf32>
    %28 = vector.extract_strided_slice %24 {offsets = [1, 0], sizes = [1, 8], strides = [1, 1]} : vector<2x8xf32> to vector<1x8xf32>
    %29 = vector.broadcast %28 : vector<1x8xf32> to vector<512x8xf32>
    %30 = arith.addf %27, %29 : vector<512x8xf32>
    %31 = arith.truncf %30 : vector<512x8xf32> to vector<512x8xbf16>
    %c0_21 = arith.constant 0 : index
    %c0_22 = arith.constant 0 : index
    %32 = vector.load %arg10[%c0_21, %c0_22] : memref<512x8xbf16, #tpu.memory_space<vmem>>, vector<512x8xbf16>
    tpu.vector_store %arg10[%c0_21, %c0_22], %31 {strides = array<i32>} : memref<512x8xbf16, #tpu.memory_space<vmem>>, vector<512x8xbf16>,
    %c0_23 = arith.constant 0 : index
    %c0_24 = arith.constant 0 : index
    %33 = vector.load %arg11[%c0_23, %c0_24] : memref<512x8xf32, #tpu.memory_space<vmem>>, vector<512x8xf32>
    tpu.vector_store %arg11[%c0_23, %c0_24], %21 {strides = array<i32>} : memref<512x8xf32, #tpu.memory_space<vmem>>, vector<512x8xf32>,
    return
  }
  func.func @transform_0(%arg0: i32) -> (i32, i32) {
    %c0_i32 = arith.constant 0 : i32
    %c0_i32_0 = arith.constant 0 : i32
    return %arg0, %c0_i32 : i32, i32
  }
  func.func @transform_1(%arg0: i32) -> (i32, i32) {
    %c0_i32 = arith.constant 0 : i32
    %c0_i32_0 = arith.constant 0 : i32
    return %arg0, %c0_i32 : i32, i32
  }
  func.func @transform_2(%arg0: i32) -> (i32, i32) {
    %c0_i32 = arith.constant 0 : i32
    %c0_i32_0 = arith.constant 0 : i32
    %c0_i32_1 = arith.constant 0 : i32
    return %c0_i32, %c0_i32_0 : i32, i32
  }
  func.func @transform_3(%arg0: i32) -> (i32, i32) {
    %c0_i32 = arith.constant 0 : i32
    %c0_i32_0 = arith.constant 0 : i32
    %c0_i32_1 = arith.constant 0 : i32
    return %c0_i32, %c0_i32_0 : i32, i32
  }
  func.func @transform_4(%arg0: i32) -> (i32, i32) {
    %c0_i32 = arith.constant 0 : i32
    %c0_i32_0 = arith.constant 0 : i32
    %c0_i32_1 = arith.constant 0 : i32
    return %c0_i32, %c0_i32_0 : i32, i32
  }
  func.func @transform_5(%arg0: i32) -> (i32, i32) {
    %c0_i32 = arith.constant 0 : i32
    %c0_i32_0 = arith.constant 0 : i32
    %c0_i32_1 = arith.constant 0 : i32
    return %c0_i32, %c0_i32_0 : i32, i32
  }
  func.func @transform_6(%arg0: i32) -> (i32, i32) {
    %c0_i32 = arith.constant 0 : i32
    %c0_i32_0 = arith.constant 0 : i32
    %c0_i32_1 = arith.constant 0 : i32
    return %c0_i32, %c0_i32_0 : i32, i32
  }
  func.func @transform_7(%arg0: i32) -> (i32, i32) {
    %c0_i32 = arith.constant 0 : i32
    %c0_i32_0 = arith.constant 0 : i32
    %c0_i32_1 = arith.constant 0 : i32
    return %c0_i32, %c0_i32_0 : i32, i32
  }
  func.func @transform_8(%arg0: i32) -> (i32, i32) {
    %c0_i32 = arith.constant 0 : i32
    %c0_i32_0 = arith.constant 0 : i32
    %c0_i32_1 = arith.constant 0 : i32
    return %c0_i32, %c0_i32_0 : i32, i32
  }
  func.func @transform_9(%arg0: i32) -> (i32, i32) {
    %c0_i32 = arith.constant 0 : i32
    %c0_i32_0 = arith.constant 0 : i32
    return %arg0, %c0_i32 : i32, i32
  }
  func.func @transform_10(%arg0: i32) -> (i32, i32) {
    %c0_i32 = arith.constant 0 : i32
    %c0_i32_0 = arith.constant 0 : i32
    return %arg0, %c0_i32 : i32, i32
  }
}

module attributes {stable_mosaic.version = 11 : i64} {
  func.func @_softmax_stats_kernel(%arg0: i32, %arg1: i32, %arg2: i32, %arg3: memref<1x256x8xf32, #tpu.memory_space<vmem>>, %arg4: memref<1x1x8xf32, #tpu.memory_space<vmem>>, %arg5: memref<1x1x8xf32, #tpu.memory_space<vmem>>, %arg6: memref<1x8xf32, #tpu.memory_space<vmem>>, %arg7: memref<1x8xf32, #tpu.memory_space<vmem>>) attributes {dimension_semantics = [#tpu.dimension_semantics<parallel>, #tpu.dimension_semantics<parallel>, #tpu.dimension_semantics<arbitrary>], iteration_bounds = array<i64: 2, 1, 1>, scalar_prefetch = 0 : i64, scratch_operands = 2 : i64, tpu.core_type = #tpu.core_type<tc>, window_params = [{transform_indices = @transform_0, window_bounds = array<i64: 1, 256, 8>}, {transform_indices = @transform_1, window_bounds = array<i64: 1, 1, 8>}, {transform_indices = @transform_2, window_bounds = array<i64: 1, 1, 8>}]} {
    %c0_i32 = arith.constant 0 : i32
    %0 = arith.cmpi eq, %arg2, %c0_i32 : i32
    %1 = arith.extui %0 : i1 to i32
    %c0_i32_0 = arith.constant 0 : i32
    %2 = arith.cmpi ne, %1, %c0_i32_0 : i32
    scf.if %2 {
      %cst_16 = arith.constant 0xFF800000 : f32
      %25 = vector.broadcast %cst_16 : f32 to vector<1x8xf32>
      %c0_17 = arith.constant 0 : index
      %c0_18 = arith.constant 0 : index
      %26 = vector.load %arg6[%c0_17, %c0_18] : memref<1x8xf32, #tpu.memory_space<vmem>>, vector<1x8xf32>
      tpu.vector_store %arg6[%c0_17, %c0_18], %25 {strides = array<i32>} : memref<1x8xf32, #tpu.memory_space<vmem>>, vector<1x8xf32>,
      %cst_19 = arith.constant 0.000000e+00 : f32
      %27 = vector.broadcast %cst_19 : f32 to vector<1x8xf32>
      %c0_20 = arith.constant 0 : index
      %c0_21 = arith.constant 0 : index
      %28 = vector.load %arg7[%c0_20, %c0_21] : memref<1x8xf32, #tpu.memory_space<vmem>>, vector<1x8xf32>
      tpu.vector_store %arg7[%c0_20, %c0_21], %27 {strides = array<i32>} : memref<1x8xf32, #tpu.memory_space<vmem>>, vector<1x8xf32>,
    } else {
    }
    %c0 = arith.constant 0 : index
    %c0_1 = arith.constant 0 : index
    %c0_2 = arith.constant 0 : index
    %3 = vector.load %arg3[%c0, %c0_1, %c0_2] : memref<1x256x8xf32, #tpu.memory_space<vmem>>, vector<1x256x8xf32>
    %4 = vector.shape_cast %3 : vector<1x256x8xf32> to vector<256x8xf32>
    %cst = arith.constant dense<0xFF800000> : vector<8xf32>
    %5 = vector.multi_reduction <maximumf>, %4, %cst [0] : vector<256x8xf32> to vector<8xf32>
    %6 = vector.shape_cast %5 : vector<8xf32> to vector<1x8xf32>
    %c0_3 = arith.constant 0 : index
    %c0_4 = arith.constant 0 : index
    %7 = vector.load %arg6[%c0_3, %c0_4] : memref<1x8xf32, #tpu.memory_space<vmem>>, vector<1x8xf32>
    %8 = arith.maximumf %7, %6 : vector<1x8xf32>
    %c0_5 = arith.constant 0 : index
    %c0_6 = arith.constant 0 : index
    %9 = vector.load %arg7[%c0_5, %c0_6] : memref<1x8xf32, #tpu.memory_space<vmem>>, vector<1x8xf32>
    %c0_7 = arith.constant 0 : index
    %c0_8 = arith.constant 0 : index
    %10 = vector.load %arg6[%c0_7, %c0_8] : memref<1x8xf32, #tpu.memory_space<vmem>>, vector<1x8xf32>
    %11 = arith.subf %10, %8 : vector<1x8xf32>
    %12 = math.exp %11 : vector<1x8xf32>
    %13 = arith.mulf %9, %12 : vector<1x8xf32>
    %14 = vector.broadcast %8 : vector<1x8xf32> to vector<256x8xf32>
    %15 = arith.subf %4, %14 : vector<256x8xf32>
    %16 = math.exp %15 : vector<256x8xf32>
    %cst_9 = arith.constant dense<0.000000e+00> : vector<8xf32>
    %17 = vector.multi_reduction <add>, %16, %cst_9 [0] : vector<256x8xf32> to vector<8xf32>
    %18 = vector.shape_cast %17 : vector<8xf32> to vector<1x8xf32>
    %19 = arith.addf %13, %18 : vector<1x8xf32>
    %c0_10 = arith.constant 0 : index
    %c0_11 = arith.constant 0 : index
    %20 = vector.load %arg7[%c0_10, %c0_11] : memref<1x8xf32, #tpu.memory_space<vmem>>, vector<1x8xf32>
    tpu.vector_store %arg7[%c0_10, %c0_11], %19 {strides = array<i32>} : memref<1x8xf32, #tpu.memory_space<vmem>>, vector<1x8xf32>,
    %c0_12 = arith.constant 0 : index
    %c0_13 = arith.constant 0 : index
    %21 = vector.load %arg6[%c0_12, %c0_13] : memref<1x8xf32, #tpu.memory_space<vmem>>, vector<1x8xf32>
    tpu.vector_store %arg6[%c0_12, %c0_13], %8 {strides = array<i32>} : memref<1x8xf32, #tpu.memory_space<vmem>>, vector<1x8xf32>,
    %c0_i32_14 = arith.constant 0 : i32
    %22 = arith.cmpi eq, %arg2, %c0_i32_14 : i32
    %23 = arith.extui %22 : i1 to i32
    %c0_i32_15 = arith.constant 0 : i32
    %24 = arith.cmpi ne, %23, %c0_i32_15 : i32
    scf.if %24 {
      %c0_16 = arith.constant 0 : index
      %c0_17 = arith.constant 0 : index
      %25 = vector.load %arg6[%c0_16, %c0_17] : memref<1x8xf32, #tpu.memory_space<vmem>>, vector<1x8xf32>
      %c0_18 = arith.constant 0 : index
      %c0_19 = arith.constant 0 : index
      %c0_20 = arith.constant 0 : index
      %26 = vector.load %arg4[%c0_18, %c0_19, %c0_20] : memref<1x1x8xf32, #tpu.memory_space<vmem>>, vector<1x1x8xf32>
      %27 = vector.shape_cast %26 : vector<1x1x8xf32> to vector<1x8xf32>
      %28 = vector.shape_cast %25 : vector<1x8xf32> to vector<1x1x8xf32>
      tpu.vector_store %arg4[%c0_18, %c0_19, %c0_20], %28 {strides = array<i32>} : memref<1x1x8xf32, #tpu.memory_space<vmem>>, vector<1x1x8xf32>,
      %c0_21 = arith.constant 0 : index
      %c0_22 = arith.constant 0 : index
      %29 = vector.load %arg7[%c0_21, %c0_22] : memref<1x8xf32, #tpu.memory_space<vmem>>, vector<1x8xf32>
      %c0_23 = arith.constant 0 : index
      %c0_24 = arith.constant 0 : index
      %c0_25 = arith.constant 0 : index
      %30 = vector.load %arg5[%c0_23, %c0_24, %c0_25] : memref<1x1x8xf32, #tpu.memory_space<vmem>>, vector<1x1x8xf32>
      %31 = vector.shape_cast %30 : vector<1x1x8xf32> to vector<1x8xf32>
      %32 = vector.shape_cast %29 : vector<1x8xf32> to vector<1x1x8xf32>
      tpu.vector_store %arg5[%c0_23, %c0_24, %c0_25], %32 {strides = array<i32>} : memref<1x1x8xf32, #tpu.memory_space<vmem>>, vector<1x1x8xf32>,
    } else {
    }
    return
  }
  func.func @transform_0(%arg0: i32, %arg1: i32, %arg2: i32) -> (i32, i32, i32) {
    %c0_i32 = arith.constant 0 : i32
    return %arg0, %arg2, %arg1 : i32, i32, i32
  }
  func.func @transform_1(%arg0: i32, %arg1: i32, %arg2: i32) -> (i32, i32, i32) {
    %c0_i32 = arith.constant 0 : i32
    %c0_i32_0 = arith.constant 0 : i32
    return %arg0, %c0_i32, %arg1 : i32, i32, i32
  }
  func.func @transform_2(%arg0: i32, %arg1: i32, %arg2: i32) -> (i32, i32, i32) {
    %c0_i32 = arith.constant 0 : i32
    %c0_i32_0 = arith.constant 0 : i32
    return %arg0, %c0_i32, %arg1 : i32, i32, i32
  }
}

module attributes {stable_mosaic.version = 11 : i64} {
  func.func @_softmax_combine_kernel(%arg0: i32, %arg1: i32, %arg2: i32, %arg3: memref<1x256x8xbf16, #tpu.memory_space<vmem>>, %arg4: memref<1x256x8xbf16, #tpu.memory_space<vmem>>, %arg5: memref<1x256x8xf32, #tpu.memory_space<vmem>>, %arg6: memref<1x1x8xf32, #tpu.memory_space<vmem>>, %arg7: memref<1x1x8xf32, #tpu.memory_space<vmem>>, %arg8: memref<1x256x8xbf16, #tpu.memory_space<vmem>>) attributes {dimension_semantics = [#tpu.dimension_semantics<parallel>, #tpu.dimension_semantics<parallel>, #tpu.dimension_semantics<parallel>], iteration_bounds = array<i64: 2, 1, 1>, scalar_prefetch = 0 : i64, scratch_operands = 0 : i64, tpu.core_type = #tpu.core_type<tc>, window_params = [{transform_indices = @transform_0, window_bounds = array<i64: 1, 256, 8>}, {transform_indices = @transform_1, window_bounds = array<i64: 1, 256, 8>}, {transform_indices = @transform_2, window_bounds = array<i64: 1, 256, 8>}, {transform_indices = @transform_3, window_bounds = array<i64: 1, 1, 8>}, {transform_indices = @transform_4, window_bounds = array<i64: 1, 1, 8>}, {transform_indices = @transform_5, window_bounds = array<i64: 1, 256, 8>}]} {
    %c0 = arith.constant 0 : index
    %c0_0 = arith.constant 0 : index
    %c0_1 = arith.constant 0 : index
    %0 = vector.load %arg5[%c0, %c0_0, %c0_1] : memref<1x256x8xf32, #tpu.memory_space<vmem>>, vector<1x256x8xf32>
    %1 = vector.shape_cast %0 : vector<1x256x8xf32> to vector<256x8xf32>
    %c0_2 = arith.constant 0 : index
    %c0_3 = arith.constant 0 : index
    %c0_4 = arith.constant 0 : index
    %2 = vector.load %arg6[%c0_2, %c0_3, %c0_4] : memref<1x1x8xf32, #tpu.memory_space<vmem>>, vector<1x1x8xf32>
    %3 = vector.shape_cast %2 : vector<1x1x8xf32> to vector<1x8xf32>
    %4 = vector.broadcast %3 : vector<1x8xf32> to vector<256x8xf32>
    %5 = arith.subf %1, %4 : vector<256x8xf32>
    %6 = math.exp %5 : vector<256x8xf32>
    %c0_5 = arith.constant 0 : index
    %c0_6 = arith.constant 0 : index
    %c0_7 = arith.constant 0 : index
    %7 = vector.load %arg7[%c0_5, %c0_6, %c0_7] : memref<1x1x8xf32, #tpu.memory_space<vmem>>, vector<1x1x8xf32>
    %8 = vector.shape_cast %7 : vector<1x1x8xf32> to vector<1x8xf32>
    %9 = tpu.reciprocal %8 {approx = true} : vector<1x8xf32> -> vector<1x8xf32>
    %10 = vector.broadcast %9 : vector<1x8xf32> to vector<256x8xf32>
    %11 = arith.mulf %6, %10 : vector<256x8xf32>
    %c0_8 = arith.constant 0 : index
    %c0_9 = arith.constant 0 : index
    %c0_10 = arith.constant 0 : index
    %12 = vector.load %arg3[%c0_8, %c0_9, %c0_10] : memref<1x256x8xbf16, #tpu.memory_space<vmem>>, vector<1x256x8xbf16>
    %13 = vector.shape_cast %12 : vector<1x256x8xbf16> to vector<256x8xbf16>
    %14 = arith.extf %13 : vector<256x8xbf16> to vector<256x8xf32>
    %c0_11 = arith.constant 0 : index
    %c0_12 = arith.constant 0 : index
    %c0_13 = arith.constant 0 : index
    %15 = vector.load %arg4[%c0_11, %c0_12, %c0_13] : memref<1x256x8xbf16, #tpu.memory_space<vmem>>, vector<1x256x8xbf16>
    %16 = vector.shape_cast %15 : vector<1x256x8xbf16> to vector<256x8xbf16>
    %17 = arith.extf %16 : vector<256x8xbf16> to vector<256x8xf32>
    %18 = arith.mulf %11, %17 : vector<256x8xf32>
    %19 = arith.addf %14, %18 : vector<256x8xf32>
    %20 = arith.truncf %19 : vector<256x8xf32> to vector<256x8xbf16>
    %c0_14 = arith.constant 0 : index
    %c0_15 = arith.constant 0 : index
    %c0_16 = arith.constant 0 : index
    %21 = vector.load %arg8[%c0_14, %c0_15, %c0_16] : memref<1x256x8xbf16, #tpu.memory_space<vmem>>, vector<1x256x8xbf16>
    %22 = vector.shape_cast %21 : vector<1x256x8xbf16> to vector<256x8xbf16>
    %23 = vector.shape_cast %20 : vector<256x8xbf16> to vector<1x256x8xbf16>
    tpu.vector_store %arg8[%c0_14, %c0_15, %c0_16], %23 {strides = array<i32>} : memref<1x256x8xbf16, #tpu.memory_space<vmem>>, vector<1x256x8xbf16>,
    return
  }
  func.func @transform_0(%arg0: i32, %arg1: i32, %arg2: i32) -> (i32, i32, i32) {
    %c0_i32 = arith.constant 0 : i32
    return %arg0, %arg2, %arg1 : i32, i32, i32
  }
  func.func @transform_1(%arg0: i32, %arg1: i32, %arg2: i32) -> (i32, i32, i32) {
    %c0_i32 = arith.constant 0 : i32
    return %arg0, %arg2, %arg1 : i32, i32, i32
  }
  func.func @transform_2(%arg0: i32, %arg1: i32, %arg2: i32) -> (i32, i32, i32) {
    %c0_i32 = arith.constant 0 : i32
    return %arg0, %arg2, %arg1 : i32, i32, i32
  }
  func.func @transform_3(%arg0: i32, %arg1: i32, %arg2: i32) -> (i32, i32, i32) {
    %c0_i32 = arith.constant 0 : i32
    %c0_i32_0 = arith.constant 0 : i32
    return %arg0, %c0_i32, %arg1 : i32, i32, i32
  }
  func.func @transform_4(%arg0: i32, %arg1: i32, %arg2: i32) -> (i32, i32, i32) {
    %c0_i32 = arith.constant 0 : i32
    %c0_i32_0 = arith.constant 0 : i32
    return %arg0, %c0_i32, %arg1 : i32, i32, i32
  }
  func.func @transform_5(%arg0: i32, %arg1: i32, %arg2: i32) -> (i32, i32, i32) {
    %c0_i32 = arith.constant 0 : i32
    return %arg0, %arg2, %arg1 : i32, i32, i32
  }
}

module attributes {stable_mosaic.version = 11 : i64} {
  func.func @_cv2_fused_kernel(%arg0: i32, %arg1: memref<512x8xbf16, #tpu.memory_space<vmem>>, %arg2: memref<512x8xbf16, #tpu.memory_space<vmem>>, %arg3: memref<512x8xbf16, #tpu.memory_space<vmem>>, %arg4: memref<8x16xbf16, #tpu.memory_space<vmem>>, %arg5: memref<8x16xbf16, #tpu.memory_space<vmem>>, %arg6: memref<8x16xbf16, #tpu.memory_space<vmem>>, %arg7: memref<2x16xf32, #tpu.memory_space<vmem>>, %arg8: memref<512x16xf32, #tpu.memory_space<vmem>>) attributes {dimension_semantics = [#tpu.dimension_semantics<parallel>], iteration_bounds = array<i64: 1>, scalar_prefetch = 0 : i64, scratch_operands = 0 : i64, tpu.core_type = #tpu.core_type<tc>, window_params = [{transform_indices = @transform_0, window_bounds = array<i64: 512, 8>}, {transform_indices = @transform_1, window_bounds = array<i64: 512, 8>}, {transform_indices = @transform_2, window_bounds = array<i64: 512, 8>}, {pipeline_mode = #tpu.pipeline_mode<synchronous>, transform_indices = @transform_3, window_bounds = array<i64: 8, 16>}, {pipeline_mode = #tpu.pipeline_mode<synchronous>, transform_indices = @transform_4, window_bounds = array<i64: 8, 16>}, {pipeline_mode = #tpu.pipeline_mode<synchronous>, transform_indices = @transform_5, window_bounds = array<i64: 8, 16>}, {pipeline_mode = #tpu.pipeline_mode<synchronous>, transform_indices = @transform_6, window_bounds = array<i64: 2, 16>}, {transform_indices = @transform_7, window_bounds = array<i64: 512, 16>}]} {
    %c0 = arith.constant 0 : index
    %c0_0 = arith.constant 0 : index
    %0 = vector.load %arg1[%c0, %c0_0] : memref<512x8xbf16, #tpu.memory_space<vmem>>, vector<512x8xbf16>
    %c0_1 = arith.constant 0 : index
    %c0_2 = arith.constant 0 : index
    %1 = vector.load %arg4[%c0_1, %c0_2] : memref<8x16xbf16, #tpu.memory_space<vmem>>, vector<8x16xbf16>
    %cst = arith.constant dense<0.000000e+00> : vector<512x16xf32>
    %2 = tpu.matmul %0, %1, %cst {dimension_numbers = #tpu.dot_dimension_numbers<[1], [0], [0], [1], [0, 0, 1, 1], [], []>} : vector<512x8xbf16>, vector<8x16xbf16>, vector<512x16xf32> -> vector<512x16xf32>
    %c0_3 = arith.constant 0 : index
    %c0_4 = arith.constant 0 : index
    %3 = vector.load %arg2[%c0_3, %c0_4] : memref<512x8xbf16, #tpu.memory_space<vmem>>, vector<512x8xbf16>
    %c0_5 = arith.constant 0 : index
    %c0_6 = arith.constant 0 : index
    %4 = vector.load %arg5[%c0_5, %c0_6] : memref<8x16xbf16, #tpu.memory_space<vmem>>, vector<8x16xbf16>
    %cst_7 = arith.constant dense<0.000000e+00> : vector<512x16xf32>
    %5 = tpu.matmul %3, %4, %cst_7 {dimension_numbers = #tpu.dot_dimension_numbers<[1], [0], [0], [1], [0, 0, 1, 1], [], []>} : vector<512x8xbf16>, vector<8x16xbf16>, vector<512x16xf32> -> vector<512x16xf32>
    %6 = arith.addf %2, %5 : vector<512x16xf32>
    %c0_8 = arith.constant 0 : index
    %c0_9 = arith.constant 0 : index
    %7 = vector.load %arg3[%c0_8, %c0_9] : memref<512x8xbf16, #tpu.memory_space<vmem>>, vector<512x8xbf16>
    %c0_10 = arith.constant 0 : index
    %c0_11 = arith.constant 0 : index
    %8 = vector.load %arg6[%c0_10, %c0_11] : memref<8x16xbf16, #tpu.memory_space<vmem>>, vector<8x16xbf16>
    %cst_12 = arith.constant dense<0.000000e+00> : vector<512x16xf32>
    %9 = tpu.matmul %7, %8, %cst_12 {dimension_numbers = #tpu.dot_dimension_numbers<[1], [0], [0], [1], [0, 0, 1, 1], [], []>} : vector<512x8xbf16>, vector<8x16xbf16>, vector<512x16xf32> -> vector<512x16xf32>
    %10 = arith.addf %6, %9 : vector<512x16xf32>
    %c0_13 = arith.constant 0 : index
    %c0_14 = arith.constant 0 : index
    %11 = vector.load %arg7[%c0_13, %c0_14] : memref<2x16xf32, #tpu.memory_space<vmem>>, vector<2x16xf32>
    %12 = vector.extract_strided_slice %11 {offsets = [0, 0], sizes = [1, 16], strides = [1, 1]} : vector<2x16xf32> to vector<1x16xf32>
    %13 = vector.broadcast %12 : vector<1x16xf32> to vector<512x16xf32>
    %14 = arith.mulf %10, %13 : vector<512x16xf32>
    %15 = vector.extract_strided_slice %11 {offsets = [1, 0], sizes = [1, 16], strides = [1, 1]} : vector<2x16xf32> to vector<1x16xf32>
    %16 = vector.broadcast %15 : vector<1x16xf32> to vector<512x16xf32>
    %17 = arith.addf %14, %16 : vector<512x16xf32>
    %cst_15 = arith.constant 0.000000e+00 : f32
    %18 = vector.broadcast %cst_15 : f32 to vector<512x16xf32>
    %19 = arith.subf %18, %17 : vector<512x16xf32>
    %20 = math.exp %19 : vector<512x16xf32>
    %cst_16 = arith.constant 1.000000e+00 : f32
    %21 = vector.broadcast %cst_16 : f32 to vector<512x16xf32>
    %22 = arith.addf %21, %20 : vector<512x16xf32>
    %23 = tpu.reciprocal %22 {approx = true} : vector<512x16xf32> -> vector<512x16xf32>
    %24 = arith.mulf %17, %23 : vector<512x16xf32>
    %c0_17 = arith.constant 0 : index
    %c0_18 = arith.constant 0 : index
    %25 = vector.load %arg8[%c0_17, %c0_18] : memref<512x16xf32, #tpu.memory_space<vmem>>, vector<512x16xf32>
    tpu.vector_store %arg8[%c0_17, %c0_18], %24 {strides = array<i32>} : memref<512x16xf32, #tpu.memory_space<vmem>>, vector<512x16xf32>,
    return
  }
  func.func @transform_0(%arg0: i32) -> (i32, i32) {
    %c0_i32 = arith.constant 0 : i32
    %c0_i32_0 = arith.constant 0 : i32
    return %arg0, %c0_i32 : i32, i32
  }
  func.func @transform_1(%arg0: i32) -> (i32, i32) {
    %c0_i32 = arith.constant 0 : i32
    %c0_i32_0 = arith.constant 0 : i32
    return %arg0, %c0_i32 : i32, i32
  }
  func.func @transform_2(%arg0: i32) -> (i32, i32) {
    %c0_i32 = arith.constant 0 : i32
    %c0_i32_0 = arith.constant 0 : i32
    return %arg0, %c0_i32 : i32, i32
  }
  func.func @transform_3(%arg0: i32) -> (i32, i32) {
    %c0_i32 = arith.constant 0 : i32
    %c0_i32_0 = arith.constant 0 : i32
    %c0_i32_1 = arith.constant 0 : i32
    return %c0_i32, %c0_i32_0 : i32, i32
  }
  func.func @transform_4(%arg0: i32) -> (i32, i32) {
    %c0_i32 = arith.constant 0 : i32
    %c0_i32_0 = arith.constant 0 : i32
    %c0_i32_1 = arith.constant 0 : i32
    return %c0_i32, %c0_i32_0 : i32, i32
  }
  func.func @transform_5(%arg0: i32) -> (i32, i32) {
    %c0_i32 = arith.constant 0 : i32
    %c0_i32_0 = arith.constant 0 : i32
    %c0_i32_1 = arith.constant 0 : i32
    return %c0_i32, %c0_i32_0 : i32, i32
  }
  func.func @transform_6(%arg0: i32) -> (i32, i32) {
    %c0_i32 = arith.constant 0 : i32
    %c0_i32_0 = arith.constant 0 : i32
    %c0_i32_1 = arith.constant 0 : i32
    return %c0_i32, %c0_i32_0 : i32, i32
  }
  func.func @transform_7(%arg0: i32) -> (i32, i32) {
    %c0_i32 = arith.constant 0 : i32
    %c0_i32_0 = arith.constant 0 : i32
    return %arg0, %c0_i32 : i32, i32
  }
}

</mosaic_0001>

<llo_original>
// kernel: c2f_cot_attention_forward.11
$region0: #{c2f_cot_attention_forward.11}
  #allocation0 [shape = 'u32[]', space=smem, size = 0x4, offset = 0x4, fixed_abs, tag = 'smem constant byte address 0x4 - core index']
  #allocation1 [shape = 'u32[72,128]{1,0:T(1,128)}', space=vmem, size = 0x9000, scoped, tag = 'internal scratch']
  %s0 = inlined_call_operand.vmem [shape: bf16[2,16,16,8], index: 0, kind: input, shape index: {}, may-alias: {0,1,2}]
  %s1 = inlined_call_operand.vmem [shape: bf16[2,16,16,8], index: 1, kind: input, shape index: {}, may-alias: {0,1,2}]
  %s2 = inlined_call_operand.vmem [shape: bf16[2,16,16,8], index: 2, kind: input, shape index: {}, may-alias: {0,1,2}]
  %s3 = inlined_call_operand.vmem [shape: bf16[72,8], index: 3, kind: input, shape index: {}]
  %s4 = inlined_call_operand.vmem [shape: f32[2,8], index: 4, kind: input, shape index: {}]
  %s5 = inlined_call_operand.vmem [shape: bf16[2,256,8], index: 5, kind: output, shape index: {}]
  %s6 = sld [smem:[#allocation0]]
  $region53: #{c2f_cot_attention_forward.11} parent=0
    _
  %s8 = ssub.s32 1, %s6
  %s9 = scalar_select 0, %s8, %s6
  loop: start=0, step=1, limit=6
  $region2: #{c2f_cot_attention_forward.11} parent=0 // loop_pre_header
    _
  $region3: #{c2f_cot_attention_forward.11} parent=0 // loop_header
    %s11 = sphi 0, %s15
    %p12 = scmp.ge.s32.totalorder %s11, 6
    %s18 = sphi 0, %s30
    %s19 = sphi 0, %s26
    %s20 = sphi 0, %s18
    %s21 = sphi 0, %s19
    %s22 = sphi 0, %s20
    %s23 = sphi 0, %s21
    %s35 = sphi 0, %s37
    %s38 = sphi 0, %s35
    %s39 = sphi 0, %s38
    %s55 = sphi 0, %s39
    %s71 = sphi 0, %s73
    %s74 = sphi 0, %s71
    %s75 = sphi 0, %s74
    %s91 = sphi 0, %s75
    %s107 = sphi 0, %s109
    %s110 = sphi 0, %s107
    %s111 = sphi 0, %s110
    %s127 = sphi 0, %s111
    %s131 = sphi 0, %s131
    %s133 = sphi 0, %s131
    %s134 = sphi 0, %s133
    %s148 = sphi 0, %s134
    %s152 = sphi 0, %s152
    %s154 = sphi 0, %s152
    %s155 = sphi 0, %s154
    %s169 = sphi 0, %s155
    %s177 = sphi 0, %s179
    %s180 = sphi 0, %s177
    %s181 = sphi 0, %s180
    %s197 = sphi 0, %s181
  $region4: #{c2f_cot_attention_forward.11} parent=0 // loop_header_branch
    %14 = sbr.rel (%p12) target = $region8
  $region5: #{c2f_cot_attention_forward.11} parent=0 // loop_body
    %s16 = ssub.s32 %s11, 1
    %s17 = ssub.s32 %s11, 2
    %s24 = sadd.s32 1, %s19
    %p25 = scmp.ge.s32.totalorder %s24, 2
    %s26 = scalar_select %p25, 0, %s24
    %s27 = sadd.s32 1, %s18
    %s28 = scalar_select %p25, %s27, %s18
    %p29 = scmp.ge.s32.totalorder %s28, 2
    %s30 = scalar_select %p29, 0, %s28
    %s31 = ssub.s32 %s18, %s30
    %s32 = ssub.s32 %s19, %s26
    %s33 = sor.u32 %s31, %s32
    %p34 = scmp.eq.s32.totalorder %s33, 0
    %s36 = sadd.s32 %s35, 1
    %s37 = scalar_select %p34, %s35, %s36
    %p40 = pneg %p34
    %p41 = scmp.eq.s32.totalorder %s11, 3
    %p42 = por %p40, %p41
    %p43 = scmp.ne.s32.totalorder %s35, %s38
    %p44 = scmp.eq.s32.totalorder %s11, 0
    %p45 = por %p43, %p44
    %p46 = scmp.ne.s32.totalorder %s35, %s38
    %p47 = scmp.eq.s32.totalorder %s16, 3
    %p48 = por %p46, %p47
    %p49 = scmp.ne.s32.totalorder %s38, %s39
    %p50 = scmp.eq.s32.totalorder %s16, 0
    %p51 = por %p49, %p50
    %p52 = scmp.ne.s32.totalorder %s38, %s39
    %p53 = scmp.eq.s32.totalorder %s17, 3
    %p54 = por %p52, %p53
    %p56 = scmp.ne.s32.totalorder %s39, %s55
    %p57 = scmp.eq.s32.totalorder %s17, 0
    %p58 = por %p56, %p57
    %s59 = smul.u32 %s19, 8
    %s60 = ssub.s32 %s59, 1
    %p61 = scmp.gt.s32.totalorder %s60, 0
    %s62 = scalar_select %p61, %s60, 0
    %s63 = smul.u32 %s26, 8
    %s64 = ssub.s32 %s63, 1
    %p65 = scmp.gt.s32.totalorder %s64, 0
    %s66 = scalar_select %p65, %s64, 0
    %s67 = ssub.s32 %s18, %s30
    %s68 = ssub.s32 %s62, %s66
    %s69 = sor.u32 %s67, %s68
    %p70 = scmp.eq.s32.totalorder %s69, 0
    %s72 = sadd.s32 %s71, 1
    %s73 = scalar_select %p70, %s71, %s72
    %p76 = pneg %p70
    %p77 = scmp.eq.s32.totalorder %s11, 3
    %p78 = por %p76, %p77
    %p79 = scmp.ne.s32.totalorder %s71, %s74
    %p80 = scmp.eq.s32.totalorder %s11, 0
    %p81 = por %p79, %p80
    %p82 = scmp.ne.s32.totalorder %s71, %s74
    %p83 = scmp.eq.s32.totalorder %s16, 3
    %p84 = por %p82, %p83
    %p85 = scmp.ne.s32.totalorder %s74, %s75
    %p86 = scmp.eq.s32.totalorder %s16, 0
    %p87 = por %p85, %p86
    %p88 = scmp.ne.s32.totalorder %s74, %s75
    %p89 = scmp.eq.s32.totalorder %s17, 3
    %p90 = por %p88, %p89
    %p92 = scmp.ne.s32.totalorder %s75, %s91
    %p93 = scmp.eq.s32.totalorder %s17, 0
    %p94 = por %p92, %p93
    %s95 = sadd.s32 %s19, 1
    %s96 = smul.u32 %s95, 8
    %p97 = scmp.lt.s32.totalorder %s96, 15
    %s98 = scalar_select %p97, %s96, 15
    %s99 = sadd.s32 %s26, 1
    %s100 = smul.u32 %s99, 8
    %p101 = scmp.lt.s32.totalorder %s100, 15
    %s102 = scalar_select %p101, %s100, 15
    %s103 = ssub.s32 %s18, %s30
    %s104 = ssub.s32 %s98, %s102
    %s105 = sor.u32 %s103, %s104
    %p106 = scmp.eq.s32.totalorder %s105, 0
    %s108 = sadd.s32 %s107, 1
    %s109 = scalar_select %p106, %s107, %s108
    %p112 = pneg %p106
    %p113 = scmp.eq.s32.totalorder %s11, 3
    %p114 = por %p112, %p113
    %p115 = scmp.ne.s32.totalorder %s107, %s110
    %p116 = scmp.eq.s32.totalorder %s11, 0
    %p117 = por %p115, %p116
    %p118 = scmp.ne.s32.totalorder %s107, %s110
    %p119 = scmp.eq.s32.totalorder %s16, 3
    %p120 = por %p118, %p119
    %p121 = scmp.ne.s32.totalorder %s110, %s111
    %p122 = scmp.eq.s32.totalorder %s16, 0
    %p123 = por %p121, %p122
    %p124 = scmp.ne.s32.totalorder %s110, %s111
    %p125 = scmp.eq.s32.totalorder %s17, 3
    %p126 = por %p124, %p125
    %p128 = scmp.ne.s32.totalorder %s111, %s127
    %p129 = scmp.eq.s32.totalorder %s17, 0
    %p130 = por %p128, %p129
    %s132 = sadd.s32 %s131, 1
    %p135 = scmp.eq.s32.totalorder %s11, 3
    %p136 = scmp.ne.s32.totalorder %s131, %s133
    %p137 = scmp.eq.s32.totalorder %s11, 0
    %p138 = por %p136, %p137
    %p139 = scmp.ne.s32.totalorder %s131, %s133
    %p140 = scmp.eq.s32.totalorder %s16, 3
    %p141 = por %p139, %p140
    %p142 = scmp.ne.s32.totalorder %s133, %s134
    %p143 = scmp.eq.s32.totalorder %s16, 0
    %p144 = por %p142, %p143
    %p145 = scmp.ne.s32.totalorder %s133, %s134
    %p146 = scmp.eq.s32.totalorder %s17, 3
    %p147 = por %p145, %p146
    %p149 = scmp.ne.s32.totalorder %s134, %s148
    %p150 = scmp.eq.s32.totalorder %s17, 0
    %p151 = por %p149, %p150
    %s153 = sadd.s32 %s152, 1
    %p156 = scmp.eq.s32.totalorder %s11, 3
    %p157 = scmp.ne.s32.totalorder %s152, %s154
    %p158 = scmp.eq.s32.totalorder %s11, 0
    %p159 = por %p157, %p158
    %p160 = scmp.ne.s32.totalorder %s152, %s154
    %p161 = scmp.eq.s32.totalorder %s16, 3
    %p162 = por %p160, %p161
    %p163 = scmp.ne.s32.totalorder %s154, %s155
    %p164 = scmp.eq.s32.totalorder %s16, 0
    %p165 = por %p163, %p164
    %p166 = scmp.ne.s32.totalorder %s154, %s155
    %p167 = scmp.eq.s32.totalorder %s17, 3
    %p168 = por %p166, %p167
    %p170 = scmp.ne.s32.totalorder %s155, %s169
    %p171 = scmp.eq.s32.totalorder %s17, 0
    %p172 = por %p170, %p171
    %s173 = ssub.s32 %s18, %s30
    %s174 = ssub.s32 %s19, %s26
    %s175 = sor.u32 %s173, %s174
    %p176 = scmp.eq.s32.totalorder %s175, 0
    %s178 = sadd.s32 %s177, 1
    %s179 = scalar_select %p176, %s177, %s178
    %p182 = pneg %p176
    %p183 = scmp.eq.s32.totalorder %s11, 3
    %p184 = por %p182, %p183
    %p185 = scmp.ne.s32.totalorder %s177, %s180
    %p186 = scmp.eq.s32.totalorder %s11, 0
    %p187 = por %p185, %p186
    %p188 = scmp.ne.s32.totalorder %s177, %s180
    %p189 = scmp.eq.s32.totalorder %s16, 3
    %p190 = por %p188, %p189
    %p191 = scmp.ne.s32.totalorder %s180, %s181
    %p192 = scmp.eq.s32.totalorder %s16, 0
    %p193 = por %p191, %p192
    %p194 = scmp.ne.s32.totalorder %s180, %s181
    %p195 = scmp.eq.s32.totalorder %s17, 3
    %p196 = por %p194, %p195
    %p198 = scmp.ne.s32.totalorder %s181, %s197
    %p199 = scmp.eq.s32.totalorder %s17, 0
    %p200 = por %p198, %p199
    %p201 = scmp.le.s32.totalorder 1, %s11
    %p202 = scmp.lt.s32.totalorder %s11, 5
    %p203 = pnand %p201, %p202
    %p204 = pneg %p203
    // Predicated region
    $region9: #{c2f_cot_attention_forward.11} parent=5 // pred_check
      _
    $region10: #{c2f_cot_attention_forward.11} parent=5 // pred_check_branch
      %206 = sbr.rel (%p203) target = $region12
    $region11: #{c2f_cot_attention_forward.11} parent=5 // pred_region
      %s207 = ssub.s32 %s11, 1
      // Predicated region
      $region13: #{c2f_cot_attention_forward.11} parent=11 // pred_check
        %p208 = pneg %p144
      $region14: #{c2f_cot_attention_forward.11} parent=11 // pred_check_branch
        %210 = sbr.rel (%p208) target = $region16
      $region15: #{c2f_cot_attention_forward.11} parent=11 // pred_region
        _
      $region16: #{c2f_cot_attention_forward.11} parent=11 // pred_fallthru
        _
      // Predicated region
      $region17: #{c2f_cot_attention_forward.11} parent=11 // pred_check
        %p211 = pneg %p165
      $region18: #{c2f_cot_attention_forward.11} parent=11 // pred_check_branch
        %213 = sbr.rel (%p211) target = $region20
      $region19: #{c2f_cot_attention_forward.11} parent=11 // pred_region
        _
      $region20: #{c2f_cot_attention_forward.11} parent=11 // pred_fallthru
        _
    $region12: #{c2f_cot_attention_forward.11} parent=5 // pred_fallthru
      _
    %p214 = scmp.lt.s32.totalorder %s11, 4
    // Predicated region
    $region21: #{c2f_cot_attention_forward.11} parent=5 // pred_check
      %p215 = pneg %p214
    $region22: #{c2f_cot_attention_forward.11} parent=5 // pred_check_branch
      %217 = sbr.rel (%p215) target = $region24
    $region23: #{c2f_cot_attention_forward.11} parent=5 // pred_region
      // Predicated region
      $region25: #{c2f_cot_attention_forward.11} parent=23 // pred_check
        %p218 = pneg %p45
      $region26: #{c2f_cot_attention_forward.11} parent=23 // pred_check_branch
        %220 = sbr.rel (%p218) target = $region28
      $region27: #{c2f_cot_attention_forward.11} parent=23 // pred_region
        %s221 = smul.u32 8, %s19
        %p222 = scmp.lt.s32.totalorder %s18, 1
        %s223 = scalar_select %p222, %s18, 1
        %p224 = scmp.lt.s32.totalorder %s221, 15
        %s225 = scalar_select %p224, %s221, 15
        %s226 = smul.addr %s225, 2
        %s227 = smul.addr %s223, 32
        %s228 = sadd.s32 %s226, %s227
        %s229 = smul.addr %s228, 4
        %s230 = scalar_lea.vmem %s0, %s229
        %s231 = smul.u32 8, %s19
      $region28: #{c2f_cot_attention_forward.11} parent=23 // pred_fallthru
        _
      // Predicated region
      $region29: #{c2f_cot_attention_forward.11} parent=23 // pred_check
        %p232 = pneg %p81
      $region30: #{c2f_cot_attention_forward.11} parent=23 // pred_check_branch
        %234 = sbr.rel (%p232) target = $region32
      $region31: #{c2f_cot_attention_forward.11} parent=23 // pred_region
        %s235 = smul.u32 %s19, 8
        %s236 = ssub.s32 %s235, 1
        %p237 = scmp.gt.s32.totalorder %s236, 0
        %s238 = scalar_select %p237, %s236, 0
        %p239 = scmp.lt.s32.totalorder %s18, 1
        %s240 = scalar_select %p239, %s18, 1
        %p241 = scmp.lt.s32.totalorder %s238, 15
        %s242 = scalar_select %p241, %s238, 15
        %s243 = smul.addr %s242, 2
        %s244 = smul.addr %s240, 32
        %s245 = sadd.s32 %s243, %s244
        %s246 = smul.addr %s245, 4
        %s247 = scalar_lea.vmem %s1, %s246
        %s248 = smul.u32 %s19, 8
        %s249 = ssub.s32 %s248, 1
        %p250 = scmp.gt.s32.totalorder %s249, 0
        %s251 = scalar_select %p250, %s249, 0
      $region32: #{c2f_cot_attention_forward.11} parent=23 // pred_fallthru
        _
      // Predicated region
      $region33: #{c2f_cot_attention_forward.11} parent=23 // pred_check
        %p252 = pneg %p117
      $region34: #{c2f_cot_attention_forward.11} parent=23 // pred_check_branch
        %254 = sbr.rel (%p252) target = $region36
      $region35: #{c2f_cot_attention_forward.11} parent=23 // pred_region
        %s255 = sadd.s32 %s19, 1
        %s256 = smul.u32 %s255, 8
        %p257 = scmp.lt.s32.totalorder %s256, 15
        %s258 = scalar_select %p257, %s256, 15
        %p259 = scmp.lt.s32.totalorder %s18, 1
        %s260 = scalar_select %p259, %s18, 1
        %p261 = scmp.lt.s32.totalorder %s258, 15
        %s262 = scalar_select %p261, %s258, 15
        %s263 = smul.addr %s262, 2
        %s264 = smul.addr %s260, 32
        %s265 = sadd.s32 %s263, %s264
        %s266 = smul.addr %s265, 4
        %s267 = scalar_lea.vmem %s2, %s266
        %s268 = sadd.s32 %s19, 1
        %s269 = smul.u32 %s268, 8
        %p270 = scmp.lt.s32.totalorder %s269, 15
        %s271 = scalar_select %p270, %s269, 15
      $region36: #{c2f_cot_attention_forward.11} parent=23 // pred_fallthru
        _
    $region24: #{c2f_cot_attention_forward.11} parent=5 // pred_fallthru
      _
    %p272 = scmp.le.s32.totalorder 1, %s11
    %p273 = scmp.lt.s32.totalorder %s11, 5
    %p274 = pnand %p272, %p273
    %p275 = pneg %p274
    // Predicated region
    $region37: #{c2f_cot_attention_forward.11} parent=5 // pred_check
      _
    $region38: #{c2f_cot_attention_forward.11} parent=5 // pred_check_branch
      %277 = sbr.rel (%p274) target = $region40
    $region39: #{c2f_cot_attention_forward.11} parent=5 // pred_region
      %s278 = ssub.s32 %s11, 1
      %s279 = smul.u32 8, %s21
      %p280 = scmp.lt.s32.totalorder %s20, 1
      %s281 = scalar_select %p280, %s20, 1
      %p282 = scmp.lt.s32.totalorder %s279, 15
      %s283 = scalar_select %p282, %s279, 15
      %s284 = smul.addr %s283, 2
      %s285 = smul.addr %s281, 32
      %s286 = sadd.s32 %s284, %s285
      %s287 = smul.addr %s286, 4
      %s288 = scalar_lea.vmem %s0, %s287
      %p289 = pneg %p51
      %p290 = pneg %p48
      %s291 = smul.u32 %s21, 8
      %s292 = ssub.s32 %s291, 1
      %p293 = scmp.gt.s32.totalorder %s292, 0
      %s294 = scalar_select %p293, %s292, 0
      %p295 = scmp.lt.s32.totalorder %s20, 1
      %s296 = scalar_select %p295, %s20, 1
      %p297 = scmp.lt.s32.totalorder %s294, 15
      %s298 = scalar_select %p297, %s294, 15
      %s299 = smul.addr %s298, 2
      %s300 = smul.addr %s296, 32
      %s301 = sadd.s32 %s299, %s300
      %s302 = smul.addr %s301, 4
      %s303 = scalar_lea.vmem %s1, %s302
      %p304 = pneg %p87
      %p305 = pneg %p84
      %s306 = sadd.s32 %s21, 1
      %s307 = smul.u32 %s306, 8
      %p308 = scmp.lt.s32.totalorder %s307, 15
      %s309 = scalar_select %p308, %s307, 15
      %p310 = scmp.lt.s32.totalorder %s20, 1
      %s311 = scalar_select %p310, %s20, 1
      %p312 = scmp.lt.s32.totalorder %s309, 15
      %s313 = scalar_select %p312, %s309, 15
      %s314 = smul.addr %s313, 2
      %s315 = smul.addr %s311, 32
      %s316 = sadd.s32 %s314, %s315
      %s317 = smul.addr %s316, 4
      %s318 = scalar_lea.vmem %s2, %s317
      %p319 = pneg %p123
      %p320 = pneg %p120
      %p321 = pneg %p144
      %p322 = pneg %p141
      %p323 = pneg %p165
      %p324 = pneg %p162
      %p325 = pneg %p193
      %p326 = pneg %p190
      %s327 = smul.u32 16, %s21
      %p328 = scmp.lt.s32.totalorder %s20, 1
      %s329 = scalar_select %p328, %s20, 1
      %p330 = scmp.lt.s32.totalorder %s327, 31
      %s331 = scalar_select %p330, %s327, 31
      %s332 = smul.addr %s329, 32
      %s333 = sadd.s32 %s331, %s332
      %s334 = smul.addr %s333, 4
      %s335 = scalar_lea.vmem %s5, %s334
      %s336 = smul.u32 8, %s21
      %p337 = scmp.lt.s32.totalorder %s20, 1
      %s338 = scalar_select %p337, %s20, 1
      %p339 = scmp.lt.s32.totalorder %s336, 15
      %s340 = scalar_select %p339, %s336, 15
      %s341 = smul.addr %s340, 2
      %s342 = smul.addr %s338, 32
      %s343 = sadd.s32 %s341, %s342
      %s344 = smul.addr %s343, 4
      %s345 = scalar_lea.vmem %s0, %s344
      %s346 = smul.u32 8, %s21
      %s347 = smul.u32 %s21, 8
      %s348 = ssub.s32 %s347, 1
      %p349 = scmp.gt.s32.totalorder %s348, 0
      %s350 = scalar_select %p349, %s348, 0
      %p351 = scmp.lt.s32.totalorder %s20, 1
      %s352 = scalar_select %p351, %s20, 1
      %p353 = scmp.lt.s32.totalorder %s350, 15
      %s354 = scalar_select %p353, %s350, 15
      %s355 = smul.addr %s354, 2
      %s356 = smul.addr %s352, 32
      %s357 = sadd.s32 %s355, %s356
      %s358 = smul.addr %s357, 4
      %s359 = scalar_lea.vmem %s1, %s358
      %s360 = smul.u32 %s21, 8
      %s361 = ssub.s32 %s360, 1
      %p362 = scmp.gt.s32.totalorder %s361, 0
      %s363 = scalar_select %p362, %s361, 0
      %s364 = sadd.s32 %s21, 1
      %s365 = smul.u32 %s364, 8
      %p366 = scmp.lt.s32.totalorder %s365, 15
      %s367 = scalar_select %p366, %s365, 15
      %p368 = scmp.lt.s32.totalorder %s20, 1
      %s369 = scalar_select %p368, %s20, 1
      %p370 = scmp.lt.s32.totalorder %s367, 15
      %s371 = scalar_select %p370, %s367, 15
      %s372 = smul.addr %s371, 2
      %s373 = smul.addr %s369, 32
      %s374 = sadd.s32 %s372, %s373
      %s375 = smul.addr %s374, 4
      %s376 = scalar_lea.vmem %s2, %s375
      %s377 = sadd.s32 %s21, 1
      %s378 = smul.u32 %s377, 8
      %p379 = scmp.lt.s32.totalorder %s378, 15
      %s380 = scalar_select %p379, %s378, 15
      %s381 = smul.u32 16, %s21
      %p382 = scmp.lt.s32.totalorder %s20, 1
      %s383 = scalar_select %p382, %s20, 1
      %p384 = scmp.lt.s32.totalorder %s381, 31
      %s385 = scalar_select %p384, %s381, 31
      %s386 = smul.addr %s383, 32
      %s387 = sadd.s32 %s385, %s386
      %s388 = smul.addr %s387, 4
      %s389 = scalar_lea.vmem %s5, %s388
      %s390 = smul.u32 16, %s21
      %v392 = vld [vmem:[%s345] sm:$0xf]
      %v393 = vld [vmem:[%s345 + $0x4] sm:$0xf]
      %v394 = vld [vmem:[%s345 + $0x8] sm:$0xf]
      %v395 = vld [vmem:[%s345 + $0xc] sm:$0xf]
      %v396 = vld [vmem:[%s345 + $0x10] sm:$0xf]
      %v397 = vld [vmem:[%s345 + $0x14] sm:$0xf]
      %v398 = vld [vmem:[%s345 + $0x18] sm:$0xf]
      %v399 = vld [vmem:[%s345 + $0x1c] sm:$0xf]
      %v400 = vld [vmem:[%s345 + $0x20] sm:$0xf]
      %v401 = vld [vmem:[%s345 + $0x24] sm:$0xf]
      %v402 = vld [vmem:[%s345 + $0x28] sm:$0xf]
      %v403 = vld [vmem:[%s345 + $0x2c] sm:$0xf]
      %v404 = vld [vmem:[%s345 + $0x30] sm:$0xf]
      %v405 = vld [vmem:[%s345 + $0x34] sm:$0xf]
      %v406 = vld [vmem:[%s345 + $0x38] sm:$0xf]
      %v407 = vld [vmem:[%s345 + $0x3c] sm:$0xf]
      %v408 = vld [vmem:[%s359] sm:$0xf]
      %v409 = vld [vmem:[%s359 + $0x4] sm:$0xf]
      %p410 = scmp.gt.s32.totalorder %s21, 0
      %s411 = scalar_select %p410, 1, 0
      %s412 = scvt.s32.f32 %s411
      %p414 = scmp.ne.f32.partialorder %s412, %s412
      %s415 = sshrl.u32 %s412, 16
      %s416 = sand.u32 %s415, 1
      %s417 = sadd.s32 32767, %s416
      %s418 = sadd.s32 %s412, %s417
      %s419 = sand.u32 %s418, 4294901760
      %s420 = scalar_select %p414, 2143289344, %s419
      %s422 = sshrl.u32 %s420, 16
      %s423 = sshll.u32 %s422, 16
      %s424 = sor.u32 %s422, %s423
      %v425 = vstv %s424
      %v427 = vunpack.c.l.bf16 %v408
      %v428 = vunpack.c.l.bf16 %v409
      %v429 = vunpack.c.l.bf16 %v425
      %v430 = vmul.f32 %v427, %v429
      %v431 = vmul.f32 %v428, %v429
      %v432 = vpack.c.bf16 %v430, %v430
      %v433 = vpack.c.bf16 %v431, %v431
      %v434 = vld [vmem:[%s376] sm:$0xf]
      %v435 = vld [vmem:[%s376 + $0x4] sm:$0xf]
      %p436 = scmp.lt.s32.totalorder %s21, 1
      %s437 = scalar_select %p436, 1, 0
      %s438 = scvt.s32.f32 %s437
      %p440 = scmp.ne.f32.partialorder %s438, %s438
      %s441 = sshrl.u32 %s438, 16
      %s442 = sand.u32 %s441, 1
      %s443 = sadd.s32 32767, %s442
      %s444 = sadd.s32 %s438, %s443
      %s445 = sand.u32 %s444, 4294901760
      %s446 = scalar_select %p440, 2143289344, %s445
      %s448 = sshrl.u32 %s446, 16
      %s449 = sshll.u32 %s448, 16
      %s450 = sor.u32 %s448, %s449
      %v451 = vstv %s450
      %v453 = vunpack.c.l.bf16 %v434
      %v454 = vunpack.c.l.bf16 %v435
      %v455 = vunpack.c.l.bf16 %v451
      %v456 = vmul.f32 %v453, %v455
      %v457 = vmul.f32 %v454, %v455
      %v458 = vpack.c.bf16 %v456, %v456
      %v459 = vpack.c.bf16 %v457, %v457
      %v480 = vunpack.c.l.b16 %v432
      %v481 = vunpack.c.l.b16 %v433
      %v482 = vunpack.c.l.b16 %v392
      %v483 = vunpack.c.l.b16 %v393
      %v484 = vunpack.c.l.b16 %v394
      %v485 = vunpack.c.l.b16 %v395
      %v486 = vunpack.c.l.b16 %v396
      %v487 = vunpack.c.l.b16 %v397
      %v488 = vunpack.c.l.b16 %v398
      %v489 = vunpack.c.l.b16 %v399
      %v490 = vunpack.c.l.b16 %v400
      %v491 = vunpack.c.l.b16 %v401
      %v492 = vunpack.c.l.b16 %v402
      %v493 = vunpack.c.l.b16 %v403
      %v494 = vunpack.c.l.b16 %v404
      %v495 = vunpack.c.l.b16 %v405
      %v496 = vunpack.c.l.b16 %v406
      %v497 = vunpack.c.l.b16 %v407
      %v498 = vunpack.c.l.b16 %v458
      %v499 = vunpack.c.l.b16 %v459
      %v500 = vpack.c.b16 %v481, %v480
      %v501 = vpack.c.b16 %v483, %v482
      %v502 = vpack.c.b16 %v485, %v484
      %v503 = vpack.c.b16 %v487, %v486
      %v504 = vpack.c.b16 %v489, %v488
      %v505 = vpack.c.b16 %v491, %v490
      %v506 = vpack.c.b16 %v493, %v492
      %v507 = vpack.c.b16 %v495, %v494
      %v508 = vpack.c.b16 %v497, %v496
      %v509 = vpack.c.b16 %v499, %v498
      %v511 = vshrl.u32 %v500, 16
      %v513 = vrot.slane %v511, 7
      %v514 = vshll.u32 %v500, 16
      %v516 = vor.u32 %v513, %v514
      %v518 = vshrl.u32 %v501, 16
      %v520 = vrot.slane %v518, 7
      %v521 = vshll.u32 %v501, 16
      %v523 = vor.u32 %v520, %v521
      %v525 = vshrl.u32 %v502, 16
      %v527 = vrot.slane %v525, 7
      %v528 = vshll.u32 %v502, 16
      %v530 = vor.u32 %v527, %v528
      %v532 = vshrl.u32 %v503, 16
      %v534 = vrot.slane %v532, 7
      %v535 = vshll.u32 %v503, 16
      %v537 = vor.u32 %v534, %v535
      %v539 = vshrl.u32 %v504, 16
      %v541 = vrot.slane %v539, 7
      %v542 = vshll.u32 %v504, 16
      %v544 = vor.u32 %v541, %v542
      %v546 = vshrl.u32 %v505, 16
      %v548 = vrot.slane %v546, 7
      %v549 = vshll.u32 %v505, 16
      %v551 = vor.u32 %v548, %v549
      %v553 = vshrl.u32 %v506, 16
      %v555 = vrot.slane %v553, 7
      %v556 = vshll.u32 %v506, 16
      %v558 = vor.u32 %v555, %v556
      %v560 = vshrl.u32 %v507, 16
      %v562 = vrot.slane %v560, 7
      %v563 = vshll.u32 %v507, 16
      %v565 = vor.u32 %v562, %v563
      %v567 = vshrl.u32 %v508, 16
      %v569 = vrot.slane %v567, 7
      %v570 = vshll.u32 %v508, 16
      %v572 = vor.u32 %v569, %v570
      %v574 = vshrl.u32 %v509, 16
      %v576 = vrot.slane %v574, 7
      %v577 = vshll.u32 %v509, 16
      %v579 = vor.u32 %v576, %v577
      %vm600 = vcmask 1040384
      %vm601 = vsmask.f32 256
      %vm602 = vmand %vm600, %vm601
      %v603 = vsel %vm602, 0, %v516
      %v604 = vsel %vm602, 0, %v523
      %v605 = vsel %vm602, 0, %v530
      %v606 = vsel %vm602, 0, %v537
      %v607 = vsel %vm602, 0, %v544
      %v608 = vsel %vm602, 0, %v551
      %v609 = vsel %vm602, 0, %v558
      %v610 = vsel %vm602, 0, %v565
      %v611 = vsel %vm602, 0, %v572
      %v612 = vsel %vm602, 0, %v579
      %v613 = vsel %vm602, %v513, 0
      %v614 = vsel %vm602, %v520, 0
      %v615 = vsel %vm602, %v527, 0
      %v616 = vsel %vm602, %v534, 0
      %v617 = vsel %vm602, %v541, 0
      %v618 = vsel %vm602, %v548, 0
      %v619 = vsel %vm602, %v555, 0
      %v620 = vsel %vm602, %v562, 0
      %v621 = vsel %vm602, %v569, 0
      %v622 = vsel %vm602, %v576, 0
      %vm623 = vsmask.f32 7424
      %v625 = vshrl.u32 %v603, 16
      %v627 = vshll.u32 %v603, 16
      %v629 = vrot.slane %v627, 1
      %v630 = vor.u32 %v625, %v629
      %v632 = vshll.u32 %v613, 16
      %v634 = vrot.slane %v632, 1
      %v635 = vsel %vm623, %v630, %v634
      %v637 = vshrl.u32 %v604, 16
      %v639 = vshll.u32 %v604, 16
      %v641 = vrot.slane %v639, 1
      %v642 = vor.u32 %v637, %v641
      %v644 = vshll.u32 %v614, 16
      %v646 = vrot.slane %v644, 1
      %v647 = vsel %vm623, %v642, %v646
      %v649 = vshrl.u32 %v605, 16
      %v651 = vshll.u32 %v605, 16
      %v653 = vrot.slane %v651, 1
      %v654 = vor.u32 %v649, %v653
      %v656 = vshll.u32 %v615, 16
      %v658 = vrot.slane %v656, 1
      %v659 = vsel %vm623, %v654, %v658
      %v661 = vshrl.u32 %v606, 16
      %v663 = vshll.u32 %v606, 16
      %v665 = vrot.slane %v663, 1
      %v666 = vor.u32 %v661, %v665
      %v668 = vshll.u32 %v616, 16
      %v670 = vrot.slane %v668, 1
      %v671 = vsel %vm623, %v666, %v670
      %v673 = vshrl.u32 %v607, 16
      %v675 = vshll.u32 %v607, 16
      %v677 = vrot.slane %v675, 1
      %v678 = vor.u32 %v673, %v677
      %v680 = vshll.u32 %v617, 16
      %v682 = vrot.slane %v680, 1
      %v683 = vsel %vm623, %v678, %v682
      %v685 = vshrl.u32 %v608, 16
      %v687 = vshll.u32 %v608, 16
      %v689 = vrot.slane %v687, 1
      %v690 = vor.u32 %v685, %v689
      %v692 = vshll.u32 %v618, 16
      %v694 = vrot.slane %v692, 1
      %v695 = vsel %vm623, %v690, %v694
      %v697 = vshrl.u32 %v609, 16
      %v699 = vshll.u32 %v609, 16
      %v701 = vrot.slane %v699, 1
      %v702 = vor.u32 %v697, %v701
      %v704 = vshll.u32 %v619, 16
      %v706 = vrot.slane %v704, 1
      %v707 = vsel %vm623, %v702, %v706
      %v709 = vshrl.u32 %v610, 16
      %v711 = vshll.u32 %v610, 16
      %v713 = vrot.slane %v711, 1
      %v714 = vor.u32 %v709, %v713
      %v716 = vshll.u32 %v620, 16
      %v718 = vrot.slane %v716, 1
      %v719 = vsel %vm623, %v714, %v718
      %vm736 = vcmask 1046528
      %v737 = vrot.slane %v603, 1
      %v738 = vrot.slane %v613, 1
      %v739 = vsel %vm736, %v737, %v738
      %v740 = vrot.slane %v604, 1
      %v741 = vrot.slane %v614, 1
      %v742 = vsel %vm736, %v740, %v741
      %v743 = vrot.slane %v605, 1
      %v744 = vrot.slane %v615, 1
      %v745 = vsel %vm736, %v743, %v744
      %v746 = vrot.slane %v606, 1
      %v747 = vrot.slane %v616, 1
      %v748 = vsel %vm736, %v746, %v747
      %v749 = vrot.slane %v607, 1
      %v750 = vrot.slane %v617, 1
      %v751 = vsel %vm736, %v749, %v750
      %v752 = vrot.slane %v608, 1
      %v753 = vrot.slane %v618, 1
      %v754 = vsel %vm736, %v752, %v753
      %v755 = vrot.slane %v609, 1
      %v756 = vrot.slane %v619, 1
      %v757 = vsel %vm736, %v755, %v756
      %v758 = vrot.slane %v610, 1
      %v759 = vrot.slane %v620, 1
      %v760 = vsel %vm736, %v758, %v759
      %v762 = vshrl.u32 %v611, 16
      %v764 = vshll.u32 %v611, 16
      %v766 = vrot.slane %v764, 1
      %v767 = vor.u32 %v762, %v766
      %v769 = vshll.u32 %v621, 16
      %v771 = vrot.slane %v769, 1
      %v772 = vsel %vm623, %v767, %v771
      %v775 = vrot.slane %v611, 1
      %v776 = vrot.slane %v621, 1
      %v777 = vsel %vm736, %v775, %v776
      %v779 = vshrl.u32 %v612, 16
      %v781 = vshll.u32 %v612, 16
      %v783 = vrot.slane %v781, 1
      %v784 = vor.u32 %v779, %v783
      %v786 = vshll.u32 %v622, 16
      %v788 = vrot.slane %v786, 1
      %v789 = vsel %vm623, %v784, %v788
      %v792 = vrot.slane %v612, 1
      %v793 = vrot.slane %v622, 1
      %v794 = vsel %vm736, %v792, %v793
      %795 = vrot.lane.b32.xlu0 %v635, 8
      %v796 = vpop.permute.xlu0 %795
      %797 = vrot.lane.b32.xlu0 %v647, 8
      %v798 = vpop.permute.xlu0 %797
      %799 = vrot.lane.b32.xlu0 %v659, 8
      %v800 = vpop.permute.xlu0 %799
      %801 = vrot.lane.b32.xlu0 %v671, 8
      %v802 = vpop.permute.xlu0 %801
      %803 = vrot.lane.b32.xlu0 %v683, 8
      %v804 = vpop.permute.xlu0 %803
      %805 = vrot.lane.b32.xlu0 %v695, 8
      %v806 = vpop.permute.xlu0 %805
      %807 = vrot.lane.b32.xlu0 %v707, 8
      %v808 = vpop.permute.xlu0 %807
      %809 = vrot.lane.b32.xlu0 %v719, 8
      %v810 = vpop.permute.xlu0 %809
      %811 = vrot.lane.b32.xlu0 %v739, 16
      %v812 = vpop.permute.xlu0 %811
      %813 = vrot.lane.b32.xlu0 %v742, 16
      %v814 = vpop.permute.xlu0 %813
      %815 = vrot.lane.b32.xlu0 %v745, 16
      %v816 = vpop.permute.xlu0 %815
      %817 = vrot.lane.b32.xlu0 %v748, 16
      %v818 = vpop.permute.xlu0 %817
      %819 = vrot.lane.b32.xlu0 %v751, 16
      %v820 = vpop.permute.xlu0 %819
      %821 = vrot.lane.b32.xlu0 %v754, 16
      %v822 = vpop.permute.xlu0 %821
      %823 = vrot.lane.b32.xlu0 %v757, 16
      %v824 = vpop.permute.xlu0 %823
      %825 = vrot.lane.b32.xlu0 %v760, 16
      %v826 = vpop.permute.xlu0 %825
      %827 = vrot.lane.b32.xlu0 %v604, 24
      %v828 = vpop.permute.xlu0 %827
      %829 = vrot.lane.b32.xlu0 %v605, 24
      %v830 = vpop.permute.xlu0 %829
      %831 = vrot.lane.b32.xlu0 %v606, 24
      %v832 = vpop.permute.xlu0 %831
      %833 = vrot.lane.b32.xlu0 %v607, 24
      %v834 = vpop.permute.xlu0 %833
      %835 = vrot.lane.b32.xlu0 %v608, 24
      %v836 = vpop.permute.xlu0 %835
      %837 = vrot.lane.b32.xlu0 %v609, 24
      %v838 = vpop.permute.xlu0 %837
      %839 = vrot.lane.b32.xlu0 %v610, 24
      %v840 = vpop.permute.xlu0 %839
      %841 = vrot.lane.b32.xlu0 %v611, 24
      %v842 = vpop.permute.xlu0 %841
      %843 = vrot.lane.b32.xlu0 %v647, 32
      %v844 = vpop.permute.xlu0 %843
      %845 = vrot.lane.b32.xlu0 %v659, 32
      %v846 = vpop.permute.xlu0 %845
      %847 = vrot.lane.b32.xlu0 %v671, 32
      %v848 = vpop.permute.xlu0 %847
      %849 = vrot.lane.b32.xlu0 %v683, 32
      %v850 = vpop.permute.xlu0 %849
      %851 = vrot.lane.b32.xlu0 %v695, 32
      %v852 = vpop.permute.xlu0 %851
      %853 = vrot.lane.b32.xlu0 %v707, 32
      %v854 = vpop.permute.xlu0 %853
      %855 = vrot.lane.b32.xlu0 %v719, 32
      %v856 = vpop.permute.xlu0 %855
      %857 = vrot.lane.b32.xlu0 %v772, 32
      %v858 = vpop.permute.xlu0 %857
      %859 = vrot.lane.b32.xlu0 %v742, 40
      %v860 = vpop.permute.xlu0 %859
      %861 = vrot.lane.b32.xlu0 %v745, 40
      %v862 = vpop.permute.xlu0 %861
      %863 = vrot.lane.b32.xlu0 %v748, 40
      %v864 = vpop.permute.xlu0 %863
      %865 = vrot.lane.b32.xlu0 %v751, 40
      %v866 = vpop.permute.xlu0 %865
      %867 = vrot.lane.b32.xlu0 %v754, 40
      %v868 = vpop.permute.xlu0 %867
      %869 = vrot.lane.b32.xlu0 %v757, 40
      %v870 = vpop.permute.xlu0 %869
      %871 = vrot.lane.b32.xlu0 %v760, 40
      %v872 = vpop.permute.xlu0 %871
      %873 = vrot.lane.b32.xlu0 %v777, 40
      %v874 = vpop.permute.xlu0 %873
      %875 = vrot.lane.b32.xlu0 %v605, 48
      %v876 = vpop.permute.xlu0 %875
      %877 = vrot.lane.b32.xlu0 %v606, 48
      %v878 = vpop.permute.xlu0 %877
      %879 = vrot.lane.b32.xlu0 %v607, 48
      %v880 = vpop.permute.xlu0 %879
      %881 = vrot.lane.b32.xlu0 %v608, 48
      %v882 = vpop.permute.xlu0 %881
      %883 = vrot.lane.b32.xlu0 %v609, 48
      %v884 = vpop.permute.xlu0 %883
      %885 = vrot.lane.b32.xlu0 %v610, 48
      %v886 = vpop.permute.xlu0 %885
      %887 = vrot.lane.b32.xlu0 %v611, 48
      %v888 = vpop.permute.xlu0 %887
      %889 = vrot.lane.b32.xlu0 %v612, 48
      %v890 = vpop.permute.xlu0 %889
      %891 = vrot.lane.b32.xlu0 %v659, 56
      %v892 = vpop.permute.xlu0 %891
      %893 = vrot.lane.b32.xlu0 %v671, 56
      %v894 = vpop.permute.xlu0 %893
      %895 = vrot.lane.b32.xlu0 %v683, 56
      %v896 = vpop.permute.xlu0 %895
      %897 = vrot.lane.b32.xlu0 %v695, 56
      %v898 = vpop.permute.xlu0 %897
      %899 = vrot.lane.b32.xlu0 %v707, 56
      %v900 = vpop.permute.xlu0 %899
      %901 = vrot.lane.b32.xlu0 %v719, 56
      %v902 = vpop.permute.xlu0 %901
      %903 = vrot.lane.b32.xlu0 %v772, 56
      %v904 = vpop.permute.xlu0 %903
      %905 = vrot.lane.b32.xlu0 %v789, 56
      %v906 = vpop.permute.xlu0 %905
      %907 = vrot.lane.b32.xlu0 %v745, 64
      %v908 = vpop.permute.xlu0 %907
      %909 = vrot.lane.b32.xlu0 %v748, 64
      %v910 = vpop.permute.xlu0 %909
      %911 = vrot.lane.b32.xlu0 %v751, 64
      %v912 = vpop.permute.xlu0 %911
      %913 = vrot.lane.b32.xlu0 %v754, 64
      %v914 = vpop.permute.xlu0 %913
      %915 = vrot.lane.b32.xlu0 %v757, 64
      %v916 = vpop.permute.xlu0 %915
      %917 = vrot.lane.b32.xlu0 %v760, 64
      %v918 = vpop.permute.xlu0 %917
      %919 = vrot.lane.b32.xlu0 %v777, 64
      %v920 = vpop.permute.xlu0 %919
      %921 = vrot.lane.b32.xlu0 %v794, 64
      %v922 = vpop.permute.xlu0 %921
      %vm923 = vcmask 64512
      %v925 = vsel %vm923, %v603, %v796
      %v927 = vsel %vm923, %v604, %v798
      %v929 = vsel %vm923, %v605, %v800
      %v931 = vsel %vm923, %v606, %v802
      %v933 = vsel %vm923, %v607, %v804
      %v935 = vsel %vm923, %v608, %v806
      %v937 = vsel %vm923, %v609, %v808
      %v939 = vsel %vm923, %v610, %v810
      %vm940 = vcmask 130048
      %v942 = vsel %vm940, %v925, %v812
      %v944 = vsel %vm940, %v927, %v814
      %v946 = vsel %vm940, %v929, %v816
      %v948 = vsel %vm940, %v931, %v818
      %v950 = vsel %vm940, %v933, %v820
      %v952 = vsel %vm940, %v935, %v822
      %v954 = vsel %vm940, %v937, %v824
      %v956 = vsel %vm940, %v939, %v826
      %vm957 = vcmask 195584
      %v959 = vsel %vm957, %v942, %v828
      %v961 = vsel %vm957, %v944, %v830
      %v963 = vsel %vm957, %v946, %v832
      %v965 = vsel %vm957, %v948, %v834
      %v967 = vsel %vm957, %v950, %v836
      %v969 = vsel %vm957, %v952, %v838
      %v971 = vsel %vm957, %v954, %v840
      %v973 = vsel %vm957, %v956, %v842
      %vm974 = vcmask 261120
      %v976 = vsel %vm974, %v959, %v844
      %v978 = vsel %vm974, %v961, %v846
      %v980 = vsel %vm974, %v963, %v848
      %v982 = vsel %vm974, %v965, %v850
      %v984 = vsel %vm974, %v967, %v852
      %v986 = vsel %vm974, %v969, %v854
      %v988 = vsel %vm974, %v971, %v856
      %v990 = vsel %vm974, %v973, %v858
      %vm991 = vcmask 326656
      %v993 = vsel %vm991, %v976, %v860
      %v995 = vsel %vm991, %v978, %v862
      %v997 = vsel %vm991, %v980, %v864
      %v999 = vsel %vm991, %v982, %v866
      %v1001 = vsel %vm991, %v984, %v868
      %v1003 = vsel %vm991, %v986, %v870
      %v1005 = vsel %vm991, %v988, %v872
      %v1007 = vsel %vm991, %v990, %v874
      %vm1008 = vcmask 392192
      %v1010 = vsel %vm1008, %v993, %v876
      %v1012 = vsel %vm1008, %v995, %v878
      %v1014 = vsel %vm1008, %v997, %v880
      %v1016 = vsel %vm1008, %v999, %v882
      %v1018 = vsel %vm1008, %v1001, %v884
      %v1020 = vsel %vm1008, %v1003, %v886
      %v1022 = vsel %vm1008, %v1005, %v888
      %v1024 = vsel %vm1008, %v1007, %v890
      %vm1025 = vcmask 457728
      %v1027 = vsel %vm1025, %v1010, %v892
      %v1029 = vsel %vm1025, %v1012, %v894
      %v1031 = vsel %vm1025, %v1014, %v896
      %v1033 = vsel %vm1025, %v1016, %v898
      %v1035 = vsel %vm1025, %v1018, %v900
      %v1037 = vsel %vm1025, %v1020, %v902
      %v1039 = vsel %vm1025, %v1022, %v904
      %v1041 = vsel %vm1025, %v1024, %v906
      %vm1042 = vcmask 523264
      %v1044 = vsel %vm1042, %v1027, %v908
      %v1046 = vsel %vm1042, %v1029, %v910
      %v1048 = vsel %vm1042, %v1031, %v912
      %v1050 = vsel %vm1042, %v1033, %v914
      %v1052 = vsel %vm1042, %v1035, %v916
      %v1054 = vsel %vm1042, %v1037, %v918
      %v1056 = vsel %vm1042, %v1039, %v920
      %v1058 = vsel %vm1042, %v1041, %v922
      %v1059 = vld [vmem:[%s3] sm:$0xf]
      %v1060 = vld [vmem:[%s3 + $0x4] sm:$0xf]
      %v1061 = vld [vmem:[%s3 + $0x8] sm:$0xf]
      %v1062 = vld [vmem:[%s3 + $0xc] sm:$0xf]
      %v1063 = vld [vmem:[%s3 + $0x10] sm:$0xf]
      %v1064 = vld [vmem:[%s3 + $0x14] sm:$0xf]
      %v1065 = vld [vmem:[%s3 + $0x18] sm:$0xf]
      %v1066 = vld [vmem:[%s3 + $0x1c] sm:$0xf]
      %v1067 = vld [vmem:[%s3 + $0x20] sm:$0xf]
      %v1077 = vunpack.c.l.b16 %v1059
      %v1078 = vunpack.c.l.b16 %v1060
      %v1079 = vunpack.c.l.b16 %v1061
      %v1080 = vunpack.c.l.b16 %v1062
      %v1081 = vunpack.c.l.b16 %v1063
      %v1082 = vunpack.c.l.b16 %v1064
      %v1083 = vunpack.c.l.b16 %v1065
      %v1084 = vunpack.c.l.b16 %v1066
      %v1085 = vunpack.c.l.b16 %v1067
      %v1086 = vpack.c.b16 %v1078, %v1077
      %v1087 = vpack.c.b16 %v1080, %v1079
      %v1088 = vpack.c.b16 %v1082, %v1081
      %v1089 = vpack.c.b16 %v1084, %v1083
      %v1090 = vpack.c.b16 %v1085, %v1085
      %vm1095 = vcmask 588800
      %v1096 = vsel %vm1095, %v1044, 0
      %v1098 = vsel %vm1095, %v1046, 0
      %v1100 = vsel %vm1095, %v1048, 0
      %v1102 = vsel %vm1095, %v1050, 0
      %v1104 = vsel %vm1095, %v1052, 0
      %v1106 = vsel %vm1095, %v1054, 0
      %v1108 = vsel %vm1095, %v1056, 0
      %v1110 = vsel %vm1095, %v1058, 0
      %vm1112 = vcmask 1043456
      %v1114 = vsel %vm1112, %v1090, 0
      %1116 = vmatpush.bf16.msra.mxu0 0
      %1117 = vmatpush.bf16.msra.mxu0 0
      %1118 = vmatpush.bf16.msra.mxu0 0
      %1119 = vmatpush.bf16.msra.mxu0 %v1114
      %1120 = vmatpush.bf16.msra.mxu0 %v1089
      %1121 = vmatpush.bf16.msra.mxu0 %v1088
      %1122 = vmatpush.bf16.msra.mxu0 %v1087
      %1123 = vmatpush.bf16.msra.mxu0 %v1086
      %1124 = vmatmul.bf16.gmra.mxu0 %v1096
      %v1125 = vpop.f32.mrf.mxu0
      %v1126 = vadd.f32 0.0, %v1125
      %v1127 = vpop.f32.mrf.mxu0
      %v1128 = vadd.f32 0.0, %v1127
      %1129 = vmatmul.bf16.gmra.mxu0 %v1098
      %v1130 = vpop.f32.mrf.mxu0
      %v1131 = vadd.f32 0.0, %v1130
      %v1132 = vpop.f32.mrf.mxu0
      %v1133 = vadd.f32 0.0, %v1132
      %1134 = vmatmul.bf16.gmra.mxu0 %v1100
      %v1135 = vpop.f32.mrf.mxu0
      %v1136 = vadd.f32 0.0, %v1135
      %v1137 = vpop.f32.mrf.mxu0
      %v1138 = vadd.f32 0.0, %v1137
      %1139 = vmatmul.bf16.gmra.mxu0 %v1102
      %v1140 = vpop.f32.mrf.mxu0
      %v1141 = vadd.f32 0.0, %v1140
      %v1142 = vpop.f32.mrf.mxu0
      %v1143 = vadd.f32 0.0, %v1142
      %1144 = vmatmul.bf16.gmra.mxu0 %v1104
      %v1145 = vpop.f32.mrf.mxu0
      %v1146 = vadd.f32 0.0, %v1145
      %v1147 = vpop.f32.mrf.mxu0
      %v1148 = vadd.f32 0.0, %v1147
      %1149 = vmatmul.bf16.gmra.mxu0 %v1106
      %v1150 = vpop.f32.mrf.mxu0
      %v1151 = vadd.f32 0.0, %v1150
      %v1152 = vpop.f32.mrf.mxu0
      %v1153 = vadd.f32 0.0, %v1152
      %1154 = vmatmul.bf16.gmra.mxu0 %v1108
      %v1155 = vpop.f32.mrf.mxu0
      %v1156 = vadd.f32 0.0, %v1155
      %v1157 = vpop.f32.mrf.mxu0
      %v1158 = vadd.f32 0.0, %v1157
      %1159 = vmatmul.bf16.gmra.mxu0 %v1110
      %v1160 = vpop.f32.mrf.mxu0
      %v1161 = vadd.f32 0.0, %v1160
      %v1162 = vpop.f32.mrf.mxu0
      %v1163 = vadd.f32 0.0, %v1162
      %1164 = vdwg.mxu0
      %v1165 = vld [vmem:[%s4] sm:$0x3]
      %v1166 = vperm.slane %v1165, 0
      %v1167 = vmul.f32 %v1126, %v1166
      %v1168 = vmul.f32 %v1128, %v1166
      %v1169 = vmul.f32 %v1131, %v1166
      %v1170 = vmul.f32 %v1133, %v1166
      %v1171 = vmul.f32 %v1136, %v1166
      %v1172 = vmul.f32 %v1138, %v1166
      %v1173 = vmul.f32 %v1141, %v1166
      %v1174 = vmul.f32 %v1143, %v1166
      %v1175 = vmul.f32 %v1146, %v1166
      %v1176 = vmul.f32 %v1148, %v1166
      %v1177 = vmul.f32 %v1151, %v1166
      %v1178 = vmul.f32 %v1153, %v1166
      %v1179 = vmul.f32 %v1156, %v1166
      %v1180 = vmul.f32 %v1158, %v1166
      %v1181 = vmul.f32 %v1161, %v1166
      %v1182 = vmul.f32 %v1163, %v1166
      %v1183 = vperm.slane %v1165, 1
      %v1184 = vadd.f32 %v1167, %v1183
      %v1185 = vadd.f32 %v1168, %v1183
      %v1186 = vadd.f32 %v1169, %v1183
      %v1187 = vadd.f32 %v1170, %v1183
      %v1188 = vadd.f32 %v1171, %v1183
      %v1189 = vadd.f32 %v1172, %v1183
      %v1190 = vadd.f32 %v1173, %v1183
      %v1191 = vadd.f32 %v1174, %v1183
      %v1192 = vadd.f32 %v1175, %v1183
      %v1193 = vadd.f32 %v1176, %v1183
      %v1194 = vadd.f32 %v1177, %v1183
      %v1195 = vadd.f32 %v1178, %v1183
      %v1196 = vadd.f32 %v1179, %v1183
      %v1197 = vadd.f32 %v1180, %v1183
      %v1198 = vadd.f32 %v1181, %v1183
      %v1199 = vadd.f32 %v1182, %v1183
      %v1200 = vmax.f32 %v1184, 0.0
      %v1201 = vmax.f32 %v1185, 0.0
      %v1202 = vmax.f32 %v1186, 0.0
      %v1203 = vmax.f32 %v1187, 0.0
      %v1204 = vmax.f32 %v1188, 0.0
      %v1205 = vmax.f32 %v1189, 0.0
      %v1206 = vmax.f32 %v1190, 0.0
      %v1207 = vmax.f32 %v1191, 0.0
      %v1208 = vmax.f32 %v1192, 0.0
      %v1209 = vmax.f32 %v1193, 0.0
      %v1210 = vmax.f32 %v1194, 0.0
      %v1211 = vmax.f32 %v1195, 0.0
      %v1212 = vmax.f32 %v1196, 0.0
      %v1213 = vmax.f32 %v1197, 0.0
      %v1214 = vmax.f32 %v1198, 0.0
      %v1215 = vmax.f32 %v1199, 0.0
      %v1216 = vpack.c.bf16 %v1200, %v1200
      %v1217 = vpack.c.bf16 %v1201, %v1201
      %v1218 = vpack.c.bf16 %v1202, %v1202
      %v1219 = vpack.c.bf16 %v1203, %v1203
      %v1220 = vpack.c.bf16 %v1204, %v1204
      %v1221 = vpack.c.bf16 %v1205, %v1205
      %v1222 = vpack.c.bf16 %v1206, %v1206
      %v1223 = vpack.c.bf16 %v1207, %v1207
      %v1224 = vpack.c.bf16 %v1208, %v1208
      %v1225 = vpack.c.bf16 %v1209, %v1209
      %v1226 = vpack.c.bf16 %v1210, %v1210
      %v1227 = vpack.c.bf16 %v1211, %v1211
      %v1228 = vpack.c.bf16 %v1212, %v1212
      %v1229 = vpack.c.bf16 %v1213, %v1213
      %v1230 = vpack.c.bf16 %v1214, %v1214
      %v1231 = vpack.c.bf16 %v1215, %v1215
      %vm1232 = vcmask 60416
      %1233 = vst.msk [vmem:[%s389] sm:$0xf] %vm1232, %v1216
      %1234 = vst.msk [vmem:[%s389 + $0x4] sm:$0xf] %vm1232, %v1217
      %1235 = vst.msk [vmem:[%s389 + $0x8] sm:$0xf] %vm1232, %v1218
      %1236 = vst.msk [vmem:[%s389 + $0xc] sm:$0xf] %vm1232, %v1219
      %1237 = vst.msk [vmem:[%s389 + $0x10] sm:$0xf] %vm1232, %v1220
      %1238 = vst.msk [vmem:[%s389 + $0x14] sm:$0xf] %vm1232, %v1221
      %1239 = vst.msk [vmem:[%s389 + $0x18] sm:$0xf] %vm1232, %v1222
      %1240 = vst.msk [vmem:[%s389 + $0x1c] sm:$0xf] %vm1232, %v1223
      %1241 = vst.msk [vmem:[%s389 + $0x20] sm:$0xf] %vm1232, %v1224
      %1242 = vst.msk [vmem:[%s389 + $0x24] sm:$0xf] %vm1232, %v1225
      %1243 = vst.msk [vmem:[%s389 + $0x28] sm:$0xf] %vm1232, %v1226
      %1244 = vst.msk [vmem:[%s389 + $0x2c] sm:$0xf] %vm1232, %v1227
      %1245 = vst.msk [vmem:[%s389 + $0x30] sm:$0xf] %vm1232, %v1228
      %1246 = vst.msk [vmem:[%s389 + $0x34] sm:$0xf] %vm1232, %v1229
      %1247 = vst.msk [vmem:[%s389 + $0x38] sm:$0xf] %vm1232, %v1230
      %1248 = vst.msk [vmem:[%s389 + $0x3c] sm:$0xf] %vm1232, %v1231
      %s1249 = smul.u32 16, %s21
      %p1250 = scmp.lt.s32.totalorder %s20, 1
      %s1251 = scalar_select %p1250, %s20, 1
      %p1252 = scmp.lt.s32.totalorder %s1249, 31
      %s1253 = scalar_select %p1252, %s1249, 31
      %s1254 = smul.addr %s1251, 32
      %s1255 = sadd.s32 %s1253, %s1254
      %s1256 = smul.addr %s1255, 4
      %s1257 = scalar_lea.vmem %s5, %s1256
      // Predicated region
      $region41: #{c2f_cot_attention_forward.11} parent=39 // pred_check
        %p1258 = pneg %p190
      $region42: #{c2f_cot_attention_forward.11} parent=39 // pred_check_branch
        %1260 = sbr.rel (%p1258) target = $region44
      $region43: #{c2f_cot_attention_forward.11} parent=39 // pred_region
        %s1261 = smul.u32 16, %s21
      $region44: #{c2f_cot_attention_forward.11} parent=39 // pred_fallthru
        _
    $region40: #{c2f_cot_attention_forward.11} parent=5 // pred_fallthru
      _
    %p1262 = scmp.le.s32.totalorder 2, %s11
    // Predicated region
    $region45: #{c2f_cot_attention_forward.11} parent=5 // pred_check
      %p1263 = pneg %p1262
    $region46: #{c2f_cot_attention_forward.11} parent=5 // pred_check_branch
      %1265 = sbr.rel (%p1263) target = $region48
    $region47: #{c2f_cot_attention_forward.11} parent=5 // pred_region
      %s1266 = ssub.s32 %s11, 2
      // Predicated region
      $region49: #{c2f_cot_attention_forward.11} parent=47 // pred_check
        %p1267 = pneg %p196
      $region50: #{c2f_cot_attention_forward.11} parent=47 // pred_check_branch
        %1269 = sbr.rel (%p1267) target = $region52
      $region51: #{c2f_cot_attention_forward.11} parent=47 // pred_region
        %s1270 = smul.u32 16, %s23
        %p1271 = scmp.lt.s32.totalorder %s22, 1
        %s1272 = scalar_select %p1271, %s22, 1
        %p1273 = scmp.lt.s32.totalorder %s1270, 31
        %s1274 = scalar_select %p1273, %s1270, 31
        %s1275 = smul.addr %s1272, 32
        %s1276 = sadd.s32 %s1274, %s1275
        %s1277 = smul.addr %s1276, 4
        %s1278 = scalar_lea.vmem %s5, %s1277
      $region52: #{c2f_cot_attention_forward.11} parent=47 // pred_fallthru
        _
    $region48: #{c2f_cot_attention_forward.11} parent=5 // pred_fallthru
      _
  $region6: #{c2f_cot_attention_forward.11} parent=0 // loop_footer
    %s15 = sadd.s32 1, %s11
  $region7: #{c2f_cot_attention_forward.11} parent=0 // loop_footer_branch
    %10 = sbr.rel target = $region3
  $region8: #{c2f_cot_attention_forward.11} parent=0 // loop_exit
    _

// kernel: c2f_cot_attention_forward.9
$region0: #{c2f_cot_attention_forward.9}
  #allocation0 [shape = 'u32[]', space=smem, size = 0x4, offset = 0x4, fixed_abs, tag = 'smem constant byte address 0x4 - core index']
  #allocation1 [shape = 'u32[72,128]{1,0:T(1,128)}', space=vmem, size = 0x9000, scoped, tag = 'internal scratch']
  %s0 = inlined_call_operand.vmem [shape: bf16[2,16,16,8], index: 0, kind: input, shape index: {}, may-alias: {0,1,2}]
  %s1 = inlined_call_operand.vmem [shape: bf16[2,16,16,8], index: 1, kind: input, shape index: {}, may-alias: {0,1,2}]
  %s2 = inlined_call_operand.vmem [shape: bf16[2,16,16,8], index: 2, kind: input, shape index: {}, may-alias: {0,1,2}]
  %s3 = inlined_call_operand.vmem [shape: bf16[72,8], index: 3, kind: input, shape index: {}]
  %s4 = inlined_call_operand.vmem [shape: f32[2,8], index: 4, kind: input, shape index: {}]
  %s5 = inlined_call_operand.vmem [shape: bf16[2,256,8], index: 5, kind: output, shape index: {}]
  %s6 = sld [smem:[#allocation0]]
  $region53: #{c2f_cot_attention_forward.9} parent=0
    _
  %s8 = ssub.s32 1, %s6
  %s9 = scalar_select 0, %s8, %s6
  loop: start=0, step=1, limit=6
  $region2: #{c2f_cot_attention_forward.9} parent=0 // loop_pre_header
    _
  $region3: #{c2f_cot_attention_forward.9} parent=0 // loop_header
    %s11 = sphi 0, %s15
    %p12 = scmp.ge.s32.totalorder %s11, 6
    %s18 = sphi 0, %s30
    %s19 = sphi 0, %s26
    %s20 = sphi 0, %s18
    %s21 = sphi 0, %s19
    %s22 = sphi 0, %s20
    %s23 = sphi 0, %s21
    %s35 = sphi 0, %s37
    %s38 = sphi 0, %s35
    %s39 = sphi 0, %s38
    %s55 = sphi 0, %s39
    %s71 = sphi 0, %s73
    %s74 = sphi 0, %s71
    %s75 = sphi 0, %s74
    %s91 = sphi 0, %s75
    %s107 = sphi 0, %s109
    %s110 = sphi 0, %s107
    %s111 = sphi 0, %s110
    %s127 = sphi 0, %s111
    %s131 = sphi 0, %s131
    %s133 = sphi 0, %s131
    %s134 = sphi 0, %s133
    %s148 = sphi 0, %s134
    %s152 = sphi 0, %s152
    %s154 = sphi 0, %s152
    %s155 = sphi 0, %s154
    %s169 = sphi 0, %s155
    %s177 = sphi 0, %s179
    %s180 = sphi 0, %s177
    %s181 = sphi 0, %s180
    %s197 = sphi 0, %s181
  $region4: #{c2f_cot_attention_forward.9} parent=0 // loop_header_branch
    %14 = sbr.rel (%p12) target = $region8
  $region5: #{c2f_cot_attention_forward.9} parent=0 // loop_body
    %s16 = ssub.s32 %s11, 1
    %s17 = ssub.s32 %s11, 2
    %s24 = sadd.s32 1, %s19
    %p25 = scmp.ge.s32.totalorder %s24, 2
    %s26 = scalar_select %p25, 0, %s24
    %s27 = sadd.s32 1, %s18
    %s28 = scalar_select %p25, %s27, %s18
    %p29 = scmp.ge.s32.totalorder %s28, 2
    %s30 = scalar_select %p29, 0, %s28
    %s31 = ssub.s32 %s18, %s30
    %s32 = ssub.s32 %s19, %s26
    %s33 = sor.u32 %s31, %s32
    %p34 = scmp.eq.s32.totalorder %s33, 0
    %s36 = sadd.s32 %s35, 1
    %s37 = scalar_select %p34, %s35, %s36
    %p40 = pneg %p34
    %p41 = scmp.eq.s32.totalorder %s11, 3
    %p42 = por %p40, %p41
    %p43 = scmp.ne.s32.totalorder %s35, %s38
    %p44 = scmp.eq.s32.totalorder %s11, 0
    %p45 = por %p43, %p44
    %p46 = scmp.ne.s32.totalorder %s35, %s38
    %p47 = scmp.eq.s32.totalorder %s16, 3
    %p48 = por %p46, %p47
    %p49 = scmp.ne.s32.totalorder %s38, %s39
    %p50 = scmp.eq.s32.totalorder %s16, 0
    %p51 = por %p49, %p50
    %p52 = scmp.ne.s32.totalorder %s38, %s39
    %p53 = scmp.eq.s32.totalorder %s17, 3
    %p54 = por %p52, %p53
    %p56 = scmp.ne.s32.totalorder %s39, %s55
    %p57 = scmp.eq.s32.totalorder %s17, 0
    %p58 = por %p56, %p57
    %s59 = smul.u32 %s19, 8
    %s60 = ssub.s32 %s59, 1
    %p61 = scmp.gt.s32.totalorder %s60, 0
    %s62 = scalar_select %p61, %s60, 0
    %s63 = smul.u32 %s26, 8
    %s64 = ssub.s32 %s63, 1
    %p65 = scmp.gt.s32.totalorder %s64, 0
    %s66 = scalar_select %p65, %s64, 0
    %s67 = ssub.s32 %s18, %s30
    %s68 = ssub.s32 %s62, %s66
    %s69 = sor.u32 %s67, %s68
    %p70 = scmp.eq.s32.totalorder %s69, 0
    %s72 = sadd.s32 %s71, 1
    %s73 = scalar_select %p70, %s71, %s72
    %p76 = pneg %p70
    %p77 = scmp.eq.s32.totalorder %s11, 3
    %p78 = por %p76, %p77
    %p79 = scmp.ne.s32.totalorder %s71, %s74
    %p80 = scmp.eq.s32.totalorder %s11, 0
    %p81 = por %p79, %p80
    %p82 = scmp.ne.s32.totalorder %s71, %s74
    %p83 = scmp.eq.s32.totalorder %s16, 3
    %p84 = por %p82, %p83
    %p85 = scmp.ne.s32.totalorder %s74, %s75
    %p86 = scmp.eq.s32.totalorder %s16, 0
    %p87 = por %p85, %p86
    %p88 = scmp.ne.s32.totalorder %s74, %s75
    %p89 = scmp.eq.s32.totalorder %s17, 3
    %p90 = por %p88, %p89
    %p92 = scmp.ne.s32.totalorder %s75, %s91
    %p93 = scmp.eq.s32.totalorder %s17, 0
    %p94 = por %p92, %p93
    %s95 = sadd.s32 %s19, 1
    %s96 = smul.u32 %s95, 8
    %p97 = scmp.lt.s32.totalorder %s96, 15
    %s98 = scalar_select %p97, %s96, 15
    %s99 = sadd.s32 %s26, 1
    %s100 = smul.u32 %s99, 8
    %p101 = scmp.lt.s32.totalorder %s100, 15
    %s102 = scalar_select %p101, %s100, 15
    %s103 = ssub.s32 %s18, %s30
    %s104 = ssub.s32 %s98, %s102
    %s105 = sor.u32 %s103, %s104
    %p106 = scmp.eq.s32.totalorder %s105, 0
    %s108 = sadd.s32 %s107, 1
    %s109 = scalar_select %p106, %s107, %s108
    %p112 = pneg %p106
    %p113 = scmp.eq.s32.totalorder %s11, 3
    %p114 = por %p112, %p113
    %p115 = scmp.ne.s32.totalorder %s107, %s110
    %p116 = scmp.eq.s32.totalorder %s11, 0
    %p117 = por %p115, %p116
    %p118 = scmp.ne.s32.totalorder %s107, %s110
    %p119 = scmp.eq.s32.totalorder %s16, 3
    %p120 = por %p118, %p119
    %p121 = scmp.ne.s32.totalorder %s110, %s111
    %p122 = scmp.eq.s32.totalorder %s16, 0
    %p123 = por %p121, %p122
    %p124 = scmp.ne.s32.totalorder %s110, %s111
    %p125 = scmp.eq.s32.totalorder %s17, 3
    %p126 = por %p124, %p125
    %p128 = scmp.ne.s32.totalorder %s111, %s127
    %p129 = scmp.eq.s32.totalorder %s17, 0
    %p130 = por %p128, %p129
    %s132 = sadd.s32 %s131, 1
    %p135 = scmp.eq.s32.totalorder %s11, 3
    %p136 = scmp.ne.s32.totalorder %s131, %s133
    %p137 = scmp.eq.s32.totalorder %s11, 0
    %p138 = por %p136, %p137
    %p139 = scmp.ne.s32.totalorder %s131, %s133
    %p140 = scmp.eq.s32.totalorder %s16, 3
    %p141 = por %p139, %p140
    %p142 = scmp.ne.s32.totalorder %s133, %s134
    %p143 = scmp.eq.s32.totalorder %s16, 0
    %p144 = por %p142, %p143
    %p145 = scmp.ne.s32.totalorder %s133, %s134
    %p146 = scmp.eq.s32.totalorder %s17, 3
    %p147 = por %p145, %p146
    %p149 = scmp.ne.s32.totalorder %s134, %s148
    %p150 = scmp.eq.s32.totalorder %s17, 0
    %p151 = por %p149, %p150
    %s153 = sadd.s32 %s152, 1
    %p156 = scmp.eq.s32.totalorder %s11, 3
    %p157 = scmp.ne.s32.totalorder %s152, %s154
    %p158 = scmp.eq.s32.totalorder %s11, 0
    %p159 = por %p157, %p158
    %p160 = scmp.ne.s32.totalorder %s152, %s154
    %p161 = scmp.eq.s32.totalorder %s16, 3
    %p162 = por %p160, %p161
    %p163 = scmp.ne.s32.totalorder %s154, %s155
    %p164 = scmp.eq.s32.totalorder %s16, 0
    %p165 = por %p163, %p164
    %p166 = scmp.ne.s32.totalorder %s154, %s155
    %p167 = scmp.eq.s32.totalorder %s17, 3
    %p168 = por %p166, %p167
    %p170 = scmp.ne.s32.totalorder %s155, %s169
    %p171 = scmp.eq.s32.totalorder %s17, 0
    %p172 = por %p170, %p171
    %s173 = ssub.s32 %s18, %s30
    %s174 = ssub.s32 %s19, %s26
    %s175 = sor.u32 %s173, %s174
    %p176 = scmp.eq.s32.totalorder %s175, 0
    %s178 = sadd.s32 %s177, 1
    %s179 = scalar_select %p176, %s177, %s178
    %p182 = pneg %p176
    %p183 = scmp.eq.s32.totalorder %s11, 3
    %p184 = por %p182, %p183
    %p185 = scmp.ne.s32.totalorder %s177, %s180
    %p186 = scmp.eq.s32.totalorder %s11, 0
    %p187 = por %p185, %p186
    %p188 = scmp.ne.s32.totalorder %s177, %s180
    %p189 = scmp.eq.s32.totalorder %s16, 3
    %p190 = por %p188, %p189
    %p191 = scmp.ne.s32.totalorder %s180, %s181
    %p192 = scmp.eq.s32.totalorder %s16, 0
    %p193 = por %p191, %p192
    %p194 = scmp.ne.s32.totalorder %s180, %s181
    %p195 = scmp.eq.s32.totalorder %s17, 3
    %p196 = por %p194, %p195
    %p198 = scmp.ne.s32.totalorder %s181, %s197
    %p199 = scmp.eq.s32.totalorder %s17, 0
    %p200 = por %p198, %p199
    %p201 = scmp.le.s32.totalorder 1, %s11
    %p202 = scmp.lt.s32.totalorder %s11, 5
    %p203 = pnand %p201, %p202
    %p204 = pneg %p203
    // Predicated region
    $region9: #{c2f_cot_attention_forward.9} parent=5 // pred_check
      _
    $region10: #{c2f_cot_attention_forward.9} parent=5 // pred_check_branch
      %206 = sbr.rel (%p203) target = $region12
    $region11: #{c2f_cot_attention_forward.9} parent=5 // pred_region
      %s207 = ssub.s32 %s11, 1
      // Predicated region
      $region13: #{c2f_cot_attention_forward.9} parent=11 // pred_check
        %p208 = pneg %p144
      $region14: #{c2f_cot_attention_forward.9} parent=11 // pred_check_branch
        %210 = sbr.rel (%p208) target = $region16
      $region15: #{c2f_cot_attention_forward.9} parent=11 // pred_region
        _
      $region16: #{c2f_cot_attention_forward.9} parent=11 // pred_fallthru
        _
      // Predicated region
      $region17: #{c2f_cot_attention_forward.9} parent=11 // pred_check
        %p211 = pneg %p165
      $region18: #{c2f_cot_attention_forward.9} parent=11 // pred_check_branch
        %213 = sbr.rel (%p211) target = $region20
      $region19: #{c2f_cot_attention_forward.9} parent=11 // pred_region
        _
      $region20: #{c2f_cot_attention_forward.9} parent=11 // pred_fallthru
        _
    $region12: #{c2f_cot_attention_forward.9} parent=5 // pred_fallthru
      _
    %p214 = scmp.lt.s32.totalorder %s11, 4
    // Predicated region
    $region21: #{c2f_cot_attention_forward.9} parent=5 // pred_check
      %p215 = pneg %p214
    $region22: #{c2f_cot_attention_forward.9} parent=5 // pred_check_branch
      %217 = sbr.rel (%p215) target = $region24
    $region23: #{c2f_cot_attention_forward.9} parent=5 // pred_region
      // Predicated region
      $region25: #{c2f_cot_attention_forward.9} parent=23 // pred_check
        %p218 = pneg %p45
      $region26: #{c2f_cot_attention_forward.9} parent=23 // pred_check_branch
        %220 = sbr.rel (%p218) target = $region28
      $region27: #{c2f_cot_attention_forward.9} parent=23 // pred_region
        %s221 = smul.u32 8, %s19
        %p222 = scmp.lt.s32.totalorder %s18, 1
        %s223 = scalar_select %p222, %s18, 1
        %p224 = scmp.lt.s32.totalorder %s221, 15
        %s225 = scalar_select %p224, %s221, 15
        %s226 = smul.addr %s225, 2
        %s227 = smul.addr %s223, 32
        %s228 = sadd.s32 %s226, %s227
        %s229 = smul.addr %s228, 4
        %s230 = scalar_lea.vmem %s0, %s229
        %s231 = smul.u32 8, %s19
      $region28: #{c2f_cot_attention_forward.9} parent=23 // pred_fallthru
        _
      // Predicated region
      $region29: #{c2f_cot_attention_forward.9} parent=23 // pred_check
        %p232 = pneg %p81
      $region30: #{c2f_cot_attention_forward.9} parent=23 // pred_check_branch
        %234 = sbr.rel (%p232) target = $region32
      $region31: #{c2f_cot_attention_forward.9} parent=23 // pred_region
        %s235 = smul.u32 %s19, 8
        %s236 = ssub.s32 %s235, 1
        %p237 = scmp.gt.s32.totalorder %s236, 0
        %s238 = scalar_select %p237, %s236, 0
        %p239 = scmp.lt.s32.totalorder %s18, 1
        %s240 = scalar_select %p239, %s18, 1
        %p241 = scmp.lt.s32.totalorder %s238, 15
        %s242 = scalar_select %p241, %s238, 15
        %s243 = smul.addr %s242, 2
        %s244 = smul.addr %s240, 32
        %s245 = sadd.s32 %s243, %s244
        %s246 = smul.addr %s245, 4
        %s247 = scalar_lea.vmem %s1, %s246
        %s248 = smul.u32 %s19, 8
        %s249 = ssub.s32 %s248, 1
        %p250 = scmp.gt.s32.totalorder %s249, 0
        %s251 = scalar_select %p250, %s249, 0
      $region32: #{c2f_cot_attention_forward.9} parent=23 // pred_fallthru
        _
      // Predicated region
      $region33: #{c2f_cot_attention_forward.9} parent=23 // pred_check
        %p252 = pneg %p117
      $region34: #{c2f_cot_attention_forward.9} parent=23 // pred_check_branch
        %254 = sbr.rel (%p252) target = $region36
      $region35: #{c2f_cot_attention_forward.9} parent=23 // pred_region
        %s255 = sadd.s32 %s19, 1
        %s256 = smul.u32 %s255, 8
        %p257 = scmp.lt.s32.totalorder %s256, 15
        %s258 = scalar_select %p257, %s256, 15
        %p259 = scmp.lt.s32.totalorder %s18, 1
        %s260 = scalar_select %p259, %s18, 1
        %p261 = scmp.lt.s32.totalorder %s258, 15
        %s262 = scalar_select %p261, %s258, 15
        %s263 = smul.addr %s262, 2
        %s264 = smul.addr %s260, 32
        %s265 = sadd.s32 %s263, %s264
        %s266 = smul.addr %s265, 4
        %s267 = scalar_lea.vmem %s2, %s266
        %s268 = sadd.s32 %s19, 1
        %s269 = smul.u32 %s268, 8
        %p270 = scmp.lt.s32.totalorder %s269, 15
        %s271 = scalar_select %p270, %s269, 15
      $region36: #{c2f_cot_attention_forward.9} parent=23 // pred_fallthru
        _
    $region24: #{c2f_cot_attention_forward.9} parent=5 // pred_fallthru
      _
    %p272 = scmp.le.s32.totalorder 1, %s11
    %p273 = scmp.lt.s32.totalorder %s11, 5
    %p274 = pnand %p272, %p273
    %p275 = pneg %p274
    // Predicated region
    $region37: #{c2f_cot_attention_forward.9} parent=5 // pred_check
      _
    $region38: #{c2f_cot_attention_forward.9} parent=5 // pred_check_branch
      %277 = sbr.rel (%p274) target = $region40
    $region39: #{c2f_cot_attention_forward.9} parent=5 // pred_region
      %s278 = ssub.s32 %s11, 1
      %s279 = smul.u32 8, %s21
      %p280 = scmp.lt.s32.totalorder %s20, 1
      %s281 = scalar_select %p280, %s20, 1
      %p282 = scmp.lt.s32.totalorder %s279, 15
      %s283 = scalar_select %p282, %s279, 15
      %s284 = smul.addr %s283, 2
      %s285 = smul.addr %s281, 32
      %s286 = sadd.s32 %s284, %s285
      %s287 = smul.addr %s286, 4
      %s288 = scalar_lea.vmem %s0, %s287
      %p289 = pneg %p51
      %p290 = pneg %p48
      %s291 = smul.u32 %s21, 8
      %s292 = ssub.s32 %s291, 1
      %p293 = scmp.gt.s32.totalorder %s292, 0
      %s294 = scalar_select %p293, %s292, 0
      %p295 = scmp.lt.s32.totalorder %s20, 1
      %s296 = scalar_select %p295, %s20, 1
      %p297 = scmp.lt.s32.totalorder %s294, 15
      %s298 = scalar_select %p297, %s294, 15
      %s299 = smul.addr %s298, 2
      %s300 = smul.addr %s296, 32
      %s301 = sadd.s32 %s299, %s300
      %s302 = smul.addr %s301, 4
      %s303 = scalar_lea.vmem %s1, %s302
      %p304 = pneg %p87
      %p305 = pneg %p84
      %s306 = sadd.s32 %s21, 1
      %s307 = smul.u32 %s306, 8
      %p308 = scmp.lt.s32.totalorder %s307, 15
      %s309 = scalar_select %p308, %s307, 15
      %p310 = scmp.lt.s32.totalorder %s20, 1
      %s311 = scalar_select %p310, %s20, 1
      %p312 = scmp.lt.s32.totalorder %s309, 15
      %s313 = scalar_select %p312, %s309, 15
      %s314 = smul.addr %s313, 2
      %s315 = smul.addr %s311, 32
      %s316 = sadd.s32 %s314, %s315
      %s317 = smul.addr %s316, 4
      %s318 = scalar_lea.vmem %s2, %s317
      %p319 = pneg %p123
      %p320 = pneg %p120
      %p321 = pneg %p144
      %p322 = pneg %p141
      %p323 = pneg %p165
      %p324 = pneg %p162
      %p325 = pneg %p193
      %p326 = pneg %p190
      %s327 = smul.u32 16, %s21
      %p328 = scmp.lt.s32.totalorder %s20, 1
      %s329 = scalar_select %p328, %s20, 1
      %p330 = scmp.lt.s32.totalorder %s327, 31
      %s331 = scalar_select %p330, %s327, 31
      %s332 = smul.addr %s329, 32
      %s333 = sadd.s32 %s331, %s332
      %s334 = smul.addr %s333, 4
      %s335 = scalar_lea.vmem %s5, %s334
      %s336 = smul.u32 8, %s21
      %p337 = scmp.lt.s32.totalorder %s20, 1
      %s338 = scalar_select %p337, %s20, 1
      %p339 = scmp.lt.s32.totalorder %s336, 15
      %s340 = scalar_select %p339, %s336, 15
      %s341 = smul.addr %s340, 2
      %s342 = smul.addr %s338, 32
      %s343 = sadd.s32 %s341, %s342
      %s344 = smul.addr %s343, 4
      %s345 = scalar_lea.vmem %s0, %s344
      %s346 = smul.u32 8, %s21
      %s347 = smul.u32 %s21, 8
      %s348 = ssub.s32 %s347, 1
      %p349 = scmp.gt.s32.totalorder %s348, 0
      %s350 = scalar_select %p349, %s348, 0
      %p351 = scmp.lt.s32.totalorder %s20, 1
      %s352 = scalar_select %p351, %s20, 1
      %p353 = scmp.lt.s32.totalorder %s350, 15
      %s354 = scalar_select %p353, %s350, 15
      %s355 = smul.addr %s354, 2
      %s356 = smul.addr %s352, 32
      %s357 = sadd.s32 %s355, %s356
      %s358 = smul.addr %s357, 4
      %s359 = scalar_lea.vmem %s1, %s358
      %s360 = smul.u32 %s21, 8
      %s361 = ssub.s32 %s360, 1
      %p362 = scmp.gt.s32.totalorder %s361, 0
      %s363 = scalar_select %p362, %s361, 0
      %s364 = sadd.s32 %s21, 1
      %s365 = smul.u32 %s364, 8
      %p366 = scmp.lt.s32.totalorder %s365, 15
      %s367 = scalar_select %p366, %s365, 15
      %p368 = scmp.lt.s32.totalorder %s20, 1
      %s369 = scalar_select %p368, %s20, 1
      %p370 = scmp.lt.s32.totalorder %s367, 15
      %s371 = scalar_select %p370, %s367, 15
      %s372 = smul.addr %s371, 2
      %s373 = smul.addr %s369, 32
      %s374 = sadd.s32 %s372, %s373
      %s375 = smul.addr %s374, 4
      %s376 = scalar_lea.vmem %s2, %s375
      %s377 = sadd.s32 %s21, 1
      %s378 = smul.u32 %s377, 8
      %p379 = scmp.lt.s32.totalorder %s378, 15
      %s380 = scalar_select %p379, %s378, 15
      %s381 = smul.u32 16, %s21
      %p382 = scmp.lt.s32.totalorder %s20, 1
      %s383 = scalar_select %p382, %s20, 1
      %p384 = scmp.lt.s32.totalorder %s381, 31
      %s385 = scalar_select %p384, %s381, 31
      %s386 = smul.addr %s383, 32
      %s387 = sadd.s32 %s385, %s386
      %s388 = smul.addr %s387, 4
      %s389 = scalar_lea.vmem %s5, %s388
      %s390 = smul.u32 16, %s21
      %v392 = vld [vmem:[%s345] sm:$0xf]
      %v393 = vld [vmem:[%s345 + $0x4] sm:$0xf]
      %v394 = vld [vmem:[%s345 + $0x8] sm:$0xf]
      %v395 = vld [vmem:[%s345 + $0xc] sm:$0xf]
      %v396 = vld [vmem:[%s345 + $0x10] sm:$0xf]
      %v397 = vld [vmem:[%s345 + $0x14] sm:$0xf]
      %v398 = vld [vmem:[%s345 + $0x18] sm:$0xf]
      %v399 = vld [vmem:[%s345 + $0x1c] sm:$0xf]
      %v400 = vld [vmem:[%s345 + $0x20] sm:$0xf]
      %v401 = vld [vmem:[%s345 + $0x24] sm:$0xf]
      %v402 = vld [vmem:[%s345 + $0x28] sm:$0xf]
      %v403 = vld [vmem:[%s345 + $0x2c] sm:$0xf]
      %v404 = vld [vmem:[%s345 + $0x30] sm:$0xf]
      %v405 = vld [vmem:[%s345 + $0x34] sm:$0xf]
      %v406 = vld [vmem:[%s345 + $0x38] sm:$0xf]
      %v407 = vld [vmem:[%s345 + $0x3c] sm:$0xf]
      %v408 = vld [vmem:[%s359] sm:$0xf]
      %v409 = vld [vmem:[%s359 + $0x4] sm:$0xf]
      %p410 = scmp.gt.s32.totalorder %s21, 0
      %s411 = scalar_select %p410, 1, 0
      %s412 = scvt.s32.f32 %s411
      %p414 = scmp.ne.f32.partialorder %s412, %s412
      %s415 = sshrl.u32 %s412, 16
      %s416 = sand.u32 %s415, 1
      %s417 = sadd.s32 32767, %s416
      %s418 = sadd.s32 %s412, %s417
      %s419 = sand.u32 %s418, 4294901760
      %s420 = scalar_select %p414, 2143289344, %s419
      %s422 = sshrl.u32 %s420, 16
      %s423 = sshll.u32 %s422, 16
      %s424 = sor.u32 %s422, %s423
      %v425 = vstv %s424
      %v427 = vunpack.c.l.bf16 %v408
      %v428 = vunpack.c.l.bf16 %v409
      %v429 = vunpack.c.l.bf16 %v425
      %v430 = vmul.f32 %v427, %v429
      %v431 = vmul.f32 %v428, %v429
      %v432 = vpack.c.bf16 %v430, %v430
      %v433 = vpack.c.bf16 %v431, %v431
      %v434 = vld [vmem:[%s376] sm:$0xf]
      %v435 = vld [vmem:[%s376 + $0x4] sm:$0xf]
      %p436 = scmp.lt.s32.totalorder %s21, 1
      %s437 = scalar_select %p436, 1, 0
      %s438 = scvt.s32.f32 %s437
      %p440 = scmp.ne.f32.partialorder %s438, %s438
      %s441 = sshrl.u32 %s438, 16
      %s442 = sand.u32 %s441, 1
      %s443 = sadd.s32 32767, %s442
      %s444 = sadd.s32 %s438, %s443
      %s445 = sand.u32 %s444, 4294901760
      %s446 = scalar_select %p440, 2143289344, %s445
      %s448 = sshrl.u32 %s446, 16
      %s449 = sshll.u32 %s448, 16
      %s450 = sor.u32 %s448, %s449
      %v451 = vstv %s450
      %v453 = vunpack.c.l.bf16 %v434
      %v454 = vunpack.c.l.bf16 %v435
      %v455 = vunpack.c.l.bf16 %v451
      %v456 = vmul.f32 %v453, %v455
      %v457 = vmul.f32 %v454, %v455
      %v458 = vpack.c.bf16 %v456, %v456
      %v459 = vpack.c.bf16 %v457, %v457
      %v480 = vunpack.c.l.b16 %v432
      %v481 = vunpack.c.l.b16 %v433
      %v482 = vunpack.c.l.b16 %v392
      %v483 = vunpack.c.l.b16 %v393
      %v484 = vunpack.c.l.b16 %v394
      %v485 = vunpack.c.l.b16 %v395
      %v486 = vunpack.c.l.b16 %v396
      %v487 = vunpack.c.l.b16 %v397
      %v488 = vunpack.c.l.b16 %v398
      %v489 = vunpack.c.l.b16 %v399
      %v490 = vunpack.c.l.b16 %v400
      %v491 = vunpack.c.l.b16 %v401
      %v492 = vunpack.c.l.b16 %v402
      %v493 = vunpack.c.l.b16 %v403
      %v494 = vunpack.c.l.b16 %v404
      %v495 = vunpack.c.l.b16 %v405
      %v496 = vunpack.c.l.b16 %v406
      %v497 = vunpack.c.l.b16 %v407
      %v498 = vunpack.c.l.b16 %v458
      %v499 = vunpack.c.l.b16 %v459
      %v500 = vpack.c.b16 %v481, %v480
      %v501 = vpack.c.b16 %v483, %v482
      %v502 = vpack.c.b16 %v485, %v484
      %v503 = vpack.c.b16 %v487, %v486
      %v504 = vpack.c.b16 %v489, %v488
      %v505 = vpack.c.b16 %v491, %v490
      %v506 = vpack.c.b16 %v493, %v492
      %v507 = vpack.c.b16 %v495, %v494
      %v508 = vpack.c.b16 %v497, %v496
      %v509 = vpack.c.b16 %v499, %v498
      %v511 = vshrl.u32 %v500, 16
      %v513 = vrot.slane %v511, 7
      %v514 = vshll.u32 %v500, 16
      %v516 = vor.u32 %v513, %v514
      %v518 = vshrl.u32 %v501, 16
      %v520 = vrot.slane %v518, 7
      %v521 = vshll.u32 %v501, 16
      %v523 = vor.u32 %v520, %v521
      %v525 = vshrl.u32 %v502, 16
      %v527 = vrot.slane %v525, 7
      %v528 = vshll.u32 %v502, 16
      %v530 = vor.u32 %v527, %v528
      %v532 = vshrl.u32 %v503, 16
      %v534 = vrot.slane %v532, 7
      %v535 = vshll.u32 %v503, 16
      %v537 = vor.u32 %v534, %v535
      %v539 = vshrl.u32 %v504, 16
      %v541 = vrot.slane %v539, 7
      %v542 = vshll.u32 %v504, 16
      %v544 = vor.u32 %v541, %v542
      %v546 = vshrl.u32 %v505, 16
      %v548 = vrot.slane %v546, 7
      %v549 = vshll.u32 %v505, 16
      %v551 = vor.u32 %v548, %v549
      %v553 = vshrl.u32 %v506, 16
      %v555 = vrot.slane %v553, 7
      %v556 = vshll.u32 %v506, 16
      %v558 = vor.u32 %v555, %v556
      %v560 = vshrl.u32 %v507, 16
      %v562 = vrot.slane %v560, 7
      %v563 = vshll.u32 %v507, 16
      %v565 = vor.u32 %v562, %v563
      %v567 = vshrl.u32 %v508, 16
      %v569 = vrot.slane %v567, 7
      %v570 = vshll.u32 %v508, 16
      %v572 = vor.u32 %v569, %v570
      %v574 = vshrl.u32 %v509, 16
      %v576 = vrot.slane %v574, 7
      %v577 = vshll.u32 %v509, 16
      %v579 = vor.u32 %v576, %v577
      %vm600 = vcmask 1040384
      %vm601 = vsmask.f32 256
      %vm602 = vmand %vm600, %vm601
      %v603 = vsel %vm602, 0, %v516
      %v604 = vsel %vm602, 0, %v523
      %v605 = vsel %vm602, 0, %v530
      %v606 = vsel %vm602, 0, %v537
      %v607 = vsel %vm602, 0, %v544
      %v608 = vsel %vm602, 0, %v551
      %v609 = vsel %vm602, 0, %v558
      %v610 = vsel %vm602, 0, %v565
      %v611 = vsel %vm602, 0, %v572
      %v612 = vsel %vm602, 0, %v579
      %v613 = vsel %vm602, %v513, 0
      %v614 = vsel %vm602, %v520, 0
      %v615 = vsel %vm602, %v527, 0
      %v616 = vsel %vm602, %v534, 0
      %v617 = vsel %vm602, %v541, 0
      %v618 = vsel %vm602, %v548, 0
      %v619 = vsel %vm602, %v555, 0
      %v620 = vsel %vm602, %v562, 0
      %v621 = vsel %vm602, %v569, 0
      %v622 = vsel %vm602, %v576, 0
      %vm623 = vsmask.f32 7424
      %v625 = vshrl.u32 %v603, 16
      %v627 = vshll.u32 %v603, 16
      %v629 = vrot.slane %v627, 1
      %v630 = vor.u32 %v625, %v629
      %v632 = vshll.u32 %v613, 16
      %v634 = vrot.slane %v632, 1
      %v635 = vsel %vm623, %v630, %v634
      %v637 = vshrl.u32 %v604, 16
      %v639 = vshll.u32 %v604, 16
      %v641 = vrot.slane %v639, 1
      %v642 = vor.u32 %v637, %v641
      %v644 = vshll.u32 %v614, 16
      %v646 = vrot.slane %v644, 1
      %v647 = vsel %vm623, %v642, %v646
      %v649 = vshrl.u32 %v605, 16
      %v651 = vshll.u32 %v605, 16
      %v653 = vrot.slane %v651, 1
      %v654 = vor.u32 %v649, %v653
      %v656 = vshll.u32 %v615, 16
      %v658 = vrot.slane %v656, 1
      %v659 = vsel %vm623, %v654, %v658
      %v661 = vshrl.u32 %v606, 16
      %v663 = vshll.u32 %v606, 16
      %v665 = vrot.slane %v663, 1
      %v666 = vor.u32 %v661, %v665
      %v668 = vshll.u32 %v616, 16
      %v670 = vrot.slane %v668, 1
      %v671 = vsel %vm623, %v666, %v670
      %v673 = vshrl.u32 %v607, 16
      %v675 = vshll.u32 %v607, 16
      %v677 = vrot.slane %v675, 1
      %v678 = vor.u32 %v673, %v677
      %v680 = vshll.u32 %v617, 16
      %v682 = vrot.slane %v680, 1
      %v683 = vsel %vm623, %v678, %v682
      %v685 = vshrl.u32 %v608, 16
      %v687 = vshll.u32 %v608, 16
      %v689 = vrot.slane %v687, 1
      %v690 = vor.u32 %v685, %v689
      %v692 = vshll.u32 %v618, 16
      %v694 = vrot.slane %v692, 1
      %v695 = vsel %vm623, %v690, %v694
      %v697 = vshrl.u32 %v609, 16
      %v699 = vshll.u32 %v609, 16
      %v701 = vrot.slane %v699, 1
      %v702 = vor.u32 %v697, %v701
      %v704 = vshll.u32 %v619, 16
      %v706 = vrot.slane %v704, 1
      %v707 = vsel %vm623, %v702, %v706
      %v709 = vshrl.u32 %v610, 16
      %v711 = vshll.u32 %v610, 16
      %v713 = vrot.slane %v711, 1
      %v714 = vor.u32 %v709, %v713
      %v716 = vshll.u32 %v620, 16
      %v718 = vrot.slane %v716, 1
      %v719 = vsel %vm623, %v714, %v718
      %vm736 = vcmask 1046528
      %v737 = vrot.slane %v603, 1
      %v738 = vrot.slane %v613, 1
      %v739 = vsel %vm736, %v737, %v738
      %v740 = vrot.slane %v604, 1
      %v741 = vrot.slane %v614, 1
      %v742 = vsel %vm736, %v740, %v741
      %v743 = vrot.slane %v605, 1
      %v744 = vrot.slane %v615, 1
      %v745 = vsel %vm736, %v743, %v744
      %v746 = vrot.slane %v606, 1
      %v747 = vrot.slane %v616, 1
      %v748 = vsel %vm736, %v746, %v747
      %v749 = vrot.slane %v607, 1
      %v750 = vrot.slane %v617, 1
      %v751 = vsel %vm736, %v749, %v750
      %v752 = vrot.slane %v608, 1
      %v753 = vrot.slane %v618, 1
      %v754 = vsel %vm736, %v752, %v753
      %v755 = vrot.slane %v609, 1
      %v756 = vrot.slane %v619, 1
      %v757 = vsel %vm736, %v755, %v756
      %v758 = vrot.slane %v610, 1
      %v759 = vrot.slane %v620, 1
      %v760 = vsel %vm736, %v758, %v759
      %v762 = vshrl.u32 %v611, 16
      %v764 = vshll.u32 %v611, 16
      %v766 = vrot.slane %v764, 1
      %v767 = vor.u32 %v762, %v766
      %v769 = vshll.u32 %v621, 16
      %v771 = vrot.slane %v769, 1
      %v772 = vsel %vm623, %v767, %v771
      %v775 = vrot.slane %v611, 1
      %v776 = vrot.slane %v621, 1
      %v777 = vsel %vm736, %v775, %v776
      %v779 = vshrl.u32 %v612, 16
      %v781 = vshll.u32 %v612, 16
      %v783 = vrot.slane %v781, 1
      %v784 = vor.u32 %v779, %v783
      %v786 = vshll.u32 %v622, 16
      %v788 = vrot.slane %v786, 1
      %v789 = vsel %vm623, %v784, %v788
      %v792 = vrot.slane %v612, 1
      %v793 = vrot.slane %v622, 1
      %v794 = vsel %vm736, %v792, %v793
      %795 = vrot.lane.b32.xlu0 %v635, 8
      %v796 = vpop.permute.xlu0 %795
      %797 = vrot.lane.b32.xlu0 %v647, 8
      %v798 = vpop.permute.xlu0 %797
      %799 = vrot.lane.b32.xlu0 %v659, 8
      %v800 = vpop.permute.xlu0 %799
      %801 = vrot.lane.b32.xlu0 %v671, 8
      %v802 = vpop.permute.xlu0 %801
      %803 = vrot.lane.b32.xlu0 %v683, 8
      %v804 = vpop.permute.xlu0 %803
      %805 = vrot.lane.b32.xlu0 %v695, 8
      %v806 = vpop.permute.xlu0 %805
      %807 = vrot.lane.b32.xlu0 %v707, 8
      %v808 = vpop.permute.xlu0 %807
      %809 = vrot.lane.b32.xlu0 %v719, 8
      %v810 = vpop.permute.xlu0 %809
      %811 = vrot.lane.b32.xlu0 %v739, 16
      %v812 = vpop.permute.xlu0 %811
      %813 = vrot.lane.b32.xlu0 %v742, 16
      %v814 = vpop.permute.xlu0 %813
      %815 = vrot.lane.b32.xlu0 %v745, 16
      %v816 = vpop.permute.xlu0 %815
      %817 = vrot.lane.b32.xlu0 %v748, 16
      %v818 = vpop.permute.xlu0 %817
      %819 = vrot.lane.b32.xlu0 %v751, 16
      %v820 = vpop.permute.xlu0 %819
      %821 = vrot.lane.b32.xlu0 %v754, 16
      %v822 = vpop.permute.xlu0 %821
      %823 = vrot.lane.b32.xlu0 %v757, 16
      %v824 = vpop.permute.xlu0 %823
      %825 = vrot.lane.b32.xlu0 %v760, 16
      %v826 = vpop.permute.xlu0 %825
      %827 = vrot.lane.b32.xlu0 %v604, 24
      %v828 = vpop.permute.xlu0 %827
      %829 = vrot.lane.b32.xlu0 %v605, 24
      %v830 = vpop.permute.xlu0 %829
      %831 = vrot.lane.b32.xlu0 %v606, 24
      %v832 = vpop.permute.xlu0 %831
      %833 = vrot.lane.b32.xlu0 %v607, 24
      %v834 = vpop.permute.xlu0 %833
      %835 = vrot.lane.b32.xlu0 %v608, 24
      %v836 = vpop.permute.xlu0 %835
      %837 = vrot.lane.b32.xlu0 %v609, 24
      %v838 = vpop.permute.xlu0 %837
      %839 = vrot.lane.b32.xlu0 %v610, 24
      %v840 = vpop.permute.xlu0 %839
      %841 = vrot.lane.b32.xlu0 %v611, 24
      %v842 = vpop.permute.xlu0 %841
      %843 = vrot.lane.b32.xlu0 %v647, 32
      %v844 = vpop.permute.xlu0 %843
      %845 = vrot.lane.b32.xlu0 %v659, 32
      %v846 = vpop.permute.xlu0 %845
      %847 = vrot.lane.b32.xlu0 %v671, 32
      %v848 = vpop.permute.xlu0 %847
      %849 = vrot.lane.b32.xlu0 %v683, 32
      %v850 = vpop.permute.xlu0 %849
      %851 = vrot.lane.b32.xlu0 %v695, 32
      %v852 = vpop.permute.xlu0 %851
      %853 = vrot.lane.b32.xlu0 %v707, 32
      %v854 = vpop.permute.xlu0 %853
      %855 = vrot.lane.b32.xlu0 %v719, 32
      %v856 = vpop.permute.xlu0 %855
      %857 = vrot.lane.b32.xlu0 %v772, 32
      %v858 = vpop.permute.xlu0 %857
      %859 = vrot.lane.b32.xlu0 %v742, 40
      %v860 = vpop.permute.xlu0 %859
      %861 = vrot.lane.b32.xlu0 %v745, 40
      %v862 = vpop.permute.xlu0 %861
      %863 = vrot.lane.b32.xlu0 %v748, 40
      %v864 = vpop.permute.xlu0 %863
      %865 = vrot.lane.b32.xlu0 %v751, 40
      %v866 = vpop.permute.xlu0 %865
      %867 = vrot.lane.b32.xlu0 %v754, 40
      %v868 = vpop.permute.xlu0 %867
      %869 = vrot.lane.b32.xlu0 %v757, 40
      %v870 = vpop.permute.xlu0 %869
      %871 = vrot.lane.b32.xlu0 %v760, 40
      %v872 = vpop.permute.xlu0 %871
      %873 = vrot.lane.b32.xlu0 %v777, 40
      %v874 = vpop.permute.xlu0 %873
      %875 = vrot.lane.b32.xlu0 %v605, 48
      %v876 = vpop.permute.xlu0 %875
      %877 = vrot.lane.b32.xlu0 %v606, 48
      %v878 = vpop.permute.xlu0 %877
      %879 = vrot.lane.b32.xlu0 %v607, 48
      %v880 = vpop.permute.xlu0 %879
      %881 = vrot.lane.b32.xlu0 %v608, 48
      %v882 = vpop.permute.xlu0 %881
      %883 = vrot.lane.b32.xlu0 %v609, 48
      %v884 = vpop.permute.xlu0 %883
      %885 = vrot.lane.b32.xlu0 %v610, 48
      %v886 = vpop.permute.xlu0 %885
      %887 = vrot.lane.b32.xlu0 %v611, 48
      %v888 = vpop.permute.xlu0 %887
      %889 = vrot.lane.b32.xlu0 %v612, 48
      %v890 = vpop.permute.xlu0 %889
      %891 = vrot.lane.b32.xlu0 %v659, 56
      %v892 = vpop.permute.xlu0 %891
      %893 = vrot.lane.b32.xlu0 %v671, 56
      %v894 = vpop.permute.xlu0 %893
      %895 = vrot.lane.b32.xlu0 %v683, 56
      %v896 = vpop.permute.xlu0 %895
      %897 = vrot.lane.b32.xlu0 %v695, 56
      %v898 = vpop.permute.xlu0 %897
      %899 = vrot.lane.b32.xlu0 %v707, 56
      %v900 = vpop.permute.xlu0 %899
      %901 = vrot.lane.b32.xlu0 %v719, 56
      %v902 = vpop.permute.xlu0 %901
      %903 = vrot.lane.b32.xlu0 %v772, 56
      %v904 = vpop.permute.xlu0 %903
      %905 = vrot.lane.b32.xlu0 %v789, 56
      %v906 = vpop.permute.xlu0 %905
      %907 = vrot.lane.b32.xlu0 %v745, 64
      %v908 = vpop.permute.xlu0 %907
      %909 = vrot.lane.b32.xlu0 %v748, 64
      %v910 = vpop.permute.xlu0 %909
      %911 = vrot.lane.b32.xlu0 %v751, 64
      %v912 = vpop.permute.xlu0 %911
      %913 = vrot.lane.b32.xlu0 %v754, 64
      %v914 = vpop.permute.xlu0 %913
      %915 = vrot.lane.b32.xlu0 %v757, 64
      %v916 = vpop.permute.xlu0 %915
      %917 = vrot.lane.b32.xlu0 %v760, 64
      %v918 = vpop.permute.xlu0 %917
      %919 = vrot.lane.b32.xlu0 %v777, 64
      %v920 = vpop.permute.xlu0 %919
      %921 = vrot.lane.b32.xlu0 %v794, 64
      %v922 = vpop.permute.xlu0 %921
      %vm923 = vcmask 64512
      %v925 = vsel %vm923, %v603, %v796
      %v927 = vsel %vm923, %v604, %v798
      %v929 = vsel %vm923, %v605, %v800
      %v931 = vsel %vm923, %v606, %v802
      %v933 = vsel %vm923, %v607, %v804
      %v935 = vsel %vm923, %v608, %v806
      %v937 = vsel %vm923, %v609, %v808
      %v939 = vsel %vm923, %v610, %v810
      %vm940 = vcmask 130048
      %v942 = vsel %vm940, %v925, %v812
      %v944 = vsel %vm940, %v927, %v814
      %v946 = vsel %vm940, %v929, %v816
      %v948 = vsel %vm940, %v931, %v818
      %v950 = vsel %vm940, %v933, %v820
      %v952 = vsel %vm940, %v935, %v822
      %v954 = vsel %vm940, %v937, %v824
      %v956 = vsel %vm940, %v939, %v826
      %vm957 = vcmask 195584
      %v959 = vsel %vm957, %v942, %v828
      %v961 = vsel %vm957, %v944, %v830
      %v963 = vsel %vm957, %v946, %v832
      %v965 = vsel %vm957, %v948, %v834
      %v967 = vsel %vm957, %v950, %v836
      %v969 = vsel %vm957, %v952, %v838
      %v971 = vsel %vm957, %v954, %v840
      %v973 = vsel %vm957, %v956, %v842
      %vm974 = vcmask 261120
      %v976 = vsel %vm974, %v959, %v844
      %v978 = vsel %vm974, %v961, %v846
      %v980 = vsel %vm974, %v963, %v848
      %v982 = vsel %vm974, %v965, %v850
      %v984 = vsel %vm974, %v967, %v852
      %v986 = vsel %vm974, %v969, %v854
      %v988 = vsel %vm974, %v971, %v856
      %v990 = vsel %vm974, %v973, %v858
      %vm991 = vcmask 326656
      %v993 = vsel %vm991, %v976, %v860
      %v995 = vsel %vm991, %v978, %v862
      %v997 = vsel %vm991, %v980, %v864
      %v999 = vsel %vm991, %v982, %v866
      %v1001 = vsel %vm991, %v984, %v868
      %v1003 = vsel %vm991, %v986, %v870
      %v1005 = vsel %vm991, %v988, %v872
      %v1007 = vsel %vm991, %v990, %v874
      %vm1008 = vcmask 392192
      %v1010 = vsel %vm1008, %v993, %v876
      %v1012 = vsel %vm1008, %v995, %v878
      %v1014 = vsel %vm1008, %v997, %v880
      %v1016 = vsel %vm1008, %v999, %v882
      %v1018 = vsel %vm1008, %v1001, %v884
      %v1020 = vsel %vm1008, %v1003, %v886
      %v1022 = vsel %vm1008, %v1005, %v888
      %v1024 = vsel %vm1008, %v1007, %v890
      %vm1025 = vcmask 457728
      %v1027 = vsel %vm1025, %v1010, %v892
      %v1029 = vsel %vm1025, %v1012, %v894
      %v1031 = vsel %vm1025, %v1014, %v896
      %v1033 = vsel %vm1025, %v1016, %v898
      %v1035 = vsel %vm1025, %v1018, %v900
      %v1037 = vsel %vm1025, %v1020, %v902
      %v1039 = vsel %vm1025, %v1022, %v904
      %v1041 = vsel %vm1025, %v1024, %v906
      %vm1042 = vcmask 523264
      %v1044 = vsel %vm1042, %v1027, %v908
      %v1046 = vsel %vm1042, %v1029, %v910
      %v1048 = vsel %vm1042, %v1031, %v912
      %v1050 = vsel %vm1042, %v1033, %v914
      %v1052 = vsel %vm1042, %v1035, %v916
      %v1054 = vsel %vm1042, %v1037, %v918
      %v1056 = vsel %vm1042, %v1039, %v920
      %v1058 = vsel %vm1042, %v1041, %v922
      %v1059 = vld [vmem:[%s3] sm:$0xf]
      %v1060 = vld [vmem:[%s3 + $0x4] sm:$0xf]
      %v1061 = vld [vmem:[%s3 + $0x8] sm:$0xf]
      %v1062 = vld [vmem:[%s3 + $0xc] sm:$0xf]
      %v1063 = vld [vmem:[%s3 + $0x10] sm:$0xf]
      %v1064 = vld [vmem:[%s3 + $0x14] sm:$0xf]
      %v1065 = vld [vmem:[%s3 + $0x18] sm:$0xf]
      %v1066 = vld [vmem:[%s3 + $0x1c] sm:$0xf]
      %v1067 = vld [vmem:[%s3 + $0x20] sm:$0xf]
      %v1077 = vunpack.c.l.b16 %v1059
      %v1078 = vunpack.c.l.b16 %v1060
      %v1079 = vunpack.c.l.b16 %v1061
      %v1080 = vunpack.c.l.b16 %v1062
      %v1081 = vunpack.c.l.b16 %v1063
      %v1082 = vunpack.c.l.b16 %v1064
      %v1083 = vunpack.c.l.b16 %v1065
      %v1084 = vunpack.c.l.b16 %v1066
      %v1085 = vunpack.c.l.b16 %v1067
      %v1086 = vpack.c.b16 %v1078, %v1077
      %v1087 = vpack.c.b16 %v1080, %v1079
      %v1088 = vpack.c.b16 %v1082, %v1081
      %v1089 = vpack.c.b16 %v1084, %v1083
      %v1090 = vpack.c.b16 %v1085, %v1085
      %vm1095 = vcmask 588800
      %v1096 = vsel %vm1095, %v1044, 0
      %v1098 = vsel %vm1095, %v1046, 0
      %v1100 = vsel %vm1095, %v1048, 0
      %v1102 = vsel %vm1095, %v1050, 0
      %v1104 = vsel %vm1095, %v1052, 0
      %v1106 = vsel %vm1095, %v1054, 0
      %v1108 = vsel %vm1095, %v1056, 0
      %v1110 = vsel %vm1095, %v1058, 0
      %vm1112 = vcmask 1043456
      %v1114 = vsel %vm1112, %v1090, 0
      %1116 = vmatpush.bf16.msra.mxu0 0
      %1117 = vmatpush.bf16.msra.mxu0 0
      %1118 = vmatpush.bf16.msra.mxu0 0
      %1119 = vmatpush.bf16.msra.mxu0 %v1114
      %1120 = vmatpush.bf16.msra.mxu0 %v1089
      %1121 = vmatpush.bf16.msra.mxu0 %v1088
      %1122 = vmatpush.bf16.msra.mxu0 %v1087
      %1123 = vmatpush.bf16.msra.mxu0 %v1086
      %1124 = vmatmul.bf16.gmra.mxu0 %v1096
      %v1125 = vpop.f32.mrf.mxu0
      %v1126 = vadd.f32 0.0, %v1125
      %v1127 = vpop.f32.mrf.mxu0
      %v1128 = vadd.f32 0.0, %v1127
      %1129 = vmatmul.bf16.gmra.mxu0 %v1098
      %v1130 = vpop.f32.mrf.mxu0
      %v1131 = vadd.f32 0.0, %v1130
      %v1132 = vpop.f32.mrf.mxu0
      %v1133 = vadd.f32 0.0, %v1132
      %1134 = vmatmul.bf16.gmra.mxu0 %v1100
      %v1135 = vpop.f32.mrf.mxu0
      %v1136 = vadd.f32 0.0, %v1135
      %v1137 = vpop.f32.mrf.mxu0
      %v1138 = vadd.f32 0.0, %v1137
      %1139 = vmatmul.bf16.gmra.mxu0 %v1102
      %v1140 = vpop.f32.mrf.mxu0
      %v1141 = vadd.f32 0.0, %v1140
      %v1142 = vpop.f32.mrf.mxu0
      %v1143 = vadd.f32 0.0, %v1142
      %1144 = vmatmul.bf16.gmra.mxu0 %v1104
      %v1145 = vpop.f32.mrf.mxu0
      %v1146 = vadd.f32 0.0, %v1145
      %v1147 = vpop.f32.mrf.mxu0
      %v1148 = vadd.f32 0.0, %v1147
      %1149 = vmatmul.bf16.gmra.mxu0 %v1106
      %v1150 = vpop.f32.mrf.mxu0
      %v1151 = vadd.f32 0.0, %v1150
      %v1152 = vpop.f32.mrf.mxu0
      %v1153 = vadd.f32 0.0, %v1152
      %1154 = vmatmul.bf16.gmra.mxu0 %v1108
      %v1155 = vpop.f32.mrf.mxu0
      %v1156 = vadd.f32 0.0, %v1155
      %v1157 = vpop.f32.mrf.mxu0
      %v1158 = vadd.f32 0.0, %v1157
      %1159 = vmatmul.bf16.gmra.mxu0 %v1110
      %v1160 = vpop.f32.mrf.mxu0
      %v1161 = vadd.f32 0.0, %v1160
      %v1162 = vpop.f32.mrf.mxu0
      %v1163 = vadd.f32 0.0, %v1162
      %1164 = vdwg.mxu0
      %v1165 = vld [vmem:[%s4] sm:$0x3]
      %v1166 = vperm.slane %v1165, 0
      %v1167 = vmul.f32 %v1126, %v1166
      %v1168 = vmul.f32 %v1128, %v1166
      %v1169 = vmul.f32 %v1131, %v1166
      %v1170 = vmul.f32 %v1133, %v1166
      %v1171 = vmul.f32 %v1136, %v1166
      %v1172 = vmul.f32 %v1138, %v1166
      %v1173 = vmul.f32 %v1141, %v1166
      %v1174 = vmul.f32 %v1143, %v1166
      %v1175 = vmul.f32 %v1146, %v1166
      %v1176 = vmul.f32 %v1148, %v1166
      %v1177 = vmul.f32 %v1151, %v1166
      %v1178 = vmul.f32 %v1153, %v1166
      %v1179 = vmul.f32 %v1156, %v1166
      %v1180 = vmul.f32 %v1158, %v1166
      %v1181 = vmul.f32 %v1161, %v1166
      %v1182 = vmul.f32 %v1163, %v1166
      %v1183 = vperm.slane %v1165, 1
      %v1184 = vadd.f32 %v1167, %v1183
      %v1185 = vadd.f32 %v1168, %v1183
      %v1186 = vadd.f32 %v1169, %v1183
      %v1187 = vadd.f32 %v1170, %v1183
      %v1188 = vadd.f32 %v1171, %v1183
      %v1189 = vadd.f32 %v1172, %v1183
      %v1190 = vadd.f32 %v1173, %v1183
      %v1191 = vadd.f32 %v1174, %v1183
      %v1192 = vadd.f32 %v1175, %v1183
      %v1193 = vadd.f32 %v1176, %v1183
      %v1194 = vadd.f32 %v1177, %v1183
      %v1195 = vadd.f32 %v1178, %v1183
      %v1196 = vadd.f32 %v1179, %v1183
      %v1197 = vadd.f32 %v1180, %v1183
      %v1198 = vadd.f32 %v1181, %v1183
      %v1199 = vadd.f32 %v1182, %v1183
      %v1200 = vsub.f32 0.0, %v1184
      %v1201 = vsub.f32 0.0, %v1185
      %v1202 = vsub.f32 0.0, %v1186
      %v1203 = vsub.f32 0.0, %v1187
      %v1204 = vsub.f32 0.0, %v1188
      %v1205 = vsub.f32 0.0, %v1189
      %v1206 = vsub.f32 0.0, %v1190
      %v1207 = vsub.f32 0.0, %v1191
      %v1208 = vsub.f32 0.0, %v1192
      %v1209 = vsub.f32 0.0, %v1193
      %v1210 = vsub.f32 0.0, %v1194
      %v1211 = vsub.f32 0.0, %v1195
      %v1212 = vsub.f32 0.0, %v1196
      %v1213 = vsub.f32 0.0, %v1197
      %v1214 = vsub.f32 0.0, %v1198
      %v1215 = vsub.f32 0.0, %v1199
      %v1216 = vmul.f32 %v1200, 1.442695
      %v1217 = vpow.pop %v1216
      %v1218 = vmul.f32 %v1201, 1.442695
      %v1219 = vpow.pop %v1218
      %v1220 = vmul.f32 %v1202, 1.442695
      %v1221 = vpow.pop %v1220
      %v1222 = vmul.f32 %v1203, 1.442695
      %v1223 = vpow.pop %v1222
      %v1224 = vmul.f32 %v1204, 1.442695
      %v1225 = vpow.pop %v1224
      %v1226 = vmul.f32 %v1205, 1.442695
      %v1227 = vpow.pop %v1226
      %v1228 = vmul.f32 %v1206, 1.442695
      %v1229 = vpow.pop %v1228
      %v1230 = vmul.f32 %v1207, 1.442695
      %v1231 = vpow.pop %v1230
      %v1232 = vmul.f32 %v1208, 1.442695
      %v1233 = vpow.pop %v1232
      %v1234 = vmul.f32 %v1209, 1.442695
      %v1235 = vpow.pop %v1234
      %v1236 = vmul.f32 %v1210, 1.442695
      %v1237 = vpow.pop %v1236
      %v1238 = vmul.f32 %v1211, 1.442695
      %v1239 = vpow.pop %v1238
      %v1240 = vmul.f32 %v1212, 1.442695
      %v1241 = vpow.pop %v1240
      %v1242 = vmul.f32 %v1213, 1.442695
      %v1243 = vpow.pop %v1242
      %v1244 = vmul.f32 %v1214, 1.442695
      %v1245 = vpow.pop %v1244
      %v1246 = vmul.f32 %v1215, 1.442695
      %v1247 = vpow.pop %v1246
      %v1248 = vadd.f32 %v1217, 1.0
      %v1249 = vadd.f32 %v1219, 1.0
      %v1250 = vadd.f32 %v1221, 1.0
      %v1251 = vadd.f32 %v1223, 1.0
      %v1252 = vadd.f32 %v1225, 1.0
      %v1253 = vadd.f32 %v1227, 1.0
      %v1254 = vadd.f32 %v1229, 1.0
      %v1255 = vadd.f32 %v1231, 1.0
      %v1256 = vadd.f32 %v1233, 1.0
      %v1257 = vadd.f32 %v1235, 1.0
      %v1258 = vadd.f32 %v1237, 1.0
      %v1259 = vadd.f32 %v1239, 1.0
      %v1260 = vadd.f32 %v1241, 1.0
      %v1261 = vadd.f32 %v1243, 1.0
      %v1262 = vadd.f32 %v1245, 1.0
      %v1263 = vadd.f32 %v1247, 1.0
      %v1264 = vrcp.pop %v1248
      %v1265 = vrcp.pop %v1249
      %v1266 = vrcp.pop %v1250
      %v1267 = vrcp.pop %v1251
      %v1268 = vrcp.pop %v1252
      %v1269 = vrcp.pop %v1253
      %v1270 = vrcp.pop %v1254
      %v1271 = vrcp.pop %v1255
      %v1272 = vrcp.pop %v1256
      %v1273 = vrcp.pop %v1257
      %v1274 = vrcp.pop %v1258
      %v1275 = vrcp.pop %v1259
      %v1276 = vrcp.pop %v1260
      %v1277 = vrcp.pop %v1261
      %v1278 = vrcp.pop %v1262
      %v1279 = vrcp.pop %v1263
      %v1280 = vmul.f32 %v1184, %v1264
      %v1281 = vmul.f32 %v1185, %v1265
      %v1282 = vmul.f32 %v1186, %v1266
      %v1283 = vmul.f32 %v1187, %v1267
      %v1284 = vmul.f32 %v1188, %v1268
      %v1285 = vmul.f32 %v1189, %v1269
      %v1286 = vmul.f32 %v1190, %v1270
      %v1287 = vmul.f32 %v1191, %v1271
      %v1288 = vmul.f32 %v1192, %v1272
      %v1289 = vmul.f32 %v1193, %v1273
      %v1290 = vmul.f32 %v1194, %v1274
      %v1291 = vmul.f32 %v1195, %v1275
      %v1292 = vmul.f32 %v1196, %v1276
      %v1293 = vmul.f32 %v1197, %v1277
      %v1294 = vmul.f32 %v1198, %v1278
      %v1295 = vmul.f32 %v1199, %v1279
      %v1296 = vpack.c.bf16 %v1280, %v1280
      %v1297 = vpack.c.bf16 %v1281, %v1281
      %v1298 = vpack.c.bf16 %v1282, %v1282
      %v1299 = vpack.c.bf16 %v1283, %v1283
      %v1300 = vpack.c.bf16 %v1284, %v1284
      %v1301 = vpack.c.bf16 %v1285, %v1285
      %v1302 = vpack.c.bf16 %v1286, %v1286
      %v1303 = vpack.c.bf16 %v1287, %v1287
      %v1304 = vpack.c.bf16 %v1288, %v1288
      %v1305 = vpack.c.bf16 %v1289, %v1289
      %v1306 = vpack.c.bf16 %v1290, %v1290
      %v1307 = vpack.c.bf16 %v1291, %v1291
      %v1308 = vpack.c.bf16 %v1292, %v1292
      %v1309 = vpack.c.bf16 %v1293, %v1293
      %v1310 = vpack.c.bf16 %v1294, %v1294
      %v1311 = vpack.c.bf16 %v1295, %v1295
      %vm1312 = vcmask 60416
      %1313 = vst.msk [vmem:[%s389] sm:$0xf] %vm1312, %v1296
      %1314 = vst.msk [vmem:[%s389 + $0x4] sm:$0xf] %vm1312, %v1297
      %1315 = vst.msk [vmem:[%s389 + $0x8] sm:$0xf] %vm1312, %v1298
      %1316 = vst.msk [vmem:[%s389 + $0xc] sm:$0xf] %vm1312, %v1299
      %1317 = vst.msk [vmem:[%s389 + $0x10] sm:$0xf] %vm1312, %v1300
      %1318 = vst.msk [vmem:[%s389 + $0x14] sm:$0xf] %vm1312, %v1301
      %1319 = vst.msk [vmem:[%s389 + $0x18] sm:$0xf] %vm1312, %v1302
      %1320 = vst.msk [vmem:[%s389 + $0x1c] sm:$0xf] %vm1312, %v1303
      %1321 = vst.msk [vmem:[%s389 + $0x20] sm:$0xf] %vm1312, %v1304
      %1322 = vst.msk [vmem:[%s389 + $0x24] sm:$0xf] %vm1312, %v1305
      %1323 = vst.msk [vmem:[%s389 + $0x28] sm:$0xf] %vm1312, %v1306
      %1324 = vst.msk [vmem:[%s389 + $0x2c] sm:$0xf] %vm1312, %v1307
      %1325 = vst.msk [vmem:[%s389 + $0x30] sm:$0xf] %vm1312, %v1308
      %1326 = vst.msk [vmem:[%s389 + $0x34] sm:$0xf] %vm1312, %v1309
      %1327 = vst.msk [vmem:[%s389 + $0x38] sm:$0xf] %vm1312, %v1310
      %1328 = vst.msk [vmem:[%s389 + $0x3c] sm:$0xf] %vm1312, %v1311
      %s1329 = smul.u32 16, %s21
      %p1330 = scmp.lt.s32.totalorder %s20, 1
      %s1331 = scalar_select %p1330, %s20, 1
      %p1332 = scmp.lt.s32.totalorder %s1329, 31
      %s1333 = scalar_select %p1332, %s1329, 31
      %s1334 = smul.addr %s1331, 32
      %s1335 = sadd.s32 %s1333, %s1334
      %s1336 = smul.addr %s1335, 4
      %s1337 = scalar_lea.vmem %s5, %s1336
      // Predicated region
      $region41: #{c2f_cot_attention_forward.9} parent=39 // pred_check
        %p1338 = pneg %p190
      $region42: #{c2f_cot_attention_forward.9} parent=39 // pred_check_branch
        %1340 = sbr.rel (%p1338) target = $region44
      $region43: #{c2f_cot_attention_forward.9} parent=39 // pred_region
        %s1341 = smul.u32 16, %s21
      $region44: #{c2f_cot_attention_forward.9} parent=39 // pred_fallthru
        _
    $region40: #{c2f_cot_attention_forward.9} parent=5 // pred_fallthru
      _
    %p1342 = scmp.le.s32.totalorder 2, %s11
    // Predicated region
    $region45: #{c2f_cot_attention_forward.9} parent=5 // pred_check
      %p1343 = pneg %p1342
    $region46: #{c2f_cot_attention_forward.9} parent=5 // pred_check_branch
      %1345 = sbr.rel (%p1343) target = $region48
    $region47: #{c2f_cot_attention_forward.9} parent=5 // pred_region
      %s1346 = ssub.s32 %s11, 2
      // Predicated region
      $region49: #{c2f_cot_attention_forward.9} parent=47 // pred_check
        %p1347 = pneg %p196
      $region50: #{c2f_cot_attention_forward.9} parent=47 // pred_check_branch
        %1349 = sbr.rel (%p1347) target = $region52
      $region51: #{c2f_cot_attention_forward.9} parent=47 // pred_region
        %s1350 = smul.u32 16, %s23
        %p1351 = scmp.lt.s32.totalorder %s22, 1
        %s1352 = scalar_select %p1351, %s22, 1
        %p1353 = scmp.lt.s32.totalorder %s1350, 31
        %s1354 = scalar_select %p1353, %s1350, 31
        %s1355 = smul.addr %s1352, 32
        %s1356 = sadd.s32 %s1354, %s1355
        %s1357 = smul.addr %s1356, 4
        %s1358 = scalar_lea.vmem %s5, %s1357
      $region52: #{c2f_cot_attention_forward.9} parent=47 // pred_fallthru
        _
    $region48: #{c2f_cot_attention_forward.9} parent=5 // pred_fallthru
      _
  $region6: #{c2f_cot_attention_forward.9} parent=0 // loop_footer
    %s15 = sadd.s32 1, %s11
  $region7: #{c2f_cot_attention_forward.9} parent=0 // loop_footer_branch
    %10 = sbr.rel target = $region3
  $region8: #{c2f_cot_attention_forward.9} parent=0 // loop_exit
    _

// kernel: c2f_cot_attention_forward.8
$region0: #{c2f_cot_attention_forward.8}
  #allocation0 [shape = 'u32[]', space=smem, size = 0x4, offset = 0x4, fixed_abs, tag = 'smem constant byte address 0x4 - core index']
  #allocation1 [shape = 'u32[72,128]{1,0:T(1,128)}', space=vmem, size = 0x9000, scoped, tag = 'internal scratch']
  %s0 = inlined_call_operand.vmem [shape: bf16[512,16], index: 0, kind: input, shape index: {}]
  %s1 = inlined_call_operand.vmem [shape: bf16[16,8], index: 1, kind: input, shape index: {}]
  %s2 = inlined_call_operand.vmem [shape: bf16[16,8], index: 2, kind: input, shape index: {}]
  %s3 = inlined_call_operand.vmem [shape: f32[2,8], index: 3, kind: input, shape index: {}]
  %s4 = inlined_call_operand.vmem [shape: f32[2,8], index: 4, kind: input, shape index: {}]
  %s5 = inlined_call_operand.vmem [shape: bf16[512,8], index: 5, kind: output, shape index: {0}]
  %s6 = inlined_call_operand.vmem [shape: bf16[512,8], index: 6, kind: output, shape index: {1}]
  %7 = xla_tuple %s5, %s6
  %s8 = sld [smem:[#allocation0]]
  $region38: #{c2f_cot_attention_forward.8} parent=0
    _
  %s10 = ssub.s32 1, %s8
  %s11 = scalar_select 0, %s10, %s8
  // Predicated region
  $region2: #{c2f_cot_attention_forward.8} parent=0 // pred_check
    _
  $region3: #{c2f_cot_attention_forward.8} parent=0 // pred_check_branch
    %13 = sbr.rel (0) target = $region5
  $region4: #{c2f_cot_attention_forward.8} parent=0 // pred_region
    _
  $region5: #{c2f_cot_attention_forward.8} parent=0 // pred_fallthru
    _
  // Predicated region
  $region6: #{c2f_cot_attention_forward.8} parent=0 // pred_check
    _
  $region7: #{c2f_cot_attention_forward.8} parent=0 // pred_check_branch
    %15 = sbr.rel (0) target = $region9
  $region8: #{c2f_cot_attention_forward.8} parent=0 // pred_region
    _
  $region9: #{c2f_cot_attention_forward.8} parent=0 // pred_fallthru
    _
  // Predicated region
  $region10: #{c2f_cot_attention_forward.8} parent=0 // pred_check
    _
  $region11: #{c2f_cot_attention_forward.8} parent=0 // pred_check_branch
    %17 = sbr.rel (0) target = $region13
  $region12: #{c2f_cot_attention_forward.8} parent=0 // pred_region
    _
  $region13: #{c2f_cot_attention_forward.8} parent=0 // pred_fallthru
    _
  // Predicated region
  $region14: #{c2f_cot_attention_forward.8} parent=0 // pred_check
    _
  $region15: #{c2f_cot_attention_forward.8} parent=0 // pred_check_branch
    %19 = sbr.rel (0) target = $region17
  $region16: #{c2f_cot_attention_forward.8} parent=0 // pred_region
    _
  $region17: #{c2f_cot_attention_forward.8} parent=0 // pred_fallthru
    _
  // Predicated region
  $region18: #{c2f_cot_attention_forward.8} parent=0 // pred_check
    _
  $region19: #{c2f_cot_attention_forward.8} parent=0 // pred_check_branch
    %21 = sbr.rel (0) target = $region21
  $region20: #{c2f_cot_attention_forward.8} parent=0 // pred_region
    _
  $region21: #{c2f_cot_attention_forward.8} parent=0 // pred_fallthru
    _
  %v23 = vld [vmem:[%s0] sm:$0xf]
  %v24 = vld [vmem:[%s0 + $0x4] sm:$0xf]
  %v25 = vld [vmem:[%s0 + $0x8] sm:$0xf]
  %v26 = vld [vmem:[%s0 + $0xc] sm:$0xf]
  %v27 = vld [vmem:[%s0 + $0x10] sm:$0xf]
  %v28 = vld [vmem:[%s0 + $0x14] sm:$0xf]
  %v29 = vld [vmem:[%s0 + $0x18] sm:$0xf]
  %v30 = vld [vmem:[%s0 + $0x1c] sm:$0xf]
  %v31 = vld [vmem:[%s0 + $0x20] sm:$0xf]
  %v32 = vld [vmem:[%s0 + $0x24] sm:$0xf]
  %v33 = vld [vmem:[%s0 + $0x28] sm:$0xf]
  %v34 = vld [vmem:[%s0 + $0x2c] sm:$0xf]
  %v35 = vld [vmem:[%s0 + $0x30] sm:$0xf]
  %v36 = vld [vmem:[%s0 + $0x34] sm:$0xf]
  %v37 = vld [vmem:[%s0 + $0x38] sm:$0xf]
  %v38 = vld [vmem:[%s0 + $0x3c] sm:$0xf]
  %v39 = vld [vmem:[%s0 + $0x40] sm:$0xf]
  %v40 = vld [vmem:[%s0 + $0x44] sm:$0xf]
  %v41 = vld [vmem:[%s0 + $0x48] sm:$0xf]
  %v42 = vld [vmem:[%s0 + $0x4c] sm:$0xf]
  %v43 = vld [vmem:[%s0 + $0x50] sm:$0xf]
  %v44 = vld [vmem:[%s0 + $0x54] sm:$0xf]
  %v45 = vld [vmem:[%s0 + $0x58] sm:$0xf]
  %v46 = vld [vmem:[%s0 + $0x5c] sm:$0xf]
  %v47 = vld [vmem:[%s0 + $0x60] sm:$0xf]
  %v48 = vld [vmem:[%s0 + $0x64] sm:$0xf]
  %v49 = vld [vmem:[%s0 + $0x68] sm:$0xf]
  %v50 = vld [vmem:[%s0 + $0x6c] sm:$0xf]
  %v51 = vld [vmem:[%s0 + $0x70] sm:$0xf]
  %v52 = vld [vmem:[%s0 + $0x74] sm:$0xf]
  %v53 = vld [vmem:[%s0 + $0x78] sm:$0xf]
  %v54 = vld [vmem:[%s0 + $0x7c] sm:$0xf]
  %v55 = vld [vmem:[%s0 + $0x80] sm:$0xf]
  %v56 = vld [vmem:[%s0 + $0x84] sm:$0xf]
  %v57 = vld [vmem:[%s0 + $0x88] sm:$0xf]
  %v58 = vld [vmem:[%s0 + $0x8c] sm:$0xf]
  %v59 = vld [vmem:[%s0 + $0x90] sm:$0xf]
  %v60 = vld [vmem:[%s0 + $0x94] sm:$0xf]
  %v61 = vld [vmem:[%s0 + $0x98] sm:$0xf]
  %v62 = vld [vmem:[%s0 + $0x9c] sm:$0xf]
  %v63 = vld [vmem:[%s0 + $0xa0] sm:$0xf]
  %v64 = vld [vmem:[%s0 + $0xa4] sm:$0xf]
  %v65 = vld [vmem:[%s0 + $0xa8] sm:$0xf]
  %v66 = vld [vmem:[%s0 + $0xac] sm:$0xf]
  %v67 = vld [vmem:[%s0 + $0xb0] sm:$0xf]
  %v68 = vld [vmem:[%s0 + $0xb4] sm:$0xf]
  %v69 = vld [vmem:[%s0 + $0xb8] sm:$0xf]
  %v70 = vld [vmem:[%s0 + $0xbc] sm:$0xf]
  %v71 = vld [vmem:[%s0 + $0xc0] sm:$0xf]
  %v72 = vld [vmem:[%s0 + $0xc4] sm:$0xf]
  %v73 = vld [vmem:[%s0 + $0xc8] sm:$0xf]
  %v74 = vld [vmem:[%s0 + $0xcc] sm:$0xf]
  %v75 = vld [vmem:[%s0 + $0xd0] sm:$0xf]
  %v76 = vld [vmem:[%s0 + $0xd4] sm:$0xf]
  %v77 = vld [vmem:[%s0 + $0xd8] sm:$0xf]
  %v78 = vld [vmem:[%s0 + $0xdc] sm:$0xf]
  %v79 = vld [vmem:[%s0 + $0xe0] sm:$0xf]
  %v80 = vld [vmem:[%s0 + $0xe4] sm:$0xf]
  %v81 = vld [vmem:[%s0 + $0xe8] sm:$0xf]
  %v82 = vld [vmem:[%s0 + $0xec] sm:$0xf]
  %v83 = vld [vmem:[%s0 + $0xf0] sm:$0xf]
  %v84 = vld [vmem:[%s0 + $0xf4] sm:$0xf]
  %v85 = vld [vmem:[%s0 + $0xf8] sm:$0xf]
  %v86 = vld [vmem:[%s0 + $0xfc] sm:$0xf]
  %v87 = vld [vmem:[%s1] sm:$0xf]
  %v88 = vld [vmem:[%s1 + $0x4] sm:$0xf]
  %v153 = vunpack.c.l.b16 %v23
  %v154 = vunpack.c.l.b16 %v24
  %v155 = vunpack.c.l.b16 %v25
  %v156 = vunpack.c.l.b16 %v26
  %v157 = vunpack.c.l.b16 %v27
  %v158 = vunpack.c.l.b16 %v28
  %v159 = vunpack.c.l.b16 %v29
  %v160 = vunpack.c.l.b16 %v30
  %v161 = vunpack.c.l.b16 %v31
  %v162 = vunpack.c.l.b16 %v32
  %v163 = vunpack.c.l.b16 %v33
  %v164 = vunpack.c.l.b16 %v34
  %v165 = vunpack.c.l.b16 %v35
  %v166 = vunpack.c.l.b16 %v36
  %v167 = vunpack.c.l.b16 %v37
  %v168 = vunpack.c.l.b16 %v38
  %v169 = vunpack.c.l.b16 %v39
  %v170 = vunpack.c.l.b16 %v40
  %v171 = vunpack.c.l.b16 %v41
  %v172 = vunpack.c.l.b16 %v42
  %v173 = vunpack.c.l.b16 %v43
  %v174 = vunpack.c.l.b16 %v44
  %v175 = vunpack.c.l.b16 %v45
  %v176 = vunpack.c.l.b16 %v46
  %v177 = vunpack.c.l.b16 %v47
  %v178 = vunpack.c.l.b16 %v48
  %v179 = vunpack.c.l.b16 %v49
  %v180 = vunpack.c.l.b16 %v50
  %v181 = vunpack.c.l.b16 %v51
  %v182 = vunpack.c.l.b16 %v52
  %v183 = vunpack.c.l.b16 %v53
  %v184 = vunpack.c.l.b16 %v54
  %v185 = vunpack.c.l.b16 %v55
  %v186 = vunpack.c.l.b16 %v56
  %v187 = vunpack.c.l.b16 %v57
  %v188 = vunpack.c.l.b16 %v58
  %v189 = vunpack.c.l.b16 %v59
  %v190 = vunpack.c.l.b16 %v60
  %v191 = vunpack.c.l.b16 %v61
  %v192 = vunpack.c.l.b16 %v62
  %v193 = vunpack.c.l.b16 %v63
  %v194 = vunpack.c.l.b16 %v64
  %v195 = vunpack.c.l.b16 %v65
  %v196 = vunpack.c.l.b16 %v66
  %v197 = vunpack.c.l.b16 %v67
  %v198 = vunpack.c.l.b16 %v68
  %v199 = vunpack.c.l.b16 %v69
  %v200 = vunpack.c.l.b16 %v70
  %v201 = vunpack.c.l.b16 %v71
  %v202 = vunpack.c.l.b16 %v72
  %v203 = vunpack.c.l.b16 %v73
  %v204 = vunpack.c.l.b16 %v74
  %v205 = vunpack.c.l.b16 %v75
  %v206 = vunpack.c.l.b16 %v76
  %v207 = vunpack.c.l.b16 %v77
  %v208 = vunpack.c.l.b16 %v78
  %v209 = vunpack.c.l.b16 %v79
  %v210 = vunpack.c.l.b16 %v80
  %v211 = vunpack.c.l.b16 %v81
  %v212 = vunpack.c.l.b16 %v82
  %v213 = vunpack.c.l.b16 %v83
  %v214 = vunpack.c.l.b16 %v84
  %v215 = vunpack.c.l.b16 %v85
  %v216 = vunpack.c.l.b16 %v86
  %v217 = vpack.c.b16 %v154, %v153
  %v218 = vpack.c.b16 %v156, %v155
  %v219 = vpack.c.b16 %v158, %v157
  %v220 = vpack.c.b16 %v160, %v159
  %v221 = vpack.c.b16 %v162, %v161
  %v222 = vpack.c.b16 %v164, %v163
  %v223 = vpack.c.b16 %v166, %v165
  %v224 = vpack.c.b16 %v168, %v167
  %v225 = vpack.c.b16 %v170, %v169
  %v226 = vpack.c.b16 %v172, %v171
  %v227 = vpack.c.b16 %v174, %v173
  %v228 = vpack.c.b16 %v176, %v175
  %v229 = vpack.c.b16 %v178, %v177
  %v230 = vpack.c.b16 %v180, %v179
  %v231 = vpack.c.b16 %v182, %v181
  %v232 = vpack.c.b16 %v184, %v183
  %v233 = vpack.c.b16 %v186, %v185
  %v234 = vpack.c.b16 %v188, %v187
  %v235 = vpack.c.b16 %v190, %v189
  %v236 = vpack.c.b16 %v192, %v191
  %v237 = vpack.c.b16 %v194, %v193
  %v238 = vpack.c.b16 %v196, %v195
  %v239 = vpack.c.b16 %v198, %v197
  %v240 = vpack.c.b16 %v200, %v199
  %v241 = vpack.c.b16 %v202, %v201
  %v242 = vpack.c.b16 %v204, %v203
  %v243 = vpack.c.b16 %v206, %v205
  %v244 = vpack.c.b16 %v208, %v207
  %v245 = vpack.c.b16 %v210, %v209
  %v246 = vpack.c.b16 %v212, %v211
  %v247 = vpack.c.b16 %v214, %v213
  %v248 = vpack.c.b16 %v216, %v215
  %v251 = vunpack.c.l.b16 %v87
  %v252 = vunpack.c.l.b16 %v88
  %v253 = vpack.c.b16 %v252, %v251
  %vm255 = vcmask 130048
  %v257 = vsel %vm255, %v217, 0
  %v260 = vsel %vm255, %v218, 0
  %v263 = vsel %vm255, %v219, 0
  %v266 = vsel %vm255, %v220, 0
  %v269 = vsel %vm255, %v221, 0
  %v272 = vsel %vm255, %v222, 0
  %v275 = vsel %vm255, %v223, 0
  %v278 = vsel %vm255, %v224, 0
  %v281 = vsel %vm255, %v225, 0
  %v284 = vsel %vm255, %v226, 0
  %v287 = vsel %vm255, %v227, 0
  %v290 = vsel %vm255, %v228, 0
  %v293 = vsel %vm255, %v229, 0
  %v296 = vsel %vm255, %v230, 0
  %v299 = vsel %vm255, %v231, 0
  %v302 = vsel %vm255, %v232, 0
  %v305 = vsel %vm255, %v233, 0
  %v308 = vsel %vm255, %v234, 0
  %v311 = vsel %vm255, %v235, 0
  %v314 = vsel %vm255, %v236, 0
  %v317 = vsel %vm255, %v237, 0
  %v320 = vsel %vm255, %v238, 0
  %v323 = vsel %vm255, %v239, 0
  %v326 = vsel %vm255, %v240, 0
  %v329 = vsel %vm255, %v241, 0
  %v332 = vsel %vm255, %v242, 0
  %v335 = vsel %vm255, %v243, 0
  %v338 = vsel %vm255, %v244, 0
  %v341 = vsel %vm255, %v245, 0
  %v344 = vsel %vm255, %v246, 0
  %v347 = vsel %vm255, %v247, 0
  %v350 = vsel %vm255, %v248, 0
  %352 = vmatpush.bf16.msra.mxu0 0
  %353 = vmatpush.bf16.msra.mxu0 0
  %354 = vmatpush.bf16.msra.mxu0 0
  %355 = vmatpush.bf16.msra.mxu0 0
  %356 = vmatpush.bf16.msra.mxu0 0
  %357 = vmatpush.bf16.msra.mxu0 0
  %358 = vmatpush.bf16.msra.mxu0 0
  %359 = vmatpush.bf16.msra.mxu0 %v253
  %360 = vmatmul.bf16.gmra.mxu0 %v257
  %v361 = vpop.f32.mrf.mxu0
  %v362 = vadd.f32 0.0, %v361
  %v363 = vpop.f32.mrf.mxu0
  %v364 = vadd.f32 0.0, %v363
  %365 = vmatmul.bf16.gmra.mxu0 %v260
  %v366 = vpop.f32.mrf.mxu0
  %v367 = vadd.f32 0.0, %v366
  %v368 = vpop.f32.mrf.mxu0
  %v369 = vadd.f32 0.0, %v368
  %370 = vmatmul.bf16.gmra.mxu0 %v263
  %v371 = vpop.f32.mrf.mxu0
  %v372 = vadd.f32 0.0, %v371
  %v373 = vpop.f32.mrf.mxu0
  %v374 = vadd.f32 0.0, %v373
  %375 = vmatmul.bf16.gmra.mxu0 %v266
  %v376 = vpop.f32.mrf.mxu0
  %v377 = vadd.f32 0.0, %v376
  %v378 = vpop.f32.mrf.mxu0
  %v379 = vadd.f32 0.0, %v378
  %380 = vmatmul.bf16.gmra.mxu0 %v269
  %v381 = vpop.f32.mrf.mxu0
  %v382 = vadd.f32 0.0, %v381
  %v383 = vpop.f32.mrf.mxu0
  %v384 = vadd.f32 0.0, %v383
  %385 = vmatmul.bf16.gmra.mxu0 %v272
  %v386 = vpop.f32.mrf.mxu0
  %v387 = vadd.f32 0.0, %v386
  %v388 = vpop.f32.mrf.mxu0
  %v389 = vadd.f32 0.0, %v388
  %390 = vmatmul.bf16.gmra.mxu0 %v275
  %v391 = vpop.f32.mrf.mxu0
  %v392 = vadd.f32 0.0, %v391
  %v393 = vpop.f32.mrf.mxu0
  %v394 = vadd.f32 0.0, %v393
  %395 = vmatmul.bf16.gmra.mxu0 %v278
  %v396 = vpop.f32.mrf.mxu0
  %v397 = vadd.f32 0.0, %v396
  %v398 = vpop.f32.mrf.mxu0
  %v399 = vadd.f32 0.0, %v398
  %400 = vmatmul.bf16.gmra.mxu0 %v281
  %v401 = vpop.f32.mrf.mxu0
  %v402 = vadd.f32 0.0, %v401
  %v403 = vpop.f32.mrf.mxu0
  %v404 = vadd.f32 0.0, %v403
  %405 = vmatmul.bf16.gmra.mxu0 %v284
  %v406 = vpop.f32.mrf.mxu0
  %v407 = vadd.f32 0.0, %v406
  %v408 = vpop.f32.mrf.mxu0
  %v409 = vadd.f32 0.0, %v408
  %410 = vmatmul.bf16.gmra.mxu0 %v287
  %v411 = vpop.f32.mrf.mxu0
  %v412 = vadd.f32 0.0, %v411
  %v413 = vpop.f32.mrf.mxu0
  %v414 = vadd.f32 0.0, %v413
  %415 = vmatmul.bf16.gmra.mxu0 %v290
  %v416 = vpop.f32.mrf.mxu0
  %v417 = vadd.f32 0.0, %v416
  %v418 = vpop.f32.mrf.mxu0
  %v419 = vadd.f32 0.0, %v418
  %420 = vmatmul.bf16.gmra.mxu0 %v293
  %v421 = vpop.f32.mrf.mxu0
  %v422 = vadd.f32 0.0, %v421
  %v423 = vpop.f32.mrf.mxu0
  %v424 = vadd.f32 0.0, %v423
  %425 = vmatmul.bf16.gmra.mxu0 %v296
  %v426 = vpop.f32.mrf.mxu0
  %v427 = vadd.f32 0.0, %v426
  %v428 = vpop.f32.mrf.mxu0
  %v429 = vadd.f32 0.0, %v428
  %430 = vmatmul.bf16.gmra.mxu0 %v299
  %v431 = vpop.f32.mrf.mxu0
  %v432 = vadd.f32 0.0, %v431
  %v433 = vpop.f32.mrf.mxu0
  %v434 = vadd.f32 0.0, %v433
  %435 = vmatmul.bf16.gmra.mxu0 %v302
  %v436 = vpop.f32.mrf.mxu0
  %v437 = vadd.f32 0.0, %v436
  %v438 = vpop.f32.mrf.mxu0
  %v439 = vadd.f32 0.0, %v438
  %440 = vmatmul.bf16.gmra.mxu0 %v305
  %v441 = vpop.f32.mrf.mxu0
  %v442 = vadd.f32 0.0, %v441
  %v443 = vpop.f32.mrf.mxu0
  %v444 = vadd.f32 0.0, %v443
  %445 = vmatmul.bf16.gmra.mxu0 %v308
  %v446 = vpop.f32.mrf.mxu0
  %v447 = vadd.f32 0.0, %v446
  %v448 = vpop.f32.mrf.mxu0
  %v449 = vadd.f32 0.0, %v448
  %450 = vmatmul.bf16.gmra.mxu0 %v311
  %v451 = vpop.f32.mrf.mxu0
  %v452 = vadd.f32 0.0, %v451
  %v453 = vpop.f32.mrf.mxu0
  %v454 = vadd.f32 0.0, %v453
  %455 = vmatmul.bf16.gmra.mxu0 %v314
  %v456 = vpop.f32.mrf.mxu0
  %v457 = vadd.f32 0.0, %v456
  %v458 = vpop.f32.mrf.mxu0
  %v459 = vadd.f32 0.0, %v458
  %460 = vmatmul.bf16.gmra.mxu0 %v317
  %v461 = vpop.f32.mrf.mxu0
  %v462 = vadd.f32 0.0, %v461
  %v463 = vpop.f32.mrf.mxu0
  %v464 = vadd.f32 0.0, %v463
  %465 = vmatmul.bf16.gmra.mxu0 %v320
  %v466 = vpop.f32.mrf.mxu0
  %v467 = vadd.f32 0.0, %v466
  %v468 = vpop.f32.mrf.mxu0
  %v469 = vadd.f32 0.0, %v468
  %470 = vmatmul.bf16.gmra.mxu0 %v323
  %v471 = vpop.f32.mrf.mxu0
  %v472 = vadd.f32 0.0, %v471
  %v473 = vpop.f32.mrf.mxu0
  %v474 = vadd.f32 0.0, %v473
  %475 = vmatmul.bf16.gmra.mxu0 %v326
  %v476 = vpop.f32.mrf.mxu0
  %v477 = vadd.f32 0.0, %v476
  %v478 = vpop.f32.mrf.mxu0
  %v479 = vadd.f32 0.0, %v478
  %480 = vmatmul.bf16.gmra.mxu0 %v329
  %v481 = vpop.f32.mrf.mxu0
  %v482 = vadd.f32 0.0, %v481
  %v483 = vpop.f32.mrf.mxu0
  %v484 = vadd.f32 0.0, %v483
  %485 = vmatmul.bf16.gmra.mxu0 %v332
  %v486 = vpop.f32.mrf.mxu0
  %v487 = vadd.f32 0.0, %v486
  %v488 = vpop.f32.mrf.mxu0
  %v489 = vadd.f32 0.0, %v488
  %490 = vmatmul.bf16.gmra.mxu0 %v335
  %v491 = vpop.f32.mrf.mxu0
  %v492 = vadd.f32 0.0, %v491
  %v493 = vpop.f32.mrf.mxu0
  %v494 = vadd.f32 0.0, %v493
  %495 = vmatmul.bf16.gmra.mxu0 %v338
  %v496 = vpop.f32.mrf.mxu0
  %v497 = vadd.f32 0.0, %v496
  %v498 = vpop.f32.mrf.mxu0
  %v499 = vadd.f32 0.0, %v498
  %500 = vmatmul.bf16.gmra.mxu0 %v341
  %v501 = vpop.f32.mrf.mxu0
  %v502 = vadd.f32 0.0, %v501
  %v503 = vpop.f32.mrf.mxu0
  %v504 = vadd.f32 0.0, %v503
  %505 = vmatmul.bf16.gmra.mxu0 %v344
  %v506 = vpop.f32.mrf.mxu0
  %v507 = vadd.f32 0.0, %v506
  %v508 = vpop.f32.mrf.mxu0
  %v509 = vadd.f32 0.0, %v508
  %510 = vmatmul.bf16.gmra.mxu0 %v347
  %v511 = vpop.f32.mrf.mxu0
  %v512 = vadd.f32 0.0, %v511
  %v513 = vpop.f32.mrf.mxu0
  %v514 = vadd.f32 0.0, %v513
  %515 = vmatmul.bf16.gmra.mxu0 %v350
  %v516 = vpop.f32.mrf.mxu0
  %v517 = vadd.f32 0.0, %v516
  %v518 = vpop.f32.mrf.mxu0
  %v519 = vadd.f32 0.0, %v518
  %520 = vdwg.mxu0
  %v521 = vld [vmem:[%s3] sm:$0x3]
  %v522 = vperm.slane %v521, 0
  %v523 = vmul.f32 %v362, %v522
  %v524 = vmul.f32 %v364, %v522
  %v525 = vmul.f32 %v367, %v522
  %v526 = vmul.f32 %v369, %v522
  %v527 = vmul.f32 %v372, %v522
  %v528 = vmul.f32 %v374, %v522
  %v529 = vmul.f32 %v377, %v522
  %v530 = vmul.f32 %v379, %v522
  %v531 = vmul.f32 %v382, %v522
  %v532 = vmul.f32 %v384, %v522
  %v533 = vmul.f32 %v387, %v522
  %v534 = vmul.f32 %v389, %v522
  %v535 = vmul.f32 %v392, %v522
  %v536 = vmul.f32 %v394, %v522
  %v537 = vmul.f32 %v397, %v522
  %v538 = vmul.f32 %v399, %v522
  %v539 = vmul.f32 %v402, %v522
  %v540 = vmul.f32 %v404, %v522
  %v541 = vmul.f32 %v407, %v522
  %v542 = vmul.f32 %v409, %v522
  %v543 = vmul.f32 %v412, %v522
  %v544 = vmul.f32 %v414, %v522
  %v545 = vmul.f32 %v417, %v522
  %v546 = vmul.f32 %v419, %v522
  %v547 = vmul.f32 %v422, %v522
  %v548 = vmul.f32 %v424, %v522
  %v549 = vmul.f32 %v427, %v522
  %v550 = vmul.f32 %v429, %v522
  %v551 = vmul.f32 %v432, %v522
  %v552 = vmul.f32 %v434, %v522
  %v553 = vmul.f32 %v437, %v522
  %v554 = vmul.f32 %v439, %v522
  %v555 = vmul.f32 %v442, %v522
  %v556 = vmul.f32 %v444, %v522
  %v557 = vmul.f32 %v447, %v522
  %v558 = vmul.f32 %v449, %v522
  %v559 = vmul.f32 %v452, %v522
  %v560 = vmul.f32 %v454, %v522
  %v561 = vmul.f32 %v457, %v522
  %v562 = vmul.f32 %v459, %v522
  %v563 = vmul.f32 %v462, %v522
  %v564 = vmul.f32 %v464, %v522
  %v565 = vmul.f32 %v467, %v522
  %v566 = vmul.f32 %v469, %v522
  %v567 = vmul.f32 %v472, %v522
  %v568 = vmul.f32 %v474, %v522
  %v569 = vmul.f32 %v477, %v522
  %v570 = vmul.f32 %v479, %v522
  %v571 = vmul.f32 %v482, %v522
  %v572 = vmul.f32 %v484, %v522
  %v573 = vmul.f32 %v487, %v522
  %v574 = vmul.f32 %v489, %v522
  %v575 = vmul.f32 %v492, %v522
  %v576 = vmul.f32 %v494, %v522
  %v577 = vmul.f32 %v497, %v522
  %v578 = vmul.f32 %v499, %v522
  %v579 = vmul.f32 %v502, %v522
  %v580 = vmul.f32 %v504, %v522
  %v581 = vmul.f32 %v507, %v522
  %v582 = vmul.f32 %v509, %v522
  %v583 = vmul.f32 %v512, %v522
  %v584 = vmul.f32 %v514, %v522
  %v585 = vmul.f32 %v517, %v522
  %v586 = vmul.f32 %v519, %v522
  %v587 = vperm.slane %v521, 1
  %v588 = vadd.f32 %v523, %v587
  %v589 = vadd.f32 %v524, %v587
  %v590 = vadd.f32 %v525, %v587
  %v591 = vadd.f32 %v526, %v587
  %v592 = vadd.f32 %v527, %v587
  %v593 = vadd.f32 %v528, %v587
  %v594 = vadd.f32 %v529, %v587
  %v595 = vadd.f32 %v530, %v587
  %v596 = vadd.f32 %v531, %v587
  %v597 = vadd.f32 %v532, %v587
  %v598 = vadd.f32 %v533, %v587
  %v599 = vadd.f32 %v534, %v587
  %v600 = vadd.f32 %v535, %v587
  %v601 = vadd.f32 %v536, %v587
  %v602 = vadd.f32 %v537, %v587
  %v603 = vadd.f32 %v538, %v587
  %v604 = vadd.f32 %v539, %v587
  %v605 = vadd.f32 %v540, %v587
  %v606 = vadd.f32 %v541, %v587
  %v607 = vadd.f32 %v542, %v587
  %v608 = vadd.f32 %v543, %v587
  %v609 = vadd.f32 %v544, %v587
  %v610 = vadd.f32 %v545, %v587
  %v611 = vadd.f32 %v546, %v587
  %v612 = vadd.f32 %v547, %v587
  %v613 = vadd.f32 %v548, %v587
  %v614 = vadd.f32 %v549, %v587
  %v615 = vadd.f32 %v550, %v587
  %v616 = vadd.f32 %v551, %v587
  %v617 = vadd.f32 %v552, %v587
  %v618 = vadd.f32 %v553, %v587
  %v619 = vadd.f32 %v554, %v587
  %v620 = vadd.f32 %v555, %v587
  %v621 = vadd.f32 %v556, %v587
  %v622 = vadd.f32 %v557, %v587
  %v623 = vadd.f32 %v558, %v587
  %v624 = vadd.f32 %v559, %v587
  %v625 = vadd.f32 %v560, %v587
  %v626 = vadd.f32 %v561, %v587
  %v627 = vadd.f32 %v562, %v587
  %v628 = vadd.f32 %v563, %v587
  %v629 = vadd.f32 %v564, %v587
  %v630 = vadd.f32 %v565, %v587
  %v631 = vadd.f32 %v566, %v587
  %v632 = vadd.f32 %v567, %v587
  %v633 = vadd.f32 %v568, %v587
  %v634 = vadd.f32 %v569, %v587
  %v635 = vadd.f32 %v570, %v587
  %v636 = vadd.f32 %v571, %v587
  %v637 = vadd.f32 %v572, %v587
  %v638 = vadd.f32 %v573, %v587
  %v639 = vadd.f32 %v574, %v587
  %v640 = vadd.f32 %v575, %v587
  %v641 = vadd.f32 %v576, %v587
  %v642 = vadd.f32 %v577, %v587
  %v643 = vadd.f32 %v578, %v587
  %v644 = vadd.f32 %v579, %v587
  %v645 = vadd.f32 %v580, %v587
  %v646 = vadd.f32 %v581, %v587
  %v647 = vadd.f32 %v582, %v587
  %v648 = vadd.f32 %v583, %v587
  %v649 = vadd.f32 %v584, %v587
  %v650 = vadd.f32 %v585, %v587
  %v651 = vadd.f32 %v586, %v587
  %v652 = vsub.f32 0.0, %v588
  %v653 = vsub.f32 0.0, %v589
  %v654 = vsub.f32 0.0, %v590
  %v655 = vsub.f32 0.0, %v591
  %v656 = vsub.f32 0.0, %v592
  %v657 = vsub.f32 0.0, %v593
  %v658 = vsub.f32 0.0, %v594
  %v659 = vsub.f32 0.0, %v595
  %v660 = vsub.f32 0.0, %v596
  %v661 = vsub.f32 0.0, %v597
  %v662 = vsub.f32 0.0, %v598
  %v663 = vsub.f32 0.0, %v599
  %v664 = vsub.f32 0.0, %v600
  %v665 = vsub.f32 0.0, %v601
  %v666 = vsub.f32 0.0, %v602
  %v667 = vsub.f32 0.0, %v603
  %v668 = vsub.f32 0.0, %v604
  %v669 = vsub.f32 0.0, %v605
  %v670 = vsub.f32 0.0, %v606
  %v671 = vsub.f32 0.0, %v607
  %v672 = vsub.f32 0.0, %v608
  %v673 = vsub.f32 0.0, %v609
  %v674 = vsub.f32 0.0, %v610
  %v675 = vsub.f32 0.0, %v611
  %v676 = vsub.f32 0.0, %v612
  %v677 = vsub.f32 0.0, %v613
  %v678 = vsub.f32 0.0, %v614
  %v679 = vsub.f32 0.0, %v615
  %v680 = vsub.f32 0.0, %v616
  %v681 = vsub.f32 0.0, %v617
  %v682 = vsub.f32 0.0, %v618
  %v683 = vsub.f32 0.0, %v619
  %v684 = vsub.f32 0.0, %v620
  %v685 = vsub.f32 0.0, %v621
  %v686 = vsub.f32 0.0, %v622
  %v687 = vsub.f32 0.0, %v623
  %v688 = vsub.f32 0.0, %v624
  %v689 = vsub.f32 0.0, %v625
  %v690 = vsub.f32 0.0, %v626
  %v691 = vsub.f32 0.0, %v627
  %v692 = vsub.f32 0.0, %v628
  %v693 = vsub.f32 0.0, %v629
  %v694 = vsub.f32 0.0, %v630
  %v695 = vsub.f32 0.0, %v631
  %v696 = vsub.f32 0.0, %v632
  %v697 = vsub.f32 0.0, %v633
  %v698 = vsub.f32 0.0, %v634
  %v699 = vsub.f32 0.0, %v635
  %v700 = vsub.f32 0.0, %v636
  %v701 = vsub.f32 0.0, %v637
  %v702 = vsub.f32 0.0, %v638
  %v703 = vsub.f32 0.0, %v639
  %v704 = vsub.f32 0.0, %v640
  %v705 = vsub.f32 0.0, %v641
  %v706 = vsub.f32 0.0, %v642
  %v707 = vsub.f32 0.0, %v643
  %v708 = vsub.f32 0.0, %v644
  %v709 = vsub.f32 0.0, %v645
  %v710 = vsub.f32 0.0, %v646
  %v711 = vsub.f32 0.0, %v647
  %v712 = vsub.f32 0.0, %v648
  %v713 = vsub.f32 0.0, %v649
  %v714 = vsub.f32 0.0, %v650
  %v715 = vsub.f32 0.0, %v651
  %v716 = vmul.f32 %v652, 1.442695
  %v717 = vpow.pop %v716
  %v718 = vmul.f32 %v653, 1.442695
  %v719 = vpow.pop %v718
  %v720 = vmul.f32 %v654, 1.442695
  %v721 = vpow.pop %v720
  %v722 = vmul.f32 %v655, 1.442695
  %v723 = vpow.pop %v722
  %v724 = vmul.f32 %v656, 1.442695
  %v725 = vpow.pop %v724
  %v726 = vmul.f32 %v657, 1.442695
  %v727 = vpow.pop %v726
  %v728 = vmul.f32 %v658, 1.442695
  %v729 = vpow.pop %v728
  %v730 = vmul.f32 %v659, 1.442695
  %v731 = vpow.pop %v730
  %v732 = vmul.f32 %v660, 1.442695
  %v733 = vpow.pop %v732
  %v734 = vmul.f32 %v661, 1.442695
  %v735 = vpow.pop %v734
  %v736 = vmul.f32 %v662, 1.442695
  %v737 = vpow.pop %v736
  %v738 = vmul.f32 %v663, 1.442695
  %v739 = vpow.pop %v738
  %v740 = vmul.f32 %v664, 1.442695
  %v741 = vpow.pop %v740
  %v742 = vmul.f32 %v665, 1.442695
  %v743 = vpow.pop %v742
  %v744 = vmul.f32 %v666, 1.442695
  %v745 = vpow.pop %v744
  %v746 = vmul.f32 %v667, 1.442695
  %v747 = vpow.pop %v746
  %v748 = vmul.f32 %v668, 1.442695
  %v749 = vpow.pop %v748
  %v750 = vmul.f32 %v669, 1.442695
  %v751 = vpow.pop %v750
  %v752 = vmul.f32 %v670, 1.442695
  %v753 = vpow.pop %v752
  %v754 = vmul.f32 %v671, 1.442695
  %v755 = vpow.pop %v754
  %v756 = vmul.f32 %v672, 1.442695
  %v757 = vpow.pop %v756
  %v758 = vmul.f32 %v673, 1.442695
  %v759 = vpow.pop %v758
  %v760 = vmul.f32 %v674, 1.442695
  %v761 = vpow.pop %v760
  %v762 = vmul.f32 %v675, 1.442695
  %v763 = vpow.pop %v762
  %v764 = vmul.f32 %v676, 1.442695
  %v765 = vpow.pop %v764
  %v766 = vmul.f32 %v677, 1.442695
  %v767 = vpow.pop %v766
  %v768 = vmul.f32 %v678, 1.442695
  %v769 = vpow.pop %v768
  %v770 = vmul.f32 %v679, 1.442695
  %v771 = vpow.pop %v770
  %v772 = vmul.f32 %v680, 1.442695
  %v773 = vpow.pop %v772
  %v774 = vmul.f32 %v681, 1.442695
  %v775 = vpow.pop %v774
  %v776 = vmul.f32 %v682, 1.442695
  %v777 = vpow.pop %v776
  %v778 = vmul.f32 %v683, 1.442695
  %v779 = vpow.pop %v778
  %v780 = vmul.f32 %v684, 1.442695
  %v781 = vpow.pop %v780
  %v782 = vmul.f32 %v685, 1.442695
  %v783 = vpow.pop %v782
  %v784 = vmul.f32 %v686, 1.442695
  %v785 = vpow.pop %v784
  %v786 = vmul.f32 %v687, 1.442695
  %v787 = vpow.pop %v786
  %v788 = vmul.f32 %v688, 1.442695
  %v789 = vpow.pop %v788
  %v790 = vmul.f32 %v689, 1.442695
  %v791 = vpow.pop %v790
  %v792 = vmul.f32 %v690, 1.442695
  %v793 = vpow.pop %v792
  %v794 = vmul.f32 %v691, 1.442695
  %v795 = vpow.pop %v794
  %v796 = vmul.f32 %v692, 1.442695
  %v797 = vpow.pop %v796
  %v798 = vmul.f32 %v693, 1.442695
  %v799 = vpow.pop %v798
  %v800 = vmul.f32 %v694, 1.442695
  %v801 = vpow.pop %v800
  %v802 = vmul.f32 %v695, 1.442695
  %v803 = vpow.pop %v802
  %v804 = vmul.f32 %v696, 1.442695
  %v805 = vpow.pop %v804
  %v806 = vmul.f32 %v697, 1.442695
  %v807 = vpow.pop %v806
  %v808 = vmul.f32 %v698, 1.442695
  %v809 = vpow.pop %v808
  %v810 = vmul.f32 %v699, 1.442695
  %v811 = vpow.pop %v810
  %v812 = vmul.f32 %v700, 1.442695
  %v813 = vpow.pop %v812
  %v814 = vmul.f32 %v701, 1.442695
  %v815 = vpow.pop %v814
  %v816 = vmul.f32 %v702, 1.442695
  %v817 = vpow.pop %v816
  %v818 = vmul.f32 %v703, 1.442695
  %v819 = vpow.pop %v818
  %v820 = vmul.f32 %v704, 1.442695
  %v821 = vpow.pop %v820
  %v822 = vmul.f32 %v705, 1.442695
  %v823 = vpow.pop %v822
  %v824 = vmul.f32 %v706, 1.442695
  %v825 = vpow.pop %v824
  %v826 = vmul.f32 %v707, 1.442695
  %v827 = vpow.pop %v826
  %v828 = vmul.f32 %v708, 1.442695
  %v829 = vpow.pop %v828
  %v830 = vmul.f32 %v709, 1.442695
  %v831 = vpow.pop %v830
  %v832 = vmul.f32 %v710, 1.442695
  %v833 = vpow.pop %v832
  %v834 = vmul.f32 %v711, 1.442695
  %v835 = vpow.pop %v834
  %v836 = vmul.f32 %v712, 1.442695
  %v837 = vpow.pop %v836
  %v838 = vmul.f32 %v713, 1.442695
  %v839 = vpow.pop %v838
  %v840 = vmul.f32 %v714, 1.442695
  %v841 = vpow.pop %v840
  %v842 = vmul.f32 %v715, 1.442695
  %v843 = vpow.pop %v842
  %v844 = vadd.f32 %v717, 1.0
  %v845 = vadd.f32 %v719, 1.0
  %v846 = vadd.f32 %v721, 1.0
  %v847 = vadd.f32 %v723, 1.0
  %v848 = vadd.f32 %v725, 1.0
  %v849 = vadd.f32 %v727, 1.0
  %v850 = vadd.f32 %v729, 1.0
  %v851 = vadd.f32 %v731, 1.0
  %v852 = vadd.f32 %v733, 1.0
  %v853 = vadd.f32 %v735, 1.0
  %v854 = vadd.f32 %v737, 1.0
  %v855 = vadd.f32 %v739, 1.0
  %v856 = vadd.f32 %v741, 1.0
  %v857 = vadd.f32 %v743, 1.0
  %v858 = vadd.f32 %v745, 1.0
  %v859 = vadd.f32 %v747, 1.0
  %v860 = vadd.f32 %v749, 1.0
  %v861 = vadd.f32 %v751, 1.0
  %v862 = vadd.f32 %v753, 1.0
  %v863 = vadd.f32 %v755, 1.0
  %v864 = vadd.f32 %v757, 1.0
  %v865 = vadd.f32 %v759, 1.0
  %v866 = vadd.f32 %v761, 1.0
  %v867 = vadd.f32 %v763, 1.0
  %v868 = vadd.f32 %v765, 1.0
  %v869 = vadd.f32 %v767, 1.0
  %v870 = vadd.f32 %v769, 1.0
  %v871 = vadd.f32 %v771, 1.0
  %v872 = vadd.f32 %v773, 1.0
  %v873 = vadd.f32 %v775, 1.0
  %v874 = vadd.f32 %v777, 1.0
  %v875 = vadd.f32 %v779, 1.0
  %v876 = vadd.f32 %v781, 1.0
  %v877 = vadd.f32 %v783, 1.0
  %v878 = vadd.f32 %v785, 1.0
  %v879 = vadd.f32 %v787, 1.0
  %v880 = vadd.f32 %v789, 1.0
  %v881 = vadd.f32 %v791, 1.0
  %v882 = vadd.f32 %v793, 1.0
  %v883 = vadd.f32 %v795, 1.0
  %v884 = vadd.f32 %v797, 1.0
  %v885 = vadd.f32 %v799, 1.0
  %v886 = vadd.f32 %v801, 1.0
  %v887 = vadd.f32 %v803, 1.0
  %v888 = vadd.f32 %v805, 1.0
  %v889 = vadd.f32 %v807, 1.0
  %v890 = vadd.f32 %v809, 1.0
  %v891 = vadd.f32 %v811, 1.0
  %v892 = vadd.f32 %v813, 1.0
  %v893 = vadd.f32 %v815, 1.0
  %v894 = vadd.f32 %v817, 1.0
  %v895 = vadd.f32 %v819, 1.0
  %v896 = vadd.f32 %v821, 1.0
  %v897 = vadd.f32 %v823, 1.0
  %v898 = vadd.f32 %v825, 1.0
  %v899 = vadd.f32 %v827, 1.0
  %v900 = vadd.f32 %v829, 1.0
  %v901 = vadd.f32 %v831, 1.0
  %v902 = vadd.f32 %v833, 1.0
  %v903 = vadd.f32 %v835, 1.0
  %v904 = vadd.f32 %v837, 1.0
  %v905 = vadd.f32 %v839, 1.0
  %v906 = vadd.f32 %v841, 1.0
  %v907 = vadd.f32 %v843, 1.0
  %v908 = vrcp.pop %v844
  %v909 = vrcp.pop %v845
  %v910 = vrcp.pop %v846
  %v911 = vrcp.pop %v847
  %v912 = vrcp.pop %v848
  %v913 = vrcp.pop %v849
  %v914 = vrcp.pop %v850
  %v915 = vrcp.pop %v851
  %v916 = vrcp.pop %v852
  %v917 = vrcp.pop %v853
  %v918 = vrcp.pop %v854
  %v919 = vrcp.pop %v855
  %v920 = vrcp.pop %v856
  %v921 = vrcp.pop %v857
  %v922 = vrcp.pop %v858
  %v923 = vrcp.pop %v859
  %v924 = vrcp.pop %v860
  %v925 = vrcp.pop %v861
  %v926 = vrcp.pop %v862
  %v927 = vrcp.pop %v863
  %v928 = vrcp.pop %v864
  %v929 = vrcp.pop %v865
  %v930 = vrcp.pop %v866
  %v931 = vrcp.pop %v867
  %v932 = vrcp.pop %v868
  %v933 = vrcp.pop %v869
  %v934 = vrcp.pop %v870
  %v935 = vrcp.pop %v871
  %v936 = vrcp.pop %v872
  %v937 = vrcp.pop %v873
  %v938 = vrcp.pop %v874
  %v939 = vrcp.pop %v875
  %v940 = vrcp.pop %v876
  %v941 = vrcp.pop %v877
  %v942 = vrcp.pop %v878
  %v943 = vrcp.pop %v879
  %v944 = vrcp.pop %v880
  %v945 = vrcp.pop %v881
  %v946 = vrcp.pop %v882
  %v947 = vrcp.pop %v883
  %v948 = vrcp.pop %v884
  %v949 = vrcp.pop %v885
  %v950 = vrcp.pop %v886
  %v951 = vrcp.pop %v887
  %v952 = vrcp.pop %v888
  %v953 = vrcp.pop %v889
  %v954 = vrcp.pop %v890
  %v955 = vrcp.pop %v891
  %v956 = vrcp.pop %v892
  %v957 = vrcp.pop %v893
  %v958 = vrcp.pop %v894
  %v959 = vrcp.pop %v895
  %v960 = vrcp.pop %v896
  %v961 = vrcp.pop %v897
  %v962 = vrcp.pop %v898
  %v963 = vrcp.pop %v899
  %v964 = vrcp.pop %v900
  %v965 = vrcp.pop %v901
  %v966 = vrcp.pop %v902
  %v967 = vrcp.pop %v903
  %v968 = vrcp.pop %v904
  %v969 = vrcp.pop %v905
  %v970 = vrcp.pop %v906
  %v971 = vrcp.pop %v907
  %v972 = vmul.f32 %v588, %v908
  %v973 = vmul.f32 %v589, %v909
  %v974 = vmul.f32 %v590, %v910
  %v975 = vmul.f32 %v591, %v911
  %v976 = vmul.f32 %v592, %v912
  %v977 = vmul.f32 %v593, %v913
  %v978 = vmul.f32 %v594, %v914
  %v979 = vmul.f32 %v595, %v915
  %v980 = vmul.f32 %v596, %v916
  %v981 = vmul.f32 %v597, %v917
  %v982 = vmul.f32 %v598, %v918
  %v983 = vmul.f32 %v599, %v919
  %v984 = vmul.f32 %v600, %v920
  %v985 = vmul.f32 %v601, %v921
  %v986 = vmul.f32 %v602, %v922
  %v987 = vmul.f32 %v603, %v923
  %v988 = vmul.f32 %v604, %v924
  %v989 = vmul.f32 %v605, %v925
  %v990 = vmul.f32 %v606, %v926
  %v991 = vmul.f32 %v607, %v927
  %v992 = vmul.f32 %v608, %v928
  %v993 = vmul.f32 %v609, %v929
  %v994 = vmul.f32 %v610, %v930
  %v995 = vmul.f32 %v611, %v931
  %v996 = vmul.f32 %v612, %v932
  %v997 = vmul.f32 %v613, %v933
  %v998 = vmul.f32 %v614, %v934
  %v999 = vmul.f32 %v615, %v935
  %v1000 = vmul.f32 %v616, %v936
  %v1001 = vmul.f32 %v617, %v937
  %v1002 = vmul.f32 %v618, %v938
  %v1003 = vmul.f32 %v619, %v939
  %v1004 = vmul.f32 %v620, %v940
  %v1005 = vmul.f32 %v621, %v941
  %v1006 = vmul.f32 %v622, %v942
  %v1007 = vmul.f32 %v623, %v943
  %v1008 = vmul.f32 %v624, %v944
  %v1009 = vmul.f32 %v625, %v945
  %v1010 = vmul.f32 %v626, %v946
  %v1011 = vmul.f32 %v627, %v947
  %v1012 = vmul.f32 %v628, %v948
  %v1013 = vmul.f32 %v629, %v949
  %v1014 = vmul.f32 %v630, %v950
  %v1015 = vmul.f32 %v631, %v951
  %v1016 = vmul.f32 %v632, %v952
  %v1017 = vmul.f32 %v633, %v953
  %v1018 = vmul.f32 %v634, %v954
  %v1019 = vmul.f32 %v635, %v955
  %v1020 = vmul.f32 %v636, %v956
  %v1021 = vmul.f32 %v637, %v957
  %v1022 = vmul.f32 %v638, %v958
  %v1023 = vmul.f32 %v639, %v959
  %v1024 = vmul.f32 %v640, %v960
  %v1025 = vmul.f32 %v641, %v961
  %v1026 = vmul.f32 %v642, %v962
  %v1027 = vmul.f32 %v643, %v963
  %v1028 = vmul.f32 %v644, %v964
  %v1029 = vmul.f32 %v645, %v965
  %v1030 = vmul.f32 %v646, %v966
  %v1031 = vmul.f32 %v647, %v967
  %v1032 = vmul.f32 %v648, %v968
  %v1033 = vmul.f32 %v649, %v969
  %v1034 = vmul.f32 %v650, %v970
  %v1035 = vmul.f32 %v651, %v971
  %v1036 = vpack.c.bf16 %v972, %v972
  %v1037 = vpack.c.bf16 %v973, %v973
  %v1038 = vpack.c.bf16 %v974, %v974
  %v1039 = vpack.c.bf16 %v975, %v975
  %v1040 = vpack.c.bf16 %v976, %v976
  %v1041 = vpack.c.bf16 %v977, %v977
  %v1042 = vpack.c.bf16 %v978, %v978
  %v1043 = vpack.c.bf16 %v979, %v979
  %v1044 = vpack.c.bf16 %v980, %v980
  %v1045 = vpack.c.bf16 %v981, %v981
  %v1046 = vpack.c.bf16 %v982, %v982
  %v1047 = vpack.c.bf16 %v983, %v983
  %v1048 = vpack.c.bf16 %v984, %v984
  %v1049 = vpack.c.bf16 %v985, %v985
  %v1050 = vpack.c.bf16 %v986, %v986
  %v1051 = vpack.c.bf16 %v987, %v987
  %v1052 = vpack.c.bf16 %v988, %v988
  %v1053 = vpack.c.bf16 %v989, %v989
  %v1054 = vpack.c.bf16 %v990, %v990
  %v1055 = vpack.c.bf16 %v991, %v991
  %v1056 = vpack.c.bf16 %v992, %v992
  %v1057 = vpack.c.bf16 %v993, %v993
  %v1058 = vpack.c.bf16 %v994, %v994
  %v1059 = vpack.c.bf16 %v995, %v995
  %v1060 = vpack.c.bf16 %v996, %v996
  %v1061 = vpack.c.bf16 %v997, %v997
  %v1062 = vpack.c.bf16 %v998, %v998
  %v1063 = vpack.c.bf16 %v999, %v999
  %v1064 = vpack.c.bf16 %v1000, %v1000
  %v1065 = vpack.c.bf16 %v1001, %v1001
  %v1066 = vpack.c.bf16 %v1002, %v1002
  %v1067 = vpack.c.bf16 %v1003, %v1003
  %v1068 = vpack.c.bf16 %v1004, %v1004
  %v1069 = vpack.c.bf16 %v1005, %v1005
  %v1070 = vpack.c.bf16 %v1006, %v1006
  %v1071 = vpack.c.bf16 %v1007, %v1007
  %v1072 = vpack.c.bf16 %v1008, %v1008
  %v1073 = vpack.c.bf16 %v1009, %v1009
  %v1074 = vpack.c.bf16 %v1010, %v1010
  %v1075 = vpack.c.bf16 %v1011, %v1011
  %v1076 = vpack.c.bf16 %v1012, %v1012
  %v1077 = vpack.c.bf16 %v1013, %v1013
  %v1078 = vpack.c.bf16 %v1014, %v1014
  %v1079 = vpack.c.bf16 %v1015, %v1015
  %v1080 = vpack.c.bf16 %v1016, %v1016
  %v1081 = vpack.c.bf16 %v1017, %v1017
  %v1082 = vpack.c.bf16 %v1018, %v1018
  %v1083 = vpack.c.bf16 %v1019, %v1019
  %v1084 = vpack.c.bf16 %v1020, %v1020
  %v1085 = vpack.c.bf16 %v1021, %v1021
  %v1086 = vpack.c.bf16 %v1022, %v1022
  %v1087 = vpack.c.bf16 %v1023, %v1023
  %v1088 = vpack.c.bf16 %v1024, %v1024
  %v1089 = vpack.c.bf16 %v1025, %v1025
  %v1090 = vpack.c.bf16 %v1026, %v1026
  %v1091 = vpack.c.bf16 %v1027, %v1027
  %v1092 = vpack.c.bf16 %v1028, %v1028
  %v1093 = vpack.c.bf16 %v1029, %v1029
  %v1094 = vpack.c.bf16 %v1030, %v1030
  %v1095 = vpack.c.bf16 %v1031, %v1031
  %v1096 = vpack.c.bf16 %v1032, %v1032
  %v1097 = vpack.c.bf16 %v1033, %v1033
  %v1098 = vpack.c.bf16 %v1034, %v1034
  %v1099 = vpack.c.bf16 %v1035, %v1035
  %vm1100 = vcmask 60416
  %1101 = vst.msk [vmem:[%s5] sm:$0xf] %vm1100, %v1036
  %1102 = vst.msk [vmem:[%s5 + $0x4] sm:$0xf] %vm1100, %v1037
  %1103 = vst.msk [vmem:[%s5 + $0x8] sm:$0xf] %vm1100, %v1038
  %1104 = vst.msk [vmem:[%s5 + $0xc] sm:$0xf] %vm1100, %v1039
  %1105 = vst.msk [vmem:[%s5 + $0x10] sm:$0xf] %vm1100, %v1040
  %1106 = vst.msk [vmem:[%s5 + $0x14] sm:$0xf] %vm1100, %v1041
  %1107 = vst.msk [vmem:[%s5 + $0x18] sm:$0xf] %vm1100, %v1042
  %1108 = vst.msk [vmem:[%s5 + $0x1c] sm:$0xf] %vm1100, %v1043
  %1109 = vst.msk [vmem:[%s5 + $0x20] sm:$0xf] %vm1100, %v1044
  %1110 = vst.msk [vmem:[%s5 + $0x24] sm:$0xf] %vm1100, %v1045
  %1111 = vst.msk [vmem:[%s5 + $0x28] sm:$0xf] %vm1100, %v1046
  %1112 = vst.msk [vmem:[%s5 + $0x2c] sm:$0xf] %vm1100, %v1047
  %1113 = vst.msk [vmem:[%s5 + $0x30] sm:$0xf] %vm1100, %v1048
  %1114 = vst.msk [vmem:[%s5 + $0x34] sm:$0xf] %vm1100, %v1049
  %1115 = vst.msk [vmem:[%s5 + $0x38] sm:$0xf] %vm1100, %v1050
  %1116 = vst.msk [vmem:[%s5 + $0x3c] sm:$0xf] %vm1100, %v1051
  %1117 = vst.msk [vmem:[%s5 + $0x40] sm:$0xf] %vm1100, %v1052
  %1118 = vst.msk [vmem:[%s5 + $0x44] sm:$0xf] %vm1100, %v1053
  %1119 = vst.msk [vmem:[%s5 + $0x48] sm:$0xf] %vm1100, %v1054
  %1120 = vst.msk [vmem:[%s5 + $0x4c] sm:$0xf] %vm1100, %v1055
  %1121 = vst.msk [vmem:[%s5 + $0x50] sm:$0xf] %vm1100, %v1056
  %1122 = vst.msk [vmem:[%s5 + $0x54] sm:$0xf] %vm1100, %v1057
  %1123 = vst.msk [vmem:[%s5 + $0x58] sm:$0xf] %vm1100, %v1058
  %1124 = vst.msk [vmem:[%s5 + $0x5c] sm:$0xf] %vm1100, %v1059
  %1125 = vst.msk [vmem:[%s5 + $0x60] sm:$0xf] %vm1100, %v1060
  %1126 = vst.msk [vmem:[%s5 + $0x64] sm:$0xf] %vm1100, %v1061
  %1127 = vst.msk [vmem:[%s5 + $0x68] sm:$0xf] %vm1100, %v1062
  %1128 = vst.msk [vmem:[%s5 + $0x6c] sm:$0xf] %vm1100, %v1063
  %1129 = vst.msk [vmem:[%s5 + $0x70] sm:$0xf] %vm1100, %v1064
  %1130 = vst.msk [vmem:[%s5 + $0x74] sm:$0xf] %vm1100, %v1065
  %1131 = vst.msk [vmem:[%s5 + $0x78] sm:$0xf] %vm1100, %v1066
  %1132 = vst.msk [vmem:[%s5 + $0x7c] sm:$0xf] %vm1100, %v1067
  %1133 = vst.msk [vmem:[%s5 + $0x80] sm:$0xf] %vm1100, %v1068
  %1134 = vst.msk [vmem:[%s5 + $0x84] sm:$0xf] %vm1100, %v1069
  %1135 = vst.msk [vmem:[%s5 + $0x88] sm:$0xf] %vm1100, %v1070
  %1136 = vst.msk [vmem:[%s5 + $0x8c] sm:$0xf] %vm1100, %v1071
  %1137 = vst.msk [vmem:[%s5 + $0x90] sm:$0xf] %vm1100, %v1072
  %1138 = vst.msk [vmem:[%s5 + $0x94] sm:$0xf] %vm1100, %v1073
  %1139 = vst.msk [vmem:[%s5 + $0x98] sm:$0xf] %vm1100, %v1074
  %1140 = vst.msk [vmem:[%s5 + $0x9c] sm:$0xf] %vm1100, %v1075
  %1141 = vst.msk [vmem:[%s5 + $0xa0] sm:$0xf] %vm1100, %v1076
  %1142 = vst.msk [vmem:[%s5 + $0xa4] sm:$0xf] %vm1100, %v1077
  %1143 = vst.msk [vmem:[%s5 + $0xa8] sm:$0xf] %vm1100, %v1078
  %1144 = vst.msk [vmem:[%s5 + $0xac] sm:$0xf] %vm1100, %v1079
  %1145 = vst.msk [vmem:[%s5 + $0xb0] sm:$0xf] %vm1100, %v1080
  %1146 = vst.msk [vmem:[%s5 + $0xb4] sm:$0xf] %vm1100, %v1081
  %1147 = vst.msk [vmem:[%s5 + $0xb8] sm:$0xf] %vm1100, %v1082
  %1148 = vst.msk [vmem:[%s5 + $0xbc] sm:$0xf] %vm1100, %v1083
  %1149 = vst.msk [vmem:[%s5 + $0xc0] sm:$0xf] %vm1100, %v1084
  %1150 = vst.msk [vmem:[%s5 + $0xc4] sm:$0xf] %vm1100, %v1085
  %1151 = vst.msk [vmem:[%s5 + $0xc8] sm:$0xf] %vm1100, %v1086
  %1152 = vst.msk [vmem:[%s5 + $0xcc] sm:$0xf] %vm1100, %v1087
  %1153 = vst.msk [vmem:[%s5 + $0xd0] sm:$0xf] %vm1100, %v1088
  %1154 = vst.msk [vmem:[%s5 + $0xd4] sm:$0xf] %vm1100, %v1089
  %1155 = vst.msk [vmem:[%s5 + $0xd8] sm:$0xf] %vm1100, %v1090
  %1156 = vst.msk [vmem:[%s5 + $0xdc] sm:$0xf] %vm1100, %v1091
  %1157 = vst.msk [vmem:[%s5 + $0xe0] sm:$0xf] %vm1100, %v1092
  %1158 = vst.msk [vmem:[%s5 + $0xe4] sm:$0xf] %vm1100, %v1093
  %1159 = vst.msk [vmem:[%s5 + $0xe8] sm:$0xf] %vm1100, %v1094
  %1160 = vst.msk [vmem:[%s5 + $0xec] sm:$0xf] %vm1100, %v1095
  %1161 = vst.msk [vmem:[%s5 + $0xf0] sm:$0xf] %vm1100, %v1096
  %1162 = vst.msk [vmem:[%s5 + $0xf4] sm:$0xf] %vm1100, %v1097
  %1163 = vst.msk [vmem:[%s5 + $0xf8] sm:$0xf] %vm1100, %v1098
  %1164 = vst.msk [vmem:[%s5 + $0xfc] sm:$0xf] %vm1100, %v1099
  %v1165 = vld [vmem:[%s2] sm:$0xf]
  %v1166 = vld [vmem:[%s2 + $0x4] sm:$0xf]
  %v1169 = vunpack.c.l.b16 %v1165
  %v1170 = vunpack.c.l.b16 %v1166
  %v1171 = vpack.c.b16 %v1170, %v1169
  %1173 = vmatpush.bf16.msra.mxu0 0
  %1174 = vmatpush.bf16.msra.mxu0 0
  %1175 = vmatpush.bf16.msra.mxu0 0
  %1176 = vmatpush.bf16.msra.mxu0 0
  %1177 = vmatpush.bf16.msra.mxu0 0
  %1178 = vmatpush.bf16.msra.mxu0 0
  %1179 = vmatpush.bf16.msra.mxu0 0
  %1180 = vmatpush.bf16.msra.mxu0 %v1171
  %1181 = vmatmul.bf16.gmra.mxu0 %v257
  %v1182 = vpop.f32.mrf.mxu0
  %v1183 = vadd.f32 0.0, %v1182
  %v1184 = vpop.f32.mrf.mxu0
  %v1185 = vadd.f32 0.0, %v1184
  %1186 = vmatmul.bf16.gmra.mxu0 %v260
  %v1187 = vpop.f32.mrf.mxu0
  %v1188 = vadd.f32 0.0, %v1187
  %v1189 = vpop.f32.mrf.mxu0
  %v1190 = vadd.f32 0.0, %v1189
  %1191 = vmatmul.bf16.gmra.mxu0 %v263
  %v1192 = vpop.f32.mrf.mxu0
  %v1193 = vadd.f32 0.0, %v1192
  %v1194 = vpop.f32.mrf.mxu0
  %v1195 = vadd.f32 0.0, %v1194
  %1196 = vmatmul.bf16.gmra.mxu0 %v266
  %v1197 = vpop.f32.mrf.mxu0
  %v1198 = vadd.f32 0.0, %v1197
  %v1199 = vpop.f32.mrf.mxu0
  %v1200 = vadd.f32 0.0, %v1199
  %1201 = vmatmul.bf16.gmra.mxu0 %v269
  %v1202 = vpop.f32.mrf.mxu0
  %v1203 = vadd.f32 0.0, %v1202
  %v1204 = vpop.f32.mrf.mxu0
  %v1205 = vadd.f32 0.0, %v1204
  %1206 = vmatmul.bf16.gmra.mxu0 %v272
  %v1207 = vpop.f32.mrf.mxu0
  %v1208 = vadd.f32 0.0, %v1207
  %v1209 = vpop.f32.mrf.mxu0
  %v1210 = vadd.f32 0.0, %v1209
  %1211 = vmatmul.bf16.gmra.mxu0 %v275
  %v1212 = vpop.f32.mrf.mxu0
  %v1213 = vadd.f32 0.0, %v1212
  %v1214 = vpop.f32.mrf.mxu0
  %v1215 = vadd.f32 0.0, %v1214
  %1216 = vmatmul.bf16.gmra.mxu0 %v278
  %v1217 = vpop.f32.mrf.mxu0
  %v1218 = vadd.f32 0.0, %v1217
  %v1219 = vpop.f32.mrf.mxu0
  %v1220 = vadd.f32 0.0, %v1219
  %1221 = vmatmul.bf16.gmra.mxu0 %v281
  %v1222 = vpop.f32.mrf.mxu0
  %v1223 = vadd.f32 0.0, %v1222
  %v1224 = vpop.f32.mrf.mxu0
  %v1225 = vadd.f32 0.0, %v1224
  %1226 = vmatmul.bf16.gmra.mxu0 %v284
  %v1227 = vpop.f32.mrf.mxu0
  %v1228 = vadd.f32 0.0, %v1227
  %v1229 = vpop.f32.mrf.mxu0
  %v1230 = vadd.f32 0.0, %v1229
  %1231 = vmatmul.bf16.gmra.mxu0 %v287
  %v1232 = vpop.f32.mrf.mxu0
  %v1233 = vadd.f32 0.0, %v1232
  %v1234 = vpop.f32.mrf.mxu0
  %v1235 = vadd.f32 0.0, %v1234
  %1236 = vmatmul.bf16.gmra.mxu0 %v290
  %v1237 = vpop.f32.mrf.mxu0
  %v1238 = vadd.f32 0.0, %v1237
  %v1239 = vpop.f32.mrf.mxu0
  %v1240 = vadd.f32 0.0, %v1239
  %1241 = vmatmul.bf16.gmra.mxu0 %v293
  %v1242 = vpop.f32.mrf.mxu0
  %v1243 = vadd.f32 0.0, %v1242
  %v1244 = vpop.f32.mrf.mxu0
  %v1245 = vadd.f32 0.0, %v1244
  %1246 = vmatmul.bf16.gmra.mxu0 %v296
  %v1247 = vpop.f32.mrf.mxu0
  %v1248 = vadd.f32 0.0, %v1247
  %v1249 = vpop.f32.mrf.mxu0
  %v1250 = vadd.f32 0.0, %v1249
  %1251 = vmatmul.bf16.gmra.mxu0 %v299
  %v1252 = vpop.f32.mrf.mxu0
  %v1253 = vadd.f32 0.0, %v1252
  %v1254 = vpop.f32.mrf.mxu0
  %v1255 = vadd.f32 0.0, %v1254
  %1256 = vmatmul.bf16.gmra.mxu0 %v302
  %v1257 = vpop.f32.mrf.mxu0
  %v1258 = vadd.f32 0.0, %v1257
  %v1259 = vpop.f32.mrf.mxu0
  %v1260 = vadd.f32 0.0, %v1259
  %1261 = vmatmul.bf16.gmra.mxu0 %v305
  %v1262 = vpop.f32.mrf.mxu0
  %v1263 = vadd.f32 0.0, %v1262
  %v1264 = vpop.f32.mrf.mxu0
  %v1265 = vadd.f32 0.0, %v1264
  %1266 = vmatmul.bf16.gmra.mxu0 %v308
  %v1267 = vpop.f32.mrf.mxu0
  %v1268 = vadd.f32 0.0, %v1267
  %v1269 = vpop.f32.mrf.mxu0
  %v1270 = vadd.f32 0.0, %v1269
  %1271 = vmatmul.bf16.gmra.mxu0 %v311
  %v1272 = vpop.f32.mrf.mxu0
  %v1273 = vadd.f32 0.0, %v1272
  %v1274 = vpop.f32.mrf.mxu0
  %v1275 = vadd.f32 0.0, %v1274
  %1276 = vmatmul.bf16.gmra.mxu0 %v314
  %v1277 = vpop.f32.mrf.mxu0
  %v1278 = vadd.f32 0.0, %v1277
  %v1279 = vpop.f32.mrf.mxu0
  %v1280 = vadd.f32 0.0, %v1279
  %1281 = vmatmul.bf16.gmra.mxu0 %v317
  %v1282 = vpop.f32.mrf.mxu0
  %v1283 = vadd.f32 0.0, %v1282
  %v1284 = vpop.f32.mrf.mxu0
  %v1285 = vadd.f32 0.0, %v1284
  %1286 = vmatmul.bf16.gmra.mxu0 %v320
  %v1287 = vpop.f32.mrf.mxu0
  %v1288 = vadd.f32 0.0, %v1287
  %v1289 = vpop.f32.mrf.mxu0
  %v1290 = vadd.f32 0.0, %v1289
  %1291 = vmatmul.bf16.gmra.mxu0 %v323
  %v1292 = vpop.f32.mrf.mxu0
  %v1293 = vadd.f32 0.0, %v1292
  %v1294 = vpop.f32.mrf.mxu0
  %v1295 = vadd.f32 0.0, %v1294
  %1296 = vmatmul.bf16.gmra.mxu0 %v326
  %v1297 = vpop.f32.mrf.mxu0
  %v1298 = vadd.f32 0.0, %v1297
  %v1299 = vpop.f32.mrf.mxu0
  %v1300 = vadd.f32 0.0, %v1299
  %1301 = vmatmul.bf16.gmra.mxu0 %v329
  %v1302 = vpop.f32.mrf.mxu0
  %v1303 = vadd.f32 0.0, %v1302
  %v1304 = vpop.f32.mrf.mxu0
  %v1305 = vadd.f32 0.0, %v1304
  %1306 = vmatmul.bf16.gmra.mxu0 %v332
  %v1307 = vpop.f32.mrf.mxu0
  %v1308 = vadd.f32 0.0, %v1307
  %v1309 = vpop.f32.mrf.mxu0
  %v1310 = vadd.f32 0.0, %v1309
  %1311 = vmatmul.bf16.gmra.mxu0 %v335
  %v1312 = vpop.f32.mrf.mxu0
  %v1313 = vadd.f32 0.0, %v1312
  %v1314 = vpop.f32.mrf.mxu0
  %v1315 = vadd.f32 0.0, %v1314
  %1316 = vmatmul.bf16.gmra.mxu0 %v338
  %v1317 = vpop.f32.mrf.mxu0
  %v1318 = vadd.f32 0.0, %v1317
  %v1319 = vpop.f32.mrf.mxu0
  %v1320 = vadd.f32 0.0, %v1319
  %1321 = vmatmul.bf16.gmra.mxu0 %v341
  %v1322 = vpop.f32.mrf.mxu0
  %v1323 = vadd.f32 0.0, %v1322
  %v1324 = vpop.f32.mrf.mxu0
  %v1325 = vadd.f32 0.0, %v1324
  %1326 = vmatmul.bf16.gmra.mxu0 %v344
  %v1327 = vpop.f32.mrf.mxu0
  %v1328 = vadd.f32 0.0, %v1327
  %v1329 = vpop.f32.mrf.mxu0
  %v1330 = vadd.f32 0.0, %v1329
  %1331 = vmatmul.bf16.gmra.mxu0 %v347
  %v1332 = vpop.f32.mrf.mxu0
  %v1333 = vadd.f32 0.0, %v1332
  %v1334 = vpop.f32.mrf.mxu0
  %v1335 = vadd.f32 0.0, %v1334
  %1336 = vmatmul.bf16.gmra.mxu0 %v350
  %v1337 = vpop.f32.mrf.mxu0
  %v1338 = vadd.f32 0.0, %v1337
  %v1339 = vpop.f32.mrf.mxu0
  %v1340 = vadd.f32 0.0, %v1339
  %1341 = vdwg.mxu0
  %v1342 = vld [vmem:[%s4] sm:$0x3]
  %v1343 = vperm.slane %v1342, 0
  %v1344 = vmul.f32 %v1183, %v1343
  %v1345 = vmul.f32 %v1185, %v1343
  %v1346 = vmul.f32 %v1188, %v1343
  %v1347 = vmul.f32 %v1190, %v1343
  %v1348 = vmul.f32 %v1193, %v1343
  %v1349 = vmul.f32 %v1195, %v1343
  %v1350 = vmul.f32 %v1198, %v1343
  %v1351 = vmul.f32 %v1200, %v1343
  %v1352 = vmul.f32 %v1203, %v1343
  %v1353 = vmul.f32 %v1205, %v1343
  %v1354 = vmul.f32 %v1208, %v1343
  %v1355 = vmul.f32 %v1210, %v1343
  %v1356 = vmul.f32 %v1213, %v1343
  %v1357 = vmul.f32 %v1215, %v1343
  %v1358 = vmul.f32 %v1218, %v1343
  %v1359 = vmul.f32 %v1220, %v1343
  %v1360 = vmul.f32 %v1223, %v1343
  %v1361 = vmul.f32 %v1225, %v1343
  %v1362 = vmul.f32 %v1228, %v1343
  %v1363 = vmul.f32 %v1230, %v1343
  %v1364 = vmul.f32 %v1233, %v1343
  %v1365 = vmul.f32 %v1235, %v1343
  %v1366 = vmul.f32 %v1238, %v1343
  %v1367 = vmul.f32 %v1240, %v1343
  %v1368 = vmul.f32 %v1243, %v1343
  %v1369 = vmul.f32 %v1245, %v1343
  %v1370 = vmul.f32 %v1248, %v1343
  %v1371 = vmul.f32 %v1250, %v1343
  %v1372 = vmul.f32 %v1253, %v1343
  %v1373 = vmul.f32 %v1255, %v1343
  %v1374 = vmul.f32 %v1258, %v1343
  %v1375 = vmul.f32 %v1260, %v1343
  %v1376 = vmul.f32 %v1263, %v1343
  %v1377 = vmul.f32 %v1265, %v1343
  %v1378 = vmul.f32 %v1268, %v1343
  %v1379 = vmul.f32 %v1270, %v1343
  %v1380 = vmul.f32 %v1273, %v1343
  %v1381 = vmul.f32 %v1275, %v1343
  %v1382 = vmul.f32 %v1278, %v1343
  %v1383 = vmul.f32 %v1280, %v1343
  %v1384 = vmul.f32 %v1283, %v1343
  %v1385 = vmul.f32 %v1285, %v1343
  %v1386 = vmul.f32 %v1288, %v1343
  %v1387 = vmul.f32 %v1290, %v1343
  %v1388 = vmul.f32 %v1293, %v1343
  %v1389 = vmul.f32 %v1295, %v1343
  %v1390 = vmul.f32 %v1298, %v1343
  %v1391 = vmul.f32 %v1300, %v1343
  %v1392 = vmul.f32 %v1303, %v1343
  %v1393 = vmul.f32 %v1305, %v1343
  %v1394 = vmul.f32 %v1308, %v1343
  %v1395 = vmul.f32 %v1310, %v1343
  %v1396 = vmul.f32 %v1313, %v1343
  %v1397 = vmul.f32 %v1315, %v1343
  %v1398 = vmul.f32 %v1318, %v1343
  %v1399 = vmul.f32 %v1320, %v1343
  %v1400 = vmul.f32 %v1323, %v1343
  %v1401 = vmul.f32 %v1325, %v1343
  %v1402 = vmul.f32 %v1328, %v1343
  %v1403 = vmul.f32 %v1330, %v1343
  %v1404 = vmul.f32 %v1333, %v1343
  %v1405 = vmul.f32 %v1335, %v1343
  %v1406 = vmul.f32 %v1338, %v1343
  %v1407 = vmul.f32 %v1340, %v1343
  %v1408 = vperm.slane %v1342, 1
  %v1409 = vadd.f32 %v1344, %v1408
  %v1410 = vadd.f32 %v1345, %v1408
  %v1411 = vadd.f32 %v1346, %v1408
  %v1412 = vadd.f32 %v1347, %v1408
  %v1413 = vadd.f32 %v1348, %v1408
  %v1414 = vadd.f32 %v1349, %v1408
  %v1415 = vadd.f32 %v1350, %v1408
  %v1416 = vadd.f32 %v1351, %v1408
  %v1417 = vadd.f32 %v1352, %v1408
  %v1418 = vadd.f32 %v1353, %v1408
  %v1419 = vadd.f32 %v1354, %v1408
  %v1420 = vadd.f32 %v1355, %v1408
  %v1421 = vadd.f32 %v1356, %v1408
  %v1422 = vadd.f32 %v1357, %v1408
  %v1423 = vadd.f32 %v1358, %v1408
  %v1424 = vadd.f32 %v1359, %v1408
  %v1425 = vadd.f32 %v1360, %v1408
  %v1426 = vadd.f32 %v1361, %v1408
  %v1427 = vadd.f32 %v1362, %v1408
  %v1428 = vadd.f32 %v1363, %v1408
  %v1429 = vadd.f32 %v1364, %v1408
  %v1430 = vadd.f32 %v1365, %v1408
  %v1431 = vadd.f32 %v1366, %v1408
  %v1432 = vadd.f32 %v1367, %v1408
  %v1433 = vadd.f32 %v1368, %v1408
  %v1434 = vadd.f32 %v1369, %v1408
  %v1435 = vadd.f32 %v1370, %v1408
  %v1436 = vadd.f32 %v1371, %v1408
  %v1437 = vadd.f32 %v1372, %v1408
  %v1438 = vadd.f32 %v1373, %v1408
  %v1439 = vadd.f32 %v1374, %v1408
  %v1440 = vadd.f32 %v1375, %v1408
  %v1441 = vadd.f32 %v1376, %v1408
  %v1442 = vadd.f32 %v1377, %v1408
  %v1443 = vadd.f32 %v1378, %v1408
  %v1444 = vadd.f32 %v1379, %v1408
  %v1445 = vadd.f32 %v1380, %v1408
  %v1446 = vadd.f32 %v1381, %v1408
  %v1447 = vadd.f32 %v1382, %v1408
  %v1448 = vadd.f32 %v1383, %v1408
  %v1449 = vadd.f32 %v1384, %v1408
  %v1450 = vadd.f32 %v1385, %v1408
  %v1451 = vadd.f32 %v1386, %v1408
  %v1452 = vadd.f32 %v1387, %v1408
  %v1453 = vadd.f32 %v1388, %v1408
  %v1454 = vadd.f32 %v1389, %v1408
  %v1455 = vadd.f32 %v1390, %v1408
  %v1456 = vadd.f32 %v1391, %v1408
  %v1457 = vadd.f32 %v1392, %v1408
  %v1458 = vadd.f32 %v1393, %v1408
  %v1459 = vadd.f32 %v1394, %v1408
  %v1460 = vadd.f32 %v1395, %v1408
  %v1461 = vadd.f32 %v1396, %v1408
  %v1462 = vadd.f32 %v1397, %v1408
  %v1463 = vadd.f32 %v1398, %v1408
  %v1464 = vadd.f32 %v1399, %v1408
  %v1465 = vadd.f32 %v1400, %v1408
  %v1466 = vadd.f32 %v1401, %v1408
  %v1467 = vadd.f32 %v1402, %v1408
  %v1468 = vadd.f32 %v1403, %v1408
  %v1469 = vadd.f32 %v1404, %v1408
  %v1470 = vadd.f32 %v1405, %v1408
  %v1471 = vadd.f32 %v1406, %v1408
  %v1472 = vadd.f32 %v1407, %v1408
  %v1473 = vsub.f32 0.0, %v1409
  %v1474 = vsub.f32 0.0, %v1410
  %v1475 = vsub.f32 0.0, %v1411
  %v1476 = vsub.f32 0.0, %v1412
  %v1477 = vsub.f32 0.0, %v1413
  %v1478 = vsub.f32 0.0, %v1414
  %v1479 = vsub.f32 0.0, %v1415
  %v1480 = vsub.f32 0.0, %v1416
  %v1481 = vsub.f32 0.0, %v1417
  %v1482 = vsub.f32 0.0, %v1418
  %v1483 = vsub.f32 0.0, %v1419
  %v1484 = vsub.f32 0.0, %v1420
  %v1485 = vsub.f32 0.0, %v1421
  %v1486 = vsub.f32 0.0, %v1422
  %v1487 = vsub.f32 0.0, %v1423
  %v1488 = vsub.f32 0.0, %v1424
  %v1489 = vsub.f32 0.0, %v1425
  %v1490 = vsub.f32 0.0, %v1426
  %v1491 = vsub.f32 0.0, %v1427
  %v1492 = vsub.f32 0.0, %v1428
  %v1493 = vsub.f32 0.0, %v1429
  %v1494 = vsub.f32 0.0, %v1430
  %v1495 = vsub.f32 0.0, %v1431
  %v1496 = vsub.f32 0.0, %v1432
  %v1497 = vsub.f32 0.0, %v1433
  %v1498 = vsub.f32 0.0, %v1434
  %v1499 = vsub.f32 0.0, %v1435
  %v1500 = vsub.f32 0.0, %v1436
  %v1501 = vsub.f32 0.0, %v1437
  %v1502 = vsub.f32 0.0, %v1438
  %v1503 = vsub.f32 0.0, %v1439
  %v1504 = vsub.f32 0.0, %v1440
  %v1505 = vsub.f32 0.0, %v1441
  %v1506 = vsub.f32 0.0, %v1442
  %v1507 = vsub.f32 0.0, %v1443
  %v1508 = vsub.f32 0.0, %v1444
  %v1509 = vsub.f32 0.0, %v1445
  %v1510 = vsub.f32 0.0, %v1446
  %v1511 = vsub.f32 0.0, %v1447
  %v1512 = vsub.f32 0.0, %v1448
  %v1513 = vsub.f32 0.0, %v1449
  %v1514 = vsub.f32 0.0, %v1450
  %v1515 = vsub.f32 0.0, %v1451
  %v1516 = vsub.f32 0.0, %v1452
  %v1517 = vsub.f32 0.0, %v1453
  %v1518 = vsub.f32 0.0, %v1454
  %v1519 = vsub.f32 0.0, %v1455
  %v1520 = vsub.f32 0.0, %v1456
  %v1521 = vsub.f32 0.0, %v1457
  %v1522 = vsub.f32 0.0, %v1458
  %v1523 = vsub.f32 0.0, %v1459
  %v1524 = vsub.f32 0.0, %v1460
  %v1525 = vsub.f32 0.0, %v1461
  %v1526 = vsub.f32 0.0, %v1462
  %v1527 = vsub.f32 0.0, %v1463
  %v1528 = vsub.f32 0.0, %v1464
  %v1529 = vsub.f32 0.0, %v1465
  %v1530 = vsub.f32 0.0, %v1466
  %v1531 = vsub.f32 0.0, %v1467
  %v1532 = vsub.f32 0.0, %v1468
  %v1533 = vsub.f32 0.0, %v1469
  %v1534 = vsub.f32 0.0, %v1470
  %v1535 = vsub.f32 0.0, %v1471
  %v1536 = vsub.f32 0.0, %v1472
  %v1537 = vmul.f32 %v1473, 1.442695
  %v1538 = vpow.pop %v1537
  %v1539 = vmul.f32 %v1474, 1.442695
  %v1540 = vpow.pop %v1539
  %v1541 = vmul.f32 %v1475, 1.442695
  %v1542 = vpow.pop %v1541
  %v1543 = vmul.f32 %v1476, 1.442695
  %v1544 = vpow.pop %v1543
  %v1545 = vmul.f32 %v1477, 1.442695
  %v1546 = vpow.pop %v1545
  %v1547 = vmul.f32 %v1478, 1.442695
  %v1548 = vpow.pop %v1547
  %v1549 = vmul.f32 %v1479, 1.442695
  %v1550 = vpow.pop %v1549
  %v1551 = vmul.f32 %v1480, 1.442695
  %v1552 = vpow.pop %v1551
  %v1553 = vmul.f32 %v1481, 1.442695
  %v1554 = vpow.pop %v1553
  %v1555 = vmul.f32 %v1482, 1.442695
  %v1556 = vpow.pop %v1555
  %v1557 = vmul.f32 %v1483, 1.442695
  %v1558 = vpow.pop %v1557
  %v1559 = vmul.f32 %v1484, 1.442695
  %v1560 = vpow.pop %v1559
  %v1561 = vmul.f32 %v1485, 1.442695
  %v1562 = vpow.pop %v1561
  %v1563 = vmul.f32 %v1486, 1.442695
  %v1564 = vpow.pop %v1563
  %v1565 = vmul.f32 %v1487, 1.442695
  %v1566 = vpow.pop %v1565
  %v1567 = vmul.f32 %v1488, 1.442695
  %v1568 = vpow.pop %v1567
  %v1569 = vmul.f32 %v1489, 1.442695
  %v1570 = vpow.pop %v1569
  %v1571 = vmul.f32 %v1490, 1.442695
  %v1572 = vpow.pop %v1571
  %v1573 = vmul.f32 %v1491, 1.442695
  %v1574 = vpow.pop %v1573
  %v1575 = vmul.f32 %v1492, 1.442695
  %v1576 = vpow.pop %v1575
  %v1577 = vmul.f32 %v1493, 1.442695
  %v1578 = vpow.pop %v1577
  %v1579 = vmul.f32 %v1494, 1.442695
  %v1580 = vpow.pop %v1579
  %v1581 = vmul.f32 %v1495, 1.442695
  %v1582 = vpow.pop %v1581
  %v1583 = vmul.f32 %v1496, 1.442695
  %v1584 = vpow.pop %v1583
  %v1585 = vmul.f32 %v1497, 1.442695
  %v1586 = vpow.pop %v1585
  %v1587 = vmul.f32 %v1498, 1.442695
  %v1588 = vpow.pop %v1587
  %v1589 = vmul.f32 %v1499, 1.442695
  %v1590 = vpow.pop %v1589
  %v1591 = vmul.f32 %v1500, 1.442695
  %v1592 = vpow.pop %v1591
  %v1593 = vmul.f32 %v1501, 1.442695
  %v1594 = vpow.pop %v1593
  %v1595 = vmul.f32 %v1502, 1.442695
  %v1596 = vpow.pop %v1595
  %v1597 = vmul.f32 %v1503, 1.442695
  %v1598 = vpow.pop %v1597
  %v1599 = vmul.f32 %v1504, 1.442695
  %v1600 = vpow.pop %v1599
  %v1601 = vmul.f32 %v1505, 1.442695
  %v1602 = vpow.pop %v1601
  %v1603 = vmul.f32 %v1506, 1.442695
  %v1604 = vpow.pop %v1603
  %v1605 = vmul.f32 %v1507, 1.442695
  %v1606 = vpow.pop %v1605
  %v1607 = vmul.f32 %v1508, 1.442695
  %v1608 = vpow.pop %v1607
  %v1609 = vmul.f32 %v1509, 1.442695
  %v1610 = vpow.pop %v1609
  %v1611 = vmul.f32 %v1510, 1.442695
  %v1612 = vpow.pop %v1611
  %v1613 = vmul.f32 %v1511, 1.442695
  %v1614 = vpow.pop %v1613
  %v1615 = vmul.f32 %v1512, 1.442695
  %v1616 = vpow.pop %v1615
  %v1617 = vmul.f32 %v1513, 1.442695
  %v1618 = vpow.pop %v1617
  %v1619 = vmul.f32 %v1514, 1.442695
  %v1620 = vpow.pop %v1619
  %v1621 = vmul.f32 %v1515, 1.442695
  %v1622 = vpow.pop %v1621
  %v1623 = vmul.f32 %v1516, 1.442695
  %v1624 = vpow.pop %v1623
  %v1625 = vmul.f32 %v1517, 1.442695
  %v1626 = vpow.pop %v1625
  %v1627 = vmul.f32 %v1518, 1.442695
  %v1628 = vpow.pop %v1627
  %v1629 = vmul.f32 %v1519, 1.442695
  %v1630 = vpow.pop %v1629
  %v1631 = vmul.f32 %v1520, 1.442695
  %v1632 = vpow.pop %v1631
  %v1633 = vmul.f32 %v1521, 1.442695
  %v1634 = vpow.pop %v1633
  %v1635 = vmul.f32 %v1522, 1.442695
  %v1636 = vpow.pop %v1635
  %v1637 = vmul.f32 %v1523, 1.442695
  %v1638 = vpow.pop %v1637
  %v1639 = vmul.f32 %v1524, 1.442695
  %v1640 = vpow.pop %v1639
  %v1641 = vmul.f32 %v1525, 1.442695
  %v1642 = vpow.pop %v1641
  %v1643 = vmul.f32 %v1526, 1.442695
  %v1644 = vpow.pop %v1643
  %v1645 = vmul.f32 %v1527, 1.442695
  %v1646 = vpow.pop %v1645
  %v1647 = vmul.f32 %v1528, 1.442695
  %v1648 = vpow.pop %v1647
  %v1649 = vmul.f32 %v1529, 1.442695
  %v1650 = vpow.pop %v1649
  %v1651 = vmul.f32 %v1530, 1.442695
  %v1652 = vpow.pop %v1651
  %v1653 = vmul.f32 %v1531, 1.442695
  %v1654 = vpow.pop %v1653
  %v1655 = vmul.f32 %v1532, 1.442695
  %v1656 = vpow.pop %v1655
  %v1657 = vmul.f32 %v1533, 1.442695
  %v1658 = vpow.pop %v1657
  %v1659 = vmul.f32 %v1534, 1.442695
  %v1660 = vpow.pop %v1659
  %v1661 = vmul.f32 %v1535, 1.442695
  %v1662 = vpow.pop %v1661
  %v1663 = vmul.f32 %v1536, 1.442695
  %v1664 = vpow.pop %v1663
  %v1665 = vadd.f32 %v1538, 1.0
  %v1666 = vadd.f32 %v1540, 1.0
  %v1667 = vadd.f32 %v1542, 1.0
  %v1668 = vadd.f32 %v1544, 1.0
  %v1669 = vadd.f32 %v1546, 1.0
  %v1670 = vadd.f32 %v1548, 1.0
  %v1671 = vadd.f32 %v1550, 1.0
  %v1672 = vadd.f32 %v1552, 1.0
  %v1673 = vadd.f32 %v1554, 1.0
  %v1674 = vadd.f32 %v1556, 1.0
  %v1675 = vadd.f32 %v1558, 1.0
  %v1676 = vadd.f32 %v1560, 1.0
  %v1677 = vadd.f32 %v1562, 1.0
  %v1678 = vadd.f32 %v1564, 1.0
  %v1679 = vadd.f32 %v1566, 1.0
  %v1680 = vadd.f32 %v1568, 1.0
  %v1681 = vadd.f32 %v1570, 1.0
  %v1682 = vadd.f32 %v1572, 1.0
  %v1683 = vadd.f32 %v1574, 1.0
  %v1684 = vadd.f32 %v1576, 1.0
  %v1685 = vadd.f32 %v1578, 1.0
  %v1686 = vadd.f32 %v1580, 1.0
  %v1687 = vadd.f32 %v1582, 1.0
  %v1688 = vadd.f32 %v1584, 1.0
  %v1689 = vadd.f32 %v1586, 1.0
  %v1690 = vadd.f32 %v1588, 1.0
  %v1691 = vadd.f32 %v1590, 1.0
  %v1692 = vadd.f32 %v1592, 1.0
  %v1693 = vadd.f32 %v1594, 1.0
  %v1694 = vadd.f32 %v1596, 1.0
  %v1695 = vadd.f32 %v1598, 1.0
  %v1696 = vadd.f32 %v1600, 1.0
  %v1697 = vadd.f32 %v1602, 1.0
  %v1698 = vadd.f32 %v1604, 1.0
  %v1699 = vadd.f32 %v1606, 1.0
  %v1700 = vadd.f32 %v1608, 1.0
  %v1701 = vadd.f32 %v1610, 1.0
  %v1702 = vadd.f32 %v1612, 1.0
  %v1703 = vadd.f32 %v1614, 1.0
  %v1704 = vadd.f32 %v1616, 1.0
  %v1705 = vadd.f32 %v1618, 1.0
  %v1706 = vadd.f32 %v1620, 1.0
  %v1707 = vadd.f32 %v1622, 1.0
  %v1708 = vadd.f32 %v1624, 1.0
  %v1709 = vadd.f32 %v1626, 1.0
  %v1710 = vadd.f32 %v1628, 1.0
  %v1711 = vadd.f32 %v1630, 1.0
  %v1712 = vadd.f32 %v1632, 1.0
  %v1713 = vadd.f32 %v1634, 1.0
  %v1714 = vadd.f32 %v1636, 1.0
  %v1715 = vadd.f32 %v1638, 1.0
  %v1716 = vadd.f32 %v1640, 1.0
  %v1717 = vadd.f32 %v1642, 1.0
  %v1718 = vadd.f32 %v1644, 1.0
  %v1719 = vadd.f32 %v1646, 1.0
  %v1720 = vadd.f32 %v1648, 1.0
  %v1721 = vadd.f32 %v1650, 1.0
  %v1722 = vadd.f32 %v1652, 1.0
  %v1723 = vadd.f32 %v1654, 1.0
  %v1724 = vadd.f32 %v1656, 1.0
  %v1725 = vadd.f32 %v1658, 1.0
  %v1726 = vadd.f32 %v1660, 1.0
  %v1727 = vadd.f32 %v1662, 1.0
  %v1728 = vadd.f32 %v1664, 1.0
  %v1729 = vrcp.pop %v1665
  %v1730 = vrcp.pop %v1666
  %v1731 = vrcp.pop %v1667
  %v1732 = vrcp.pop %v1668
  %v1733 = vrcp.pop %v1669
  %v1734 = vrcp.pop %v1670
  %v1735 = vrcp.pop %v1671
  %v1736 = vrcp.pop %v1672
  %v1737 = vrcp.pop %v1673
  %v1738 = vrcp.pop %v1674
  %v1739 = vrcp.pop %v1675
  %v1740 = vrcp.pop %v1676
  %v1741 = vrcp.pop %v1677
  %v1742 = vrcp.pop %v1678
  %v1743 = vrcp.pop %v1679
  %v1744 = vrcp.pop %v1680
  %v1745 = vrcp.pop %v1681
  %v1746 = vrcp.pop %v1682
  %v1747 = vrcp.pop %v1683
  %v1748 = vrcp.pop %v1684
  %v1749 = vrcp.pop %v1685
  %v1750 = vrcp.pop %v1686
  %v1751 = vrcp.pop %v1687
  %v1752 = vrcp.pop %v1688
  %v1753 = vrcp.pop %v1689
  %v1754 = vrcp.pop %v1690
  %v1755 = vrcp.pop %v1691
  %v1756 = vrcp.pop %v1692
  %v1757 = vrcp.pop %v1693
  %v1758 = vrcp.pop %v1694
  %v1759 = vrcp.pop %v1695
  %v1760 = vrcp.pop %v1696
  %v1761 = vrcp.pop %v1697
  %v1762 = vrcp.pop %v1698
  %v1763 = vrcp.pop %v1699
  %v1764 = vrcp.pop %v1700
  %v1765 = vrcp.pop %v1701
  %v1766 = vrcp.pop %v1702
  %v1767 = vrcp.pop %v1703
  %v1768 = vrcp.pop %v1704
  %v1769 = vrcp.pop %v1705
  %v1770 = vrcp.pop %v1706
  %v1771 = vrcp.pop %v1707
  %v1772 = vrcp.pop %v1708
  %v1773 = vrcp.pop %v1709
  %v1774 = vrcp.pop %v1710
  %v1775 = vrcp.pop %v1711
  %v1776 = vrcp.pop %v1712
  %v1777 = vrcp.pop %v1713
  %v1778 = vrcp.pop %v1714
  %v1779 = vrcp.pop %v1715
  %v1780 = vrcp.pop %v1716
  %v1781 = vrcp.pop %v1717
  %v1782 = vrcp.pop %v1718
  %v1783 = vrcp.pop %v1719
  %v1784 = vrcp.pop %v1720
  %v1785 = vrcp.pop %v1721
  %v1786 = vrcp.pop %v1722
  %v1787 = vrcp.pop %v1723
  %v1788 = vrcp.pop %v1724
  %v1789 = vrcp.pop %v1725
  %v1790 = vrcp.pop %v1726
  %v1791 = vrcp.pop %v1727
  %v1792 = vrcp.pop %v1728
  %v1793 = vmul.f32 %v1409, %v1729
  %v1794 = vmul.f32 %v1410, %v1730
  %v1795 = vmul.f32 %v1411, %v1731
  %v1796 = vmul.f32 %v1412, %v1732
  %v1797 = vmul.f32 %v1413, %v1733
  %v1798 = vmul.f32 %v1414, %v1734
  %v1799 = vmul.f32 %v1415, %v1735
  %v1800 = vmul.f32 %v1416, %v1736
  %v1801 = vmul.f32 %v1417, %v1737
  %v1802 = vmul.f32 %v1418, %v1738
  %v1803 = vmul.f32 %v1419, %v1739
  %v1804 = vmul.f32 %v1420, %v1740
  %v1805 = vmul.f32 %v1421, %v1741
  %v1806 = vmul.f32 %v1422, %v1742
  %v1807 = vmul.f32 %v1423, %v1743
  %v1808 = vmul.f32 %v1424, %v1744
  %v1809 = vmul.f32 %v1425, %v1745
  %v1810 = vmul.f32 %v1426, %v1746
  %v1811 = vmul.f32 %v1427, %v1747
  %v1812 = vmul.f32 %v1428, %v1748
  %v1813 = vmul.f32 %v1429, %v1749
  %v1814 = vmul.f32 %v1430, %v1750
  %v1815 = vmul.f32 %v1431, %v1751
  %v1816 = vmul.f32 %v1432, %v1752
  %v1817 = vmul.f32 %v1433, %v1753
  %v1818 = vmul.f32 %v1434, %v1754
  %v1819 = vmul.f32 %v1435, %v1755
  %v1820 = vmul.f32 %v1436, %v1756
  %v1821 = vmul.f32 %v1437, %v1757
  %v1822 = vmul.f32 %v1438, %v1758
  %v1823 = vmul.f32 %v1439, %v1759
  %v1824 = vmul.f32 %v1440, %v1760
  %v1825 = vmul.f32 %v1441, %v1761
  %v1826 = vmul.f32 %v1442, %v1762
  %v1827 = vmul.f32 %v1443, %v1763
  %v1828 = vmul.f32 %v1444, %v1764
  %v1829 = vmul.f32 %v1445, %v1765
  %v1830 = vmul.f32 %v1446, %v1766
  %v1831 = vmul.f32 %v1447, %v1767
  %v1832 = vmul.f32 %v1448, %v1768
  %v1833 = vmul.f32 %v1449, %v1769
  %v1834 = vmul.f32 %v1450, %v1770
  %v1835 = vmul.f32 %v1451, %v1771
  %v1836 = vmul.f32 %v1452, %v1772
  %v1837 = vmul.f32 %v1453, %v1773
  %v1838 = vmul.f32 %v1454, %v1774
  %v1839 = vmul.f32 %v1455, %v1775
  %v1840 = vmul.f32 %v1456, %v1776
  %v1841 = vmul.f32 %v1457, %v1777
  %v1842 = vmul.f32 %v1458, %v1778
  %v1843 = vmul.f32 %v1459, %v1779
  %v1844 = vmul.f32 %v1460, %v1780
  %v1845 = vmul.f32 %v1461, %v1781
  %v1846 = vmul.f32 %v1462, %v1782
  %v1847 = vmul.f32 %v1463, %v1783
  %v1848 = vmul.f32 %v1464, %v1784
  %v1849 = vmul.f32 %v1465, %v1785
  %v1850 = vmul.f32 %v1466, %v1786
  %v1851 = vmul.f32 %v1467, %v1787
  %v1852 = vmul.f32 %v1468, %v1788
  %v1853 = vmul.f32 %v1469, %v1789
  %v1854 = vmul.f32 %v1470, %v1790
  %v1855 = vmul.f32 %v1471, %v1791
  %v1856 = vmul.f32 %v1472, %v1792
  %v1857 = vpack.c.bf16 %v1793, %v1793
  %v1858 = vpack.c.bf16 %v1794, %v1794
  %v1859 = vpack.c.bf16 %v1795, %v1795
  %v1860 = vpack.c.bf16 %v1796, %v1796
  %v1861 = vpack.c.bf16 %v1797, %v1797
  %v1862 = vpack.c.bf16 %v1798, %v1798
  %v1863 = vpack.c.bf16 %v1799, %v1799
  %v1864 = vpack.c.bf16 %v1800, %v1800
  %v1865 = vpack.c.bf16 %v1801, %v1801
  %v1866 = vpack.c.bf16 %v1802, %v1802
  %v1867 = vpack.c.bf16 %v1803, %v1803
  %v1868 = vpack.c.bf16 %v1804, %v1804
  %v1869 = vpack.c.bf16 %v1805, %v1805
  %v1870 = vpack.c.bf16 %v1806, %v1806
  %v1871 = vpack.c.bf16 %v1807, %v1807
  %v1872 = vpack.c.bf16 %v1808, %v1808
  %v1873 = vpack.c.bf16 %v1809, %v1809
  %v1874 = vpack.c.bf16 %v1810, %v1810
  %v1875 = vpack.c.bf16 %v1811, %v1811
  %v1876 = vpack.c.bf16 %v1812, %v1812
  %v1877 = vpack.c.bf16 %v1813, %v1813
  %v1878 = vpack.c.bf16 %v1814, %v1814
  %v1879 = vpack.c.bf16 %v1815, %v1815
  %v1880 = vpack.c.bf16 %v1816, %v1816
  %v1881 = vpack.c.bf16 %v1817, %v1817
  %v1882 = vpack.c.bf16 %v1818, %v1818
  %v1883 = vpack.c.bf16 %v1819, %v1819
  %v1884 = vpack.c.bf16 %v1820, %v1820
  %v1885 = vpack.c.bf16 %v1821, %v1821
  %v1886 = vpack.c.bf16 %v1822, %v1822
  %v1887 = vpack.c.bf16 %v1823, %v1823
  %v1888 = vpack.c.bf16 %v1824, %v1824
  %v1889 = vpack.c.bf16 %v1825, %v1825
  %v1890 = vpack.c.bf16 %v1826, %v1826
  %v1891 = vpack.c.bf16 %v1827, %v1827
  %v1892 = vpack.c.bf16 %v1828, %v1828
  %v1893 = vpack.c.bf16 %v1829, %v1829
  %v1894 = vpack.c.bf16 %v1830, %v1830
  %v1895 = vpack.c.bf16 %v1831, %v1831
  %v1896 = vpack.c.bf16 %v1832, %v1832
  %v1897 = vpack.c.bf16 %v1833, %v1833
  %v1898 = vpack.c.bf16 %v1834, %v1834
  %v1899 = vpack.c.bf16 %v1835, %v1835
  %v1900 = vpack.c.bf16 %v1836, %v1836
  %v1901 = vpack.c.bf16 %v1837, %v1837
  %v1902 = vpack.c.bf16 %v1838, %v1838
  %v1903 = vpack.c.bf16 %v1839, %v1839
  %v1904 = vpack.c.bf16 %v1840, %v1840
  %v1905 = vpack.c.bf16 %v1841, %v1841
  %v1906 = vpack.c.bf16 %v1842, %v1842
  %v1907 = vpack.c.bf16 %v1843, %v1843
  %v1908 = vpack.c.bf16 %v1844, %v1844
  %v1909 = vpack.c.bf16 %v1845, %v1845
  %v1910 = vpack.c.bf16 %v1846, %v1846
  %v1911 = vpack.c.bf16 %v1847, %v1847
  %v1912 = vpack.c.bf16 %v1848, %v1848
  %v1913 = vpack.c.bf16 %v1849, %v1849
  %v1914 = vpack.c.bf16 %v1850, %v1850
  %v1915 = vpack.c.bf16 %v1851, %v1851
  %v1916 = vpack.c.bf16 %v1852, %v1852
  %v1917 = vpack.c.bf16 %v1853, %v1853
  %v1918 = vpack.c.bf16 %v1854, %v1854
  %v1919 = vpack.c.bf16 %v1855, %v1855
  %v1920 = vpack.c.bf16 %v1856, %v1856
  %1921 = vst.msk [vmem:[%s6] sm:$0xf] %vm1100, %v1857
  %1922 = vst.msk [vmem:[%s6 + $0x4] sm:$0xf] %vm1100, %v1858
  %1923 = vst.msk [vmem:[%s6 + $0x8] sm:$0xf] %vm1100, %v1859
  %1924 = vst.msk [vmem:[%s6 + $0xc] sm:$0xf] %vm1100, %v1860
  %1925 = vst.msk [vmem:[%s6 + $0x10] sm:$0xf] %vm1100, %v1861
  %1926 = vst.msk [vmem:[%s6 + $0x14] sm:$0xf] %vm1100, %v1862
  %1927 = vst.msk [vmem:[%s6 + $0x18] sm:$0xf] %vm1100, %v1863
  %1928 = vst.msk [vmem:[%s6 + $0x1c] sm:$0xf] %vm1100, %v1864
  %1929 = vst.msk [vmem:[%s6 + $0x20] sm:$0xf] %vm1100, %v1865
  %1930 = vst.msk [vmem:[%s6 + $0x24] sm:$0xf] %vm1100, %v1866
  %1931 = vst.msk [vmem:[%s6 + $0x28] sm:$0xf] %vm1100, %v1867
  %1932 = vst.msk [vmem:[%s6 + $0x2c] sm:$0xf] %vm1100, %v1868
  %1933 = vst.msk [vmem:[%s6 + $0x30] sm:$0xf] %vm1100, %v1869
  %1934 = vst.msk [vmem:[%s6 + $0x34] sm:$0xf] %vm1100, %v1870
  %1935 = vst.msk [vmem:[%s6 + $0x38] sm:$0xf] %vm1100, %v1871
  %1936 = vst.msk [vmem:[%s6 + $0x3c] sm:$0xf] %vm1100, %v1872
  %1937 = vst.msk [vmem:[%s6 + $0x40] sm:$0xf] %vm1100, %v1873
  %1938 = vst.msk [vmem:[%s6 + $0x44] sm:$0xf] %vm1100, %v1874
  %1939 = vst.msk [vmem:[%s6 + $0x48] sm:$0xf] %vm1100, %v1875
  %1940 = vst.msk [vmem:[%s6 + $0x4c] sm:$0xf] %vm1100, %v1876
  %1941 = vst.msk [vmem:[%s6 + $0x50] sm:$0xf] %vm1100, %v1877
  %1942 = vst.msk [vmem:[%s6 + $0x54] sm:$0xf] %vm1100, %v1878
  %1943 = vst.msk [vmem:[%s6 + $0x58] sm:$0xf] %vm1100, %v1879
  %1944 = vst.msk [vmem:[%s6 + $0x5c] sm:$0xf] %vm1100, %v1880
  %1945 = vst.msk [vmem:[%s6 + $0x60] sm:$0xf] %vm1100, %v1881
  %1946 = vst.msk [vmem:[%s6 + $0x64] sm:$0xf] %vm1100, %v1882
  %1947 = vst.msk [vmem:[%s6 + $0x68] sm:$0xf] %vm1100, %v1883
  %1948 = vst.msk [vmem:[%s6 + $0x6c] sm:$0xf] %vm1100, %v1884
  %1949 = vst.msk [vmem:[%s6 + $0x70] sm:$0xf] %vm1100, %v1885
  %1950 = vst.msk [vmem:[%s6 + $0x74] sm:$0xf] %vm1100, %v1886
  %1951 = vst.msk [vmem:[%s6 + $0x78] sm:$0xf] %vm1100, %v1887
  %1952 = vst.msk [vmem:[%s6 + $0x7c] sm:$0xf] %vm1100, %v1888
  %1953 = vst.msk [vmem:[%s6 + $0x80] sm:$0xf] %vm1100, %v1889
  %1954 = vst.msk [vmem:[%s6 + $0x84] sm:$0xf] %vm1100, %v1890
  %1955 = vst.msk [vmem:[%s6 + $0x88] sm:$0xf] %vm1100, %v1891
  %1956 = vst.msk [vmem:[%s6 + $0x8c] sm:$0xf] %vm1100, %v1892
  %1957 = vst.msk [vmem:[%s6 + $0x90] sm:$0xf] %vm1100, %v1893
  %1958 = vst.msk [vmem:[%s6 + $0x94] sm:$0xf] %vm1100, %v1894
  %1959 = vst.msk [vmem:[%s6 + $0x98] sm:$0xf] %vm1100, %v1895
  %1960 = vst.msk [vmem:[%s6 + $0x9c] sm:$0xf] %vm1100, %v1896
  %1961 = vst.msk [vmem:[%s6 + $0xa0] sm:$0xf] %vm1100, %v1897
  %1962 = vst.msk [vmem:[%s6 + $0xa4] sm:$0xf] %vm1100, %v1898
  %1963 = vst.msk [vmem:[%s6 + $0xa8] sm:$0xf] %vm1100, %v1899
  %1964 = vst.msk [vmem:[%s6 + $0xac] sm:$0xf] %vm1100, %v1900
  %1965 = vst.msk [vmem:[%s6 + $0xb0] sm:$0xf] %vm1100, %v1901
  %1966 = vst.msk [vmem:[%s6 + $0xb4] sm:$0xf] %vm1100, %v1902
  %1967 = vst.msk [vmem:[%s6 + $0xb8] sm:$0xf] %vm1100, %v1903
  %1968 = vst.msk [vmem:[%s6 + $0xbc] sm:$0xf] %vm1100, %v1904
  %1969 = vst.msk [vmem:[%s6 + $0xc0] sm:$0xf] %vm1100, %v1905
  %1970 = vst.msk [vmem:[%s6 + $0xc4] sm:$0xf] %vm1100, %v1906
  %1971 = vst.msk [vmem:[%s6 + $0xc8] sm:$0xf] %vm1100, %v1907
  %1972 = vst.msk [vmem:[%s6 + $0xcc] sm:$0xf] %vm1100, %v1908
  %1973 = vst.msk [vmem:[%s6 + $0xd0] sm:$0xf] %vm1100, %v1909
  %1974 = vst.msk [vmem:[%s6 + $0xd4] sm:$0xf] %vm1100, %v1910
  %1975 = vst.msk [vmem:[%s6 + $0xd8] sm:$0xf] %vm1100, %v1911
  %1976 = vst.msk [vmem:[%s6 + $0xdc] sm:$0xf] %vm1100, %v1912
  %1977 = vst.msk [vmem:[%s6 + $0xe0] sm:$0xf] %vm1100, %v1913
  %1978 = vst.msk [vmem:[%s6 + $0xe4] sm:$0xf] %vm1100, %v1914
  %1979 = vst.msk [vmem:[%s6 + $0xe8] sm:$0xf] %vm1100, %v1915
  %1980 = vst.msk [vmem:[%s6 + $0xec] sm:$0xf] %vm1100, %v1916
  %1981 = vst.msk [vmem:[%s6 + $0xf0] sm:$0xf] %vm1100, %v1917
  %1982 = vst.msk [vmem:[%s6 + $0xf4] sm:$0xf] %vm1100, %v1918
  %1983 = vst.msk [vmem:[%s6 + $0xf8] sm:$0xf] %vm1100, %v1919
  %1984 = vst.msk [vmem:[%s6 + $0xfc] sm:$0xf] %vm1100, %v1920
  // Predicated region
  $region22: #{c2f_cot_attention_forward.8} parent=0 // pred_check
    _
  $region23: #{c2f_cot_attention_forward.8} parent=0 // pred_check_branch
    %1986 = sbr.rel (0) target = $region25
  $region24: #{c2f_cot_attention_forward.8} parent=0 // pred_region
    _
  $region25: #{c2f_cot_attention_forward.8} parent=0 // pred_fallthru
    _
  // Predicated region
  $region26: #{c2f_cot_attention_forward.8} parent=0 // pred_check
    _
  $region27: #{c2f_cot_attention_forward.8} parent=0 // pred_check_branch
    %1988 = sbr.rel (0) target = $region29
  $region28: #{c2f_cot_attention_forward.8} parent=0 // pred_region
    _
  $region29: #{c2f_cot_attention_forward.8} parent=0 // pred_fallthru
    _
  // Predicated region
  $region30: #{c2f_cot_attention_forward.8} parent=0 // pred_check
    _
  $region31: #{c2f_cot_attention_forward.8} parent=0 // pred_check_branch
    %1990 = sbr.rel (0) target = $region33
  $region32: #{c2f_cot_attention_forward.8} parent=0 // pred_region
    _
  $region33: #{c2f_cot_attention_forward.8} parent=0 // pred_fallthru
    _
  // Predicated region
  $region34: #{c2f_cot_attention_forward.8} parent=0 // pred_check
    _
  $region35: #{c2f_cot_attention_forward.8} parent=0 // pred_check_branch
    %1992 = sbr.rel (0) target = $region37
  $region36: #{c2f_cot_attention_forward.8} parent=0 // pred_region
    _
  $region37: #{c2f_cot_attention_forward.8} parent=0 // pred_fallthru
    _

// kernel: c2f_cot_attention_forward.12
$region0: #{c2f_cot_attention_forward.12}
  #allocation0 [shape = 'u32[]', space=smem, size = 0x4, offset = 0x4, fixed_abs, tag = 'smem constant byte address 0x4 - core index']
  #allocation1 [shape = 'u32[72,128]{1,0:T(1,128)}', space=vmem, size = 0x9000, scoped, tag = 'internal scratch']
  %s0 = inlined_call_operand.vmem [shape: bf16[512,8], index: 0, kind: input, shape index: {}]
  %s1 = inlined_call_operand.vmem [shape: bf16[512,8], index: 1, kind: input, shape index: {}]
  %s2 = inlined_call_operand.vmem [shape: bf16[8,4], index: 2, kind: input, shape index: {}]
  %s3 = inlined_call_operand.vmem [shape: bf16[8,4], index: 3, kind: input, shape index: {}]
  %s4 = inlined_call_operand.vmem [shape: bf16[8,8], index: 4, kind: input, shape index: {}]
  %s5 = inlined_call_operand.vmem [shape: bf16[4,8], index: 5, kind: input, shape index: {}]
  %s6 = inlined_call_operand.vmem [shape: f32[2,4], index: 6, kind: input, shape index: {}]
  %s7 = inlined_call_operand.vmem [shape: f32[2,8], index: 7, kind: input, shape index: {}]
  %s8 = inlined_call_operand.vmem [shape: f32[1,8], index: 8, kind: input, shape index: {}]
  %s9 = inlined_call_operand.vmem [shape: bf16[512,8], index: 9, kind: output, shape index: {0}]
  %s10 = inlined_call_operand.vmem [shape: f32[512,8], index: 10, kind: output, shape index: {1}]
  %11 = xla_tuple %s9, %s10
  %s12 = sld [smem:[#allocation0]]
  $region54: #{c2f_cot_attention_forward.12} parent=0
    _
  %s14 = ssub.s32 1, %s12
  %s15 = scalar_select 0, %s14, %s12
  // Predicated region
  $region2: #{c2f_cot_attention_forward.12} parent=0 // pred_check
    _
  $region3: #{c2f_cot_attention_forward.12} parent=0 // pred_check_branch
    %17 = sbr.rel (0) target = $region5
  $region4: #{c2f_cot_attention_forward.12} parent=0 // pred_region
    _
  $region5: #{c2f_cot_attention_forward.12} parent=0 // pred_fallthru
    _
  // Predicated region
  $region6: #{c2f_cot_attention_forward.12} parent=0 // pred_check
    _
  $region7: #{c2f_cot_attention_forward.12} parent=0 // pred_check_branch
    %19 = sbr.rel (0) target = $region9
  $region8: #{c2f_cot_attention_forward.12} parent=0 // pred_region
    _
  $region9: #{c2f_cot_attention_forward.12} parent=0 // pred_fallthru
    _
  // Predicated region
  $region10: #{c2f_cot_attention_forward.12} parent=0 // pred_check
    _
  $region11: #{c2f_cot_attention_forward.12} parent=0 // pred_check_branch
    %21 = sbr.rel (0) target = $region13
  $region12: #{c2f_cot_attention_forward.12} parent=0 // pred_region
    _
  $region13: #{c2f_cot_attention_forward.12} parent=0 // pred_fallthru
    _
  // Predicated region
  $region14: #{c2f_cot_attention_forward.12} parent=0 // pred_check
    _
  $region15: #{c2f_cot_attention_forward.12} parent=0 // pred_check_branch
    %23 = sbr.rel (0) target = $region17
  $region16: #{c2f_cot_attention_forward.12} parent=0 // pred_region
    _
  $region17: #{c2f_cot_attention_forward.12} parent=0 // pred_fallthru
    _
  // Predicated region
  $region18: #{c2f_cot_attention_forward.12} parent=0 // pred_check
    _
  $region19: #{c2f_cot_attention_forward.12} parent=0 // pred_check_branch
    %25 = sbr.rel (0) target = $region21
  $region20: #{c2f_cot_attention_forward.12} parent=0 // pred_region
    _
  $region21: #{c2f_cot_attention_forward.12} parent=0 // pred_fallthru
    _
  // Predicated region
  $region22: #{c2f_cot_attention_forward.12} parent=0 // pred_check
    _
  $region23: #{c2f_cot_attention_forward.12} parent=0 // pred_check_branch
    %27 = sbr.rel (0) target = $region25
  $region24: #{c2f_cot_attention_forward.12} parent=0 // pred_region
    _
  $region25: #{c2f_cot_attention_forward.12} parent=0 // pred_fallthru
    _
  // Predicated region
  $region26: #{c2f_cot_attention_forward.12} parent=0 // pred_check
    _
  $region27: #{c2f_cot_attention_forward.12} parent=0 // pred_check_branch
    %29 = sbr.rel (0) target = $region29
  $region28: #{c2f_cot_attention_forward.12} parent=0 // pred_region
    _
  $region29: #{c2f_cot_attention_forward.12} parent=0 // pred_fallthru
    _
  // Predicated region
  $region30: #{c2f_cot_attention_forward.12} parent=0 // pred_check
    _
  $region31: #{c2f_cot_attention_forward.12} parent=0 // pred_check_branch
    %31 = sbr.rel (0) target = $region33
  $region32: #{c2f_cot_attention_forward.12} parent=0 // pred_region
    _
  $region33: #{c2f_cot_attention_forward.12} parent=0 // pred_fallthru
    _
  // Predicated region
  $region34: #{c2f_cot_attention_forward.12} parent=0 // pred_check
    _
  $region35: #{c2f_cot_attention_forward.12} parent=0 // pred_check_branch
    %33 = sbr.rel (0) target = $region37
  $region36: #{c2f_cot_attention_forward.12} parent=0 // pred_region
    _
  $region37: #{c2f_cot_attention_forward.12} parent=0 // pred_fallthru
    _
  %v35 = vld [vmem:[%s0] sm:$0xf]
  %v36 = vld [vmem:[%s0 + $0x4] sm:$0xf]
  %v37 = vld [vmem:[%s0 + $0x8] sm:$0xf]
  %v38 = vld [vmem:[%s0 + $0xc] sm:$0xf]
  %v39 = vld [vmem:[%s0 + $0x10] sm:$0xf]
  %v40 = vld [vmem:[%s0 + $0x14] sm:$0xf]
  %v41 = vld [vmem:[%s0 + $0x18] sm:$0xf]
  %v42 = vld [vmem:[%s0 + $0x1c] sm:$0xf]
  %v43 = vld [vmem:[%s0 + $0x20] sm:$0xf]
  %v44 = vld [vmem:[%s0 + $0x24] sm:$0xf]
  %v45 = vld [vmem:[%s0 + $0x28] sm:$0xf]
  %v46 = vld [vmem:[%s0 + $0x2c] sm:$0xf]
  %v47 = vld [vmem:[%s0 + $0x30] sm:$0xf]
  %v48 = vld [vmem:[%s0 + $0x34] sm:$0xf]
  %v49 = vld [vmem:[%s0 + $0x38] sm:$0xf]
  %v50 = vld [vmem:[%s0 + $0x3c] sm:$0xf]
  %v51 = vld [vmem:[%s0 + $0x40] sm:$0xf]
  %v52 = vld [vmem:[%s0 + $0x44] sm:$0xf]
  %v53 = vld [vmem:[%s0 + $0x48] sm:$0xf]
  %v54 = vld [vmem:[%s0 + $0x4c] sm:$0xf]
  %v55 = vld [vmem:[%s0 + $0x50] sm:$0xf]
  %v56 = vld [vmem:[%s0 + $0x54] sm:$0xf]
  %v57 = vld [vmem:[%s0 + $0x58] sm:$0xf]
  %v58 = vld [vmem:[%s0 + $0x5c] sm:$0xf]
  %v59 = vld [vmem:[%s0 + $0x60] sm:$0xf]
  %v60 = vld [vmem:[%s0 + $0x64] sm:$0xf]
  %v61 = vld [vmem:[%s0 + $0x68] sm:$0xf]
  %v62 = vld [vmem:[%s0 + $0x6c] sm:$0xf]
  %v63 = vld [vmem:[%s0 + $0x70] sm:$0xf]
  %v64 = vld [vmem:[%s0 + $0x74] sm:$0xf]
  %v65 = vld [vmem:[%s0 + $0x78] sm:$0xf]
  %v66 = vld [vmem:[%s0 + $0x7c] sm:$0xf]
  %v67 = vld [vmem:[%s0 + $0x80] sm:$0xf]
  %v68 = vld [vmem:[%s0 + $0x84] sm:$0xf]
  %v69 = vld [vmem:[%s0 + $0x88] sm:$0xf]
  %v70 = vld [vmem:[%s0 + $0x8c] sm:$0xf]
  %v71 = vld [vmem:[%s0 + $0x90] sm:$0xf]
  %v72 = vld [vmem:[%s0 + $0x94] sm:$0xf]
  %v73 = vld [vmem:[%s0 + $0x98] sm:$0xf]
  %v74 = vld [vmem:[%s0 + $0x9c] sm:$0xf]
  %v75 = vld [vmem:[%s0 + $0xa0] sm:$0xf]
  %v76 = vld [vmem:[%s0 + $0xa4] sm:$0xf]
  %v77 = vld [vmem:[%s0 + $0xa8] sm:$0xf]
  %v78 = vld [vmem:[%s0 + $0xac] sm:$0xf]
  %v79 = vld [vmem:[%s0 + $0xb0] sm:$0xf]
  %v80 = vld [vmem:[%s0 + $0xb4] sm:$0xf]
  %v81 = vld [vmem:[%s0 + $0xb8] sm:$0xf]
  %v82 = vld [vmem:[%s0 + $0xbc] sm:$0xf]
  %v83 = vld [vmem:[%s0 + $0xc0] sm:$0xf]
  %v84 = vld [vmem:[%s0 + $0xc4] sm:$0xf]
  %v85 = vld [vmem:[%s0 + $0xc8] sm:$0xf]
  %v86 = vld [vmem:[%s0 + $0xcc] sm:$0xf]
  %v87 = vld [vmem:[%s0 + $0xd0] sm:$0xf]
  %v88 = vld [vmem:[%s0 + $0xd4] sm:$0xf]
  %v89 = vld [vmem:[%s0 + $0xd8] sm:$0xf]
  %v90 = vld [vmem:[%s0 + $0xdc] sm:$0xf]
  %v91 = vld [vmem:[%s0 + $0xe0] sm:$0xf]
  %v92 = vld [vmem:[%s0 + $0xe4] sm:$0xf]
  %v93 = vld [vmem:[%s0 + $0xe8] sm:$0xf]
  %v94 = vld [vmem:[%s0 + $0xec] sm:$0xf]
  %v95 = vld [vmem:[%s0 + $0xf0] sm:$0xf]
  %v96 = vld [vmem:[%s0 + $0xf4] sm:$0xf]
  %v97 = vld [vmem:[%s0 + $0xf8] sm:$0xf]
  %v98 = vld [vmem:[%s0 + $0xfc] sm:$0xf]
  %v99 = vld [vmem:[%s1] sm:$0xf]
  %v100 = vld [vmem:[%s1 + $0x4] sm:$0xf]
  %v101 = vld [vmem:[%s1 + $0x8] sm:$0xf]
  %v102 = vld [vmem:[%s1 + $0xc] sm:$0xf]
  %v103 = vld [vmem:[%s1 + $0x10] sm:$0xf]
  %v104 = vld [vmem:[%s1 + $0x14] sm:$0xf]
  %v105 = vld [vmem:[%s1 + $0x18] sm:$0xf]
  %v106 = vld [vmem:[%s1 + $0x1c] sm:$0xf]
  %v107 = vld [vmem:[%s1 + $0x20] sm:$0xf]
  %v108 = vld [vmem:[%s1 + $0x24] sm:$0xf]
  %v109 = vld [vmem:[%s1 + $0x28] sm:$0xf]
  %v110 = vld [vmem:[%s1 + $0x2c] sm:$0xf]
  %v111 = vld [vmem:[%s1 + $0x30] sm:$0xf]
  %v112 = vld [vmem:[%s1 + $0x34] sm:$0xf]
  %v113 = vld [vmem:[%s1 + $0x38] sm:$0xf]
  %v114 = vld [vmem:[%s1 + $0x3c] sm:$0xf]
  %v115 = vld [vmem:[%s1 + $0x40] sm:$0xf]
  %v116 = vld [vmem:[%s1 + $0x44] sm:$0xf]
  %v117 = vld [vmem:[%s1 + $0x48] sm:$0xf]
  %v118 = vld [vmem:[%s1 + $0x4c] sm:$0xf]
  %v119 = vld [vmem:[%s1 + $0x50] sm:$0xf]
  %v120 = vld [vmem:[%s1 + $0x54] sm:$0xf]
  %v121 = vld [vmem:[%s1 + $0x58] sm:$0xf]
  %v122 = vld [vmem:[%s1 + $0x5c] sm:$0xf]
  %v123 = vld [vmem:[%s1 + $0x60] sm:$0xf]
  %v124 = vld [vmem:[%s1 + $0x64] sm:$0xf]
  %v125 = vld [vmem:[%s1 + $0x68] sm:$0xf]
  %v126 = vld [vmem:[%s1 + $0x6c] sm:$0xf]
  %v127 = vld [vmem:[%s1 + $0x70] sm:$0xf]
  %v128 = vld [vmem:[%s1 + $0x74] sm:$0xf]
  %v129 = vld [vmem:[%s1 + $0x78] sm:$0xf]
  %v130 = vld [vmem:[%s1 + $0x7c] sm:$0xf]
  %v131 = vld [vmem:[%s1 + $0x80] sm:$0xf]
  %v132 = vld [vmem:[%s1 + $0x84] sm:$0xf]
  %v133 = vld [vmem:[%s1 + $0x88] sm:$0xf]
  %v134 = vld [vmem:[%s1 + $0x8c] sm:$0xf]
  %v135 = vld [vmem:[%s1 + $0x90] sm:$0xf]
  %v136 = vld [vmem:[%s1 + $0x94] sm:$0xf]
  %v137 = vld [vmem:[%s1 + $0x98] sm:$0xf]
  %v138 = vld [vmem:[%s1 + $0x9c] sm:$0xf]
  %v139 = vld [vmem:[%s1 + $0xa0] sm:$0xf]
  %v140 = vld [vmem:[%s1 + $0xa4] sm:$0xf]
  %v141 = vld [vmem:[%s1 + $0xa8] sm:$0xf]
  %v142 = vld [vmem:[%s1 + $0xac] sm:$0xf]
  %v143 = vld [vmem:[%s1 + $0xb0] sm:$0xf]
  %v144 = vld [vmem:[%s1 + $0xb4] sm:$0xf]
  %v145 = vld [vmem:[%s1 + $0xb8] sm:$0xf]
  %v146 = vld [vmem:[%s1 + $0xbc] sm:$0xf]
  %v147 = vld [vmem:[%s1 + $0xc0] sm:$0xf]
  %v148 = vld [vmem:[%s1 + $0xc4] sm:$0xf]
  %v149 = vld [vmem:[%s1 + $0xc8] sm:$0xf]
  %v150 = vld [vmem:[%s1 + $0xcc] sm:$0xf]
  %v151 = vld [vmem:[%s1 + $0xd0] sm:$0xf]
  %v152 = vld [vmem:[%s1 + $0xd4] sm:$0xf]
  %v153 = vld [vmem:[%s1 + $0xd8] sm:$0xf]
  %v154 = vld [vmem:[%s1 + $0xdc] sm:$0xf]
  %v155 = vld [vmem:[%s1 + $0xe0] sm:$0xf]
  %v156 = vld [vmem:[%s1 + $0xe4] sm:$0xf]
  %v157 = vld [vmem:[%s1 + $0xe8] sm:$0xf]
  %v158 = vld [vmem:[%s1 + $0xec] sm:$0xf]
  %v159 = vld [vmem:[%s1 + $0xf0] sm:$0xf]
  %v160 = vld [vmem:[%s1 + $0xf4] sm:$0xf]
  %v161 = vld [vmem:[%s1 + $0xf8] sm:$0xf]
  %v162 = vld [vmem:[%s1 + $0xfc] sm:$0xf]
  %v163 = vld [vmem:[%s2] sm:$0xf]
  %v164 = vld [vmem:[%s3] sm:$0xf]
  %v229 = vunpack.c.l.b16 %v99
  %v230 = vunpack.c.l.b16 %v100
  %v231 = vunpack.c.l.b16 %v101
  %v232 = vunpack.c.l.b16 %v102
  %v233 = vunpack.c.l.b16 %v103
  %v234 = vunpack.c.l.b16 %v104
  %v235 = vunpack.c.l.b16 %v105
  %v236 = vunpack.c.l.b16 %v106
  %v237 = vunpack.c.l.b16 %v107
  %v238 = vunpack.c.l.b16 %v108
  %v239 = vunpack.c.l.b16 %v109
  %v240 = vunpack.c.l.b16 %v110
  %v241 = vunpack.c.l.b16 %v111
  %v242 = vunpack.c.l.b16 %v112
  %v243 = vunpack.c.l.b16 %v113
  %v244 = vunpack.c.l.b16 %v114
  %v245 = vunpack.c.l.b16 %v115
  %v246 = vunpack.c.l.b16 %v116
  %v247 = vunpack.c.l.b16 %v117
  %v248 = vunpack.c.l.b16 %v118
  %v249 = vunpack.c.l.b16 %v119
  %v250 = vunpack.c.l.b16 %v120
  %v251 = vunpack.c.l.b16 %v121
  %v252 = vunpack.c.l.b16 %v122
  %v253 = vunpack.c.l.b16 %v123
  %v254 = vunpack.c.l.b16 %v124
  %v255 = vunpack.c.l.b16 %v125
  %v256 = vunpack.c.l.b16 %v126
  %v257 = vunpack.c.l.b16 %v127
  %v258 = vunpack.c.l.b16 %v128
  %v259 = vunpack.c.l.b16 %v129
  %v260 = vunpack.c.l.b16 %v130
  %v261 = vunpack.c.l.b16 %v131
  %v262 = vunpack.c.l.b16 %v132
  %v263 = vunpack.c.l.b16 %v133
  %v264 = vunpack.c.l.b16 %v134
  %v265 = vunpack.c.l.b16 %v135
  %v266 = vunpack.c.l.b16 %v136
  %v267 = vunpack.c.l.b16 %v137
  %v268 = vunpack.c.l.b16 %v138
  %v269 = vunpack.c.l.b16 %v139
  %v270 = vunpack.c.l.b16 %v140
  %v271 = vunpack.c.l.b16 %v141
  %v272 = vunpack.c.l.b16 %v142
  %v273 = vunpack.c.l.b16 %v143
  %v274 = vunpack.c.l.b16 %v144
  %v275 = vunpack.c.l.b16 %v145
  %v276 = vunpack.c.l.b16 %v146
  %v277 = vunpack.c.l.b16 %v147
  %v278 = vunpack.c.l.b16 %v148
  %v279 = vunpack.c.l.b16 %v149
  %v280 = vunpack.c.l.b16 %v150
  %v281 = vunpack.c.l.b16 %v151
  %v282 = vunpack.c.l.b16 %v152
  %v283 = vunpack.c.l.b16 %v153
  %v284 = vunpack.c.l.b16 %v154
  %v285 = vunpack.c.l.b16 %v155
  %v286 = vunpack.c.l.b16 %v156
  %v287 = vunpack.c.l.b16 %v157
  %v288 = vunpack.c.l.b16 %v158
  %v289 = vunpack.c.l.b16 %v159
  %v290 = vunpack.c.l.b16 %v160
  %v291 = vunpack.c.l.b16 %v161
  %v292 = vunpack.c.l.b16 %v162
  %v293 = vpack.c.b16 %v230, %v229
  %v294 = vpack.c.b16 %v232, %v231
  %v295 = vpack.c.b16 %v234, %v233
  %v296 = vpack.c.b16 %v236, %v235
  %v297 = vpack.c.b16 %v238, %v237
  %v298 = vpack.c.b16 %v240, %v239
  %v299 = vpack.c.b16 %v242, %v241
  %v300 = vpack.c.b16 %v244, %v243
  %v301 = vpack.c.b16 %v246, %v245
  %v302 = vpack.c.b16 %v248, %v247
  %v303 = vpack.c.b16 %v250, %v249
  %v304 = vpack.c.b16 %v252, %v251
  %v305 = vpack.c.b16 %v254, %v253
  %v306 = vpack.c.b16 %v256, %v255
  %v307 = vpack.c.b16 %v258, %v257
  %v308 = vpack.c.b16 %v260, %v259
  %v309 = vpack.c.b16 %v262, %v261
  %v310 = vpack.c.b16 %v264, %v263
  %v311 = vpack.c.b16 %v266, %v265
  %v312 = vpack.c.b16 %v268, %v267
  %v313 = vpack.c.b16 %v270, %v269
  %v314 = vpack.c.b16 %v272, %v271
  %v315 = vpack.c.b16 %v274, %v273
  %v316 = vpack.c.b16 %v276, %v275
  %v317 = vpack.c.b16 %v278, %v277
  %v318 = vpack.c.b16 %v280, %v279
  %v319 = vpack.c.b16 %v282, %v281
  %v320 = vpack.c.b16 %v284, %v283
  %v321 = vpack.c.b16 %v286, %v285
  %v322 = vpack.c.b16 %v288, %v287
  %v323 = vpack.c.b16 %v290, %v289
  %v324 = vpack.c.b16 %v292, %v291
  %vm325 = vcmask 64512
  %v327 = vsel %vm325, %v293, 0
  %v330 = vsel %vm325, %v294, 0
  %v333 = vsel %vm325, %v295, 0
  %v336 = vsel %vm325, %v296, 0
  %v339 = vsel %vm325, %v297, 0
  %v342 = vsel %vm325, %v298, 0
  %v345 = vsel %vm325, %v299, 0
  %v348 = vsel %vm325, %v300, 0
  %v351 = vsel %vm325, %v301, 0
  %v354 = vsel %vm325, %v302, 0
  %v357 = vsel %vm325, %v303, 0
  %v360 = vsel %vm325, %v304, 0
  %v363 = vsel %vm325, %v305, 0
  %v366 = vsel %vm325, %v306, 0
  %v369 = vsel %vm325, %v307, 0
  %v372 = vsel %vm325, %v308, 0
  %v375 = vsel %vm325, %v309, 0
  %v378 = vsel %vm325, %v310, 0
  %v381 = vsel %vm325, %v311, 0
  %v384 = vsel %vm325, %v312, 0
  %v387 = vsel %vm325, %v313, 0
  %v390 = vsel %vm325, %v314, 0
  %v393 = vsel %vm325, %v315, 0
  %v396 = vsel %vm325, %v316, 0
  %v399 = vsel %vm325, %v317, 0
  %v402 = vsel %vm325, %v318, 0
  %v405 = vsel %vm325, %v319, 0
  %v408 = vsel %vm325, %v320, 0
  %v411 = vsel %vm325, %v321, 0
  %v414 = vsel %vm325, %v322, 0
  %v417 = vsel %vm325, %v323, 0
  %v420 = vsel %vm325, %v324, 0
  %vm422 = vcmask 1043456
  %v424 = vsel %vm422, %v164, 0
  %426 = vmatpush.bf16.msra.mxu0 0
  %427 = vmatpush.bf16.msra.mxu0 0
  %428 = vmatpush.bf16.msra.mxu0 0
  %429 = vmatpush.bf16.msra.mxu0 0
  %430 = vmatpush.bf16.msra.mxu0 0
  %431 = vmatpush.bf16.msra.mxu0 0
  %432 = vmatpush.bf16.msra.mxu0 0
  %433 = vmatpush.bf16.msra.mxu0 %v424
  %434 = vmatmul.bf16.gmra.mxu0 %v327
  %v435 = vpop.f32.mrf.mxu0
  %v436 = vadd.f32 0.0, %v435
  %v437 = vpop.f32.mrf.mxu0
  %v438 = vadd.f32 0.0, %v437
  %439 = vmatmul.bf16.gmra.mxu0 %v330
  %v440 = vpop.f32.mrf.mxu0
  %v441 = vadd.f32 0.0, %v440
  %v442 = vpop.f32.mrf.mxu0
  %v443 = vadd.f32 0.0, %v442
  %444 = vmatmul.bf16.gmra.mxu0 %v333
  %v445 = vpop.f32.mrf.mxu0
  %v446 = vadd.f32 0.0, %v445
  %v447 = vpop.f32.mrf.mxu0
  %v448 = vadd.f32 0.0, %v447
  %449 = vmatmul.bf16.gmra.mxu0 %v336
  %v450 = vpop.f32.mrf.mxu0
  %v451 = vadd.f32 0.0, %v450
  %v452 = vpop.f32.mrf.mxu0
  %v453 = vadd.f32 0.0, %v452
  %454 = vmatmul.bf16.gmra.mxu0 %v339
  %v455 = vpop.f32.mrf.mxu0
  %v456 = vadd.f32 0.0, %v455
  %v457 = vpop.f32.mrf.mxu0
  %v458 = vadd.f32 0.0, %v457
  %459 = vmatmul.bf16.gmra.mxu0 %v342
  %v460 = vpop.f32.mrf.mxu0
  %v461 = vadd.f32 0.0, %v460
  %v462 = vpop.f32.mrf.mxu0
  %v463 = vadd.f32 0.0, %v462
  %464 = vmatmul.bf16.gmra.mxu0 %v345
  %v465 = vpop.f32.mrf.mxu0
  %v466 = vadd.f32 0.0, %v465
  %v467 = vpop.f32.mrf.mxu0
  %v468 = vadd.f32 0.0, %v467
  %469 = vmatmul.bf16.gmra.mxu0 %v348
  %v470 = vpop.f32.mrf.mxu0
  %v471 = vadd.f32 0.0, %v470
  %v472 = vpop.f32.mrf.mxu0
  %v473 = vadd.f32 0.0, %v472
  %474 = vmatmul.bf16.gmra.mxu0 %v351
  %v475 = vpop.f32.mrf.mxu0
  %v476 = vadd.f32 0.0, %v475
  %v477 = vpop.f32.mrf.mxu0
  %v478 = vadd.f32 0.0, %v477
  %479 = vmatmul.bf16.gmra.mxu0 %v354
  %v480 = vpop.f32.mrf.mxu0
  %v481 = vadd.f32 0.0, %v480
  %v482 = vpop.f32.mrf.mxu0
  %v483 = vadd.f32 0.0, %v482
  %484 = vmatmul.bf16.gmra.mxu0 %v357
  %v485 = vpop.f32.mrf.mxu0
  %v486 = vadd.f32 0.0, %v485
  %v487 = vpop.f32.mrf.mxu0
  %v488 = vadd.f32 0.0, %v487
  %489 = vmatmul.bf16.gmra.mxu0 %v360
  %v490 = vpop.f32.mrf.mxu0
  %v491 = vadd.f32 0.0, %v490
  %v492 = vpop.f32.mrf.mxu0
  %v493 = vadd.f32 0.0, %v492
  %494 = vmatmul.bf16.gmra.mxu0 %v363
  %v495 = vpop.f32.mrf.mxu0
  %v496 = vadd.f32 0.0, %v495
  %v497 = vpop.f32.mrf.mxu0
  %v498 = vadd.f32 0.0, %v497
  %499 = vmatmul.bf16.gmra.mxu0 %v366
  %v500 = vpop.f32.mrf.mxu0
  %v501 = vadd.f32 0.0, %v500
  %v502 = vpop.f32.mrf.mxu0
  %v503 = vadd.f32 0.0, %v502
  %504 = vmatmul.bf16.gmra.mxu0 %v369
  %v505 = vpop.f32.mrf.mxu0
  %v506 = vadd.f32 0.0, %v505
  %v507 = vpop.f32.mrf.mxu0
  %v508 = vadd.f32 0.0, %v507
  %509 = vmatmul.bf16.gmra.mxu0 %v372
  %v510 = vpop.f32.mrf.mxu0
  %v511 = vadd.f32 0.0, %v510
  %v512 = vpop.f32.mrf.mxu0
  %v513 = vadd.f32 0.0, %v512
  %514 = vmatmul.bf16.gmra.mxu0 %v375
  %v515 = vpop.f32.mrf.mxu0
  %v516 = vadd.f32 0.0, %v515
  %v517 = vpop.f32.mrf.mxu0
  %v518 = vadd.f32 0.0, %v517
  %519 = vmatmul.bf16.gmra.mxu0 %v378
  %v520 = vpop.f32.mrf.mxu0
  %v521 = vadd.f32 0.0, %v520
  %v522 = vpop.f32.mrf.mxu0
  %v523 = vadd.f32 0.0, %v522
  %524 = vmatmul.bf16.gmra.mxu0 %v381
  %v525 = vpop.f32.mrf.mxu0
  %v526 = vadd.f32 0.0, %v525
  %v527 = vpop.f32.mrf.mxu0
  %v528 = vadd.f32 0.0, %v527
  %529 = vmatmul.bf16.gmra.mxu0 %v384
  %v530 = vpop.f32.mrf.mxu0
  %v531 = vadd.f32 0.0, %v530
  %v532 = vpop.f32.mrf.mxu0
  %v533 = vadd.f32 0.0, %v532
  %534 = vmatmul.bf16.gmra.mxu0 %v387
  %v535 = vpop.f32.mrf.mxu0
  %v536 = vadd.f32 0.0, %v535
  %v537 = vpop.f32.mrf.mxu0
  %v538 = vadd.f32 0.0, %v537
  %539 = vmatmul.bf16.gmra.mxu0 %v390
  %v540 = vpop.f32.mrf.mxu0
  %v541 = vadd.f32 0.0, %v540
  %v542 = vpop.f32.mrf.mxu0
  %v543 = vadd.f32 0.0, %v542
  %544 = vmatmul.bf16.gmra.mxu0 %v393
  %v545 = vpop.f32.mrf.mxu0
  %v546 = vadd.f32 0.0, %v545
  %v547 = vpop.f32.mrf.mxu0
  %v548 = vadd.f32 0.0, %v547
  %549 = vmatmul.bf16.gmra.mxu0 %v396
  %v550 = vpop.f32.mrf.mxu0
  %v551 = vadd.f32 0.0, %v550
  %v552 = vpop.f32.mrf.mxu0
  %v553 = vadd.f32 0.0, %v552
  %554 = vmatmul.bf16.gmra.mxu0 %v399
  %v555 = vpop.f32.mrf.mxu0
  %v556 = vadd.f32 0.0, %v555
  %v557 = vpop.f32.mrf.mxu0
  %v558 = vadd.f32 0.0, %v557
  %559 = vmatmul.bf16.gmra.mxu0 %v402
  %v560 = vpop.f32.mrf.mxu0
  %v561 = vadd.f32 0.0, %v560
  %v562 = vpop.f32.mrf.mxu0
  %v563 = vadd.f32 0.0, %v562
  %564 = vmatmul.bf16.gmra.mxu0 %v405
  %v565 = vpop.f32.mrf.mxu0
  %v566 = vadd.f32 0.0, %v565
  %v567 = vpop.f32.mrf.mxu0
  %v568 = vadd.f32 0.0, %v567
  %569 = vmatmul.bf16.gmra.mxu0 %v408
  %v570 = vpop.f32.mrf.mxu0
  %v571 = vadd.f32 0.0, %v570
  %v572 = vpop.f32.mrf.mxu0
  %v573 = vadd.f32 0.0, %v572
  %574 = vmatmul.bf16.gmra.mxu0 %v411
  %v575 = vpop.f32.mrf.mxu0
  %v576 = vadd.f32 0.0, %v575
  %v577 = vpop.f32.mrf.mxu0
  %v578 = vadd.f32 0.0, %v577
  %579 = vmatmul.bf16.gmra.mxu0 %v414
  %v580 = vpop.f32.mrf.mxu0
  %v581 = vadd.f32 0.0, %v580
  %v582 = vpop.f32.mrf.mxu0
  %v583 = vadd.f32 0.0, %v582
  %584 = vmatmul.bf16.gmra.mxu0 %v417
  %v585 = vpop.f32.mrf.mxu0
  %v586 = vadd.f32 0.0, %v585
  %v587 = vpop.f32.mrf.mxu0
  %v588 = vadd.f32 0.0, %v587
  %589 = vmatmul.bf16.gmra.mxu0 %v420
  %v590 = vpop.f32.mrf.mxu0
  %v591 = vadd.f32 0.0, %v590
  %v592 = vpop.f32.mrf.mxu0
  %v593 = vadd.f32 0.0, %v592
  %594 = vdwg.mxu0
  %v659 = vunpack.c.l.b16 %v35
  %v660 = vunpack.c.l.b16 %v36
  %v661 = vunpack.c.l.b16 %v37
  %v662 = vunpack.c.l.b16 %v38
  %v663 = vunpack.c.l.b16 %v39
  %v664 = vunpack.c.l.b16 %v40
  %v665 = vunpack.c.l.b16 %v41
  %v666 = vunpack.c.l.b16 %v42
  %v667 = vunpack.c.l.b16 %v43
  %v668 = vunpack.c.l.b16 %v44
  %v669 = vunpack.c.l.b16 %v45
  %v670 = vunpack.c.l.b16 %v46
  %v671 = vunpack.c.l.b16 %v47
  %v672 = vunpack.c.l.b16 %v48
  %v673 = vunpack.c.l.b16 %v49
  %v674 = vunpack.c.l.b16 %v50
  %v675 = vunpack.c.l.b16 %v51
  %v676 = vunpack.c.l.b16 %v52
  %v677 = vunpack.c.l.b16 %v53
  %v678 = vunpack.c.l.b16 %v54
  %v679 = vunpack.c.l.b16 %v55
  %v680 = vunpack.c.l.b16 %v56
  %v681 = vunpack.c.l.b16 %v57
  %v682 = vunpack.c.l.b16 %v58
  %v683 = vunpack.c.l.b16 %v59
  %v684 = vunpack.c.l.b16 %v60
  %v685 = vunpack.c.l.b16 %v61
  %v686 = vunpack.c.l.b16 %v62
  %v687 = vunpack.c.l.b16 %v63
  %v688 = vunpack.c.l.b16 %v64
  %v689 = vunpack.c.l.b16 %v65
  %v690 = vunpack.c.l.b16 %v66
  %v691 = vunpack.c.l.b16 %v67
  %v692 = vunpack.c.l.b16 %v68
  %v693 = vunpack.c.l.b16 %v69
  %v694 = vunpack.c.l.b16 %v70
  %v695 = vunpack.c.l.b16 %v71
  %v696 = vunpack.c.l.b16 %v72
  %v697 = vunpack.c.l.b16 %v73
  %v698 = vunpack.c.l.b16 %v74
  %v699 = vunpack.c.l.b16 %v75
  %v700 = vunpack.c.l.b16 %v76
  %v701 = vunpack.c.l.b16 %v77
  %v702 = vunpack.c.l.b16 %v78
  %v703 = vunpack.c.l.b16 %v79
  %v704 = vunpack.c.l.b16 %v80
  %v705 = vunpack.c.l.b16 %v81
  %v706 = vunpack.c.l.b16 %v82
  %v707 = vunpack.c.l.b16 %v83
  %v708 = vunpack.c.l.b16 %v84
  %v709 = vunpack.c.l.b16 %v85
  %v710 = vunpack.c.l.b16 %v86
  %v711 = vunpack.c.l.b16 %v87
  %v712 = vunpack.c.l.b16 %v88
  %v713 = vunpack.c.l.b16 %v89
  %v714 = vunpack.c.l.b16 %v90
  %v715 = vunpack.c.l.b16 %v91
  %v716 = vunpack.c.l.b16 %v92
  %v717 = vunpack.c.l.b16 %v93
  %v718 = vunpack.c.l.b16 %v94
  %v719 = vunpack.c.l.b16 %v95
  %v720 = vunpack.c.l.b16 %v96
  %v721 = vunpack.c.l.b16 %v97
  %v722 = vunpack.c.l.b16 %v98
  %v723 = vpack.c.b16 %v660, %v659
  %v724 = vpack.c.b16 %v662, %v661
  %v725 = vpack.c.b16 %v664, %v663
  %v726 = vpack.c.b16 %v666, %v665
  %v727 = vpack.c.b16 %v668, %v667
  %v728 = vpack.c.b16 %v670, %v669
  %v729 = vpack.c.b16 %v672, %v671
  %v730 = vpack.c.b16 %v674, %v673
  %v731 = vpack.c.b16 %v676, %v675
  %v732 = vpack.c.b16 %v678, %v677
  %v733 = vpack.c.b16 %v680, %v679
  %v734 = vpack.c.b16 %v682, %v681
  %v735 = vpack.c.b16 %v684, %v683
  %v736 = vpack.c.b16 %v686, %v685
  %v737 = vpack.c.b16 %v688, %v687
  %v738 = vpack.c.b16 %v690, %v689
  %v739 = vpack.c.b16 %v692, %v691
  %v740 = vpack.c.b16 %v694, %v693
  %v741 = vpack.c.b16 %v696, %v695
  %v742 = vpack.c.b16 %v698, %v697
  %v743 = vpack.c.b16 %v700, %v699
  %v744 = vpack.c.b16 %v702, %v701
  %v745 = vpack.c.b16 %v704, %v703
  %v746 = vpack.c.b16 %v706, %v705
  %v747 = vpack.c.b16 %v708, %v707
  %v748 = vpack.c.b16 %v710, %v709
  %v749 = vpack.c.b16 %v712, %v711
  %v750 = vpack.c.b16 %v714, %v713
  %v751 = vpack.c.b16 %v716, %v715
  %v752 = vpack.c.b16 %v718, %v717
  %v753 = vpack.c.b16 %v720, %v719
  %v754 = vpack.c.b16 %v722, %v721
  %v756 = vsel %vm325, %v723, 0
  %v759 = vsel %vm325, %v724, 0
  %v762 = vsel %vm325, %v725, 0
  %v765 = vsel %vm325, %v726, 0
  %v768 = vsel %vm325, %v727, 0
  %v771 = vsel %vm325, %v728, 0
  %v774 = vsel %vm325, %v729, 0
  %v777 = vsel %vm325, %v730, 0
  %v780 = vsel %vm325, %v731, 0
  %v783 = vsel %vm325, %v732, 0
  %v786 = vsel %vm325, %v733, 0
  %v789 = vsel %vm325, %v734, 0
  %v792 = vsel %vm325, %v735, 0
  %v795 = vsel %vm325, %v736, 0
  %v798 = vsel %vm325, %v737, 0
  %v801 = vsel %vm325, %v738, 0
  %v804 = vsel %vm325, %v739, 0
  %v807 = vsel %vm325, %v740, 0
  %v810 = vsel %vm325, %v741, 0
  %v813 = vsel %vm325, %v742, 0
  %v816 = vsel %vm325, %v743, 0
  %v819 = vsel %vm325, %v744, 0
  %v822 = vsel %vm325, %v745, 0
  %v825 = vsel %vm325, %v746, 0
  %v828 = vsel %vm325, %v747, 0
  %v831 = vsel %vm325, %v748, 0
  %v834 = vsel %vm325, %v749, 0
  %v837 = vsel %vm325, %v750, 0
  %v840 = vsel %vm325, %v751, 0
  %v843 = vsel %vm325, %v752, 0
  %v846 = vsel %vm325, %v753, 0
  %v849 = vsel %vm325, %v754, 0
  %v852 = vsel %vm422, %v163, 0
  %854 = vmatpush.bf16.msra.mxu0 0
  %855 = vmatpush.bf16.msra.mxu0 0
  %856 = vmatpush.bf16.msra.mxu0 0
  %857 = vmatpush.bf16.msra.mxu0 0
  %858 = vmatpush.bf16.msra.mxu0 0
  %859 = vmatpush.bf16.msra.mxu0 0
  %860 = vmatpush.bf16.msra.mxu0 0
  %861 = vmatpush.bf16.msra.mxu0 %v852
  %862 = vmatmul.bf16.gmra.mxu0 %v756
  %v863 = vpop.f32.mrf.mxu0
  %v864 = vadd.f32 %v436, %v863
  %v865 = vpop.f32.mrf.mxu0
  %v866 = vadd.f32 %v438, %v865
  %867 = vmatmul.bf16.gmra.mxu0 %v759
  %v868 = vpop.f32.mrf.mxu0
  %v869 = vadd.f32 %v441, %v868
  %v870 = vpop.f32.mrf.mxu0
  %v871 = vadd.f32 %v443, %v870
  %872 = vmatmul.bf16.gmra.mxu0 %v762
  %v873 = vpop.f32.mrf.mxu0
  %v874 = vadd.f32 %v446, %v873
  %v875 = vpop.f32.mrf.mxu0
  %v876 = vadd.f32 %v448, %v875
  %877 = vmatmul.bf16.gmra.mxu0 %v765
  %v878 = vpop.f32.mrf.mxu0
  %v879 = vadd.f32 %v451, %v878
  %v880 = vpop.f32.mrf.mxu0
  %v881 = vadd.f32 %v453, %v880
  %882 = vmatmul.bf16.gmra.mxu0 %v768
  %v883 = vpop.f32.mrf.mxu0
  %v884 = vadd.f32 %v456, %v883
  %v885 = vpop.f32.mrf.mxu0
  %v886 = vadd.f32 %v458, %v885
  %887 = vmatmul.bf16.gmra.mxu0 %v771
  %v888 = vpop.f32.mrf.mxu0
  %v889 = vadd.f32 %v461, %v888
  %v890 = vpop.f32.mrf.mxu0
  %v891 = vadd.f32 %v463, %v890
  %892 = vmatmul.bf16.gmra.mxu0 %v774
  %v893 = vpop.f32.mrf.mxu0
  %v894 = vadd.f32 %v466, %v893
  %v895 = vpop.f32.mrf.mxu0
  %v896 = vadd.f32 %v468, %v895
  %897 = vmatmul.bf16.gmra.mxu0 %v777
  %v898 = vpop.f32.mrf.mxu0
  %v899 = vadd.f32 %v471, %v898
  %v900 = vpop.f32.mrf.mxu0
  %v901 = vadd.f32 %v473, %v900
  %902 = vmatmul.bf16.gmra.mxu0 %v780
  %v903 = vpop.f32.mrf.mxu0
  %v904 = vadd.f32 %v476, %v903
  %v905 = vpop.f32.mrf.mxu0
  %v906 = vadd.f32 %v478, %v905
  %907 = vmatmul.bf16.gmra.mxu0 %v783
  %v908 = vpop.f32.mrf.mxu0
  %v909 = vadd.f32 %v481, %v908
  %v910 = vpop.f32.mrf.mxu0
  %v911 = vadd.f32 %v483, %v910
  %912 = vmatmul.bf16.gmra.mxu0 %v786
  %v913 = vpop.f32.mrf.mxu0
  %v914 = vadd.f32 %v486, %v913
  %v915 = vpop.f32.mrf.mxu0
  %v916 = vadd.f32 %v488, %v915
  %917 = vmatmul.bf16.gmra.mxu0 %v789
  %v918 = vpop.f32.mrf.mxu0
  %v919 = vadd.f32 %v491, %v918
  %v920 = vpop.f32.mrf.mxu0
  %v921 = vadd.f32 %v493, %v920
  %922 = vmatmul.bf16.gmra.mxu0 %v792
  %v923 = vpop.f32.mrf.mxu0
  %v924 = vadd.f32 %v496, %v923
  %v925 = vpop.f32.mrf.mxu0
  %v926 = vadd.f32 %v498, %v925
  %927 = vmatmul.bf16.gmra.mxu0 %v795
  %v928 = vpop.f32.mrf.mxu0
  %v929 = vadd.f32 %v501, %v928
  %v930 = vpop.f32.mrf.mxu0
  %v931 = vadd.f32 %v503, %v930
  %932 = vmatmul.bf16.gmra.mxu0 %v798
  %v933 = vpop.f32.mrf.mxu0
  %v934 = vadd.f32 %v506, %v933
  %v935 = vpop.f32.mrf.mxu0
  %v936 = vadd.f32 %v508, %v935
  %937 = vmatmul.bf16.gmra.mxu0 %v801
  %v938 = vpop.f32.mrf.mxu0
  %v939 = vadd.f32 %v511, %v938
  %v940 = vpop.f32.mrf.mxu0
  %v941 = vadd.f32 %v513, %v940
  %942 = vmatmul.bf16.gmra.mxu0 %v804
  %v943 = vpop.f32.mrf.mxu0
  %v944 = vadd.f32 %v516, %v943
  %v945 = vpop.f32.mrf.mxu0
  %v946 = vadd.f32 %v518, %v945
  %947 = vmatmul.bf16.gmra.mxu0 %v807
  %v948 = vpop.f32.mrf.mxu0
  %v949 = vadd.f32 %v521, %v948
  %v950 = vpop.f32.mrf.mxu0
  %v951 = vadd.f32 %v523, %v950
  %952 = vmatmul.bf16.gmra.mxu0 %v810
  %v953 = vpop.f32.mrf.mxu0
  %v954 = vadd.f32 %v526, %v953
  %v955 = vpop.f32.mrf.mxu0
  %v956 = vadd.f32 %v528, %v955
  %957 = vmatmul.bf16.gmra.mxu0 %v813
  %v958 = vpop.f32.mrf.mxu0
  %v959 = vadd.f32 %v531, %v958
  %v960 = vpop.f32.mrf.mxu0
  %v961 = vadd.f32 %v533, %v960
  %962 = vmatmul.bf16.gmra.mxu0 %v816
  %v963 = vpop.f32.mrf.mxu0
  %v964 = vadd.f32 %v536, %v963
  %v965 = vpop.f32.mrf.mxu0
  %v966 = vadd.f32 %v538, %v965
  %967 = vmatmul.bf16.gmra.mxu0 %v819
  %v968 = vpop.f32.mrf.mxu0
  %v969 = vadd.f32 %v541, %v968
  %v970 = vpop.f32.mrf.mxu0
  %v971 = vadd.f32 %v543, %v970
  %972 = vmatmul.bf16.gmra.mxu0 %v822
  %v973 = vpop.f32.mrf.mxu0
  %v974 = vadd.f32 %v546, %v973
  %v975 = vpop.f32.mrf.mxu0
  %v976 = vadd.f32 %v548, %v975
  %977 = vmatmul.bf16.gmra.mxu0 %v825
  %v978 = vpop.f32.mrf.mxu0
  %v979 = vadd.f32 %v551, %v978
  %v980 = vpop.f32.mrf.mxu0
  %v981 = vadd.f32 %v553, %v980
  %982 = vmatmul.bf16.gmra.mxu0 %v828
  %v983 = vpop.f32.mrf.mxu0
  %v984 = vadd.f32 %v556, %v983
  %v985 = vpop.f32.mrf.mxu0
  %v986 = vadd.f32 %v558, %v985
  %987 = vmatmul.bf16.gmra.mxu0 %v831
  %v988 = vpop.f32.mrf.mxu0
  %v989 = vadd.f32 %v561, %v988
  %v990 = vpop.f32.mrf.mxu0
  %v991 = vadd.f32 %v563, %v990
  %992 = vmatmul.bf16.gmra.mxu0 %v834
  %v993 = vpop.f32.mrf.mxu0
  %v994 = vadd.f32 %v566, %v993
  %v995 = vpop.f32.mrf.mxu0
  %v996 = vadd.f32 %v568, %v995
  %997 = vmatmul.bf16.gmra.mxu0 %v837
  %v998 = vpop.f32.mrf.mxu0
  %v999 = vadd.f32 %v571, %v998
  %v1000 = vpop.f32.mrf.mxu0
  %v1001 = vadd.f32 %v573, %v1000
  %1002 = vmatmul.bf16.gmra.mxu0 %v840
  %v1003 = vpop.f32.mrf.mxu0
  %v1004 = vadd.f32 %v576, %v1003
  %v1005 = vpop.f32.mrf.mxu0
  %v1006 = vadd.f32 %v578, %v1005
  %1007 = vmatmul.bf16.gmra.mxu0 %v843
  %v1008 = vpop.f32.mrf.mxu0
  %v1009 = vadd.f32 %v581, %v1008
  %v1010 = vpop.f32.mrf.mxu0
  %v1011 = vadd.f32 %v583, %v1010
  %1012 = vmatmul.bf16.gmra.mxu0 %v846
  %v1013 = vpop.f32.mrf.mxu0
  %v1014 = vadd.f32 %v586, %v1013
  %v1015 = vpop.f32.mrf.mxu0
  %v1016 = vadd.f32 %v588, %v1015
  %1017 = vmatmul.bf16.gmra.mxu0 %v849
  %v1018 = vpop.f32.mrf.mxu0
  %v1019 = vadd.f32 %v591, %v1018
  %v1020 = vpop.f32.mrf.mxu0
  %v1021 = vadd.f32 %v593, %v1020
  %1022 = vdwg.mxu0
  %v1023 = vld [vmem:[%s6] sm:$0x3]
  %v1024 = vperm.slane %v1023, 0
  %v1025 = vmul.f32 %v864, %v1024
  %v1026 = vmul.f32 %v866, %v1024
  %v1027 = vmul.f32 %v869, %v1024
  %v1028 = vmul.f32 %v871, %v1024
  %v1029 = vmul.f32 %v874, %v1024
  %v1030 = vmul.f32 %v876, %v1024
  %v1031 = vmul.f32 %v879, %v1024
  %v1032 = vmul.f32 %v881, %v1024
  %v1033 = vmul.f32 %v884, %v1024
  %v1034 = vmul.f32 %v886, %v1024
  %v1035 = vmul.f32 %v889, %v1024
  %v1036 = vmul.f32 %v891, %v1024
  %v1037 = vmul.f32 %v894, %v1024
  %v1038 = vmul.f32 %v896, %v1024
  %v1039 = vmul.f32 %v899, %v1024
  %v1040 = vmul.f32 %v901, %v1024
  %v1041 = vmul.f32 %v904, %v1024
  %v1042 = vmul.f32 %v906, %v1024
  %v1043 = vmul.f32 %v909, %v1024
  %v1044 = vmul.f32 %v911, %v1024
  %v1045 = vmul.f32 %v914, %v1024
  %v1046 = vmul.f32 %v916, %v1024
  %v1047 = vmul.f32 %v919, %v1024
  %v1048 = vmul.f32 %v921, %v1024
  %v1049 = vmul.f32 %v924, %v1024
  %v1050 = vmul.f32 %v926, %v1024
  %v1051 = vmul.f32 %v929, %v1024
  %v1052 = vmul.f32 %v931, %v1024
  %v1053 = vmul.f32 %v934, %v1024
  %v1054 = vmul.f32 %v936, %v1024
  %v1055 = vmul.f32 %v939, %v1024
  %v1056 = vmul.f32 %v941, %v1024
  %v1057 = vmul.f32 %v944, %v1024
  %v1058 = vmul.f32 %v946, %v1024
  %v1059 = vmul.f32 %v949, %v1024
  %v1060 = vmul.f32 %v951, %v1024
  %v1061 = vmul.f32 %v954, %v1024
  %v1062 = vmul.f32 %v956, %v1024
  %v1063 = vmul.f32 %v959, %v1024
  %v1064 = vmul.f32 %v961, %v1024
  %v1065 = vmul.f32 %v964, %v1024
  %v1066 = vmul.f32 %v966, %v1024
  %v1067 = vmul.f32 %v969, %v1024
  %v1068 = vmul.f32 %v971, %v1024
  %v1069 = vmul.f32 %v974, %v1024
  %v1070 = vmul.f32 %v976, %v1024
  %v1071 = vmul.f32 %v979, %v1024
  %v1072 = vmul.f32 %v981, %v1024
  %v1073 = vmul.f32 %v984, %v1024
  %v1074 = vmul.f32 %v986, %v1024
  %v1075 = vmul.f32 %v989, %v1024
  %v1076 = vmul.f32 %v991, %v1024
  %v1077 = vmul.f32 %v994, %v1024
  %v1078 = vmul.f32 %v996, %v1024
  %v1079 = vmul.f32 %v999, %v1024
  %v1080 = vmul.f32 %v1001, %v1024
  %v1081 = vmul.f32 %v1004, %v1024
  %v1082 = vmul.f32 %v1006, %v1024
  %v1083 = vmul.f32 %v1009, %v1024
  %v1084 = vmul.f32 %v1011, %v1024
  %v1085 = vmul.f32 %v1014, %v1024
  %v1086 = vmul.f32 %v1016, %v1024
  %v1087 = vmul.f32 %v1019, %v1024
  %v1088 = vmul.f32 %v1021, %v1024
  %v1089 = vperm.slane %v1023, 1
  %v1090 = vadd.f32 %v1025, %v1089
  %v1091 = vadd.f32 %v1026, %v1089
  %v1092 = vadd.f32 %v1027, %v1089
  %v1093 = vadd.f32 %v1028, %v1089
  %v1094 = vadd.f32 %v1029, %v1089
  %v1095 = vadd.f32 %v1030, %v1089
  %v1096 = vadd.f32 %v1031, %v1089
  %v1097 = vadd.f32 %v1032, %v1089
  %v1098 = vadd.f32 %v1033, %v1089
  %v1099 = vadd.f32 %v1034, %v1089
  %v1100 = vadd.f32 %v1035, %v1089
  %v1101 = vadd.f32 %v1036, %v1089
  %v1102 = vadd.f32 %v1037, %v1089
  %v1103 = vadd.f32 %v1038, %v1089
  %v1104 = vadd.f32 %v1039, %v1089
  %v1105 = vadd.f32 %v1040, %v1089
  %v1106 = vadd.f32 %v1041, %v1089
  %v1107 = vadd.f32 %v1042, %v1089
  %v1108 = vadd.f32 %v1043, %v1089
  %v1109 = vadd.f32 %v1044, %v1089
  %v1110 = vadd.f32 %v1045, %v1089
  %v1111 = vadd.f32 %v1046, %v1089
  %v1112 = vadd.f32 %v1047, %v1089
  %v1113 = vadd.f32 %v1048, %v1089
  %v1114 = vadd.f32 %v1049, %v1089
  %v1115 = vadd.f32 %v1050, %v1089
  %v1116 = vadd.f32 %v1051, %v1089
  %v1117 = vadd.f32 %v1052, %v1089
  %v1118 = vadd.f32 %v1053, %v1089
  %v1119 = vadd.f32 %v1054, %v1089
  %v1120 = vadd.f32 %v1055, %v1089
  %v1121 = vadd.f32 %v1056, %v1089
  %v1122 = vadd.f32 %v1057, %v1089
  %v1123 = vadd.f32 %v1058, %v1089
  %v1124 = vadd.f32 %v1059, %v1089
  %v1125 = vadd.f32 %v1060, %v1089
  %v1126 = vadd.f32 %v1061, %v1089
  %v1127 = vadd.f32 %v1062, %v1089
  %v1128 = vadd.f32 %v1063, %v1089
  %v1129 = vadd.f32 %v1064, %v1089
  %v1130 = vadd.f32 %v1065, %v1089
  %v1131 = vadd.f32 %v1066, %v1089
  %v1132 = vadd.f32 %v1067, %v1089
  %v1133 = vadd.f32 %v1068, %v1089
  %v1134 = vadd.f32 %v1069, %v1089
  %v1135 = vadd.f32 %v1070, %v1089
  %v1136 = vadd.f32 %v1071, %v1089
  %v1137 = vadd.f32 %v1072, %v1089
  %v1138 = vadd.f32 %v1073, %v1089
  %v1139 = vadd.f32 %v1074, %v1089
  %v1140 = vadd.f32 %v1075, %v1089
  %v1141 = vadd.f32 %v1076, %v1089
  %v1142 = vadd.f32 %v1077, %v1089
  %v1143 = vadd.f32 %v1078, %v1089
  %v1144 = vadd.f32 %v1079, %v1089
  %v1145 = vadd.f32 %v1080, %v1089
  %v1146 = vadd.f32 %v1081, %v1089
  %v1147 = vadd.f32 %v1082, %v1089
  %v1148 = vadd.f32 %v1083, %v1089
  %v1149 = vadd.f32 %v1084, %v1089
  %v1150 = vadd.f32 %v1085, %v1089
  %v1151 = vadd.f32 %v1086, %v1089
  %v1152 = vadd.f32 %v1087, %v1089
  %v1153 = vadd.f32 %v1088, %v1089
  %v1154 = vmax.f32 %v1090, 0.0
  %v1155 = vmax.f32 %v1091, 0.0
  %v1156 = vmax.f32 %v1092, 0.0
  %v1157 = vmax.f32 %v1093, 0.0
  %v1158 = vmax.f32 %v1094, 0.0
  %v1159 = vmax.f32 %v1095, 0.0
  %v1160 = vmax.f32 %v1096, 0.0
  %v1161 = vmax.f32 %v1097, 0.0
  %v1162 = vmax.f32 %v1098, 0.0
  %v1163 = vmax.f32 %v1099, 0.0
  %v1164 = vmax.f32 %v1100, 0.0
  %v1165 = vmax.f32 %v1101, 0.0
  %v1166 = vmax.f32 %v1102, 0.0
  %v1167 = vmax.f32 %v1103, 0.0
  %v1168 = vmax.f32 %v1104, 0.0
  %v1169 = vmax.f32 %v1105, 0.0
  %v1170 = vmax.f32 %v1106, 0.0
  %v1171 = vmax.f32 %v1107, 0.0
  %v1172 = vmax.f32 %v1108, 0.0
  %v1173 = vmax.f32 %v1109, 0.0
  %v1174 = vmax.f32 %v1110, 0.0
  %v1175 = vmax.f32 %v1111, 0.0
  %v1176 = vmax.f32 %v1112, 0.0
  %v1177 = vmax.f32 %v1113, 0.0
  %v1178 = vmax.f32 %v1114, 0.0
  %v1179 = vmax.f32 %v1115, 0.0
  %v1180 = vmax.f32 %v1116, 0.0
  %v1181 = vmax.f32 %v1117, 0.0
  %v1182 = vmax.f32 %v1118, 0.0
  %v1183 = vmax.f32 %v1119, 0.0
  %v1184 = vmax.f32 %v1120, 0.0
  %v1185 = vmax.f32 %v1121, 0.0
  %v1186 = vmax.f32 %v1122, 0.0
  %v1187 = vmax.f32 %v1123, 0.0
  %v1188 = vmax.f32 %v1124, 0.0
  %v1189 = vmax.f32 %v1125, 0.0
  %v1190 = vmax.f32 %v1126, 0.0
  %v1191 = vmax.f32 %v1127, 0.0
  %v1192 = vmax.f32 %v1128, 0.0
  %v1193 = vmax.f32 %v1129, 0.0
  %v1194 = vmax.f32 %v1130, 0.0
  %v1195 = vmax.f32 %v1131, 0.0
  %v1196 = vmax.f32 %v1132, 0.0
  %v1197 = vmax.f32 %v1133, 0.0
  %v1198 = vmax.f32 %v1134, 0.0
  %v1199 = vmax.f32 %v1135, 0.0
  %v1200 = vmax.f32 %v1136, 0.0
  %v1201 = vmax.f32 %v1137, 0.0
  %v1202 = vmax.f32 %v1138, 0.0
  %v1203 = vmax.f32 %v1139, 0.0
  %v1204 = vmax.f32 %v1140, 0.0
  %v1205 = vmax.f32 %v1141, 0.0
  %v1206 = vmax.f32 %v1142, 0.0
  %v1207 = vmax.f32 %v1143, 0.0
  %v1208 = vmax.f32 %v1144, 0.0
  %v1209 = vmax.f32 %v1145, 0.0
  %v1210 = vmax.f32 %v1146, 0.0
  %v1211 = vmax.f32 %v1147, 0.0
  %v1212 = vmax.f32 %v1148, 0.0
  %v1213 = vmax.f32 %v1149, 0.0
  %v1214 = vmax.f32 %v1150, 0.0
  %v1215 = vmax.f32 %v1151, 0.0
  %v1216 = vmax.f32 %v1152, 0.0
  %v1217 = vmax.f32 %v1153, 0.0
  %v1218 = vpack.c.bf16 %v1155, %v1154
  %v1219 = vpack.c.bf16 %v1157, %v1156
  %v1220 = vpack.c.bf16 %v1159, %v1158
  %v1221 = vpack.c.bf16 %v1161, %v1160
  %v1222 = vpack.c.bf16 %v1163, %v1162
  %v1223 = vpack.c.bf16 %v1165, %v1164
  %v1224 = vpack.c.bf16 %v1167, %v1166
  %v1225 = vpack.c.bf16 %v1169, %v1168
  %v1226 = vpack.c.bf16 %v1171, %v1170
  %v1227 = vpack.c.bf16 %v1173, %v1172
  %v1228 = vpack.c.bf16 %v1175, %v1174
  %v1229 = vpack.c.bf16 %v1177, %v1176
  %v1230 = vpack.c.bf16 %v1179, %v1178
  %v1231 = vpack.c.bf16 %v1181, %v1180
  %v1232 = vpack.c.bf16 %v1183, %v1182
  %v1233 = vpack.c.bf16 %v1185, %v1184
  %v1234 = vpack.c.bf16 %v1187, %v1186
  %v1235 = vpack.c.bf16 %v1189, %v1188
  %v1236 = vpack.c.bf16 %v1191, %v1190
  %v1237 = vpack.c.bf16 %v1193, %v1192
  %v1238 = vpack.c.bf16 %v1195, %v1194
  %v1239 = vpack.c.bf16 %v1197, %v1196
  %v1240 = vpack.c.bf16 %v1199, %v1198
  %v1241 = vpack.c.bf16 %v1201, %v1200
  %v1242 = vpack.c.bf16 %v1203, %v1202
  %v1243 = vpack.c.bf16 %v1205, %v1204
  %v1244 = vpack.c.bf16 %v1207, %v1206
  %v1245 = vpack.c.bf16 %v1209, %v1208
  %v1246 = vpack.c.bf16 %v1211, %v1210
  %v1247 = vpack.c.bf16 %v1213, %v1212
  %v1248 = vpack.c.bf16 %v1215, %v1214
  %v1249 = vpack.c.bf16 %v1217, %v1216
  %v1250 = vld [vmem:[%s5] sm:$0x3]
  %v1251 = vld [vmem:[%s8] sm:$0x1]
  %v1253 = vperm.slane %v1251, 0
  %vm1255 = vcmask 31744
  %v1257 = vsel %vm1255, %v1218, 0
  %v1260 = vsel %vm1255, %v1219, 0
  %v1263 = vsel %vm1255, %v1220, 0
  %v1266 = vsel %vm1255, %v1221, 0
  %v1269 = vsel %vm1255, %v1222, 0
  %v1272 = vsel %vm1255, %v1223, 0
  %v1275 = vsel %vm1255, %v1224, 0
  %v1278 = vsel %vm1255, %v1225, 0
  %v1281 = vsel %vm1255, %v1226, 0
  %v1284 = vsel %vm1255, %v1227, 0
  %v1287 = vsel %vm1255, %v1228, 0
  %v1290 = vsel %vm1255, %v1229, 0
  %v1293 = vsel %vm1255, %v1230, 0
  %v1296 = vsel %vm1255, %v1231, 0
  %v1299 = vsel %vm1255, %v1232, 0
  %v1302 = vsel %vm1255, %v1233, 0
  %v1305 = vsel %vm1255, %v1234, 0
  %v1308 = vsel %vm1255, %v1235, 0
  %v1311 = vsel %vm1255, %v1236, 0
  %v1314 = vsel %vm1255, %v1237, 0
  %v1317 = vsel %vm1255, %v1238, 0
  %v1320 = vsel %vm1255, %v1239, 0
  %v1323 = vsel %vm1255, %v1240, 0
  %v1326 = vsel %vm1255, %v1241, 0
  %v1329 = vsel %vm1255, %v1242, 0
  %v1332 = vsel %vm1255, %v1243, 0
  %v1335 = vsel %vm1255, %v1244, 0
  %v1338 = vsel %vm1255, %v1245, 0
  %v1341 = vsel %vm1255, %v1246, 0
  %v1344 = vsel %vm1255, %v1247, 0
  %v1347 = vsel %vm1255, %v1248, 0
  %v1350 = vsel %vm1255, %v1249, 0
  %vm1352 = vcmask 1041408
  %v1354 = vsel %vm1352, %v1250, 0
  %1356 = vmatpush.bf16.msra.mxu0 0
  %1357 = vmatpush.bf16.msra.mxu0 0
  %1358 = vmatpush.bf16.msra.mxu0 0
  %1359 = vmatpush.bf16.msra.mxu0 0
  %1360 = vmatpush.bf16.msra.mxu0 0
  %1361 = vmatpush.bf16.msra.mxu0 0
  %1362 = vmatpush.bf16.msra.mxu0 0
  %1363 = vmatpush.bf16.msra.mxu0 %v1354
  %1364 = vmatmul.bf16.gmra.mxu0 %v1257
  %v1365 = vpop.f32.mrf.mxu0
  %v1366 = vadd.f32 %v1253, %v1365
  %v1367 = vpop.f32.mrf.mxu0
  %v1368 = vadd.f32 %v1253, %v1367
  %1369 = vmatmul.bf16.gmra.mxu0 %v1260
  %v1370 = vpop.f32.mrf.mxu0
  %v1371 = vadd.f32 %v1253, %v1370
  %v1372 = vpop.f32.mrf.mxu0
  %v1373 = vadd.f32 %v1253, %v1372
  %1374 = vmatmul.bf16.gmra.mxu0 %v1263
  %v1375 = vpop.f32.mrf.mxu0
  %v1376 = vadd.f32 %v1253, %v1375
  %v1377 = vpop.f32.mrf.mxu0
  %v1378 = vadd.f32 %v1253, %v1377
  %1379 = vmatmul.bf16.gmra.mxu0 %v1266
  %v1380 = vpop.f32.mrf.mxu0
  %v1381 = vadd.f32 %v1253, %v1380
  %v1382 = vpop.f32.mrf.mxu0
  %v1383 = vadd.f32 %v1253, %v1382
  %1384 = vmatmul.bf16.gmra.mxu0 %v1269
  %v1385 = vpop.f32.mrf.mxu0
  %v1386 = vadd.f32 %v1253, %v1385
  %v1387 = vpop.f32.mrf.mxu0
  %v1388 = vadd.f32 %v1253, %v1387
  %1389 = vmatmul.bf16.gmra.mxu0 %v1272
  %v1390 = vpop.f32.mrf.mxu0
  %v1391 = vadd.f32 %v1253, %v1390
  %v1392 = vpop.f32.mrf.mxu0
  %v1393 = vadd.f32 %v1253, %v1392
  %1394 = vmatmul.bf16.gmra.mxu0 %v1275
  %v1395 = vpop.f32.mrf.mxu0
  %v1396 = vadd.f32 %v1253, %v1395
  %v1397 = vpop.f32.mrf.mxu0
  %v1398 = vadd.f32 %v1253, %v1397
  %1399 = vmatmul.bf16.gmra.mxu0 %v1278
  %v1400 = vpop.f32.mrf.mxu0
  %v1401 = vadd.f32 %v1253, %v1400
  %v1402 = vpop.f32.mrf.mxu0
  %v1403 = vadd.f32 %v1253, %v1402
  %1404 = vmatmul.bf16.gmra.mxu0 %v1281
  %v1405 = vpop.f32.mrf.mxu0
  %v1406 = vadd.f32 %v1253, %v1405
  %v1407 = vpop.f32.mrf.mxu0
  %v1408 = vadd.f32 %v1253, %v1407
  %1409 = vmatmul.bf16.gmra.mxu0 %v1284
  %v1410 = vpop.f32.mrf.mxu0
  %v1411 = vadd.f32 %v1253, %v1410
  %v1412 = vpop.f32.mrf.mxu0
  %v1413 = vadd.f32 %v1253, %v1412
  %1414 = vmatmul.bf16.gmra.mxu0 %v1287
  %v1415 = vpop.f32.mrf.mxu0
  %v1416 = vadd.f32 %v1253, %v1415
  %v1417 = vpop.f32.mrf.mxu0
  %v1418 = vadd.f32 %v1253, %v1417
  %1419 = vmatmul.bf16.gmra.mxu0 %v1290
  %v1420 = vpop.f32.mrf.mxu0
  %v1421 = vadd.f32 %v1253, %v1420
  %v1422 = vpop.f32.mrf.mxu0
  %v1423 = vadd.f32 %v1253, %v1422
  %1424 = vmatmul.bf16.gmra.mxu0 %v1293
  %v1425 = vpop.f32.mrf.mxu0
  %v1426 = vadd.f32 %v1253, %v1425
  %v1427 = vpop.f32.mrf.mxu0
  %v1428 = vadd.f32 %v1253, %v1427
  %1429 = vmatmul.bf16.gmra.mxu0 %v1296
  %v1430 = vpop.f32.mrf.mxu0
  %v1431 = vadd.f32 %v1253, %v1430
  %v1432 = vpop.f32.mrf.mxu0
  %v1433 = vadd.f32 %v1253, %v1432
  %1434 = vmatmul.bf16.gmra.mxu0 %v1299
  %v1435 = vpop.f32.mrf.mxu0
  %v1436 = vadd.f32 %v1253, %v1435
  %v1437 = vpop.f32.mrf.mxu0
  %v1438 = vadd.f32 %v1253, %v1437
  %1439 = vmatmul.bf16.gmra.mxu0 %v1302
  %v1440 = vpop.f32.mrf.mxu0
  %v1441 = vadd.f32 %v1253, %v1440
  %v1442 = vpop.f32.mrf.mxu0
  %v1443 = vadd.f32 %v1253, %v1442
  %1444 = vmatmul.bf16.gmra.mxu0 %v1305
  %v1445 = vpop.f32.mrf.mxu0
  %v1446 = vadd.f32 %v1253, %v1445
  %v1447 = vpop.f32.mrf.mxu0
  %v1448 = vadd.f32 %v1253, %v1447
  %1449 = vmatmul.bf16.gmra.mxu0 %v1308
  %v1450 = vpop.f32.mrf.mxu0
  %v1451 = vadd.f32 %v1253, %v1450
  %v1452 = vpop.f32.mrf.mxu0
  %v1453 = vadd.f32 %v1253, %v1452
  %1454 = vmatmul.bf16.gmra.mxu0 %v1311
  %v1455 = vpop.f32.mrf.mxu0
  %v1456 = vadd.f32 %v1253, %v1455
  %v1457 = vpop.f32.mrf.mxu0
  %v1458 = vadd.f32 %v1253, %v1457
  %1459 = vmatmul.bf16.gmra.mxu0 %v1314
  %v1460 = vpop.f32.mrf.mxu0
  %v1461 = vadd.f32 %v1253, %v1460
  %v1462 = vpop.f32.mrf.mxu0
  %v1463 = vadd.f32 %v1253, %v1462
  %1464 = vmatmul.bf16.gmra.mxu0 %v1317
  %v1465 = vpop.f32.mrf.mxu0
  %v1466 = vadd.f32 %v1253, %v1465
  %v1467 = vpop.f32.mrf.mxu0
  %v1468 = vadd.f32 %v1253, %v1467
  %1469 = vmatmul.bf16.gmra.mxu0 %v1320
  %v1470 = vpop.f32.mrf.mxu0
  %v1471 = vadd.f32 %v1253, %v1470
  %v1472 = vpop.f32.mrf.mxu0
  %v1473 = vadd.f32 %v1253, %v1472
  %1474 = vmatmul.bf16.gmra.mxu0 %v1323
  %v1475 = vpop.f32.mrf.mxu0
  %v1476 = vadd.f32 %v1253, %v1475
  %v1477 = vpop.f32.mrf.mxu0
  %v1478 = vadd.f32 %v1253, %v1477
  %1479 = vmatmul.bf16.gmra.mxu0 %v1326
  %v1480 = vpop.f32.mrf.mxu0
  %v1481 = vadd.f32 %v1253, %v1480
  %v1482 = vpop.f32.mrf.mxu0
  %v1483 = vadd.f32 %v1253, %v1482
  %1484 = vmatmul.bf16.gmra.mxu0 %v1329
  %v1485 = vpop.f32.mrf.mxu0
  %v1486 = vadd.f32 %v1253, %v1485
  %v1487 = vpop.f32.mrf.mxu0
  %v1488 = vadd.f32 %v1253, %v1487
  %1489 = vmatmul.bf16.gmra.mxu0 %v1332
  %v1490 = vpop.f32.mrf.mxu0
  %v1491 = vadd.f32 %v1253, %v1490
  %v1492 = vpop.f32.mrf.mxu0
  %v1493 = vadd.f32 %v1253, %v1492
  %1494 = vmatmul.bf16.gmra.mxu0 %v1335
  %v1495 = vpop.f32.mrf.mxu0
  %v1496 = vadd.f32 %v1253, %v1495
  %v1497 = vpop.f32.mrf.mxu0
  %v1498 = vadd.f32 %v1253, %v1497
  %1499 = vmatmul.bf16.gmra.mxu0 %v1338
  %v1500 = vpop.f32.mrf.mxu0
  %v1501 = vadd.f32 %v1253, %v1500
  %v1502 = vpop.f32.mrf.mxu0
  %v1503 = vadd.f32 %v1253, %v1502
  %1504 = vmatmul.bf16.gmra.mxu0 %v1341
  %v1505 = vpop.f32.mrf.mxu0
  %v1506 = vadd.f32 %v1253, %v1505
  %v1507 = vpop.f32.mrf.mxu0
  %v1508 = vadd.f32 %v1253, %v1507
  %1509 = vmatmul.bf16.gmra.mxu0 %v1344
  %v1510 = vpop.f32.mrf.mxu0
  %v1511 = vadd.f32 %v1253, %v1510
  %v1512 = vpop.f32.mrf.mxu0
  %v1513 = vadd.f32 %v1253, %v1512
  %1514 = vmatmul.bf16.gmra.mxu0 %v1347
  %v1515 = vpop.f32.mrf.mxu0
  %v1516 = vadd.f32 %v1253, %v1515
  %v1517 = vpop.f32.mrf.mxu0
  %v1518 = vadd.f32 %v1253, %v1517
  %1519 = vmatmul.bf16.gmra.mxu0 %v1350
  %v1520 = vpop.f32.mrf.mxu0
  %v1521 = vadd.f32 %v1253, %v1520
  %v1522 = vpop.f32.mrf.mxu0
  %v1523 = vadd.f32 %v1253, %v1522
  %1524 = vdwg.mxu0
  %v1525 = vld [vmem:[%s4] sm:$0xf]
  %v1527 = vsel %vm422, %v1525, 0
  %1529 = vmatpush.bf16.msra.mxu0 0
  %1530 = vmatpush.bf16.msra.mxu0 0
  %1531 = vmatpush.bf16.msra.mxu0 0
  %1532 = vmatpush.bf16.msra.mxu0 0
  %1533 = vmatpush.bf16.msra.mxu0 0
  %1534 = vmatpush.bf16.msra.mxu0 0
  %1535 = vmatpush.bf16.msra.mxu0 0
  %1536 = vmatpush.bf16.msra.mxu0 %v1527
  %1537 = vmatmul.bf16.gmra.mxu0 %v327
  %v1538 = vpop.f32.mrf.mxu0
  %v1539 = vadd.f32 0.0, %v1538
  %v1540 = vpop.f32.mrf.mxu0
  %v1541 = vadd.f32 0.0, %v1540
  %1542 = vmatmul.bf16.gmra.mxu0 %v330
  %v1543 = vpop.f32.mrf.mxu0
  %v1544 = vadd.f32 0.0, %v1543
  %v1545 = vpop.f32.mrf.mxu0
  %v1546 = vadd.f32 0.0, %v1545
  %1547 = vmatmul.bf16.gmra.mxu0 %v333
  %v1548 = vpop.f32.mrf.mxu0
  %v1549 = vadd.f32 0.0, %v1548
  %v1550 = vpop.f32.mrf.mxu0
  %v1551 = vadd.f32 0.0, %v1550
  %1552 = vmatmul.bf16.gmra.mxu0 %v336
  %v1553 = vpop.f32.mrf.mxu0
  %v1554 = vadd.f32 0.0, %v1553
  %v1555 = vpop.f32.mrf.mxu0
  %v1556 = vadd.f32 0.0, %v1555
  %1557 = vmatmul.bf16.gmra.mxu0 %v339
  %v1558 = vpop.f32.mrf.mxu0
  %v1559 = vadd.f32 0.0, %v1558
  %v1560 = vpop.f32.mrf.mxu0
  %v1561 = vadd.f32 0.0, %v1560
  %1562 = vmatmul.bf16.gmra.mxu0 %v342
  %v1563 = vpop.f32.mrf.mxu0
  %v1564 = vadd.f32 0.0, %v1563
  %v1565 = vpop.f32.mrf.mxu0
  %v1566 = vadd.f32 0.0, %v1565
  %1567 = vmatmul.bf16.gmra.mxu0 %v345
  %v1568 = vpop.f32.mrf.mxu0
  %v1569 = vadd.f32 0.0, %v1568
  %v1570 = vpop.f32.mrf.mxu0
  %v1571 = vadd.f32 0.0, %v1570
  %1572 = vmatmul.bf16.gmra.mxu0 %v348
  %v1573 = vpop.f32.mrf.mxu0
  %v1574 = vadd.f32 0.0, %v1573
  %v1575 = vpop.f32.mrf.mxu0
  %v1576 = vadd.f32 0.0, %v1575
  %1577 = vmatmul.bf16.gmra.mxu0 %v351
  %v1578 = vpop.f32.mrf.mxu0
  %v1579 = vadd.f32 0.0, %v1578
  %v1580 = vpop.f32.mrf.mxu0
  %v1581 = vadd.f32 0.0, %v1580
  %1582 = vmatmul.bf16.gmra.mxu0 %v354
  %v1583 = vpop.f32.mrf.mxu0
  %v1584 = vadd.f32 0.0, %v1583
  %v1585 = vpop.f32.mrf.mxu0
  %v1586 = vadd.f32 0.0, %v1585
  %1587 = vmatmul.bf16.gmra.mxu0 %v357
  %v1588 = vpop.f32.mrf.mxu0
  %v1589 = vadd.f32 0.0, %v1588
  %v1590 = vpop.f32.mrf.mxu0
  %v1591 = vadd.f32 0.0, %v1590
  %1592 = vmatmul.bf16.gmra.mxu0 %v360
  %v1593 = vpop.f32.mrf.mxu0
  %v1594 = vadd.f32 0.0, %v1593
  %v1595 = vpop.f32.mrf.mxu0
  %v1596 = vadd.f32 0.0, %v1595
  %1597 = vmatmul.bf16.gmra.mxu0 %v363
  %v1598 = vpop.f32.mrf.mxu0
  %v1599 = vadd.f32 0.0, %v1598
  %v1600 = vpop.f32.mrf.mxu0
  %v1601 = vadd.f32 0.0, %v1600
  %1602 = vmatmul.bf16.gmra.mxu0 %v366
  %v1603 = vpop.f32.mrf.mxu0
  %v1604 = vadd.f32 0.0, %v1603
  %v1605 = vpop.f32.mrf.mxu0
  %v1606 = vadd.f32 0.0, %v1605
  %1607 = vmatmul.bf16.gmra.mxu0 %v369
  %v1608 = vpop.f32.mrf.mxu0
  %v1609 = vadd.f32 0.0, %v1608
  %v1610 = vpop.f32.mrf.mxu0
  %v1611 = vadd.f32 0.0, %v1610
  %1612 = vmatmul.bf16.gmra.mxu0 %v372
  %v1613 = vpop.f32.mrf.mxu0
  %v1614 = vadd.f32 0.0, %v1613
  %v1615 = vpop.f32.mrf.mxu0
  %v1616 = vadd.f32 0.0, %v1615
  %1617 = vmatmul.bf16.gmra.mxu0 %v375
  %v1618 = vpop.f32.mrf.mxu0
  %v1619 = vadd.f32 0.0, %v1618
  %v1620 = vpop.f32.mrf.mxu0
  %v1621 = vadd.f32 0.0, %v1620
  %1622 = vmatmul.bf16.gmra.mxu0 %v378
  %v1623 = vpop.f32.mrf.mxu0
  %v1624 = vadd.f32 0.0, %v1623
  %v1625 = vpop.f32.mrf.mxu0
  %v1626 = vadd.f32 0.0, %v1625
  %1627 = vmatmul.bf16.gmra.mxu0 %v381
  %v1628 = vpop.f32.mrf.mxu0
  %v1629 = vadd.f32 0.0, %v1628
  %v1630 = vpop.f32.mrf.mxu0
  %v1631 = vadd.f32 0.0, %v1630
  %1632 = vmatmul.bf16.gmra.mxu0 %v384
  %v1633 = vpop.f32.mrf.mxu0
  %v1634 = vadd.f32 0.0, %v1633
  %v1635 = vpop.f32.mrf.mxu0
  %v1636 = vadd.f32 0.0, %v1635
  %1637 = vmatmul.bf16.gmra.mxu0 %v387
  %v1638 = vpop.f32.mrf.mxu0
  %v1639 = vadd.f32 0.0, %v1638
  %v1640 = vpop.f32.mrf.mxu0
  %v1641 = vadd.f32 0.0, %v1640
  %1642 = vmatmul.bf16.gmra.mxu0 %v390
  %v1643 = vpop.f32.mrf.mxu0
  %v1644 = vadd.f32 0.0, %v1643
  %v1645 = vpop.f32.mrf.mxu0
  %v1646 = vadd.f32 0.0, %v1645
  %1647 = vmatmul.bf16.gmra.mxu0 %v393
  %v1648 = vpop.f32.mrf.mxu0
  %v1649 = vadd.f32 0.0, %v1648
  %v1650 = vpop.f32.mrf.mxu0
  %v1651 = vadd.f32 0.0, %v1650
  %1652 = vmatmul.bf16.gmra.mxu0 %v396
  %v1653 = vpop.f32.mrf.mxu0
  %v1654 = vadd.f32 0.0, %v1653
  %v1655 = vpop.f32.mrf.mxu0
  %v1656 = vadd.f32 0.0, %v1655
  %1657 = vmatmul.bf16.gmra.mxu0 %v399
  %v1658 = vpop.f32.mrf.mxu0
  %v1659 = vadd.f32 0.0, %v1658
  %v1660 = vpop.f32.mrf.mxu0
  %v1661 = vadd.f32 0.0, %v1660
  %1662 = vmatmul.bf16.gmra.mxu0 %v402
  %v1663 = vpop.f32.mrf.mxu0
  %v1664 = vadd.f32 0.0, %v1663
  %v1665 = vpop.f32.mrf.mxu0
  %v1666 = vadd.f32 0.0, %v1665
  %1667 = vmatmul.bf16.gmra.mxu0 %v405
  %v1668 = vpop.f32.mrf.mxu0
  %v1669 = vadd.f32 0.0, %v1668
  %v1670 = vpop.f32.mrf.mxu0
  %v1671 = vadd.f32 0.0, %v1670
  %1672 = vmatmul.bf16.gmra.mxu0 %v408
  %v1673 = vpop.f32.mrf.mxu0
  %v1674 = vadd.f32 0.0, %v1673
  %v1675 = vpop.f32.mrf.mxu0
  %v1676 = vadd.f32 0.0, %v1675
  %1677 = vmatmul.bf16.gmra.mxu0 %v411
  %v1678 = vpop.f32.mrf.mxu0
  %v1679 = vadd.f32 0.0, %v1678
  %v1680 = vpop.f32.mrf.mxu0
  %v1681 = vadd.f32 0.0, %v1680
  %1682 = vmatmul.bf16.gmra.mxu0 %v414
  %v1683 = vpop.f32.mrf.mxu0
  %v1684 = vadd.f32 0.0, %v1683
  %v1685 = vpop.f32.mrf.mxu0
  %v1686 = vadd.f32 0.0, %v1685
  %1687 = vmatmul.bf16.gmra.mxu0 %v417
  %v1688 = vpop.f32.mrf.mxu0
  %v1689 = vadd.f32 0.0, %v1688
  %v1690 = vpop.f32.mrf.mxu0
  %v1691 = vadd.f32 0.0, %v1690
  %1692 = vmatmul.bf16.gmra.mxu0 %v420
  %v1693 = vpop.f32.mrf.mxu0
  %v1694 = vadd.f32 0.0, %v1693
  %v1695 = vpop.f32.mrf.mxu0
  %v1696 = vadd.f32 0.0, %v1695
  %1697 = vdwg.mxu0
  %v1698 = vld [vmem:[%s7] sm:$0x3]
  %v1699 = vperm.slane %v1698, 0
  %v1700 = vmul.f32 %v1539, %v1699
  %v1701 = vmul.f32 %v1541, %v1699
  %v1702 = vmul.f32 %v1544, %v1699
  %v1703 = vmul.f32 %v1546, %v1699
  %v1704 = vmul.f32 %v1549, %v1699
  %v1705 = vmul.f32 %v1551, %v1699
  %v1706 = vmul.f32 %v1554, %v1699
  %v1707 = vmul.f32 %v1556, %v1699
  %v1708 = vmul.f32 %v1559, %v1699
  %v1709 = vmul.f32 %v1561, %v1699
  %v1710 = vmul.f32 %v1564, %v1699
  %v1711 = vmul.f32 %v1566, %v1699
  %v1712 = vmul.f32 %v1569, %v1699
  %v1713 = vmul.f32 %v1571, %v1699
  %v1714 = vmul.f32 %v1574, %v1699
  %v1715 = vmul.f32 %v1576, %v1699
  %v1716 = vmul.f32 %v1579, %v1699
  %v1717 = vmul.f32 %v1581, %v1699
  %v1718 = vmul.f32 %v1584, %v1699
  %v1719 = vmul.f32 %v1586, %v1699
  %v1720 = vmul.f32 %v1589, %v1699
  %v1721 = vmul.f32 %v1591, %v1699
  %v1722 = vmul.f32 %v1594, %v1699
  %v1723 = vmul.f32 %v1596, %v1699
  %v1724 = vmul.f32 %v1599, %v1699
  %v1725 = vmul.f32 %v1601, %v1699
  %v1726 = vmul.f32 %v1604, %v1699
  %v1727 = vmul.f32 %v1606, %v1699
  %v1728 = vmul.f32 %v1609, %v1699
  %v1729 = vmul.f32 %v1611, %v1699
  %v1730 = vmul.f32 %v1614, %v1699
  %v1731 = vmul.f32 %v1616, %v1699
  %v1732 = vmul.f32 %v1619, %v1699
  %v1733 = vmul.f32 %v1621, %v1699
  %v1734 = vmul.f32 %v1624, %v1699
  %v1735 = vmul.f32 %v1626, %v1699
  %v1736 = vmul.f32 %v1629, %v1699
  %v1737 = vmul.f32 %v1631, %v1699
  %v1738 = vmul.f32 %v1634, %v1699
  %v1739 = vmul.f32 %v1636, %v1699
  %v1740 = vmul.f32 %v1639, %v1699
  %v1741 = vmul.f32 %v1641, %v1699
  %v1742 = vmul.f32 %v1644, %v1699
  %v1743 = vmul.f32 %v1646, %v1699
  %v1744 = vmul.f32 %v1649, %v1699
  %v1745 = vmul.f32 %v1651, %v1699
  %v1746 = vmul.f32 %v1654, %v1699
  %v1747 = vmul.f32 %v1656, %v1699
  %v1748 = vmul.f32 %v1659, %v1699
  %v1749 = vmul.f32 %v1661, %v1699
  %v1750 = vmul.f32 %v1664, %v1699
  %v1751 = vmul.f32 %v1666, %v1699
  %v1752 = vmul.f32 %v1669, %v1699
  %v1753 = vmul.f32 %v1671, %v1699
  %v1754 = vmul.f32 %v1674, %v1699
  %v1755 = vmul.f32 %v1676, %v1699
  %v1756 = vmul.f32 %v1679, %v1699
  %v1757 = vmul.f32 %v1681, %v1699
  %v1758 = vmul.f32 %v1684, %v1699
  %v1759 = vmul.f32 %v1686, %v1699
  %v1760 = vmul.f32 %v1689, %v1699
  %v1761 = vmul.f32 %v1691, %v1699
  %v1762 = vmul.f32 %v1694, %v1699
  %v1763 = vmul.f32 %v1696, %v1699
  %v1764 = vperm.slane %v1698, 1
  %v1765 = vadd.f32 %v1700, %v1764
  %v1766 = vadd.f32 %v1701, %v1764
  %v1767 = vadd.f32 %v1702, %v1764
  %v1768 = vadd.f32 %v1703, %v1764
  %v1769 = vadd.f32 %v1704, %v1764
  %v1770 = vadd.f32 %v1705, %v1764
  %v1771 = vadd.f32 %v1706, %v1764
  %v1772 = vadd.f32 %v1707, %v1764
  %v1773 = vadd.f32 %v1708, %v1764
  %v1774 = vadd.f32 %v1709, %v1764
  %v1775 = vadd.f32 %v1710, %v1764
  %v1776 = vadd.f32 %v1711, %v1764
  %v1777 = vadd.f32 %v1712, %v1764
  %v1778 = vadd.f32 %v1713, %v1764
  %v1779 = vadd.f32 %v1714, %v1764
  %v1780 = vadd.f32 %v1715, %v1764
  %v1781 = vadd.f32 %v1716, %v1764
  %v1782 = vadd.f32 %v1717, %v1764
  %v1783 = vadd.f32 %v1718, %v1764
  %v1784 = vadd.f32 %v1719, %v1764
  %v1785 = vadd.f32 %v1720, %v1764
  %v1786 = vadd.f32 %v1721, %v1764
  %v1787 = vadd.f32 %v1722, %v1764
  %v1788 = vadd.f32 %v1723, %v1764
  %v1789 = vadd.f32 %v1724, %v1764
  %v1790 = vadd.f32 %v1725, %v1764
  %v1791 = vadd.f32 %v1726, %v1764
  %v1792 = vadd.f32 %v1727, %v1764
  %v1793 = vadd.f32 %v1728, %v1764
  %v1794 = vadd.f32 %v1729, %v1764
  %v1795 = vadd.f32 %v1730, %v1764
  %v1796 = vadd.f32 %v1731, %v1764
  %v1797 = vadd.f32 %v1732, %v1764
  %v1798 = vadd.f32 %v1733, %v1764
  %v1799 = vadd.f32 %v1734, %v1764
  %v1800 = vadd.f32 %v1735, %v1764
  %v1801 = vadd.f32 %v1736, %v1764
  %v1802 = vadd.f32 %v1737, %v1764
  %v1803 = vadd.f32 %v1738, %v1764
  %v1804 = vadd.f32 %v1739, %v1764
  %v1805 = vadd.f32 %v1740, %v1764
  %v1806 = vadd.f32 %v1741, %v1764
  %v1807 = vadd.f32 %v1742, %v1764
  %v1808 = vadd.f32 %v1743, %v1764
  %v1809 = vadd.f32 %v1744, %v1764
  %v1810 = vadd.f32 %v1745, %v1764
  %v1811 = vadd.f32 %v1746, %v1764
  %v1812 = vadd.f32 %v1747, %v1764
  %v1813 = vadd.f32 %v1748, %v1764
  %v1814 = vadd.f32 %v1749, %v1764
  %v1815 = vadd.f32 %v1750, %v1764
  %v1816 = vadd.f32 %v1751, %v1764
  %v1817 = vadd.f32 %v1752, %v1764
  %v1818 = vadd.f32 %v1753, %v1764
  %v1819 = vadd.f32 %v1754, %v1764
  %v1820 = vadd.f32 %v1755, %v1764
  %v1821 = vadd.f32 %v1756, %v1764
  %v1822 = vadd.f32 %v1757, %v1764
  %v1823 = vadd.f32 %v1758, %v1764
  %v1824 = vadd.f32 %v1759, %v1764
  %v1825 = vadd.f32 %v1760, %v1764
  %v1826 = vadd.f32 %v1761, %v1764
  %v1827 = vadd.f32 %v1762, %v1764
  %v1828 = vadd.f32 %v1763, %v1764
  %v1829 = vpack.c.bf16 %v1765, %v1765
  %v1830 = vpack.c.bf16 %v1766, %v1766
  %v1831 = vpack.c.bf16 %v1767, %v1767
  %v1832 = vpack.c.bf16 %v1768, %v1768
  %v1833 = vpack.c.bf16 %v1769, %v1769
  %v1834 = vpack.c.bf16 %v1770, %v1770
  %v1835 = vpack.c.bf16 %v1771, %v1771
  %v1836 = vpack.c.bf16 %v1772, %v1772
  %v1837 = vpack.c.bf16 %v1773, %v1773
  %v1838 = vpack.c.bf16 %v1774, %v1774
  %v1839 = vpack.c.bf16 %v1775, %v1775
  %v1840 = vpack.c.bf16 %v1776, %v1776
  %v1841 = vpack.c.bf16 %v1777, %v1777
  %v1842 = vpack.c.bf16 %v1778, %v1778
  %v1843 = vpack.c.bf16 %v1779, %v1779
  %v1844 = vpack.c.bf16 %v1780, %v1780
  %v1845 = vpack.c.bf16 %v1781, %v1781
  %v1846 = vpack.c.bf16 %v1782, %v1782
  %v1847 = vpack.c.bf16 %v1783, %v1783
  %v1848 = vpack.c.bf16 %v1784, %v1784
  %v1849 = vpack.c.bf16 %v1785, %v1785
  %v1850 = vpack.c.bf16 %v1786, %v1786
  %v1851 = vpack.c.bf16 %v1787, %v1787
  %v1852 = vpack.c.bf16 %v1788, %v1788
  %v1853 = vpack.c.bf16 %v1789, %v1789
  %v1854 = vpack.c.bf16 %v1790, %v1790
  %v1855 = vpack.c.bf16 %v1791, %v1791
  %v1856 = vpack.c.bf16 %v1792, %v1792
  %v1857 = vpack.c.bf16 %v1793, %v1793
  %v1858 = vpack.c.bf16 %v1794, %v1794
  %v1859 = vpack.c.bf16 %v1795, %v1795
  %v1860 = vpack.c.bf16 %v1796, %v1796
  %v1861 = vpack.c.bf16 %v1797, %v1797
  %v1862 = vpack.c.bf16 %v1798, %v1798
  %v1863 = vpack.c.bf16 %v1799, %v1799
  %v1864 = vpack.c.bf16 %v1800, %v1800
  %v1865 = vpack.c.bf16 %v1801, %v1801
  %v1866 = vpack.c.bf16 %v1802, %v1802
  %v1867 = vpack.c.bf16 %v1803, %v1803
  %v1868 = vpack.c.bf16 %v1804, %v1804
  %v1869 = vpack.c.bf16 %v1805, %v1805
  %v1870 = vpack.c.bf16 %v1806, %v1806
  %v1871 = vpack.c.bf16 %v1807, %v1807
  %v1872 = vpack.c.bf16 %v1808, %v1808
  %v1873 = vpack.c.bf16 %v1809, %v1809
  %v1874 = vpack.c.bf16 %v1810, %v1810
  %v1875 = vpack.c.bf16 %v1811, %v1811
  %v1876 = vpack.c.bf16 %v1812, %v1812
  %v1877 = vpack.c.bf16 %v1813, %v1813
  %v1878 = vpack.c.bf16 %v1814, %v1814
  %v1879 = vpack.c.bf16 %v1815, %v1815
  %v1880 = vpack.c.bf16 %v1816, %v1816
  %v1881 = vpack.c.bf16 %v1817, %v1817
  %v1882 = vpack.c.bf16 %v1818, %v1818
  %v1883 = vpack.c.bf16 %v1819, %v1819
  %v1884 = vpack.c.bf16 %v1820, %v1820
  %v1885 = vpack.c.bf16 %v1821, %v1821
  %v1886 = vpack.c.bf16 %v1822, %v1822
  %v1887 = vpack.c.bf16 %v1823, %v1823
  %v1888 = vpack.c.bf16 %v1824, %v1824
  %v1889 = vpack.c.bf16 %v1825, %v1825
  %v1890 = vpack.c.bf16 %v1826, %v1826
  %v1891 = vpack.c.bf16 %v1827, %v1827
  %v1892 = vpack.c.bf16 %v1828, %v1828
  %vm1893 = vcmask 60416
  %1894 = vst.msk [vmem:[%s9] sm:$0xf] %vm1893, %v1829
  %1895 = vst.msk [vmem:[%s9 + $0x4] sm:$0xf] %vm1893, %v1830
  %1896 = vst.msk [vmem:[%s9 + $0x8] sm:$0xf] %vm1893, %v1831
  %1897 = vst.msk [vmem:[%s9 + $0xc] sm:$0xf] %vm1893, %v1832
  %1898 = vst.msk [vmem:[%s9 + $0x10] sm:$0xf] %vm1893, %v1833
  %1899 = vst.msk [vmem:[%s9 + $0x14] sm:$0xf] %vm1893, %v1834
  %1900 = vst.msk [vmem:[%s9 + $0x18] sm:$0xf] %vm1893, %v1835
  %1901 = vst.msk [vmem:[%s9 + $0x1c] sm:$0xf] %vm1893, %v1836
  %1902 = vst.msk [vmem:[%s9 + $0x20] sm:$0xf] %vm1893, %v1837
  %1903 = vst.msk [vmem:[%s9 + $0x24] sm:$0xf] %vm1893, %v1838
  %1904 = vst.msk [vmem:[%s9 + $0x28] sm:$0xf] %vm1893, %v1839
  %1905 = vst.msk [vmem:[%s9 + $0x2c] sm:$0xf] %vm1893, %v1840
  %1906 = vst.msk [vmem:[%s9 + $0x30] sm:$0xf] %vm1893, %v1841
  %1907 = vst.msk [vmem:[%s9 + $0x34] sm:$0xf] %vm1893, %v1842
  %1908 = vst.msk [vmem:[%s9 + $0x38] sm:$0xf] %vm1893, %v1843
  %1909 = vst.msk [vmem:[%s9 + $0x3c] sm:$0xf] %vm1893, %v1844
  %1910 = vst.msk [vmem:[%s9 + $0x40] sm:$0xf] %vm1893, %v1845
  %1911 = vst.msk [vmem:[%s9 + $0x44] sm:$0xf] %vm1893, %v1846
  %1912 = vst.msk [vmem:[%s9 + $0x48] sm:$0xf] %vm1893, %v1847
  %1913 = vst.msk [vmem:[%s9 + $0x4c] sm:$0xf] %vm1893, %v1848
  %1914 = vst.msk [vmem:[%s9 + $0x50] sm:$0xf] %vm1893, %v1849
  %1915 = vst.msk [vmem:[%s9 + $0x54] sm:$0xf] %vm1893, %v1850
  %1916 = vst.msk [vmem:[%s9 + $0x58] sm:$0xf] %vm1893, %v1851
  %1917 = vst.msk [vmem:[%s9 + $0x5c] sm:$0xf] %vm1893, %v1852
  %1918 = vst.msk [vmem:[%s9 + $0x60] sm:$0xf] %vm1893, %v1853
  %1919 = vst.msk [vmem:[%s9 + $0x64] sm:$0xf] %vm1893, %v1854
  %1920 = vst.msk [vmem:[%s9 + $0x68] sm:$0xf] %vm1893, %v1855
  %1921 = vst.msk [vmem:[%s9 + $0x6c] sm:$0xf] %vm1893, %v1856
  %1922 = vst.msk [vmem:[%s9 + $0x70] sm:$0xf] %vm1893, %v1857
  %1923 = vst.msk [vmem:[%s9 + $0x74] sm:$0xf] %vm1893, %v1858
  %1924 = vst.msk [vmem:[%s9 + $0x78] sm:$0xf] %vm1893, %v1859
  %1925 = vst.msk [vmem:[%s9 + $0x7c] sm:$0xf] %vm1893, %v1860
  %1926 = vst.msk [vmem:[%s9 + $0x80] sm:$0xf] %vm1893, %v1861
  %1927 = vst.msk [vmem:[%s9 + $0x84] sm:$0xf] %vm1893, %v1862
  %1928 = vst.msk [vmem:[%s9 + $0x88] sm:$0xf] %vm1893, %v1863
  %1929 = vst.msk [vmem:[%s9 + $0x8c] sm:$0xf] %vm1893, %v1864
  %1930 = vst.msk [vmem:[%s9 + $0x90] sm:$0xf] %vm1893, %v1865
  %1931 = vst.msk [vmem:[%s9 + $0x94] sm:$0xf] %vm1893, %v1866
  %1932 = vst.msk [vmem:[%s9 + $0x98] sm:$0xf] %vm1893, %v1867
  %1933 = vst.msk [vmem:[%s9 + $0x9c] sm:$0xf] %vm1893, %v1868
  %1934 = vst.msk [vmem:[%s9 + $0xa0] sm:$0xf] %vm1893, %v1869
  %1935 = vst.msk [vmem:[%s9 + $0xa4] sm:$0xf] %vm1893, %v1870
  %1936 = vst.msk [vmem:[%s9 + $0xa8] sm:$0xf] %vm1893, %v1871
  %1937 = vst.msk [vmem:[%s9 + $0xac] sm:$0xf] %vm1893, %v1872
  %1938 = vst.msk [vmem:[%s9 + $0xb0] sm:$0xf] %vm1893, %v1873
  %1939 = vst.msk [vmem:[%s9 + $0xb4] sm:$0xf] %vm1893, %v1874
  %1940 = vst.msk [vmem:[%s9 + $0xb8] sm:$0xf] %vm1893, %v1875
  %1941 = vst.msk [vmem:[%s9 + $0xbc] sm:$0xf] %vm1893, %v1876
  %1942 = vst.msk [vmem:[%s9 + $0xc0] sm:$0xf] %vm1893, %v1877
  %1943 = vst.msk [vmem:[%s9 + $0xc4] sm:$0xf] %vm1893, %v1878
  %1944 = vst.msk [vmem:[%s9 + $0xc8] sm:$0xf] %vm1893, %v1879
  %1945 = vst.msk [vmem:[%s9 + $0xcc] sm:$0xf] %vm1893, %v1880
  %1946 = vst.msk [vmem:[%s9 + $0xd0] sm:$0xf] %vm1893, %v1881
  %1947 = vst.msk [vmem:[%s9 + $0xd4] sm:$0xf] %vm1893, %v1882
  %1948 = vst.msk [vmem:[%s9 + $0xd8] sm:$0xf] %vm1893, %v1883
  %1949 = vst.msk [vmem:[%s9 + $0xdc] sm:$0xf] %vm1893, %v1884
  %1950 = vst.msk [vmem:[%s9 + $0xe0] sm:$0xf] %vm1893, %v1885
  %1951 = vst.msk [vmem:[%s9 + $0xe4] sm:$0xf] %vm1893, %v1886
  %1952 = vst.msk [vmem:[%s9 + $0xe8] sm:$0xf] %vm1893, %v1887
  %1953 = vst.msk [vmem:[%s9 + $0xec] sm:$0xf] %vm1893, %v1888
  %1954 = vst.msk [vmem:[%s9 + $0xf0] sm:$0xf] %vm1893, %v1889
  %1955 = vst.msk [vmem:[%s9 + $0xf4] sm:$0xf] %vm1893, %v1890
  %1956 = vst.msk [vmem:[%s9 + $0xf8] sm:$0xf] %vm1893, %v1891
  %1957 = vst.msk [vmem:[%s9 + $0xfc] sm:$0xf] %vm1893, %v1892
  %1958 = vst.msk [vmem:[%s10] sm:$0xff] %vm325, %v1366
  %1959 = vst.msk [vmem:[%s10 + $0x8] sm:$0xff] %vm325, %v1368
  %1960 = vst.msk [vmem:[%s10 + $0x10] sm:$0xff] %vm325, %v1371
  %1961 = vst.msk [vmem:[%s10 + $0x18] sm:$0xff] %vm325, %v1373
  %1962 = vst.msk [vmem:[%s10 + $0x20] sm:$0xff] %vm325, %v1376
  %1963 = vst.msk [vmem:[%s10 + $0x28] sm:$0xff] %vm325, %v1378
  %1964 = vst.msk [vmem:[%s10 + $0x30] sm:$0xff] %vm325, %v1381
  %1965 = vst.msk [vmem:[%s10 + $0x38] sm:$0xff] %vm325, %v1383
  %1966 = vst.msk [vmem:[%s10 + $0x40] sm:$0xff] %vm325, %v1386
  %1967 = vst.msk [vmem:[%s10 + $0x48] sm:$0xff] %vm325, %v1388
  %1968 = vst.msk [vmem:[%s10 + $0x50] sm:$0xff] %vm325, %v1391
  %1969 = vst.msk [vmem:[%s10 + $0x58] sm:$0xff] %vm325, %v1393
  %1970 = vst.msk [vmem:[%s10 + $0x60] sm:$0xff] %vm325, %v1396
  %1971 = vst.msk [vmem:[%s10 + $0x68] sm:$0xff] %vm325, %v1398
  %1972 = vst.msk [vmem:[%s10 + $0x70] sm:$0xff] %vm325, %v1401
  %1973 = vst.msk [vmem:[%s10 + $0x78] sm:$0xff] %vm325, %v1403
  %1974 = vst.msk [vmem:[%s10 + $0x80] sm:$0xff] %vm325, %v1406
  %1975 = vst.msk [vmem:[%s10 + $0x88] sm:$0xff] %vm325, %v1408
  %1976 = vst.msk [vmem:[%s10 + $0x90] sm:$0xff] %vm325, %v1411
  %1977 = vst.msk [vmem:[%s10 + $0x98] sm:$0xff] %vm325, %v1413
  %1978 = vst.msk [vmem:[%s10 + $0xa0] sm:$0xff] %vm325, %v1416
  %1979 = vst.msk [vmem:[%s10 + $0xa8] sm:$0xff] %vm325, %v1418
  %1980 = vst.msk [vmem:[%s10 + $0xb0] sm:$0xff] %vm325, %v1421
  %1981 = vst.msk [vmem:[%s10 + $0xb8] sm:$0xff] %vm325, %v1423
  %1982 = vst.msk [vmem:[%s10 + $0xc0] sm:$0xff] %vm325, %v1426
  %1983 = vst.msk [vmem:[%s10 + $0xc8] sm:$0xff] %vm325, %v1428
  %1984 = vst.msk [vmem:[%s10 + $0xd0] sm:$0xff] %vm325, %v1431
  %1985 = vst.msk [vmem:[%s10 + $0xd8] sm:$0xff] %vm325, %v1433
  %1986 = vst.msk [vmem:[%s10 + $0xe0] sm:$0xff] %vm325, %v1436
  %1987 = vst.msk [vmem:[%s10 + $0xe8] sm:$0xff] %vm325, %v1438
  %1988 = vst.msk [vmem:[%s10 + $0xf0] sm:$0xff] %vm325, %v1441
  %1989 = vst.msk [vmem:[%s10 + $0xf8] sm:$0xff] %vm325, %v1443
  %1990 = vst.msk [vmem:[%s10 + $0x100] sm:$0xff] %vm325, %v1446
  %1991 = vst.msk [vmem:[%s10 + $0x108] sm:$0xff] %vm325, %v1448
  %1992 = vst.msk [vmem:[%s10 + $0x110] sm:$0xff] %vm325, %v1451
  %1993 = vst.msk [vmem:[%s10 + $0x118] sm:$0xff] %vm325, %v1453
  %1994 = vst.msk [vmem:[%s10 + $0x120] sm:$0xff] %vm325, %v1456
  %1995 = vst.msk [vmem:[%s10 + $0x128] sm:$0xff] %vm325, %v1458
  %1996 = vst.msk [vmem:[%s10 + $0x130] sm:$0xff] %vm325, %v1461
  %1997 = vst.msk [vmem:[%s10 + $0x138] sm:$0xff] %vm325, %v1463
  %1998 = vst.msk [vmem:[%s10 + $0x140] sm:$0xff] %vm325, %v1466
  %1999 = vst.msk [vmem:[%s10 + $0x148] sm:$0xff] %vm325, %v1468
  %2000 = vst.msk [vmem:[%s10 + $0x150] sm:$0xff] %vm325, %v1471
  %2001 = vst.msk [vmem:[%s10 + $0x158] sm:$0xff] %vm325, %v1473
  %2002 = vst.msk [vmem:[%s10 + $0x160] sm:$0xff] %vm325, %v1476
  %2003 = vst.msk [vmem:[%s10 + $0x168] sm:$0xff] %vm325, %v1478
  %2004 = vst.msk [vmem:[%s10 + $0x170] sm:$0xff] %vm325, %v1481
  %2005 = vst.msk [vmem:[%s10 + $0x178] sm:$0xff] %vm325, %v1483
  %2006 = vst.msk [vmem:[%s10 + $0x180] sm:$0xff] %vm325, %v1486
  %2007 = vst.msk [vmem:[%s10 + $0x188] sm:$0xff] %vm325, %v1488
  %2008 = vst.msk [vmem:[%s10 + $0x190] sm:$0xff] %vm325, %v1491
  %2009 = vst.msk [vmem:[%s10 + $0x198] sm:$0xff] %vm325, %v1493
  %2010 = vst.msk [vmem:[%s10 + $0x1a0] sm:$0xff] %vm325, %v1496
  %2011 = vst.msk [vmem:[%s10 + $0x1a8] sm:$0xff] %vm325, %v1498
  %2012 = vst.msk [vmem:[%s10 + $0x1b0] sm:$0xff] %vm325, %v1501
  %2013 = vst.msk [vmem:[%s10 + $0x1b8] sm:$0xff] %vm325, %v1503
  %2014 = vst.msk [vmem:[%s10 + $0x1c0] sm:$0xff] %vm325, %v1506
  %2015 = vst.msk [vmem:[%s10 + $0x1c8] sm:$0xff] %vm325, %v1508
  %2016 = vst.msk [vmem:[%s10 + $0x1d0] sm:$0xff] %vm325, %v1511
  %2017 = vst.msk [vmem:[%s10 + $0x1d8] sm:$0xff] %vm325, %v1513
  %2018 = vst.msk [vmem:[%s10 + $0x1e0] sm:$0xff] %vm325, %v1516
  %2019 = vst.msk [vmem:[%s10 + $0x1e8] sm:$0xff] %vm325, %v1518
  %2020 = vst.msk [vmem:[%s10 + $0x1f0] sm:$0xff] %vm325, %v1521
  %2021 = vst.msk [vmem:[%s10 + $0x1f8] sm:$0xff] %vm325, %v1523
  // Predicated region
  $region38: #{c2f_cot_attention_forward.12} parent=0 // pred_check
    _
  $region39: #{c2f_cot_attention_forward.12} parent=0 // pred_check_branch
    %2023 = sbr.rel (0) target = $region41
  $region40: #{c2f_cot_attention_forward.12} parent=0 // pred_region
    _
  $region41: #{c2f_cot_attention_forward.12} parent=0 // pred_fallthru
    _
  // Predicated region
  $region42: #{c2f_cot_attention_forward.12} parent=0 // pred_check
    _
  $region43: #{c2f_cot_attention_forward.12} parent=0 // pred_check_branch
    %2025 = sbr.rel (0) target = $region45
  $region44: #{c2f_cot_attention_forward.12} parent=0 // pred_region
    _
  $region45: #{c2f_cot_attention_forward.12} parent=0 // pred_fallthru
    _
  // Predicated region
  $region46: #{c2f_cot_attention_forward.12} parent=0 // pred_check
    _
  $region47: #{c2f_cot_attention_forward.12} parent=0 // pred_check_branch
    %2027 = sbr.rel (0) target = $region49
  $region48: #{c2f_cot_attention_forward.12} parent=0 // pred_region
    _
  $region49: #{c2f_cot_attention_forward.12} parent=0 // pred_fallthru
    _
  // Predicated region
  $region50: #{c2f_cot_attention_forward.12} parent=0 // pred_check
    _
  $region51: #{c2f_cot_attention_forward.12} parent=0 // pred_check_branch
    %2029 = sbr.rel (0) target = $region53
  $region52: #{c2f_cot_attention_forward.12} parent=0 // pred_region
    _
  $region53: #{c2f_cot_attention_forward.12} parent=0 // pred_fallthru
    _

// kernel: c2f_cot_attention_forward.13
$region0: #{c2f_cot_attention_forward.13}
  #allocation0 [shape = 'u32[]', space=smem, size = 0x4, offset = 0x4, fixed_abs, tag = 'smem constant byte address 0x4 - core index']
  #allocation1 [shape = 'u32[72,128]{1,0:T(1,128)}', space=vmem, size = 0x9000, scoped, tag = 'internal scratch']
  #allocation2 [shape = 'f32[1,8]{1,0:T(1,128)}', space=vmem, size = 0x200, scoped, tag = 'scratch operand']
  #allocation3 [shape = 'f32[1,8]{1,0:T(1,128)}', space=vmem, size = 0x200, scoped, tag = 'scratch operand']
  %s0 = inlined_call_operand.vmem [shape: f32[2,256,8], index: 0, kind: input, shape index: {}]
  %s1 = inlined_call_operand.vmem [shape: f32[2,1,8], index: 1, kind: output, shape index: {0}]
  %s2 = inlined_call_operand.vmem [shape: f32[2,1,8], index: 2, kind: output, shape index: {1}]
  %3 = xla_tuple %s1, %s2
  %s4 = sld [smem:[#allocation0]]
  $region53: #{c2f_cot_attention_forward.13} parent=0
    _
  %s6 = ssub.s32 1, %s4
  %s7 = scalar_select 0, %s6, %s4
  loop: start=0, step=1, limit=4
  $region2: #{c2f_cot_attention_forward.13} parent=0 // loop_pre_header
    _
  $region3: #{c2f_cot_attention_forward.13} parent=0 // loop_header
    %s9 = sphi 0, %s13
    %p10 = scmp.ge.s32.totalorder %s9, 4
    %s16 = sphi 0, %s35
    %s17 = sphi 0, %s31
    %s18 = sphi 0, %s27
    %s19 = sphi 0, %s16
    %s20 = sphi 0, %s17
    %s21 = sphi 0, %s18
    %s22 = sphi 0, %s19
    %s23 = sphi 0, %s20
    %s24 = sphi 0, %s21
    %s42 = sphi 0, %s44
    %s45 = sphi 0, %s42
    %s46 = sphi 0, %s45
    %s62 = sphi 0, %s46
    %s70 = sphi 0, %s72
    %s73 = sphi 0, %s70
    %s74 = sphi 0, %s73
    %s90 = sphi 0, %s74
    %s98 = sphi 0, %s100
    %s101 = sphi 0, %s98
    %s102 = sphi 0, %s101
    %s118 = sphi 0, %s102
  $region4: #{c2f_cot_attention_forward.13} parent=0 // loop_header_branch
    %12 = sbr.rel (%p10) target = $region8
  $region5: #{c2f_cot_attention_forward.13} parent=0 // loop_body
    %s14 = ssub.s32 %s9, 1
    %s15 = ssub.s32 %s9, 2
    %s25 = sadd.s32 1, %s18
    %p26 = scmp.ge.s32.totalorder %s25, 1
    %s27 = scalar_select %p26, 0, %s25
    %s28 = sadd.s32 1, %s17
    %s29 = scalar_select %p26, %s28, %s17
    %p30 = scmp.ge.s32.totalorder %s29, 1
    %s31 = scalar_select %p30, 0, %s29
    %s32 = sadd.s32 1, %s16
    %s33 = scalar_select %p30, %s32, %s16
    %p34 = scmp.ge.s32.totalorder %s33, 2
    %s35 = scalar_select %p34, 0, %s33
    %s36 = ssub.s32 %s16, %s35
    %s37 = ssub.s32 %s18, %s27
    %s38 = sor.u32 %s36, %s37
    %s39 = ssub.s32 %s17, %s31
    %s40 = sor.u32 %s38, %s39
    %p41 = scmp.eq.s32.totalorder %s40, 0
    %s43 = sadd.s32 %s42, 1
    %s44 = scalar_select %p41, %s42, %s43
    %p47 = pneg %p41
    %p48 = scmp.eq.s32.totalorder %s9, 1
    %p49 = por %p47, %p48
    %p50 = scmp.ne.s32.totalorder %s42, %s45
    %p51 = scmp.eq.s32.totalorder %s9, 0
    %p52 = por %p50, %p51
    %p53 = scmp.ne.s32.totalorder %s42, %s45
    %p54 = scmp.eq.s32.totalorder %s14, 1
    %p55 = por %p53, %p54
    %p56 = scmp.ne.s32.totalorder %s45, %s46
    %p57 = scmp.eq.s32.totalorder %s14, 0
    %p58 = por %p56, %p57
    %p59 = scmp.ne.s32.totalorder %s45, %s46
    %p60 = scmp.eq.s32.totalorder %s15, 1
    %p61 = por %p59, %p60
    %p63 = scmp.ne.s32.totalorder %s46, %s62
    %p64 = scmp.eq.s32.totalorder %s15, 0
    %p65 = por %p63, %p64
    %s66 = ssub.s32 %s16, %s35
    %s67 = ssub.s32 %s17, %s31
    %s68 = sor.u32 %s66, %s67
    %p69 = scmp.eq.s32.totalorder %s68, 0
    %s71 = sadd.s32 %s70, 1
    %s72 = scalar_select %p69, %s70, %s71
    %p75 = pneg %p69
    %p76 = scmp.eq.s32.totalorder %s9, 1
    %p77 = por %p75, %p76
    %p78 = scmp.ne.s32.totalorder %s70, %s73
    %p79 = scmp.eq.s32.totalorder %s9, 0
    %p80 = por %p78, %p79
    %p81 = scmp.ne.s32.totalorder %s70, %s73
    %p82 = scmp.eq.s32.totalorder %s14, 1
    %p83 = por %p81, %p82
    %p84 = scmp.ne.s32.totalorder %s73, %s74
    %p85 = scmp.eq.s32.totalorder %s14, 0
    %p86 = por %p84, %p85
    %p87 = scmp.ne.s32.totalorder %s73, %s74
    %p88 = scmp.eq.s32.totalorder %s15, 1
    %p89 = por %p87, %p88
    %p91 = scmp.ne.s32.totalorder %s74, %s90
    %p92 = scmp.eq.s32.totalorder %s15, 0
    %p93 = por %p91, %p92
    %s94 = ssub.s32 %s16, %s35
    %s95 = ssub.s32 %s17, %s31
    %s96 = sor.u32 %s94, %s95
    %p97 = scmp.eq.s32.totalorder %s96, 0
    %s99 = sadd.s32 %s98, 1
    %s100 = scalar_select %p97, %s98, %s99
    %p103 = pneg %p97
    %p104 = scmp.eq.s32.totalorder %s9, 1
    %p105 = por %p103, %p104
    %p106 = scmp.ne.s32.totalorder %s98, %s101
    %p107 = scmp.eq.s32.totalorder %s9, 0
    %p108 = por %p106, %p107
    %p109 = scmp.ne.s32.totalorder %s98, %s101
    %p110 = scmp.eq.s32.totalorder %s14, 1
    %p111 = por %p109, %p110
    %p112 = scmp.ne.s32.totalorder %s101, %s102
    %p113 = scmp.eq.s32.totalorder %s14, 0
    %p114 = por %p112, %p113
    %p115 = scmp.ne.s32.totalorder %s101, %s102
    %p116 = scmp.eq.s32.totalorder %s15, 1
    %p117 = por %p115, %p116
    %p119 = scmp.ne.s32.totalorder %s102, %s118
    %p120 = scmp.eq.s32.totalorder %s15, 0
    %p121 = por %p119, %p120
    %p122 = scmp.le.s32.totalorder 1, %s9
    %p123 = scmp.lt.s32.totalorder %s9, 3
    %p124 = pnand %p122, %p123
    %p125 = pneg %p124
    // Predicated region
    $region9: #{c2f_cot_attention_forward.13} parent=5 // pred_check
      _
    $region10: #{c2f_cot_attention_forward.13} parent=5 // pred_check_branch
      %127 = sbr.rel (%p124) target = $region12
    $region11: #{c2f_cot_attention_forward.13} parent=5 // pred_region
      %s128 = ssub.s32 %s9, 1
    $region12: #{c2f_cot_attention_forward.13} parent=5 // pred_fallthru
      _
    %p129 = scmp.lt.s32.totalorder %s9, 2
    // Predicated region
    $region13: #{c2f_cot_attention_forward.13} parent=5 // pred_check
      %p130 = pneg %p129
    $region14: #{c2f_cot_attention_forward.13} parent=5 // pred_check_branch
      %132 = sbr.rel (%p130) target = $region16
    $region15: #{c2f_cot_attention_forward.13} parent=5 // pred_region
      // Predicated region
      $region17: #{c2f_cot_attention_forward.13} parent=15 // pred_check
        %p133 = pneg %p52
      $region18: #{c2f_cot_attention_forward.13} parent=15 // pred_check_branch
        %135 = sbr.rel (%p133) target = $region20
      $region19: #{c2f_cot_attention_forward.13} parent=15 // pred_region
        %s136 = smul.u32 32, %s18
        %p137 = scmp.lt.s32.totalorder %s16, 1
        %s138 = scalar_select %p137, %s16, 1
        %p139 = scmp.lt.s32.totalorder %s136, 31
        %s140 = scalar_select %p139, %s136, 31
        %p141 = scmp.lt.s32.totalorder %s17, 0
        %s142 = scalar_select %p141, %s17, 0
        %s143 = sadd.s32 %s142, %s140
        %s144 = smul.addr %s138, 32
        %s145 = sadd.s32 %s143, %s144
        %s146 = smul.addr %s145, 8
        %s147 = scalar_lea.vmem %s0, %s146
        %s148 = smul.u32 32, %s18
      $region20: #{c2f_cot_attention_forward.13} parent=15 // pred_fallthru
        _
    $region16: #{c2f_cot_attention_forward.13} parent=5 // pred_fallthru
      _
    %p149 = scmp.le.s32.totalorder 1, %s9
    %p150 = scmp.lt.s32.totalorder %s9, 3
    %p151 = pnand %p149, %p150
    %p152 = pneg %p151
    // Predicated region
    $region21: #{c2f_cot_attention_forward.13} parent=5 // pred_check
      _
    $region22: #{c2f_cot_attention_forward.13} parent=5 // pred_check_branch
      %154 = sbr.rel (%p151) target = $region24
    $region23: #{c2f_cot_attention_forward.13} parent=5 // pred_region
      %s155 = ssub.s32 %s9, 1
      %s156 = smul.u32 32, %s21
      %p157 = scmp.lt.s32.totalorder %s19, 1
      %s158 = scalar_select %p157, %s19, 1
      %p159 = scmp.lt.s32.totalorder %s156, 31
      %s160 = scalar_select %p159, %s156, 31
      %p161 = scmp.lt.s32.totalorder %s20, 0
      %s162 = scalar_select %p161, %s20, 0
      %s163 = sadd.s32 %s162, %s160
      %s164 = smul.addr %s158, 32
      %s165 = sadd.s32 %s163, %s164
      %s166 = smul.addr %s165, 8
      %s167 = scalar_lea.vmem %s0, %s166
      %p168 = pneg %p58
      %p169 = pneg %p55
      %p170 = pneg %p86
      %p171 = pneg %p83
      %p172 = scmp.lt.s32.totalorder %s19, 1
      %s173 = scalar_select %p172, %s19, 1
      %p174 = scmp.lt.s32.totalorder %s20, 0
      %s175 = scalar_select %p174, %s20, 0
      %s176 = sadd.s32 %s175, %s173
      %s177 = scalar_lea.vmem %s1, %s176
      %p178 = pneg %p114
      %p179 = pneg %p111
      %p180 = scmp.lt.s32.totalorder %s19, 1
      %s181 = scalar_select %p180, %s19, 1
      %p182 = scmp.lt.s32.totalorder %s20, 0
      %s183 = scalar_select %p182, %s20, 0
      %s184 = sadd.s32 %s183, %s181
      %s185 = scalar_lea.vmem %s2, %s184
      %s186 = smul.u32 32, %s21
      %p187 = scmp.lt.s32.totalorder %s19, 1
      %s188 = scalar_select %p187, %s19, 1
      %p189 = scmp.lt.s32.totalorder %s186, 31
      %s190 = scalar_select %p189, %s186, 31
      %p191 = scmp.lt.s32.totalorder %s20, 0
      %s192 = scalar_select %p191, %s20, 0
      %s193 = sadd.s32 %s192, %s190
      %s194 = smul.addr %s188, 32
      %s195 = sadd.s32 %s193, %s194
      %s196 = smul.addr %s195, 8
      %s197 = scalar_lea.vmem %s0, %s196
      %s198 = smul.u32 32, %s21
      %p199 = scmp.lt.s32.totalorder %s19, 1
      %s200 = scalar_select %p199, %s19, 1
      %p201 = scmp.lt.s32.totalorder %s20, 0
      %s202 = scalar_select %p201, %s20, 0
      %s203 = sadd.s32 %s202, %s200
      %s204 = scalar_lea.vmem %s1, %s203
      %p205 = scmp.lt.s32.totalorder %s19, 1
      %s206 = scalar_select %p205, %s19, 1
      %p207 = scmp.lt.s32.totalorder %s20, 0
      %s208 = scalar_select %p207, %s20, 0
      %s209 = sadd.s32 %s208, %s206
      %s210 = scalar_lea.vmem %s2, %s209
      %p211 = scmp.eq.s32.totalorder %s21, 0
      // Predicated region
      $region25: #{c2f_cot_attention_forward.13} parent=23 // pred_check
        %p212 = pneg %p211
      $region26: #{c2f_cot_attention_forward.13} parent=23 // pred_check_branch
        %214 = sbr.rel (%p212) target = $region28
      $region27: #{c2f_cot_attention_forward.13} parent=23 // pred_region
        %vm215 = vcmask 57344
        %216 = vst.msk [vmem:[#allocation2] sm:$0x1] %vm215, -inf
        %217 = vst.msk [vmem:[#allocation3] sm:$0x1] %vm215, 0.0
      $region28: #{c2f_cot_attention_forward.13} parent=23 // pred_fallthru
        _
      %v218 = vld [vmem:[%s197] sm:$0xff]
      %v219 = vld [vmem:[%s197 + $0x8] sm:$0xff]
      %v220 = vld [vmem:[%s197 + $0x10] sm:$0xff]
      %v221 = vld [vmem:[%s197 + $0x18] sm:$0xff]
      %v222 = vld [vmem:[%s197 + $0x20] sm:$0xff]
      %v223 = vld [vmem:[%s197 + $0x28] sm:$0xff]
      %v224 = vld [vmem:[%s197 + $0x30] sm:$0xff]
      %v225 = vld [vmem:[%s197 + $0x38] sm:$0xff]
      %v226 = vld [vmem:[%s197 + $0x40] sm:$0xff]
      %v227 = vld [vmem:[%s197 + $0x48] sm:$0xff]
      %v228 = vld [vmem:[%s197 + $0x50] sm:$0xff]
      %v229 = vld [vmem:[%s197 + $0x58] sm:$0xff]
      %v230 = vld [vmem:[%s197 + $0x60] sm:$0xff]
      %v231 = vld [vmem:[%s197 + $0x68] sm:$0xff]
      %v232 = vld [vmem:[%s197 + $0x70] sm:$0xff]
      %v233 = vld [vmem:[%s197 + $0x78] sm:$0xff]
      %v234 = vld [vmem:[%s197 + $0x80] sm:$0xff]
      %v235 = vld [vmem:[%s197 + $0x88] sm:$0xff]
      %v236 = vld [vmem:[%s197 + $0x90] sm:$0xff]
      %v237 = vld [vmem:[%s197 + $0x98] sm:$0xff]
      %v238 = vld [vmem:[%s197 + $0xa0] sm:$0xff]
      %v239 = vld [vmem:[%s197 + $0xa8] sm:$0xff]
      %v240 = vld [vmem:[%s197 + $0xb0] sm:$0xff]
      %v241 = vld [vmem:[%s197 + $0xb8] sm:$0xff]
      %v242 = vld [vmem:[%s197 + $0xc0] sm:$0xff]
      %v243 = vld [vmem:[%s197 + $0xc8] sm:$0xff]
      %v244 = vld [vmem:[%s197 + $0xd0] sm:$0xff]
      %v245 = vld [vmem:[%s197 + $0xd8] sm:$0xff]
      %v246 = vld [vmem:[%s197 + $0xe0] sm:$0xff]
      %v247 = vld [vmem:[%s197 + $0xe8] sm:$0xff]
      %v248 = vld [vmem:[%s197 + $0xf0] sm:$0xff]
      %v249 = vld [vmem:[%s197 + $0xf8] sm:$0xff]
      %vm250 = vcmask 64512
      %v251 = vsel %vm250, %v218, -inf
      %v252 = vsel %vm250, %v219, -inf
      %v253 = vsel %vm250, %v220, -inf
      %v254 = vsel %vm250, %v221, -inf
      %v255 = vsel %vm250, %v222, -inf
      %v256 = vmax.f32 %v251, %v255
      %v257 = vsel %vm250, %v223, -inf
      %v258 = vmax.f32 %v252, %v257
      %v259 = vsel %vm250, %v224, -inf
      %v260 = vmax.f32 %v253, %v259
      %v261 = vsel %vm250, %v225, -inf
      %v262 = vmax.f32 %v254, %v261
      %v263 = vsel %vm250, %v226, -inf
      %v264 = vmax.f32 %v256, %v263
      %v265 = vsel %vm250, %v227, -inf
      %v266 = vmax.f32 %v258, %v265
      %v267 = vsel %vm250, %v228, -inf
      %v268 = vmax.f32 %v260, %v267
      %v269 = vsel %vm250, %v229, -inf
      %v270 = vmax.f32 %v262, %v269
      %v271 = vsel %vm250, %v230, -inf
      %v272 = vmax.f32 %v264, %v271
      %v273 = vsel %vm250, %v231, -inf
      %v274 = vmax.f32 %v266, %v273
      %v275 = vsel %vm250, %v232, -inf
      %v276 = vmax.f32 %v268, %v275
      %v277 = vsel %vm250, %v233, -inf
      %v278 = vmax.f32 %v270, %v277
      %v279 = vsel %vm250, %v234, -inf
      %v280 = vmax.f32 %v272, %v279
      %v281 = vsel %vm250, %v235, -inf
      %v282 = vmax.f32 %v274, %v281
      %v283 = vsel %vm250, %v236, -inf
      %v284 = vmax.f32 %v276, %v283
      %v285 = vsel %vm250, %v237, -inf
      %v286 = vmax.f32 %v278, %v285
      %v287 = vsel %vm250, %v238, -inf
      %v288 = vmax.f32 %v280, %v287
      %v289 = vsel %vm250, %v239, -inf
      %v290 = vmax.f32 %v282, %v289
      %v291 = vsel %vm250, %v240, -inf
      %v292 = vmax.f32 %v284, %v291
      %v293 = vsel %vm250, %v241, -inf
      %v294 = vmax.f32 %v286, %v293
      %v295 = vsel %vm250, %v242, -inf
      %v296 = vmax.f32 %v288, %v295
      %v297 = vsel %vm250, %v243, -inf
      %v298 = vmax.f32 %v290, %v297
      %v299 = vsel %vm250, %v244, -inf
      %v300 = vmax.f32 %v292, %v299
      %v301 = vsel %vm250, %v245, -inf
      %v302 = vmax.f32 %v294, %v301
      %v303 = vsel %vm250, %v246, -inf
      %v304 = vmax.f32 %v296, %v303
      %v305 = vsel %vm250, %v247, -inf
      %v306 = vmax.f32 %v298, %v305
      %v307 = vsel %vm250, %v248, -inf
      %v308 = vmax.f32 %v300, %v307
      %v309 = vsel %vm250, %v249, -inf
      %v310 = vmax.f32 %v302, %v309
      %v311 = vmax.f32 %v304, %v306
      %v312 = vmax.f32 %v308, %v310
      %v313 = vmax.f32 %v311, %v312
      %v314 = vrot.slane %v313, 4
      %v315 = vmax.f32 %v313, %v314
      %v316 = vrot.slane %v315, 2
      %v317 = vmax.f32 %v315, %v316
      %v318 = vrot.slane %v317, 1
      %v319 = vmax.f32 %v317, %v318
      %v320 = vld [vmem:[#allocation2] sm:$0x1]
      %v321 = vmax.f32 %v320, %v319
      %v322 = vld [vmem:[#allocation3] sm:$0x1]
      %v323 = vsub.f32 %v320, %v321
      %v324 = vmul.f32 %v323, 1.442695
      %v325 = vpow.pop %v324
      %v326 = vmul.f32 %v322, %v325
      %v328 = vperm.slane %v321, 0
      %v330 = vsub.f32 %v218, %v328
      %v331 = vsub.f32 %v219, %v328
      %v332 = vsub.f32 %v220, %v328
      %v333 = vsub.f32 %v221, %v328
      %v334 = vsub.f32 %v222, %v328
      %v335 = vsub.f32 %v223, %v328
      %v336 = vsub.f32 %v224, %v328
      %v337 = vsub.f32 %v225, %v328
      %v338 = vsub.f32 %v226, %v328
      %v339 = vsub.f32 %v227, %v328
      %v340 = vsub.f32 %v228, %v328
      %v341 = vsub.f32 %v229, %v328
      %v342 = vsub.f32 %v230, %v328
      %v343 = vsub.f32 %v231, %v328
      %v344 = vsub.f32 %v232, %v328
      %v345 = vsub.f32 %v233, %v328
      %v346 = vsub.f32 %v234, %v328
      %v347 = vsub.f32 %v235, %v328
      %v348 = vsub.f32 %v236, %v328
      %v349 = vsub.f32 %v237, %v328
      %v350 = vsub.f32 %v238, %v328
      %v351 = vsub.f32 %v239, %v328
      %v352 = vsub.f32 %v240, %v328
      %v353 = vsub.f32 %v241, %v328
      %v354 = vsub.f32 %v242, %v328
      %v355 = vsub.f32 %v243, %v328
      %v356 = vsub.f32 %v244, %v328
      %v357 = vsub.f32 %v245, %v328
      %v358 = vsub.f32 %v246, %v328
      %v359 = vsub.f32 %v247, %v328
      %v360 = vsub.f32 %v248, %v328
      %v361 = vsub.f32 %v249, %v328
      %v362 = vmul.f32 %v330, 1.442695
      %v363 = vpow.pop %v362
      %v364 = vmul.f32 %v331, 1.442695
      %v365 = vpow.pop %v364
      %v366 = vmul.f32 %v332, 1.442695
      %v367 = vpow.pop %v366
      %v368 = vmul.f32 %v333, 1.442695
      %v369 = vpow.pop %v368
      %v370 = vmul.f32 %v334, 1.442695
      %v371 = vpow.pop %v370
      %v372 = vmul.f32 %v335, 1.442695
      %v373 = vpow.pop %v372
      %v374 = vmul.f32 %v336, 1.442695
      %v375 = vpow.pop %v374
      %v376 = vmul.f32 %v337, 1.442695
      %v377 = vpow.pop %v376
      %v378 = vmul.f32 %v338, 1.442695
      %v379 = vpow.pop %v378
      %v380 = vmul.f32 %v339, 1.442695
      %v381 = vpow.pop %v380
      %v382 = vmul.f32 %v340, 1.442695
      %v383 = vpow.pop %v382
      %v384 = vmul.f32 %v341, 1.442695
      %v385 = vpow.pop %v384
      %v386 = vmul.f32 %v342, 1.442695
      %v387 = vpow.pop %v386
      %v388 = vmul.f32 %v343, 1.442695
      %v389 = vpow.pop %v388
      %v390 = vmul.f32 %v344, 1.442695
      %v391 = vpow.pop %v390
      %v392 = vmul.f32 %v345, 1.442695
      %v393 = vpow.pop %v392
      %v394 = vmul.f32 %v346, 1.442695
      %v395 = vpow.pop %v394
      %v396 = vmul.f32 %v347, 1.442695
      %v397 = vpow.pop %v396
      %v398 = vmul.f32 %v348, 1.442695
      %v399 = vpow.pop %v398
      %v400 = vmul.f32 %v349, 1.442695
      %v401 = vpow.pop %v400
      %v402 = vmul.f32 %v350, 1.442695
      %v403 = vpow.pop %v402
      %v404 = vmul.f32 %v351, 1.442695
      %v405 = vpow.pop %v404
      %v406 = vmul.f32 %v352, 1.442695
      %v407 = vpow.pop %v406
      %v408 = vmul.f32 %v353, 1.442695
      %v409 = vpow.pop %v408
      %v410 = vmul.f32 %v354, 1.442695
      %v411 = vpow.pop %v410
      %v412 = vmul.f32 %v355, 1.442695
      %v413 = vpow.pop %v412
      %v414 = vmul.f32 %v356, 1.442695
      %v415 = vpow.pop %v414
      %v416 = vmul.f32 %v357, 1.442695
      %v417 = vpow.pop %v416
      %v418 = vmul.f32 %v358, 1.442695
      %v419 = vpow.pop %v418
      %v420 = vmul.f32 %v359, 1.442695
      %v421 = vpow.pop %v420
      %v422 = vmul.f32 %v360, 1.442695
      %v423 = vpow.pop %v422
      %v424 = vmul.f32 %v361, 1.442695
      %v425 = vpow.pop %v424
      %v426 = vsel %vm250, %v363, 0.0
      %v427 = vsel %vm250, %v365, 0.0
      %v428 = vadd.f32 %v426, %v427
      %v429 = vsel %vm250, %v367, 0.0
      %v430 = vadd.f32 %v428, %v429
      %v431 = vsel %vm250, %v369, 0.0
      %v432 = vadd.f32 %v430, %v431
      %v433 = vsel %vm250, %v371, 0.0
      %v434 = vadd.f32 %v432, %v433
      %v435 = vsel %vm250, %v373, 0.0
      %v436 = vadd.f32 %v434, %v435
      %v437 = vsel %vm250, %v375, 0.0
      %v438 = vadd.f32 %v436, %v437
      %v439 = vsel %vm250, %v377, 0.0
      %v440 = vadd.f32 %v438, %v439
      %v441 = vsel %vm250, %v379, 0.0
      %v442 = vadd.f32 %v440, %v441
      %v443 = vsel %vm250, %v381, 0.0
      %v444 = vadd.f32 %v442, %v443
      %v445 = vsel %vm250, %v383, 0.0
      %v446 = vadd.f32 %v444, %v445
      %v447 = vsel %vm250, %v385, 0.0
      %v448 = vadd.f32 %v446, %v447
      %v449 = vsel %vm250, %v387, 0.0
      %v450 = vadd.f32 %v448, %v449
      %v451 = vsel %vm250, %v389, 0.0
      %v452 = vadd.f32 %v450, %v451
      %v453 = vsel %vm250, %v391, 0.0
      %v454 = vadd.f32 %v452, %v453
      %v455 = vsel %vm250, %v393, 0.0
      %v456 = vadd.f32 %v454, %v455
      %v457 = vsel %vm250, %v395, 0.0
      %v458 = vadd.f32 %v456, %v457
      %v459 = vsel %vm250, %v397, 0.0
      %v460 = vadd.f32 %v458, %v459
      %v461 = vsel %vm250, %v399, 0.0
      %v462 = vadd.f32 %v460, %v461
      %v463 = vsel %vm250, %v401, 0.0
      %v464 = vadd.f32 %v462, %v463
      %v465 = vsel %vm250, %v403, 0.0
      %v466 = vadd.f32 %v464, %v465
      %v467 = vsel %vm250, %v405, 0.0
      %v468 = vadd.f32 %v466, %v467
      %v469 = vsel %vm250, %v407, 0.0
      %v470 = vadd.f32 %v468, %v469
      %v471 = vsel %vm250, %v409, 0.0
      %v472 = vadd.f32 %v470, %v471
      %v473 = vsel %vm250, %v411, 0.0
      %v474 = vadd.f32 %v472, %v473
      %v475 = vsel %vm250, %v413, 0.0
      %v476 = vadd.f32 %v474, %v475
      %v477 = vsel %vm250, %v415, 0.0
      %v478 = vadd.f32 %v476, %v477
      %v479 = vsel %vm250, %v417, 0.0
      %v480 = vadd.f32 %v478, %v479
      %v481 = vsel %vm250, %v419, 0.0
      %v482 = vadd.f32 %v480, %v481
      %v483 = vsel %vm250, %v421, 0.0
      %v484 = vadd.f32 %v482, %v483
      %v485 = vsel %vm250, %v423, 0.0
      %v486 = vadd.f32 %v484, %v485
      %v487 = vsel %vm250, %v425, 0.0
      %v488 = vadd.f32 %v486, %v487
      %v489 = vrot.slane %v488, 4
      %v490 = vadd.f32 %v488, %v489
      %v491 = vrot.slane %v490, 2
      %v492 = vadd.f32 %v490, %v491
      %v493 = vrot.slane %v492, 1
      %v494 = vadd.f32 %v492, %v493
      %v495 = vadd.f32 %v326, %v494
      %vm496 = vcmask 57344
      %497 = vst.msk [vmem:[#allocation3] sm:$0x1] %vm496, %v495
      %498 = vst.msk [vmem:[#allocation2] sm:$0x1] %vm496, %v321
      // Predicated region
      $region29: #{c2f_cot_attention_forward.13} parent=23 // pred_check
        %p499 = pneg %p211
      $region30: #{c2f_cot_attention_forward.13} parent=23 // pred_check_branch
        %501 = sbr.rel (%p499) target = $region32
      $region31: #{c2f_cot_attention_forward.13} parent=23 // pred_region
        %v502 = vld [vmem:[#allocation2] sm:$0x1]
        %503 = vst.msk [vmem:[%s204] sm:$0x1] %vm496, %v502
        %v504 = vld [vmem:[#allocation3] sm:$0x1]
        %505 = vst.msk [vmem:[%s210] sm:$0x1] %vm496, %v504
      $region32: #{c2f_cot_attention_forward.13} parent=23 // pred_fallthru
        _
      %p506 = scmp.lt.s32.totalorder %s19, 1
      %s507 = scalar_select %p506, %s19, 1
      %p508 = scmp.lt.s32.totalorder %s20, 0
      %s509 = scalar_select %p508, %s20, 0
      %s510 = sadd.s32 %s509, %s507
      %s511 = scalar_lea.vmem %s1, %s510
      %p512 = scmp.lt.s32.totalorder %s19, 1
      %s513 = scalar_select %p512, %s19, 1
      %p514 = scmp.lt.s32.totalorder %s20, 0
      %s515 = scalar_select %p514, %s20, 0
      %s516 = sadd.s32 %s515, %s513
      %s517 = scalar_lea.vmem %s2, %s516
      // Predicated region
      $region33: #{c2f_cot_attention_forward.13} parent=23 // pred_check
        %p518 = pneg %p83
      $region34: #{c2f_cot_attention_forward.13} parent=23 // pred_check_branch
        %520 = sbr.rel (%p518) target = $region36
      $region35: #{c2f_cot_attention_forward.13} parent=23 // pred_region
        _
      $region36: #{c2f_cot_attention_forward.13} parent=23 // pred_fallthru
        _
      // Predicated region
      $region37: #{c2f_cot_attention_forward.13} parent=23 // pred_check
        %p521 = pneg %p111
      $region38: #{c2f_cot_attention_forward.13} parent=23 // pred_check_branch
        %523 = sbr.rel (%p521) target = $region40
      $region39: #{c2f_cot_attention_forward.13} parent=23 // pred_region
        _
      $region40: #{c2f_cot_attention_forward.13} parent=23 // pred_fallthru
        _
    $region24: #{c2f_cot_attention_forward.13} parent=5 // pred_fallthru
      _
    %p524 = scmp.le.s32.totalorder 2, %s9
    // Predicated region
    $region41: #{c2f_cot_attention_forward.13} parent=5 // pred_check
      %p525 = pneg %p524
    $region42: #{c2f_cot_attention_forward.13} parent=5 // pred_check_branch
      %527 = sbr.rel (%p525) target = $region44
    $region43: #{c2f_cot_attention_forward.13} parent=5 // pred_region
      %s528 = ssub.s32 %s9, 2
      // Predicated region
      $region45: #{c2f_cot_attention_forward.13} parent=43 // pred_check
        %p529 = pneg %p89
      $region46: #{c2f_cot_attention_forward.13} parent=43 // pred_check_branch
        %531 = sbr.rel (%p529) target = $region48
      $region47: #{c2f_cot_attention_forward.13} parent=43 // pred_region
        %p532 = scmp.lt.s32.totalorder %s22, 1
        %s533 = scalar_select %p532, %s22, 1
        %p534 = scmp.lt.s32.totalorder %s23, 0
        %s535 = scalar_select %p534, %s23, 0
        %s536 = sadd.s32 %s535, %s533
        %s537 = scalar_lea.vmem %s1, %s536
      $region48: #{c2f_cot_attention_forward.13} parent=43 // pred_fallthru
        _
      // Predicated region
      $region49: #{c2f_cot_attention_forward.13} parent=43 // pred_check
        %p538 = pneg %p117
      $region50: #{c2f_cot_attention_forward.13} parent=43 // pred_check_branch
        %540 = sbr.rel (%p538) target = $region52
      $region51: #{c2f_cot_attention_forward.13} parent=43 // pred_region
        %p541 = scmp.lt.s32.totalorder %s22, 1
        %s542 = scalar_select %p541, %s22, 1
        %p543 = scmp.lt.s32.totalorder %s23, 0
        %s544 = scalar_select %p543, %s23, 0
        %s545 = sadd.s32 %s544, %s542
        %s546 = scalar_lea.vmem %s2, %s545
      $region52: #{c2f_cot_attention_forward.13} parent=43 // pred_fallthru
        _
    $region44: #{c2f_cot_attention_forward.13} parent=5 // pred_fallthru
      _
  $region6: #{c2f_cot_attention_forward.13} parent=0 // loop_footer
    %s13 = sadd.s32 1, %s9
  $region7: #{c2f_cot_attention_forward.13} parent=0 // loop_footer_branch
    %8 = sbr.rel target = $region3
  $region8: #{c2f_cot_attention_forward.13} parent=0 // loop_exit
    _

// kernel: c2f_cot_attention_forward.14
$region0: #{c2f_cot_attention_forward.14}
  #allocation0 [shape = 'u32[]', space=smem, size = 0x4, offset = 0x4, fixed_abs, tag = 'smem constant byte address 0x4 - core index']
  #allocation1 [shape = 'u32[72,128]{1,0:T(1,128)}', space=vmem, size = 0x9000, scoped, tag = 'internal scratch']
  %s0 = inlined_call_operand.vmem [shape: bf16[2,256,8], index: 0, kind: input, shape index: {}]
  %s1 = inlined_call_operand.vmem [shape: bf16[2,256,8], index: 1, kind: input, shape index: {}]
  %s2 = inlined_call_operand.vmem [shape: f32[2,256,8], index: 2, kind: input, shape index: {}]
  %s3 = inlined_call_operand.vmem [shape: f32[2,1,8], index: 3, kind: input, shape index: {}]
  %s4 = inlined_call_operand.vmem [shape: f32[2,1,8], index: 4, kind: input, shape index: {}]
  %s5 = inlined_call_operand.vmem [shape: bf16[2,256,8], index: 5, kind: output, shape index: {}]
  %s6 = sld [smem:[#allocation0]]
  $region53: #{c2f_cot_attention_forward.14} parent=0
    _
  %s8 = ssub.s32 1, %s6
  %s9 = scalar_select 0, %s8, %s6
  loop: start=0, step=1, limit=4
  $region2: #{c2f_cot_attention_forward.14} parent=0 // loop_pre_header
    _
  $region3: #{c2f_cot_attention_forward.14} parent=0 // loop_header
    %s11 = sphi 0, %s15
    %p12 = scmp.ge.s32.totalorder %s11, 4
    %s18 = sphi 0, %s37
    %s19 = sphi 0, %s33
    %s20 = sphi 0, %s29
    %s21 = sphi 0, %s18
    %s22 = sphi 0, %s19
    %s23 = sphi 0, %s20
    %s24 = sphi 0, %s21
    %s25 = sphi 0, %s22
    %s26 = sphi 0, %s23
    %s44 = sphi 0, %s46
    %s47 = sphi 0, %s44
    %s48 = sphi 0, %s47
    %s64 = sphi 0, %s48
    %s74 = sphi 0, %s76
    %s77 = sphi 0, %s74
    %s78 = sphi 0, %s77
    %s94 = sphi 0, %s78
    %s104 = sphi 0, %s106
    %s107 = sphi 0, %s104
    %s108 = sphi 0, %s107
    %s124 = sphi 0, %s108
    %s132 = sphi 0, %s134
    %s135 = sphi 0, %s132
    %s136 = sphi 0, %s135
    %s152 = sphi 0, %s136
    %s160 = sphi 0, %s162
    %s163 = sphi 0, %s160
    %s164 = sphi 0, %s163
    %s180 = sphi 0, %s164
    %s190 = sphi 0, %s192
    %s193 = sphi 0, %s190
    %s194 = sphi 0, %s193
    %s210 = sphi 0, %s194
  $region4: #{c2f_cot_attention_forward.14} parent=0 // loop_header_branch
    %14 = sbr.rel (%p12) target = $region8
  $region5: #{c2f_cot_attention_forward.14} parent=0 // loop_body
    %s16 = ssub.s32 %s11, 1
    %s17 = ssub.s32 %s11, 2
    %s27 = sadd.s32 1, %s20
    %p28 = scmp.ge.s32.totalorder %s27, 1
    %s29 = scalar_select %p28, 0, %s27
    %s30 = sadd.s32 1, %s19
    %s31 = scalar_select %p28, %s30, %s19
    %p32 = scmp.ge.s32.totalorder %s31, 1
    %s33 = scalar_select %p32, 0, %s31
    %s34 = sadd.s32 1, %s18
    %s35 = scalar_select %p32, %s34, %s18
    %p36 = scmp.ge.s32.totalorder %s35, 2
    %s37 = scalar_select %p36, 0, %s35
    %s38 = ssub.s32 %s18, %s37
    %s39 = ssub.s32 %s20, %s29
    %s40 = sor.u32 %s38, %s39
    %s41 = ssub.s32 %s19, %s33
    %s42 = sor.u32 %s40, %s41
    %p43 = scmp.eq.s32.totalorder %s42, 0
    %s45 = sadd.s32 %s44, 1
    %s46 = scalar_select %p43, %s44, %s45
    %p49 = pneg %p43
    %p50 = scmp.eq.s32.totalorder %s11, 1
    %p51 = por %p49, %p50
    %p52 = scmp.ne.s32.totalorder %s44, %s47
    %p53 = scmp.eq.s32.totalorder %s11, 0
    %p54 = por %p52, %p53
    %p55 = scmp.ne.s32.totalorder %s44, %s47
    %p56 = scmp.eq.s32.totalorder %s16, 1
    %p57 = por %p55, %p56
    %p58 = scmp.ne.s32.totalorder %s47, %s48
    %p59 = scmp.eq.s32.totalorder %s16, 0
    %p60 = por %p58, %p59
    %p61 = scmp.ne.s32.totalorder %s47, %s48
    %p62 = scmp.eq.s32.totalorder %s17, 1
    %p63 = por %p61, %p62
    %p65 = scmp.ne.s32.totalorder %s48, %s64
    %p66 = scmp.eq.s32.totalorder %s17, 0
    %p67 = por %p65, %p66
    %s68 = ssub.s32 %s18, %s37
    %s69 = ssub.s32 %s20, %s29
    %s70 = sor.u32 %s68, %s69
    %s71 = ssub.s32 %s19, %s33
    %s72 = sor.u32 %s70, %s71
    %p73 = scmp.eq.s32.totalorder %s72, 0
    %s75 = sadd.s32 %s74, 1
    %s76 = scalar_select %p73, %s74, %s75
    %p79 = pneg %p73
    %p80 = scmp.eq.s32.totalorder %s11, 1
    %p81 = por %p79, %p80
    %p82 = scmp.ne.s32.totalorder %s74, %s77
    %p83 = scmp.eq.s32.totalorder %s11, 0
    %p84 = por %p82, %p83
    %p85 = scmp.ne.s32.totalorder %s74, %s77
    %p86 = scmp.eq.s32.totalorder %s16, 1
    %p87 = por %p85, %p86
    %p88 = scmp.ne.s32.totalorder %s77, %s78
    %p89 = scmp.eq.s32.totalorder %s16, 0
    %p90 = por %p88, %p89
    %p91 = scmp.ne.s32.totalorder %s77, %s78
    %p92 = scmp.eq.s32.totalorder %s17, 1
    %p93 = por %p91, %p92
    %p95 = scmp.ne.s32.totalorder %s78, %s94
    %p96 = scmp.eq.s32.totalorder %s17, 0
    %p97 = por %p95, %p96
    %s98 = ssub.s32 %s18, %s37
    %s99 = ssub.s32 %s20, %s29
    %s100 = sor.u32 %s98, %s99
    %s101 = ssub.s32 %s19, %s33
    %s102 = sor.u32 %s100, %s101
    %p103 = scmp.eq.s32.totalorder %s102, 0
    %s105 = sadd.s32 %s104, 1
    %s106 = scalar_select %p103, %s104, %s105
    %p109 = pneg %p103
    %p110 = scmp.eq.s32.totalorder %s11, 1
    %p111 = por %p109, %p110
    %p112 = scmp.ne.s32.totalorder %s104, %s107
    %p113 = scmp.eq.s32.totalorder %s11, 0
    %p114 = por %p112, %p113
    %p115 = scmp.ne.s32.totalorder %s104, %s107
    %p116 = scmp.eq.s32.totalorder %s16, 1
    %p117 = por %p115, %p116
    %p118 = scmp.ne.s32.totalorder %s107, %s108
    %p119 = scmp.eq.s32.totalorder %s16, 0
    %p120 = por %p118, %p119
    %p121 = scmp.ne.s32.totalorder %s107, %s108
    %p122 = scmp.eq.s32.totalorder %s17, 1
    %p123 = por %p121, %p122
    %p125 = scmp.ne.s32.totalorder %s108, %s124
    %p126 = scmp.eq.s32.totalorder %s17, 0
    %p127 = por %p125, %p126
    %s128 = ssub.s32 %s18, %s37
    %s129 = ssub.s32 %s19, %s33
    %s130 = sor.u32 %s128, %s129
    %p131 = scmp.eq.s32.totalorder %s130, 0
    %s133 = sadd.s32 %s132, 1
    %s134 = scalar_select %p131, %s132, %s133
    %p137 = pneg %p131
    %p138 = scmp.eq.s32.totalorder %s11, 1
    %p139 = por %p137, %p138
    %p140 = scmp.ne.s32.totalorder %s132, %s135
    %p141 = scmp.eq.s32.totalorder %s11, 0
    %p142 = por %p140, %p141
    %p143 = scmp.ne.s32.totalorder %s132, %s135
    %p144 = scmp.eq.s32.totalorder %s16, 1
    %p145 = por %p143, %p144
    %p146 = scmp.ne.s32.totalorder %s135, %s136
    %p147 = scmp.eq.s32.totalorder %s16, 0
    %p148 = por %p146, %p147
    %p149 = scmp.ne.s32.totalorder %s135, %s136
    %p150 = scmp.eq.s32.totalorder %s17, 1
    %p151 = por %p149, %p150
    %p153 = scmp.ne.s32.totalorder %s136, %s152
    %p154 = scmp.eq.s32.totalorder %s17, 0
    %p155 = por %p153, %p154
    %s156 = ssub.s32 %s18, %s37
    %s157 = ssub.s32 %s19, %s33
    %s158 = sor.u32 %s156, %s157
    %p159 = scmp.eq.s32.totalorder %s158, 0
    %s161 = sadd.s32 %s160, 1
    %s162 = scalar_select %p159, %s160, %s161
    %p165 = pneg %p159
    %p166 = scmp.eq.s32.totalorder %s11, 1
    %p167 = por %p165, %p166
    %p168 = scmp.ne.s32.totalorder %s160, %s163
    %p169 = scmp.eq.s32.totalorder %s11, 0
    %p170 = por %p168, %p169
    %p171 = scmp.ne.s32.totalorder %s160, %s163
    %p172 = scmp.eq.s32.totalorder %s16, 1
    %p173 = por %p171, %p172
    %p174 = scmp.ne.s32.totalorder %s163, %s164
    %p175 = scmp.eq.s32.totalorder %s16, 0
    %p176 = por %p174, %p175
    %p177 = scmp.ne.s32.totalorder %s163, %s164
    %p178 = scmp.eq.s32.totalorder %s17, 1
    %p179 = por %p177, %p178
    %p181 = scmp.ne.s32.totalorder %s164, %s180
    %p182 = scmp.eq.s32.totalorder %s17, 0
    %p183 = por %p181, %p182
    %s184 = ssub.s32 %s18, %s37
    %s185 = ssub.s32 %s20, %s29
    %s186 = sor.u32 %s184, %s185
    %s187 = ssub.s32 %s19, %s33
    %s188 = sor.u32 %s186, %s187
    %p189 = scmp.eq.s32.totalorder %s188, 0
    %s191 = sadd.s32 %s190, 1
    %s192 = scalar_select %p189, %s190, %s191
    %p195 = pneg %p189
    %p196 = scmp.eq.s32.totalorder %s11, 1
    %p197 = por %p195, %p196
    %p198 = scmp.ne.s32.totalorder %s190, %s193
    %p199 = scmp.eq.s32.totalorder %s11, 0
    %p200 = por %p198, %p199
    %p201 = scmp.ne.s32.totalorder %s190, %s193
    %p202 = scmp.eq.s32.totalorder %s16, 1
    %p203 = por %p201, %p202
    %p204 = scmp.ne.s32.totalorder %s193, %s194
    %p205 = scmp.eq.s32.totalorder %s16, 0
    %p206 = por %p204, %p205
    %p207 = scmp.ne.s32.totalorder %s193, %s194
    %p208 = scmp.eq.s32.totalorder %s17, 1
    %p209 = por %p207, %p208
    %p211 = scmp.ne.s32.totalorder %s194, %s210
    %p212 = scmp.eq.s32.totalorder %s17, 0
    %p213 = por %p211, %p212
    %p214 = scmp.le.s32.totalorder 1, %s11
    %p215 = scmp.lt.s32.totalorder %s11, 3
    %p216 = pnand %p214, %p215
    %p217 = pneg %p216
    // Predicated region
    $region9: #{c2f_cot_attention_forward.14} parent=5 // pred_check
      _
    $region10: #{c2f_cot_attention_forward.14} parent=5 // pred_check_branch
      %219 = sbr.rel (%p216) target = $region12
    $region11: #{c2f_cot_attention_forward.14} parent=5 // pred_region
      %s220 = ssub.s32 %s11, 1
    $region12: #{c2f_cot_attention_forward.14} parent=5 // pred_fallthru
      _
    %p221 = scmp.lt.s32.totalorder %s11, 2
    // Predicated region
    $region13: #{c2f_cot_attention_forward.14} parent=5 // pred_check
      %p222 = pneg %p221
    $region14: #{c2f_cot_attention_forward.14} parent=5 // pred_check_branch
      %224 = sbr.rel (%p222) target = $region16
    $region15: #{c2f_cot_attention_forward.14} parent=5 // pred_region
      // Predicated region
      $region17: #{c2f_cot_attention_forward.14} parent=15 // pred_check
        %p225 = pneg %p54
      $region18: #{c2f_cot_attention_forward.14} parent=15 // pred_check_branch
        %227 = sbr.rel (%p225) target = $region20
      $region19: #{c2f_cot_attention_forward.14} parent=15 // pred_region
        %s228 = smul.u32 32, %s20
        %p229 = scmp.lt.s32.totalorder %s18, 1
        %s230 = scalar_select %p229, %s18, 1
        %p231 = scmp.lt.s32.totalorder %s228, 31
        %s232 = scalar_select %p231, %s228, 31
        %p233 = scmp.lt.s32.totalorder %s19, 0
        %s234 = scalar_select %p233, %s19, 0
        %s235 = sadd.s32 %s234, %s232
        %s236 = smul.addr %s230, 32
        %s237 = sadd.s32 %s235, %s236
        %s238 = smul.addr %s237, 4
        %s239 = scalar_lea.vmem %s0, %s238
        %s240 = smul.u32 32, %s20
      $region20: #{c2f_cot_attention_forward.14} parent=15 // pred_fallthru
        _
      // Predicated region
      $region21: #{c2f_cot_attention_forward.14} parent=15 // pred_check
        %p241 = pneg %p84
      $region22: #{c2f_cot_attention_forward.14} parent=15 // pred_check_branch
        %243 = sbr.rel (%p241) target = $region24
      $region23: #{c2f_cot_attention_forward.14} parent=15 // pred_region
        %s244 = smul.u32 32, %s20
        %p245 = scmp.lt.s32.totalorder %s18, 1
        %s246 = scalar_select %p245, %s18, 1
        %p247 = scmp.lt.s32.totalorder %s244, 31
        %s248 = scalar_select %p247, %s244, 31
        %p249 = scmp.lt.s32.totalorder %s19, 0
        %s250 = scalar_select %p249, %s19, 0
        %s251 = sadd.s32 %s250, %s248
        %s252 = smul.addr %s246, 32
        %s253 = sadd.s32 %s251, %s252
        %s254 = smul.addr %s253, 4
        %s255 = scalar_lea.vmem %s1, %s254
        %s256 = smul.u32 32, %s20
      $region24: #{c2f_cot_attention_forward.14} parent=15 // pred_fallthru
        _
      // Predicated region
      $region25: #{c2f_cot_attention_forward.14} parent=15 // pred_check
        %p257 = pneg %p114
      $region26: #{c2f_cot_attention_forward.14} parent=15 // pred_check_branch
        %259 = sbr.rel (%p257) target = $region28
      $region27: #{c2f_cot_attention_forward.14} parent=15 // pred_region
        %s260 = smul.u32 32, %s20
        %p261 = scmp.lt.s32.totalorder %s18, 1
        %s262 = scalar_select %p261, %s18, 1
        %p263 = scmp.lt.s32.totalorder %s260, 31
        %s264 = scalar_select %p263, %s260, 31
        %p265 = scmp.lt.s32.totalorder %s19, 0
        %s266 = scalar_select %p265, %s19, 0
        %s267 = sadd.s32 %s266, %s264
        %s268 = smul.addr %s262, 32
        %s269 = sadd.s32 %s267, %s268
        %s270 = smul.addr %s269, 8
        %s271 = scalar_lea.vmem %s2, %s270
        %s272 = smul.u32 32, %s20
      $region28: #{c2f_cot_attention_forward.14} parent=15 // pred_fallthru
        _
      // Predicated region
      $region29: #{c2f_cot_attention_forward.14} parent=15 // pred_check
        %p273 = pneg %p142
      $region30: #{c2f_cot_attention_forward.14} parent=15 // pred_check_branch
        %275 = sbr.rel (%p273) target = $region32
      $region31: #{c2f_cot_attention_forward.14} parent=15 // pred_region
        %p276 = scmp.lt.s32.totalorder %s18, 1
        %s277 = scalar_select %p276, %s18, 1
        %p278 = scmp.lt.s32.totalorder %s19, 0
        %s279 = scalar_select %p278, %s19, 0
        %s280 = sadd.s32 %s279, %s277
        %s281 = scalar_lea.vmem %s3, %s280
      $region32: #{c2f_cot_attention_forward.14} parent=15 // pred_fallthru
        _
      // Predicated region
      $region33: #{c2f_cot_attention_forward.14} parent=15 // pred_check
        %p282 = pneg %p170
      $region34: #{c2f_cot_attention_forward.14} parent=15 // pred_check_branch
        %284 = sbr.rel (%p282) target = $region36
      $region35: #{c2f_cot_attention_forward.14} parent=15 // pred_region
        %p285 = scmp.lt.s32.totalorder %s18, 1
        %s286 = scalar_select %p285, %s18, 1
        %p287 = scmp.lt.s32.totalorder %s19, 0
        %s288 = scalar_select %p287, %s19, 0
        %s289 = sadd.s32 %s288, %s286
        %s290 = scalar_lea.vmem %s4, %s289
      $region36: #{c2f_cot_attention_forward.14} parent=15 // pred_fallthru
        _
    $region16: #{c2f_cot_attention_forward.14} parent=5 // pred_fallthru
      _
    %p291 = scmp.le.s32.totalorder 1, %s11
    %p292 = scmp.lt.s32.totalorder %s11, 3
    %p293 = pnand %p291, %p292
    %p294 = pneg %p293
    // Predicated region
    $region37: #{c2f_cot_attention_forward.14} parent=5 // pred_check
      _
    $region38: #{c2f_cot_attention_forward.14} parent=5 // pred_check_branch
      %296 = sbr.rel (%p293) target = $region40
    $region39: #{c2f_cot_attention_forward.14} parent=5 // pred_region
      %s297 = ssub.s32 %s11, 1
      %s298 = smul.u32 32, %s23
      %p299 = scmp.lt.s32.totalorder %s21, 1
      %s300 = scalar_select %p299, %s21, 1
      %p301 = scmp.lt.s32.totalorder %s298, 31
      %s302 = scalar_select %p301, %s298, 31
      %p303 = scmp.lt.s32.totalorder %s22, 0
      %s304 = scalar_select %p303, %s22, 0
      %s305 = sadd.s32 %s304, %s302
      %s306 = smul.addr %s300, 32
      %s307 = sadd.s32 %s305, %s306
      %s308 = smul.addr %s307, 4
      %s309 = scalar_lea.vmem %s0, %s308
      %p310 = pneg %p60
      %p311 = pneg %p57
      %s312 = smul.u32 32, %s23
      %p313 = scmp.lt.s32.totalorder %s21, 1
      %s314 = scalar_select %p313, %s21, 1
      %p315 = scmp.lt.s32.totalorder %s312, 31
      %s316 = scalar_select %p315, %s312, 31
      %p317 = scmp.lt.s32.totalorder %s22, 0
      %s318 = scalar_select %p317, %s22, 0
      %s319 = sadd.s32 %s318, %s316
      %s320 = smul.addr %s314, 32
      %s321 = sadd.s32 %s319, %s320
      %s322 = smul.addr %s321, 4
      %s323 = scalar_lea.vmem %s1, %s322
      %p324 = pneg %p90
      %p325 = pneg %p87
      %s326 = smul.u32 32, %s23
      %p327 = scmp.lt.s32.totalorder %s21, 1
      %s328 = scalar_select %p327, %s21, 1
      %p329 = scmp.lt.s32.totalorder %s326, 31
      %s330 = scalar_select %p329, %s326, 31
      %p331 = scmp.lt.s32.totalorder %s22, 0
      %s332 = scalar_select %p331, %s22, 0
      %s333 = sadd.s32 %s332, %s330
      %s334 = smul.addr %s328, 32
      %s335 = sadd.s32 %s333, %s334
      %s336 = smul.addr %s335, 8
      %s337 = scalar_lea.vmem %s2, %s336
      %p338 = pneg %p120
      %p339 = pneg %p117
      %p340 = scmp.lt.s32.totalorder %s21, 1
      %s341 = scalar_select %p340, %s21, 1
      %p342 = scmp.lt.s32.totalorder %s22, 0
      %s343 = scalar_select %p342, %s22, 0
      %s344 = sadd.s32 %s343, %s341
      %s345 = scalar_lea.vmem %s3, %s344
      %p346 = pneg %p148
      %p347 = pneg %p145
      %p348 = scmp.lt.s32.totalorder %s21, 1
      %s349 = scalar_select %p348, %s21, 1
      %p350 = scmp.lt.s32.totalorder %s22, 0
      %s351 = scalar_select %p350, %s22, 0
      %s352 = sadd.s32 %s351, %s349
      %s353 = scalar_lea.vmem %s4, %s352
      %p354 = pneg %p176
      %p355 = pneg %p173
      %p356 = pneg %p206
      %p357 = pneg %p203
      %s358 = smul.u32 32, %s23
      %p359 = scmp.lt.s32.totalorder %s21, 1
      %s360 = scalar_select %p359, %s21, 1
      %p361 = scmp.lt.s32.totalorder %s358, 31
      %s362 = scalar_select %p361, %s358, 31
      %p363 = scmp.lt.s32.totalorder %s22, 0
      %s364 = scalar_select %p363, %s22, 0
      %s365 = sadd.s32 %s364, %s362
      %s366 = smul.addr %s360, 32
      %s367 = sadd.s32 %s365, %s366
      %s368 = smul.addr %s367, 4
      %s369 = scalar_lea.vmem %s5, %s368
      %s370 = smul.u32 32, %s23
      %p371 = scmp.lt.s32.totalorder %s21, 1
      %s372 = scalar_select %p371, %s21, 1
      %p373 = scmp.lt.s32.totalorder %s370, 31
      %s374 = scalar_select %p373, %s370, 31
      %p375 = scmp.lt.s32.totalorder %s22, 0
      %s376 = scalar_select %p375, %s22, 0
      %s377 = sadd.s32 %s376, %s374
      %s378 = smul.addr %s372, 32
      %s379 = sadd.s32 %s377, %s378
      %s380 = smul.addr %s379, 4
      %s381 = scalar_lea.vmem %s0, %s380
      %s382 = smul.u32 32, %s23
      %s383 = smul.u32 32, %s23
      %p384 = scmp.lt.s32.totalorder %s21, 1
      %s385 = scalar_select %p384, %s21, 1
      %p386 = scmp.lt.s32.totalorder %s383, 31
      %s387 = scalar_select %p386, %s383, 31
      %p388 = scmp.lt.s32.totalorder %s22, 0
      %s389 = scalar_select %p388, %s22, 0
      %s390 = sadd.s32 %s389, %s387
      %s391 = smul.addr %s385, 32
      %s392 = sadd.s32 %s390, %s391
      %s393 = smul.addr %s392, 4
      %s394 = scalar_lea.vmem %s1, %s393
      %s395 = smul.u32 32, %s23
      %s396 = smul.u32 32, %s23
      %p397 = scmp.lt.s32.totalorder %s21, 1
      %s398 = scalar_select %p397, %s21, 1
      %p399 = scmp.lt.s32.totalorder %s396, 31
      %s400 = scalar_select %p399, %s396, 31
      %p401 = scmp.lt.s32.totalorder %s22, 0
      %s402 = scalar_select %p401, %s22, 0
      %s403 = sadd.s32 %s402, %s400
      %s404 = smul.addr %s398, 32
      %s405 = sadd.s32 %s403, %s404
      %s406 = smul.addr %s405, 8
      %s407 = scalar_lea.vmem %s2, %s406
      %s408 = smul.u32 32, %s23
      %p409 = scmp.lt.s32.totalorder %s21, 1
      %s410 = scalar_select %p409, %s21, 1
      %p411 = scmp.lt.s32.totalorder %s22, 0
      %s412 = scalar_select %p411, %s22, 0
      %s413 = sadd.s32 %s412, %s410
      %s414 = scalar_lea.vmem %s3, %s413
      %p415 = scmp.lt.s32.totalorder %s21, 1
      %s416 = scalar_select %p415, %s21, 1
      %p417 = scmp.lt.s32.totalorder %s22, 0
      %s418 = scalar_select %p417, %s22, 0
      %s419 = sadd.s32 %s418, %s416
      %s420 = scalar_lea.vmem %s4, %s419
      %s421 = smul.u32 32, %s23
      %p422 = scmp.lt.s32.totalorder %s21, 1
      %s423 = scalar_select %p422, %s21, 1
      %p424 = scmp.lt.s32.totalorder %s421, 31
      %s425 = scalar_select %p424, %s421, 31
      %p426 = scmp.lt.s32.totalorder %s22, 0
      %s427 = scalar_select %p426, %s22, 0
      %s428 = sadd.s32 %s427, %s425
      %s429 = smul.addr %s423, 32
      %s430 = sadd.s32 %s428, %s429
      %s431 = smul.addr %s430, 4
      %s432 = scalar_lea.vmem %s5, %s431
      %s433 = smul.u32 32, %s23
      %v434 = vld [vmem:[%s407] sm:$0xff]
      %v435 = vld [vmem:[%s407 + $0x8] sm:$0xff]
      %v436 = vld [vmem:[%s407 + $0x10] sm:$0xff]
      %v437 = vld [vmem:[%s407 + $0x18] sm:$0xff]
      %v438 = vld [vmem:[%s407 + $0x20] sm:$0xff]
      %v439 = vld [vmem:[%s407 + $0x28] sm:$0xff]
      %v440 = vld [vmem:[%s407 + $0x30] sm:$0xff]
      %v441 = vld [vmem:[%s407 + $0x38] sm:$0xff]
      %v442 = vld [vmem:[%s407 + $0x40] sm:$0xff]
      %v443 = vld [vmem:[%s407 + $0x48] sm:$0xff]
      %v444 = vld [vmem:[%s407 + $0x50] sm:$0xff]
      %v445 = vld [vmem:[%s407 + $0x58] sm:$0xff]
      %v446 = vld [vmem:[%s407 + $0x60] sm:$0xff]
      %v447 = vld [vmem:[%s407 + $0x68] sm:$0xff]
      %v448 = vld [vmem:[%s407 + $0x70] sm:$0xff]
      %v449 = vld [vmem:[%s407 + $0x78] sm:$0xff]
      %v450 = vld [vmem:[%s407 + $0x80] sm:$0xff]
      %v451 = vld [vmem:[%s407 + $0x88] sm:$0xff]
      %v452 = vld [vmem:[%s407 + $0x90] sm:$0xff]
      %v453 = vld [vmem:[%s407 + $0x98] sm:$0xff]
      %v454 = vld [vmem:[%s407 + $0xa0] sm:$0xff]
      %v455 = vld [vmem:[%s407 + $0xa8] sm:$0xff]
      %v456 = vld [vmem:[%s407 + $0xb0] sm:$0xff]
      %v457 = vld [vmem:[%s407 + $0xb8] sm:$0xff]
      %v458 = vld [vmem:[%s407 + $0xc0] sm:$0xff]
      %v459 = vld [vmem:[%s407 + $0xc8] sm:$0xff]
      %v460 = vld [vmem:[%s407 + $0xd0] sm:$0xff]
      %v461 = vld [vmem:[%s407 + $0xd8] sm:$0xff]
      %v462 = vld [vmem:[%s407 + $0xe0] sm:$0xff]
      %v463 = vld [vmem:[%s407 + $0xe8] sm:$0xff]
      %v464 = vld [vmem:[%s407 + $0xf0] sm:$0xff]
      %v465 = vld [vmem:[%s407 + $0xf8] sm:$0xff]
      %v466 = vld [vmem:[%s414] sm:$0x1]
      %v468 = vperm.slane %v466, 0
      %v470 = vsub.f32 %v434, %v468
      %v471 = vsub.f32 %v435, %v468
      %v472 = vsub.f32 %v436, %v468
      %v473 = vsub.f32 %v437, %v468
      %v474 = vsub.f32 %v438, %v468
      %v475 = vsub.f32 %v439, %v468
      %v476 = vsub.f32 %v440, %v468
      %v477 = vsub.f32 %v441, %v468
      %v478 = vsub.f32 %v442, %v468
      %v479 = vsub.f32 %v443, %v468
      %v480 = vsub.f32 %v444, %v468
      %v481 = vsub.f32 %v445, %v468
      %v482 = vsub.f32 %v446, %v468
      %v483 = vsub.f32 %v447, %v468
      %v484 = vsub.f32 %v448, %v468
      %v485 = vsub.f32 %v449, %v468
      %v486 = vsub.f32 %v450, %v468
      %v487 = vsub.f32 %v451, %v468
      %v488 = vsub.f32 %v452, %v468
      %v489 = vsub.f32 %v453, %v468
      %v490 = vsub.f32 %v454, %v468
      %v491 = vsub.f32 %v455, %v468
      %v492 = vsub.f32 %v456, %v468
      %v493 = vsub.f32 %v457, %v468
      %v494 = vsub.f32 %v458, %v468
      %v495 = vsub.f32 %v459, %v468
      %v496 = vsub.f32 %v460, %v468
      %v497 = vsub.f32 %v461, %v468
      %v498 = vsub.f32 %v462, %v468
      %v499 = vsub.f32 %v463, %v468
      %v500 = vsub.f32 %v464, %v468
      %v501 = vsub.f32 %v465, %v468
      %v502 = vmul.f32 %v470, 1.442695
      %v503 = vpow.pop %v502
      %v504 = vmul.f32 %v471, 1.442695
      %v505 = vpow.pop %v504
      %v506 = vmul.f32 %v472, 1.442695
      %v507 = vpow.pop %v506
      %v508 = vmul.f32 %v473, 1.442695
      %v509 = vpow.pop %v508
      %v510 = vmul.f32 %v474, 1.442695
      %v511 = vpow.pop %v510
      %v512 = vmul.f32 %v475, 1.442695
      %v513 = vpow.pop %v512
      %v514 = vmul.f32 %v476, 1.442695
      %v515 = vpow.pop %v514
      %v516 = vmul.f32 %v477, 1.442695
      %v517 = vpow.pop %v516
      %v518 = vmul.f32 %v478, 1.442695
      %v519 = vpow.pop %v518
      %v520 = vmul.f32 %v479, 1.442695
      %v521 = vpow.pop %v520
      %v522 = vmul.f32 %v480, 1.442695
      %v523 = vpow.pop %v522
      %v524 = vmul.f32 %v481, 1.442695
      %v525 = vpow.pop %v524
      %v526 = vmul.f32 %v482, 1.442695
      %v527 = vpow.pop %v526
      %v528 = vmul.f32 %v483, 1.442695
      %v529 = vpow.pop %v528
      %v530 = vmul.f32 %v484, 1.442695
      %v531 = vpow.pop %v530
      %v532 = vmul.f32 %v485, 1.442695
      %v533 = vpow.pop %v532
      %v534 = vmul.f32 %v486, 1.442695
      %v535 = vpow.pop %v534
      %v536 = vmul.f32 %v487, 1.442695
      %v537 = vpow.pop %v536
      %v538 = vmul.f32 %v488, 1.442695
      %v539 = vpow.pop %v538
      %v540 = vmul.f32 %v489, 1.442695
      %v541 = vpow.pop %v540
      %v542 = vmul.f32 %v490, 1.442695
      %v543 = vpow.pop %v542
      %v544 = vmul.f32 %v491, 1.442695
      %v545 = vpow.pop %v544
      %v546 = vmul.f32 %v492, 1.442695
      %v547 = vpow.pop %v546
      %v548 = vmul.f32 %v493, 1.442695
      %v549 = vpow.pop %v548
      %v550 = vmul.f32 %v494, 1.442695
      %v551 = vpow.pop %v550
      %v552 = vmul.f32 %v495, 1.442695
      %v553 = vpow.pop %v552
      %v554 = vmul.f32 %v496, 1.442695
      %v555 = vpow.pop %v554
      %v556 = vmul.f32 %v497, 1.442695
      %v557 = vpow.pop %v556
      %v558 = vmul.f32 %v498, 1.442695
      %v559 = vpow.pop %v558
      %v560 = vmul.f32 %v499, 1.442695
      %v561 = vpow.pop %v560
      %v562 = vmul.f32 %v500, 1.442695
      %v563 = vpow.pop %v562
      %v564 = vmul.f32 %v501, 1.442695
      %v565 = vpow.pop %v564
      %v566 = vld [vmem:[%s420] sm:$0x1]
      %v567 = vrcp.pop %v566
      %v569 = vperm.slane %v567, 0
      %v571 = vmul.f32 %v503, %v569
      %v572 = vmul.f32 %v505, %v569
      %v573 = vmul.f32 %v507, %v569
      %v574 = vmul.f32 %v509, %v569
      %v575 = vmul.f32 %v511, %v569
      %v576 = vmul.f32 %v513, %v569
      %v577 = vmul.f32 %v515, %v569
      %v578 = vmul.f32 %v517, %v569
      %v579 = vmul.f32 %v519, %v569
      %v580 = vmul.f32 %v521, %v569
      %v581 = vmul.f32 %v523, %v569
      %v582 = vmul.f32 %v525, %v569
      %v583 = vmul.f32 %v527, %v569
      %v584 = vmul.f32 %v529, %v569
      %v585 = vmul.f32 %v531, %v569
      %v586 = vmul.f32 %v533, %v569
      %v587 = vmul.f32 %v535, %v569
      %v588 = vmul.f32 %v537, %v569
      %v589 = vmul.f32 %v539, %v569
      %v590 = vmul.f32 %v541, %v569
      %v591 = vmul.f32 %v543, %v569
      %v592 = vmul.f32 %v545, %v569
      %v593 = vmul.f32 %v547, %v569
      %v594 = vmul.f32 %v549, %v569
      %v595 = vmul.f32 %v551, %v569
      %v596 = vmul.f32 %v553, %v569
      %v597 = vmul.f32 %v555, %v569
      %v598 = vmul.f32 %v557, %v569
      %v599 = vmul.f32 %v559, %v569
      %v600 = vmul.f32 %v561, %v569
      %v601 = vmul.f32 %v563, %v569
      %v602 = vmul.f32 %v565, %v569
      %v603 = vld [vmem:[%s381] sm:$0xf]
      %v604 = vld [vmem:[%s381 + $0x4] sm:$0xf]
      %v605 = vld [vmem:[%s381 + $0x8] sm:$0xf]
      %v606 = vld [vmem:[%s381 + $0xc] sm:$0xf]
      %v607 = vld [vmem:[%s381 + $0x10] sm:$0xf]
      %v608 = vld [vmem:[%s381 + $0x14] sm:$0xf]
      %v609 = vld [vmem:[%s381 + $0x18] sm:$0xf]
      %v610 = vld [vmem:[%s381 + $0x1c] sm:$0xf]
      %v611 = vld [vmem:[%s381 + $0x20] sm:$0xf]
      %v612 = vld [vmem:[%s381 + $0x24] sm:$0xf]
      %v613 = vld [vmem:[%s381 + $0x28] sm:$0xf]
      %v614 = vld [vmem:[%s381 + $0x2c] sm:$0xf]
      %v615 = vld [vmem:[%s381 + $0x30] sm:$0xf]
      %v616 = vld [vmem:[%s381 + $0x34] sm:$0xf]
      %v617 = vld [vmem:[%s381 + $0x38] sm:$0xf]
      %v618 = vld [vmem:[%s381 + $0x3c] sm:$0xf]
      %v619 = vld [vmem:[%s381 + $0x40] sm:$0xf]
      %v620 = vld [vmem:[%s381 + $0x44] sm:$0xf]
      %v621 = vld [vmem:[%s381 + $0x48] sm:$0xf]
      %v622 = vld [vmem:[%s381 + $0x4c] sm:$0xf]
      %v623 = vld [vmem:[%s381 + $0x50] sm:$0xf]
      %v624 = vld [vmem:[%s381 + $0x54] sm:$0xf]
      %v625 = vld [vmem:[%s381 + $0x58] sm:$0xf]
      %v626 = vld [vmem:[%s381 + $0x5c] sm:$0xf]
      %v627 = vld [vmem:[%s381 + $0x60] sm:$0xf]
      %v628 = vld [vmem:[%s381 + $0x64] sm:$0xf]
      %v629 = vld [vmem:[%s381 + $0x68] sm:$0xf]
      %v630 = vld [vmem:[%s381 + $0x6c] sm:$0xf]
      %v631 = vld [vmem:[%s381 + $0x70] sm:$0xf]
      %v632 = vld [vmem:[%s381 + $0x74] sm:$0xf]
      %v633 = vld [vmem:[%s381 + $0x78] sm:$0xf]
      %v634 = vld [vmem:[%s381 + $0x7c] sm:$0xf]
      %v635 = vunpack.c.l.bf16 %v603
      %v636 = vunpack.c.l.bf16 %v604
      %v637 = vunpack.c.l.bf16 %v605
      %v638 = vunpack.c.l.bf16 %v606
      %v639 = vunpack.c.l.bf16 %v607
      %v640 = vunpack.c.l.bf16 %v608
      %v641 = vunpack.c.l.bf16 %v609
      %v642 = vunpack.c.l.bf16 %v610
      %v643 = vunpack.c.l.bf16 %v611
      %v644 = vunpack.c.l.bf16 %v612
      %v645 = vunpack.c.l.bf16 %v613
      %v646 = vunpack.c.l.bf16 %v614
      %v647 = vunpack.c.l.bf16 %v615
      %v648 = vunpack.c.l.bf16 %v616
      %v649 = vunpack.c.l.bf16 %v617
      %v650 = vunpack.c.l.bf16 %v618
      %v651 = vunpack.c.l.bf16 %v619
      %v652 = vunpack.c.l.bf16 %v620
      %v653 = vunpack.c.l.bf16 %v621
      %v654 = vunpack.c.l.bf16 %v622
      %v655 = vunpack.c.l.bf16 %v623
      %v656 = vunpack.c.l.bf16 %v624
      %v657 = vunpack.c.l.bf16 %v625
      %v658 = vunpack.c.l.bf16 %v626
      %v659 = vunpack.c.l.bf16 %v627
      %v660 = vunpack.c.l.bf16 %v628
      %v661 = vunpack.c.l.bf16 %v629
      %v662 = vunpack.c.l.bf16 %v630
      %v663 = vunpack.c.l.bf16 %v631
      %v664 = vunpack.c.l.bf16 %v632
      %v665 = vunpack.c.l.bf16 %v633
      %v666 = vunpack.c.l.bf16 %v634
      %v667 = vld [vmem:[%s394] sm:$0xf]
      %v668 = vld [vmem:[%s394 + $0x4] sm:$0xf]
      %v669 = vld [vmem:[%s394 + $0x8] sm:$0xf]
      %v670 = vld [vmem:[%s394 + $0xc] sm:$0xf]
      %v671 = vld [vmem:[%s394 + $0x10] sm:$0xf]
      %v672 = vld [vmem:[%s394 + $0x14] sm:$0xf]
      %v673 = vld [vmem:[%s394 + $0x18] sm:$0xf]
      %v674 = vld [vmem:[%s394 + $0x1c] sm:$0xf]
      %v675 = vld [vmem:[%s394 + $0x20] sm:$0xf]
      %v676 = vld [vmem:[%s394 + $0x24] sm:$0xf]
      %v677 = vld [vmem:[%s394 + $0x28] sm:$0xf]
      %v678 = vld [vmem:[%s394 + $0x2c] sm:$0xf]
      %v679 = vld [vmem:[%s394 + $0x30] sm:$0xf]
      %v680 = vld [vmem:[%s394 + $0x34] sm:$0xf]
      %v681 = vld [vmem:[%s394 + $0x38] sm:$0xf]
      %v682 = vld [vmem:[%s394 + $0x3c] sm:$0xf]
      %v683 = vld [vmem:[%s394 + $0x40] sm:$0xf]
      %v684 = vld [vmem:[%s394 + $0x44] sm:$0xf]
      %v685 = vld [vmem:[%s394 + $0x48] sm:$0xf]
      %v686 = vld [vmem:[%s394 + $0x4c] sm:$0xf]
      %v687 = vld [vmem:[%s394 + $0x50] sm:$0xf]
      %v688 = vld [vmem:[%s394 + $0x54] sm:$0xf]
      %v689 = vld [vmem:[%s394 + $0x58] sm:$0xf]
      %v690 = vld [vmem:[%s394 + $0x5c] sm:$0xf]
      %v691 = vld [vmem:[%s394 + $0x60] sm:$0xf]
      %v692 = vld [vmem:[%s394 + $0x64] sm:$0xf]
      %v693 = vld [vmem:[%s394 + $0x68] sm:$0xf]
      %v694 = vld [vmem:[%s394 + $0x6c] sm:$0xf]
      %v695 = vld [vmem:[%s394 + $0x70] sm:$0xf]
      %v696 = vld [vmem:[%s394 + $0x74] sm:$0xf]
      %v697 = vld [vmem:[%s394 + $0x78] sm:$0xf]
      %v698 = vld [vmem:[%s394 + $0x7c] sm:$0xf]
      %v699 = vunpack.c.l.bf16 %v667
      %v700 = vunpack.c.l.bf16 %v668
      %v701 = vunpack.c.l.bf16 %v669
      %v702 = vunpack.c.l.bf16 %v670
      %v703 = vunpack.c.l.bf16 %v671
      %v704 = vunpack.c.l.bf16 %v672
      %v705 = vunpack.c.l.bf16 %v673
      %v706 = vunpack.c.l.bf16 %v674
      %v707 = vunpack.c.l.bf16 %v675
      %v708 = vunpack.c.l.bf16 %v676
      %v709 = vunpack.c.l.bf16 %v677
      %v710 = vunpack.c.l.bf16 %v678
      %v711 = vunpack.c.l.bf16 %v679
      %v712 = vunpack.c.l.bf16 %v680
      %v713 = vunpack.c.l.bf16 %v681
      %v714 = vunpack.c.l.bf16 %v682
      %v715 = vunpack.c.l.bf16 %v683
      %v716 = vunpack.c.l.bf16 %v684
      %v717 = vunpack.c.l.bf16 %v685
      %v718 = vunpack.c.l.bf16 %v686
      %v719 = vunpack.c.l.bf16 %v687
      %v720 = vunpack.c.l.bf16 %v688
      %v721 = vunpack.c.l.bf16 %v689
      %v722 = vunpack.c.l.bf16 %v690
      %v723 = vunpack.c.l.bf16 %v691
      %v724 = vunpack.c.l.bf16 %v692
      %v725 = vunpack.c.l.bf16 %v693
      %v726 = vunpack.c.l.bf16 %v694
      %v727 = vunpack.c.l.bf16 %v695
      %v728 = vunpack.c.l.bf16 %v696
      %v729 = vunpack.c.l.bf16 %v697
      %v730 = vunpack.c.l.bf16 %v698
      %v731 = vmul.f32 %v571, %v699
      %v732 = vmul.f32 %v572, %v700
      %v733 = vmul.f32 %v573, %v701
      %v734 = vmul.f32 %v574, %v702
      %v735 = vmul.f32 %v575, %v703
      %v736 = vmul.f32 %v576, %v704
      %v737 = vmul.f32 %v577, %v705
      %v738 = vmul.f32 %v578, %v706
      %v739 = vmul.f32 %v579, %v707
      %v740 = vmul.f32 %v580, %v708
      %v741 = vmul.f32 %v581, %v709
      %v742 = vmul.f32 %v582, %v710
      %v743 = vmul.f32 %v583, %v711
      %v744 = vmul.f32 %v584, %v712
      %v745 = vmul.f32 %v585, %v713
      %v746 = vmul.f32 %v586, %v714
      %v747 = vmul.f32 %v587, %v715
      %v748 = vmul.f32 %v588, %v716
      %v749 = vmul.f32 %v589, %v717
      %v750 = vmul.f32 %v590, %v718
      %v751 = vmul.f32 %v591, %v719
      %v752 = vmul.f32 %v592, %v720
      %v753 = vmul.f32 %v593, %v721
      %v754 = vmul.f32 %v594, %v722
      %v755 = vmul.f32 %v595, %v723
      %v756 = vmul.f32 %v596, %v724
      %v757 = vmul.f32 %v597, %v725
      %v758 = vmul.f32 %v598, %v726
      %v759 = vmul.f32 %v599, %v727
      %v760 = vmul.f32 %v600, %v728
      %v761 = vmul.f32 %v601, %v729
      %v762 = vmul.f32 %v602, %v730
      %v763 = vadd.f32 %v635, %v731
      %v764 = vadd.f32 %v636, %v732
      %v765 = vadd.f32 %v637, %v733
      %v766 = vadd.f32 %v638, %v734
      %v767 = vadd.f32 %v639, %v735
      %v768 = vadd.f32 %v640, %v736
      %v769 = vadd.f32 %v641, %v737
      %v770 = vadd.f32 %v642, %v738
      %v771 = vadd.f32 %v643, %v739
      %v772 = vadd.f32 %v644, %v740
      %v773 = vadd.f32 %v645, %v741
      %v774 = vadd.f32 %v646, %v742
      %v775 = vadd.f32 %v647, %v743
      %v776 = vadd.f32 %v648, %v744
      %v777 = vadd.f32 %v649, %v745
      %v778 = vadd.f32 %v650, %v746
      %v779 = vadd.f32 %v651, %v747
      %v780 = vadd.f32 %v652, %v748
      %v781 = vadd.f32 %v653, %v749
      %v782 = vadd.f32 %v654, %v750
      %v783 = vadd.f32 %v655, %v751
      %v784 = vadd.f32 %v656, %v752
      %v785 = vadd.f32 %v657, %v753
      %v786 = vadd.f32 %v658, %v754
      %v787 = vadd.f32 %v659, %v755
      %v788 = vadd.f32 %v660, %v756
      %v789 = vadd.f32 %v661, %v757
      %v790 = vadd.f32 %v662, %v758
      %v791 = vadd.f32 %v663, %v759
      %v792 = vadd.f32 %v664, %v760
      %v793 = vadd.f32 %v665, %v761
      %v794 = vadd.f32 %v666, %v762
      %v795 = vpack.c.bf16 %v763, %v763
      %v796 = vpack.c.bf16 %v764, %v764
      %v797 = vpack.c.bf16 %v765, %v765
      %v798 = vpack.c.bf16 %v766, %v766
      %v799 = vpack.c.bf16 %v767, %v767
      %v800 = vpack.c.bf16 %v768, %v768
      %v801 = vpack.c.bf16 %v769, %v769
      %v802 = vpack.c.bf16 %v770, %v770
      %v803 = vpack.c.bf16 %v771, %v771
      %v804 = vpack.c.bf16 %v772, %v772
      %v805 = vpack.c.bf16 %v773, %v773
      %v806 = vpack.c.bf16 %v774, %v774
      %v807 = vpack.c.bf16 %v775, %v775
      %v808 = vpack.c.bf16 %v776, %v776
      %v809 = vpack.c.bf16 %v777, %v777
      %v810 = vpack.c.bf16 %v778, %v778
      %v811 = vpack.c.bf16 %v779, %v779
      %v812 = vpack.c.bf16 %v780, %v780
      %v813 = vpack.c.bf16 %v781, %v781
      %v814 = vpack.c.bf16 %v782, %v782
      %v815 = vpack.c.bf16 %v783, %v783
      %v816 = vpack.c.bf16 %v784, %v784
      %v817 = vpack.c.bf16 %v785, %v785
      %v818 = vpack.c.bf16 %v786, %v786
      %v819 = vpack.c.bf16 %v787, %v787
      %v820 = vpack.c.bf16 %v788, %v788
      %v821 = vpack.c.bf16 %v789, %v789
      %v822 = vpack.c.bf16 %v790, %v790
      %v823 = vpack.c.bf16 %v791, %v791
      %v824 = vpack.c.bf16 %v792, %v792
      %v825 = vpack.c.bf16 %v793, %v793
      %v826 = vpack.c.bf16 %v794, %v794
      %vm827 = vcmask 60416
      %828 = vst.msk [vmem:[%s432] sm:$0xf] %vm827, %v795
      %829 = vst.msk [vmem:[%s432 + $0x4] sm:$0xf] %vm827, %v796
      %830 = vst.msk [vmem:[%s432 + $0x8] sm:$0xf] %vm827, %v797
      %831 = vst.msk [vmem:[%s432 + $0xc] sm:$0xf] %vm827, %v798
      %832 = vst.msk [vmem:[%s432 + $0x10] sm:$0xf] %vm827, %v799
      %833 = vst.msk [vmem:[%s432 + $0x14] sm:$0xf] %vm827, %v800
      %834 = vst.msk [vmem:[%s432 + $0x18] sm:$0xf] %vm827, %v801
      %835 = vst.msk [vmem:[%s432 + $0x1c] sm:$0xf] %vm827, %v802
      %836 = vst.msk [vmem:[%s432 + $0x20] sm:$0xf] %vm827, %v803
      %837 = vst.msk [vmem:[%s432 + $0x24] sm:$0xf] %vm827, %v804
      %838 = vst.msk [vmem:[%s432 + $0x28] sm:$0xf] %vm827, %v805
      %839 = vst.msk [vmem:[%s432 + $0x2c] sm:$0xf] %vm827, %v806
      %840 = vst.msk [vmem:[%s432 + $0x30] sm:$0xf] %vm827, %v807
      %841 = vst.msk [vmem:[%s432 + $0x34] sm:$0xf] %vm827, %v808
      %842 = vst.msk [vmem:[%s432 + $0x38] sm:$0xf] %vm827, %v809
      %843 = vst.msk [vmem:[%s432 + $0x3c] sm:$0xf] %vm827, %v810
      %844 = vst.msk [vmem:[%s432 + $0x40] sm:$0xf] %vm827, %v811
      %845 = vst.msk [vmem:[%s432 + $0x44] sm:$0xf] %vm827, %v812
      %846 = vst.msk [vmem:[%s432 + $0x48] sm:$0xf] %vm827, %v813
      %847 = vst.msk [vmem:[%s432 + $0x4c] sm:$0xf] %vm827, %v814
      %848 = vst.msk [vmem:[%s432 + $0x50] sm:$0xf] %vm827, %v815
      %849 = vst.msk [vmem:[%s432 + $0x54] sm:$0xf] %vm827, %v816
      %850 = vst.msk [vmem:[%s432 + $0x58] sm:$0xf] %vm827, %v817
      %851 = vst.msk [vmem:[%s432 + $0x5c] sm:$0xf] %vm827, %v818
      %852 = vst.msk [vmem:[%s432 + $0x60] sm:$0xf] %vm827, %v819
      %853 = vst.msk [vmem:[%s432 + $0x64] sm:$0xf] %vm827, %v820
      %854 = vst.msk [vmem:[%s432 + $0x68] sm:$0xf] %vm827, %v821
      %855 = vst.msk [vmem:[%s432 + $0x6c] sm:$0xf] %vm827, %v822
      %856 = vst.msk [vmem:[%s432 + $0x70] sm:$0xf] %vm827, %v823
      %857 = vst.msk [vmem:[%s432 + $0x74] sm:$0xf] %vm827, %v824
      %858 = vst.msk [vmem:[%s432 + $0x78] sm:$0xf] %vm827, %v825
      %859 = vst.msk [vmem:[%s432 + $0x7c] sm:$0xf] %vm827, %v826
      %s860 = smul.u32 32, %s23
      %p861 = scmp.lt.s32.totalorder %s21, 1
      %s862 = scalar_select %p861, %s21, 1
      %p863 = scmp.lt.s32.totalorder %s860, 31
      %s864 = scalar_select %p863, %s860, 31
      %p865 = scmp.lt.s32.totalorder %s22, 0
      %s866 = scalar_select %p865, %s22, 0
      %s867 = sadd.s32 %s866, %s864
      %s868 = smul.addr %s862, 32
      %s869 = sadd.s32 %s867, %s868
      %s870 = smul.addr %s869, 4
      %s871 = scalar_lea.vmem %s5, %s870
      // Predicated region
      $region41: #{c2f_cot_attention_forward.14} parent=39 // pred_check
        %p872 = pneg %p203
      $region42: #{c2f_cot_attention_forward.14} parent=39 // pred_check_branch
        %874 = sbr.rel (%p872) target = $region44
      $region43: #{c2f_cot_attention_forward.14} parent=39 // pred_region
        %s875 = smul.u32 32, %s23
      $region44: #{c2f_cot_attention_forward.14} parent=39 // pred_fallthru
        _
    $region40: #{c2f_cot_attention_forward.14} parent=5 // pred_fallthru
      _
    %p876 = scmp.le.s32.totalorder 2, %s11
    // Predicated region
    $region45: #{c2f_cot_attention_forward.14} parent=5 // pred_check
      %p877 = pneg %p876
    $region46: #{c2f_cot_attention_forward.14} parent=5 // pred_check_branch
      %879 = sbr.rel (%p877) target = $region48
    $region47: #{c2f_cot_attention_forward.14} parent=5 // pred_region
      %s880 = ssub.s32 %s11, 2
      // Predicated region
      $region49: #{c2f_cot_attention_forward.14} parent=47 // pred_check
        %p881 = pneg %p209
      $region50: #{c2f_cot_attention_forward.14} parent=47 // pred_check_branch
        %883 = sbr.rel (%p881) target = $region52
      $region51: #{c2f_cot_attention_forward.14} parent=47 // pred_region
        %s884 = smul.u32 32, %s26
        %p885 = scmp.lt.s32.totalorder %s24, 1
        %s886 = scalar_select %p885, %s24, 1
        %p887 = scmp.lt.s32.totalorder %s884, 31
        %s888 = scalar_select %p887, %s884, 31
        %p889 = scmp.lt.s32.totalorder %s25, 0
        %s890 = scalar_select %p889, %s25, 0
        %s891 = sadd.s32 %s890, %s888
        %s892 = smul.addr %s886, 32
        %s893 = sadd.s32 %s891, %s892
        %s894 = smul.addr %s893, 4
        %s895 = scalar_lea.vmem %s5, %s894
      $region52: #{c2f_cot_attention_forward.14} parent=47 // pred_fallthru
        _
    $region48: #{c2f_cot_attention_forward.14} parent=5 // pred_fallthru
      _
  $region6: #{c2f_cot_attention_forward.14} parent=0 // loop_footer
    %s15 = sadd.s32 1, %s11
  $region7: #{c2f_cot_attention_forward.14} parent=0 // loop_footer_branch
    %10 = sbr.rel target = $region3
  $region8: #{c2f_cot_attention_forward.14} parent=0 // loop_exit
    _

// kernel: c2f_cot_attention_forward.15
$region0: #{c2f_cot_attention_forward.15}
  #allocation0 [shape = 'u32[]', space=smem, size = 0x4, offset = 0x4, fixed_abs, tag = 'smem constant byte address 0x4 - core index']
  #allocation1 [shape = 'u32[72,128]{1,0:T(1,128)}', space=vmem, size = 0x9000, scoped, tag = 'internal scratch']
  %s0 = inlined_call_operand.vmem [shape: bf16[512,8], index: 0, kind: input, shape index: {}]
  %s1 = inlined_call_operand.vmem [shape: bf16[512,8], index: 1, kind: input, shape index: {}]
  %s2 = inlined_call_operand.vmem [shape: bf16[512,8], index: 2, kind: input, shape index: {}]
  %s3 = inlined_call_operand.vmem [shape: bf16[8,16], index: 3, kind: input, shape index: {}]
  %s4 = inlined_call_operand.vmem [shape: bf16[8,16], index: 4, kind: input, shape index: {}]
  %s5 = inlined_call_operand.vmem [shape: bf16[8,16], index: 5, kind: input, shape index: {}]
  %s6 = inlined_call_operand.vmem [shape: f32[2,16], index: 6, kind: input, shape index: {}]
  %s7 = inlined_call_operand.vmem [shape: f32[512,16], index: 7, kind: output, shape index: {}]
  %s8 = sld [smem:[#allocation0]]
  $region38: #{c2f_cot_attention_forward.15} parent=0
    _
  %s10 = ssub.s32 1, %s8
  %s11 = scalar_select 0, %s10, %s8
  // Predicated region
  $region2: #{c2f_cot_attention_forward.15} parent=0 // pred_check
    _
  $region3: #{c2f_cot_attention_forward.15} parent=0 // pred_check_branch
    %13 = sbr.rel (0) target = $region5
  $region4: #{c2f_cot_attention_forward.15} parent=0 // pred_region
    _
  $region5: #{c2f_cot_attention_forward.15} parent=0 // pred_fallthru
    _
  // Predicated region
  $region6: #{c2f_cot_attention_forward.15} parent=0 // pred_check
    _
  $region7: #{c2f_cot_attention_forward.15} parent=0 // pred_check_branch
    %15 = sbr.rel (0) target = $region9
  $region8: #{c2f_cot_attention_forward.15} parent=0 // pred_region
    _
  $region9: #{c2f_cot_attention_forward.15} parent=0 // pred_fallthru
    _
  // Predicated region
  $region10: #{c2f_cot_attention_forward.15} parent=0 // pred_check
    _
  $region11: #{c2f_cot_attention_forward.15} parent=0 // pred_check_branch
    %17 = sbr.rel (0) target = $region13
  $region12: #{c2f_cot_attention_forward.15} parent=0 // pred_region
    _
  $region13: #{c2f_cot_attention_forward.15} parent=0 // pred_fallthru
    _
  // Predicated region
  $region14: #{c2f_cot_attention_forward.15} parent=0 // pred_check
    _
  $region15: #{c2f_cot_attention_forward.15} parent=0 // pred_check_branch
    %19 = sbr.rel (0) target = $region17
  $region16: #{c2f_cot_attention_forward.15} parent=0 // pred_region
    _
  $region17: #{c2f_cot_attention_forward.15} parent=0 // pred_fallthru
    _
  // Predicated region
  $region18: #{c2f_cot_attention_forward.15} parent=0 // pred_check
    _
  $region19: #{c2f_cot_attention_forward.15} parent=0 // pred_check_branch
    %21 = sbr.rel (0) target = $region21
  $region20: #{c2f_cot_attention_forward.15} parent=0 // pred_region
    _
  $region21: #{c2f_cot_attention_forward.15} parent=0 // pred_fallthru
    _
  // Predicated region
  $region22: #{c2f_cot_attention_forward.15} parent=0 // pred_check
    _
  $region23: #{c2f_cot_attention_forward.15} parent=0 // pred_check_branch
    %23 = sbr.rel (0) target = $region25
  $region24: #{c2f_cot_attention_forward.15} parent=0 // pred_region
    _
  $region25: #{c2f_cot_attention_forward.15} parent=0 // pred_fallthru
    _
  // Predicated region
  $region26: #{c2f_cot_attention_forward.15} parent=0 // pred_check
    _
  $region27: #{c2f_cot_attention_forward.15} parent=0 // pred_check_branch
    %25 = sbr.rel (0) target = $region29
  $region28: #{c2f_cot_attention_forward.15} parent=0 // pred_region
    _
  $region29: #{c2f_cot_attention_forward.15} parent=0 // pred_fallthru
    _
  %v27 = vld [vmem:[%s0] sm:$0xf]
  %v28 = vld [vmem:[%s0 + $0x4] sm:$0xf]
  %v29 = vld [vmem:[%s0 + $0x8] sm:$0xf]
  %v30 = vld [vmem:[%s0 + $0xc] sm:$0xf]
  %v31 = vld [vmem:[%s0 + $0x10] sm:$0xf]
  %v32 = vld [vmem:[%s0 + $0x14] sm:$0xf]
  %v33 = vld [vmem:[%s0 + $0x18] sm:$0xf]
  %v34 = vld [vmem:[%s0 + $0x1c] sm:$0xf]
  %v35 = vld [vmem:[%s0 + $0x20] sm:$0xf]
  %v36 = vld [vmem:[%s0 + $0x24] sm:$0xf]
  %v37 = vld [vmem:[%s0 + $0x28] sm:$0xf]
  %v38 = vld [vmem:[%s0 + $0x2c] sm:$0xf]
  %v39 = vld [vmem:[%s0 + $0x30] sm:$0xf]
  %v40 = vld [vmem:[%s0 + $0x34] sm:$0xf]
  %v41 = vld [vmem:[%s0 + $0x38] sm:$0xf]
  %v42 = vld [vmem:[%s0 + $0x3c] sm:$0xf]
  %v43 = vld [vmem:[%s0 + $0x40] sm:$0xf]
  %v44 = vld [vmem:[%s0 + $0x44] sm:$0xf]
  %v45 = vld [vmem:[%s0 + $0x48] sm:$0xf]
  %v46 = vld [vmem:[%s0 + $0x4c] sm:$0xf]
  %v47 = vld [vmem:[%s0 + $0x50] sm:$0xf]
  %v48 = vld [vmem:[%s0 + $0x54] sm:$0xf]
  %v49 = vld [vmem:[%s0 + $0x58] sm:$0xf]
  %v50 = vld [vmem:[%s0 + $0x5c] sm:$0xf]
  %v51 = vld [vmem:[%s0 + $0x60] sm:$0xf]
  %v52 = vld [vmem:[%s0 + $0x64] sm:$0xf]
  %v53 = vld [vmem:[%s0 + $0x68] sm:$0xf]
  %v54 = vld [vmem:[%s0 + $0x6c] sm:$0xf]
  %v55 = vld [vmem:[%s0 + $0x70] sm:$0xf]
  %v56 = vld [vmem:[%s0 + $0x74] sm:$0xf]
  %v57 = vld [vmem:[%s0 + $0x78] sm:$0xf]
  %v58 = vld [vmem:[%s0 + $0x7c] sm:$0xf]
  %v59 = vld [vmem:[%s0 + $0x80] sm:$0xf]
  %v60 = vld [vmem:[%s0 + $0x84] sm:$0xf]
  %v61 = vld [vmem:[%s0 + $0x88] sm:$0xf]
  %v62 = vld [vmem:[%s0 + $0x8c] sm:$0xf]
  %v63 = vld [vmem:[%s0 + $0x90] sm:$0xf]
  %v64 = vld [vmem:[%s0 + $0x94] sm:$0xf]
  %v65 = vld [vmem:[%s0 + $0x98] sm:$0xf]
  %v66 = vld [vmem:[%s0 + $0x9c] sm:$0xf]
  %v67 = vld [vmem:[%s0 + $0xa0] sm:$0xf]
  %v68 = vld [vmem:[%s0 + $0xa4] sm:$0xf]
  %v69 = vld [vmem:[%s0 + $0xa8] sm:$0xf]
  %v70 = vld [vmem:[%s0 + $0xac] sm:$0xf]
  %v71 = vld [vmem:[%s0 + $0xb0] sm:$0xf]
  %v72 = vld [vmem:[%s0 + $0xb4] sm:$0xf]
  %v73 = vld [vmem:[%s0 + $0xb8] sm:$0xf]
  %v74 = vld [vmem:[%s0 + $0xbc] sm:$0xf]
  %v75 = vld [vmem:[%s0 + $0xc0] sm:$0xf]
  %v76 = vld [vmem:[%s0 + $0xc4] sm:$0xf]
  %v77 = vld [vmem:[%s0 + $0xc8] sm:$0xf]
  %v78 = vld [vmem:[%s0 + $0xcc] sm:$0xf]
  %v79 = vld [vmem:[%s0 + $0xd0] sm:$0xf]
  %v80 = vld [vmem:[%s0 + $0xd4] sm:$0xf]
  %v81 = vld [vmem:[%s0 + $0xd8] sm:$0xf]
  %v82 = vld [vmem:[%s0 + $0xdc] sm:$0xf]
  %v83 = vld [vmem:[%s0 + $0xe0] sm:$0xf]
  %v84 = vld [vmem:[%s0 + $0xe4] sm:$0xf]
  %v85 = vld [vmem:[%s0 + $0xe8] sm:$0xf]
  %v86 = vld [vmem:[%s0 + $0xec] sm:$0xf]
  %v87 = vld [vmem:[%s0 + $0xf0] sm:$0xf]
  %v88 = vld [vmem:[%s0 + $0xf4] sm:$0xf]
  %v89 = vld [vmem:[%s0 + $0xf8] sm:$0xf]
  %v90 = vld [vmem:[%s0 + $0xfc] sm:$0xf]
  %v91 = vld [vmem:[%s3] sm:$0xf]
  %v92 = vld [vmem:[%s1] sm:$0xf]
  %v93 = vld [vmem:[%s1 + $0x4] sm:$0xf]
  %v94 = vld [vmem:[%s1 + $0x8] sm:$0xf]
  %v95 = vld [vmem:[%s1 + $0xc] sm:$0xf]
  %v96 = vld [vmem:[%s1 + $0x10] sm:$0xf]
  %v97 = vld [vmem:[%s1 + $0x14] sm:$0xf]
  %v98 = vld [vmem:[%s1 + $0x18] sm:$0xf]
  %v99 = vld [vmem:[%s1 + $0x1c] sm:$0xf]
  %v100 = vld [vmem:[%s1 + $0x20] sm:$0xf]
  %v101 = vld [vmem:[%s1 + $0x24] sm:$0xf]
  %v102 = vld [vmem:[%s1 + $0x28] sm:$0xf]
  %v103 = vld [vmem:[%s1 + $0x2c] sm:$0xf]
  %v104 = vld [vmem:[%s1 + $0x30] sm:$0xf]
  %v105 = vld [vmem:[%s1 + $0x34] sm:$0xf]
  %v106 = vld [vmem:[%s1 + $0x38] sm:$0xf]
  %v107 = vld [vmem:[%s1 + $0x3c] sm:$0xf]
  %v108 = vld [vmem:[%s1 + $0x40] sm:$0xf]
  %v109 = vld [vmem:[%s1 + $0x44] sm:$0xf]
  %v110 = vld [vmem:[%s1 + $0x48] sm:$0xf]
  %v111 = vld [vmem:[%s1 + $0x4c] sm:$0xf]
  %v112 = vld [vmem:[%s1 + $0x50] sm:$0xf]
  %v113 = vld [vmem:[%s1 + $0x54] sm:$0xf]
  %v114 = vld [vmem:[%s1 + $0x58] sm:$0xf]
  %v115 = vld [vmem:[%s1 + $0x5c] sm:$0xf]
  %v116 = vld [vmem:[%s1 + $0x60] sm:$0xf]
  %v117 = vld [vmem:[%s1 + $0x64] sm:$0xf]
  %v118 = vld [vmem:[%s1 + $0x68] sm:$0xf]
  %v119 = vld [vmem:[%s1 + $0x6c] sm:$0xf]
  %v120 = vld [vmem:[%s1 + $0x70] sm:$0xf]
  %v121 = vld [vmem:[%s1 + $0x74] sm:$0xf]
  %v122 = vld [vmem:[%s1 + $0x78] sm:$0xf]
  %v123 = vld [vmem:[%s1 + $0x7c] sm:$0xf]
  %v124 = vld [vmem:[%s1 + $0x80] sm:$0xf]
  %v125 = vld [vmem:[%s1 + $0x84] sm:$0xf]
  %v126 = vld [vmem:[%s1 + $0x88] sm:$0xf]
  %v127 = vld [vmem:[%s1 + $0x8c] sm:$0xf]
  %v128 = vld [vmem:[%s1 + $0x90] sm:$0xf]
  %v129 = vld [vmem:[%s1 + $0x94] sm:$0xf]
  %v130 = vld [vmem:[%s1 + $0x98] sm:$0xf]
  %v131 = vld [vmem:[%s1 + $0x9c] sm:$0xf]
  %v132 = vld [vmem:[%s1 + $0xa0] sm:$0xf]
  %v133 = vld [vmem:[%s1 + $0xa4] sm:$0xf]
  %v134 = vld [vmem:[%s1 + $0xa8] sm:$0xf]
  %v135 = vld [vmem:[%s1 + $0xac] sm:$0xf]
  %v136 = vld [vmem:[%s1 + $0xb0] sm:$0xf]
  %v137 = vld [vmem:[%s1 + $0xb4] sm:$0xf]
  %v138 = vld [vmem:[%s1 + $0xb8] sm:$0xf]
  %v139 = vld [vmem:[%s1 + $0xbc] sm:$0xf]
  %v140 = vld [vmem:[%s1 + $0xc0] sm:$0xf]
  %v141 = vld [vmem:[%s1 + $0xc4] sm:$0xf]
  %v142 = vld [vmem:[%s1 + $0xc8] sm:$0xf]
  %v143 = vld [vmem:[%s1 + $0xcc] sm:$0xf]
  %v144 = vld [vmem:[%s1 + $0xd0] sm:$0xf]
  %v145 = vld [vmem:[%s1 + $0xd4] sm:$0xf]
  %v146 = vld [vmem:[%s1 + $0xd8] sm:$0xf]
  %v147 = vld [vmem:[%s1 + $0xdc] sm:$0xf]
  %v148 = vld [vmem:[%s1 + $0xe0] sm:$0xf]
  %v149 = vld [vmem:[%s1 + $0xe4] sm:$0xf]
  %v150 = vld [vmem:[%s1 + $0xe8] sm:$0xf]
  %v151 = vld [vmem:[%s1 + $0xec] sm:$0xf]
  %v152 = vld [vmem:[%s1 + $0xf0] sm:$0xf]
  %v153 = vld [vmem:[%s1 + $0xf4] sm:$0xf]
  %v154 = vld [vmem:[%s1 + $0xf8] sm:$0xf]
  %v155 = vld [vmem:[%s1 + $0xfc] sm:$0xf]
  %v156 = vld [vmem:[%s4] sm:$0xf]
  %v221 = vunpack.c.l.b16 %v92
  %v222 = vunpack.c.l.b16 %v93
  %v223 = vunpack.c.l.b16 %v94
  %v224 = vunpack.c.l.b16 %v95
  %v225 = vunpack.c.l.b16 %v96
  %v226 = vunpack.c.l.b16 %v97
  %v227 = vunpack.c.l.b16 %v98
  %v228 = vunpack.c.l.b16 %v99
  %v229 = vunpack.c.l.b16 %v100
  %v230 = vunpack.c.l.b16 %v101
  %v231 = vunpack.c.l.b16 %v102
  %v232 = vunpack.c.l.b16 %v103
  %v233 = vunpack.c.l.b16 %v104
  %v234 = vunpack.c.l.b16 %v105
  %v235 = vunpack.c.l.b16 %v106
  %v236 = vunpack.c.l.b16 %v107
  %v237 = vunpack.c.l.b16 %v108
  %v238 = vunpack.c.l.b16 %v109
  %v239 = vunpack.c.l.b16 %v110
  %v240 = vunpack.c.l.b16 %v111
  %v241 = vunpack.c.l.b16 %v112
  %v242 = vunpack.c.l.b16 %v113
  %v243 = vunpack.c.l.b16 %v114
  %v244 = vunpack.c.l.b16 %v115
  %v245 = vunpack.c.l.b16 %v116
  %v246 = vunpack.c.l.b16 %v117
  %v247 = vunpack.c.l.b16 %v118
  %v248 = vunpack.c.l.b16 %v119
  %v249 = vunpack.c.l.b16 %v120
  %v250 = vunpack.c.l.b16 %v121
  %v251 = vunpack.c.l.b16 %v122
  %v252 = vunpack.c.l.b16 %v123
  %v253 = vunpack.c.l.b16 %v124
  %v254 = vunpack.c.l.b16 %v125
  %v255 = vunpack.c.l.b16 %v126
  %v256 = vunpack.c.l.b16 %v127
  %v257 = vunpack.c.l.b16 %v128
  %v258 = vunpack.c.l.b16 %v129
  %v259 = vunpack.c.l.b16 %v130
  %v260 = vunpack.c.l.b16 %v131
  %v261 = vunpack.c.l.b16 %v132
  %v262 = vunpack.c.l.b16 %v133
  %v263 = vunpack.c.l.b16 %v134
  %v264 = vunpack.c.l.b16 %v135
  %v265 = vunpack.c.l.b16 %v136
  %v266 = vunpack.c.l.b16 %v137
  %v267 = vunpack.c.l.b16 %v138
  %v268 = vunpack.c.l.b16 %v139
  %v269 = vunpack.c.l.b16 %v140
  %v270 = vunpack.c.l.b16 %v141
  %v271 = vunpack.c.l.b16 %v142
  %v272 = vunpack.c.l.b16 %v143
  %v273 = vunpack.c.l.b16 %v144
  %v274 = vunpack.c.l.b16 %v145
  %v275 = vunpack.c.l.b16 %v146
  %v276 = vunpack.c.l.b16 %v147
  %v277 = vunpack.c.l.b16 %v148
  %v278 = vunpack.c.l.b16 %v149
  %v279 = vunpack.c.l.b16 %v150
  %v280 = vunpack.c.l.b16 %v151
  %v281 = vunpack.c.l.b16 %v152
  %v282 = vunpack.c.l.b16 %v153
  %v283 = vunpack.c.l.b16 %v154
  %v284 = vunpack.c.l.b16 %v155
  %v285 = vpack.c.b16 %v222, %v221
  %v286 = vpack.c.b16 %v224, %v223
  %v287 = vpack.c.b16 %v226, %v225
  %v288 = vpack.c.b16 %v228, %v227
  %v289 = vpack.c.b16 %v230, %v229
  %v290 = vpack.c.b16 %v232, %v231
  %v291 = vpack.c.b16 %v234, %v233
  %v292 = vpack.c.b16 %v236, %v235
  %v293 = vpack.c.b16 %v238, %v237
  %v294 = vpack.c.b16 %v240, %v239
  %v295 = vpack.c.b16 %v242, %v241
  %v296 = vpack.c.b16 %v244, %v243
  %v297 = vpack.c.b16 %v246, %v245
  %v298 = vpack.c.b16 %v248, %v247
  %v299 = vpack.c.b16 %v250, %v249
  %v300 = vpack.c.b16 %v252, %v251
  %v301 = vpack.c.b16 %v254, %v253
  %v302 = vpack.c.b16 %v256, %v255
  %v303 = vpack.c.b16 %v258, %v257
  %v304 = vpack.c.b16 %v260, %v259
  %v305 = vpack.c.b16 %v262, %v261
  %v306 = vpack.c.b16 %v264, %v263
  %v307 = vpack.c.b16 %v266, %v265
  %v308 = vpack.c.b16 %v268, %v267
  %v309 = vpack.c.b16 %v270, %v269
  %v310 = vpack.c.b16 %v272, %v271
  %v311 = vpack.c.b16 %v274, %v273
  %v312 = vpack.c.b16 %v276, %v275
  %v313 = vpack.c.b16 %v278, %v277
  %v314 = vpack.c.b16 %v280, %v279
  %v315 = vpack.c.b16 %v282, %v281
  %v316 = vpack.c.b16 %v284, %v283
  %vm317 = vcmask 64512
  %v319 = vsel %vm317, %v285, 0
  %v322 = vsel %vm317, %v286, 0
  %v325 = vsel %vm317, %v287, 0
  %v328 = vsel %vm317, %v288, 0
  %v331 = vsel %vm317, %v289, 0
  %v334 = vsel %vm317, %v290, 0
  %v337 = vsel %vm317, %v291, 0
  %v340 = vsel %vm317, %v292, 0
  %v343 = vsel %vm317, %v293, 0
  %v346 = vsel %vm317, %v294, 0
  %v349 = vsel %vm317, %v295, 0
  %v352 = vsel %vm317, %v296, 0
  %v355 = vsel %vm317, %v297, 0
  %v358 = vsel %vm317, %v298, 0
  %v361 = vsel %vm317, %v299, 0
  %v364 = vsel %vm317, %v300, 0
  %v367 = vsel %vm317, %v301, 0
  %v370 = vsel %vm317, %v302, 0
  %v373 = vsel %vm317, %v303, 0
  %v376 = vsel %vm317, %v304, 0
  %v379 = vsel %vm317, %v305, 0
  %v382 = vsel %vm317, %v306, 0
  %v385 = vsel %vm317, %v307, 0
  %v388 = vsel %vm317, %v308, 0
  %v391 = vsel %vm317, %v309, 0
  %v394 = vsel %vm317, %v310, 0
  %v397 = vsel %vm317, %v311, 0
  %v400 = vsel %vm317, %v312, 0
  %v403 = vsel %vm317, %v313, 0
  %v406 = vsel %vm317, %v314, 0
  %v409 = vsel %vm317, %v315, 0
  %v412 = vsel %vm317, %v316, 0
  %vm414 = vcmask 1043456
  %v416 = vsel %vm414, %v156, 0
  %418 = vmatpush.bf16.msra.mxu0 0
  %419 = vmatpush.bf16.msra.mxu0 0
  %420 = vmatpush.bf16.msra.mxu0 0
  %421 = vmatpush.bf16.msra.mxu0 0
  %422 = vmatpush.bf16.msra.mxu0 0
  %423 = vmatpush.bf16.msra.mxu0 0
  %424 = vmatpush.bf16.msra.mxu0 0
  %425 = vmatpush.bf16.msra.mxu0 %v416
  %426 = vmatmul.bf16.gmra.mxu0 %v319
  %v427 = vpop.f32.mrf.mxu0
  %v428 = vadd.f32 0.0, %v427
  %v429 = vpop.f32.mrf.mxu0
  %v430 = vadd.f32 0.0, %v429
  %431 = vmatmul.bf16.gmra.mxu0 %v322
  %v432 = vpop.f32.mrf.mxu0
  %v433 = vadd.f32 0.0, %v432
  %v434 = vpop.f32.mrf.mxu0
  %v435 = vadd.f32 0.0, %v434
  %436 = vmatmul.bf16.gmra.mxu0 %v325
  %v437 = vpop.f32.mrf.mxu0
  %v438 = vadd.f32 0.0, %v437
  %v439 = vpop.f32.mrf.mxu0
  %v440 = vadd.f32 0.0, %v439
  %441 = vmatmul.bf16.gmra.mxu0 %v328
  %v442 = vpop.f32.mrf.mxu0
  %v443 = vadd.f32 0.0, %v442
  %v444 = vpop.f32.mrf.mxu0
  %v445 = vadd.f32 0.0, %v444
  %446 = vmatmul.bf16.gmra.mxu0 %v331
  %v447 = vpop.f32.mrf.mxu0
  %v448 = vadd.f32 0.0, %v447
  %v449 = vpop.f32.mrf.mxu0
  %v450 = vadd.f32 0.0, %v449
  %451 = vmatmul.bf16.gmra.mxu0 %v334
  %v452 = vpop.f32.mrf.mxu0
  %v453 = vadd.f32 0.0, %v452
  %v454 = vpop.f32.mrf.mxu0
  %v455 = vadd.f32 0.0, %v454
  %456 = vmatmul.bf16.gmra.mxu0 %v337
  %v457 = vpop.f32.mrf.mxu0
  %v458 = vadd.f32 0.0, %v457
  %v459 = vpop.f32.mrf.mxu0
  %v460 = vadd.f32 0.0, %v459
  %461 = vmatmul.bf16.gmra.mxu0 %v340
  %v462 = vpop.f32.mrf.mxu0
  %v463 = vadd.f32 0.0, %v462
  %v464 = vpop.f32.mrf.mxu0
  %v465 = vadd.f32 0.0, %v464
  %466 = vmatmul.bf16.gmra.mxu0 %v343
  %v467 = vpop.f32.mrf.mxu0
  %v468 = vadd.f32 0.0, %v467
  %v469 = vpop.f32.mrf.mxu0
  %v470 = vadd.f32 0.0, %v469
  %471 = vmatmul.bf16.gmra.mxu0 %v346
  %v472 = vpop.f32.mrf.mxu0
  %v473 = vadd.f32 0.0, %v472
  %v474 = vpop.f32.mrf.mxu0
  %v475 = vadd.f32 0.0, %v474
  %476 = vmatmul.bf16.gmra.mxu0 %v349
  %v477 = vpop.f32.mrf.mxu0
  %v478 = vadd.f32 0.0, %v477
  %v479 = vpop.f32.mrf.mxu0
  %v480 = vadd.f32 0.0, %v479
  %481 = vmatmul.bf16.gmra.mxu0 %v352
  %v482 = vpop.f32.mrf.mxu0
  %v483 = vadd.f32 0.0, %v482
  %v484 = vpop.f32.mrf.mxu0
  %v485 = vadd.f32 0.0, %v484
  %486 = vmatmul.bf16.gmra.mxu0 %v355
  %v487 = vpop.f32.mrf.mxu0
  %v488 = vadd.f32 0.0, %v487
  %v489 = vpop.f32.mrf.mxu0
  %v490 = vadd.f32 0.0, %v489
  %491 = vmatmul.bf16.gmra.mxu0 %v358
  %v492 = vpop.f32.mrf.mxu0
  %v493 = vadd.f32 0.0, %v492
  %v494 = vpop.f32.mrf.mxu0
  %v495 = vadd.f32 0.0, %v494
  %496 = vmatmul.bf16.gmra.mxu0 %v361
  %v497 = vpop.f32.mrf.mxu0
  %v498 = vadd.f32 0.0, %v497
  %v499 = vpop.f32.mrf.mxu0
  %v500 = vadd.f32 0.0, %v499
  %501 = vmatmul.bf16.gmra.mxu0 %v364
  %v502 = vpop.f32.mrf.mxu0
  %v503 = vadd.f32 0.0, %v502
  %v504 = vpop.f32.mrf.mxu0
  %v505 = vadd.f32 0.0, %v504
  %506 = vmatmul.bf16.gmra.mxu0 %v367
  %v507 = vpop.f32.mrf.mxu0
  %v508 = vadd.f32 0.0, %v507
  %v509 = vpop.f32.mrf.mxu0
  %v510 = vadd.f32 0.0, %v509
  %511 = vmatmul.bf16.gmra.mxu0 %v370
  %v512 = vpop.f32.mrf.mxu0
  %v513 = vadd.f32 0.0, %v512
  %v514 = vpop.f32.mrf.mxu0
  %v515 = vadd.f32 0.0, %v514
  %516 = vmatmul.bf16.gmra.mxu0 %v373
  %v517 = vpop.f32.mrf.mxu0
  %v518 = vadd.f32 0.0, %v517
  %v519 = vpop.f32.mrf.mxu0
  %v520 = vadd.f32 0.0, %v519
  %521 = vmatmul.bf16.gmra.mxu0 %v376
  %v522 = vpop.f32.mrf.mxu0
  %v523 = vadd.f32 0.0, %v522
  %v524 = vpop.f32.mrf.mxu0
  %v525 = vadd.f32 0.0, %v524
  %526 = vmatmul.bf16.gmra.mxu0 %v379
  %v527 = vpop.f32.mrf.mxu0
  %v528 = vadd.f32 0.0, %v527
  %v529 = vpop.f32.mrf.mxu0
  %v530 = vadd.f32 0.0, %v529
  %531 = vmatmul.bf16.gmra.mxu0 %v382
  %v532 = vpop.f32.mrf.mxu0
  %v533 = vadd.f32 0.0, %v532
  %v534 = vpop.f32.mrf.mxu0
  %v535 = vadd.f32 0.0, %v534
  %536 = vmatmul.bf16.gmra.mxu0 %v385
  %v537 = vpop.f32.mrf.mxu0
  %v538 = vadd.f32 0.0, %v537
  %v539 = vpop.f32.mrf.mxu0
  %v540 = vadd.f32 0.0, %v539
  %541 = vmatmul.bf16.gmra.mxu0 %v388
  %v542 = vpop.f32.mrf.mxu0
  %v543 = vadd.f32 0.0, %v542
  %v544 = vpop.f32.mrf.mxu0
  %v545 = vadd.f32 0.0, %v544
  %546 = vmatmul.bf16.gmra.mxu0 %v391
  %v547 = vpop.f32.mrf.mxu0
  %v548 = vadd.f32 0.0, %v547
  %v549 = vpop.f32.mrf.mxu0
  %v550 = vadd.f32 0.0, %v549
  %551 = vmatmul.bf16.gmra.mxu0 %v394
  %v552 = vpop.f32.mrf.mxu0
  %v553 = vadd.f32 0.0, %v552
  %v554 = vpop.f32.mrf.mxu0
  %v555 = vadd.f32 0.0, %v554
  %556 = vmatmul.bf16.gmra.mxu0 %v397
  %v557 = vpop.f32.mrf.mxu0
  %v558 = vadd.f32 0.0, %v557
  %v559 = vpop.f32.mrf.mxu0
  %v560 = vadd.f32 0.0, %v559
  %561 = vmatmul.bf16.gmra.mxu0 %v400
  %v562 = vpop.f32.mrf.mxu0
  %v563 = vadd.f32 0.0, %v562
  %v564 = vpop.f32.mrf.mxu0
  %v565 = vadd.f32 0.0, %v564
  %566 = vmatmul.bf16.gmra.mxu0 %v403
  %v567 = vpop.f32.mrf.mxu0
  %v568 = vadd.f32 0.0, %v567
  %v569 = vpop.f32.mrf.mxu0
  %v570 = vadd.f32 0.0, %v569
  %571 = vmatmul.bf16.gmra.mxu0 %v406
  %v572 = vpop.f32.mrf.mxu0
  %v573 = vadd.f32 0.0, %v572
  %v574 = vpop.f32.mrf.mxu0
  %v575 = vadd.f32 0.0, %v574
  %576 = vmatmul.bf16.gmra.mxu0 %v409
  %v577 = vpop.f32.mrf.mxu0
  %v578 = vadd.f32 0.0, %v577
  %v579 = vpop.f32.mrf.mxu0
  %v580 = vadd.f32 0.0, %v579
  %581 = vmatmul.bf16.gmra.mxu0 %v412
  %v582 = vpop.f32.mrf.mxu0
  %v583 = vadd.f32 0.0, %v582
  %v584 = vpop.f32.mrf.mxu0
  %v585 = vadd.f32 0.0, %v584
  %586 = vdwg.mxu0
  %v651 = vunpack.c.l.b16 %v27
  %v652 = vunpack.c.l.b16 %v28
  %v653 = vunpack.c.l.b16 %v29
  %v654 = vunpack.c.l.b16 %v30
  %v655 = vunpack.c.l.b16 %v31
  %v656 = vunpack.c.l.b16 %v32
  %v657 = vunpack.c.l.b16 %v33
  %v658 = vunpack.c.l.b16 %v34
  %v659 = vunpack.c.l.b16 %v35
  %v660 = vunpack.c.l.b16 %v36
  %v661 = vunpack.c.l.b16 %v37
  %v662 = vunpack.c.l.b16 %v38
  %v663 = vunpack.c.l.b16 %v39
  %v664 = vunpack.c.l.b16 %v40
  %v665 = vunpack.c.l.b16 %v41
  %v666 = vunpack.c.l.b16 %v42
  %v667 = vunpack.c.l.b16 %v43
  %v668 = vunpack.c.l.b16 %v44
  %v669 = vunpack.c.l.b16 %v45
  %v670 = vunpack.c.l.b16 %v46
  %v671 = vunpack.c.l.b16 %v47
  %v672 = vunpack.c.l.b16 %v48
  %v673 = vunpack.c.l.b16 %v49
  %v674 = vunpack.c.l.b16 %v50
  %v675 = vunpack.c.l.b16 %v51
  %v676 = vunpack.c.l.b16 %v52
  %v677 = vunpack.c.l.b16 %v53
  %v678 = vunpack.c.l.b16 %v54
  %v679 = vunpack.c.l.b16 %v55
  %v680 = vunpack.c.l.b16 %v56
  %v681 = vunpack.c.l.b16 %v57
  %v682 = vunpack.c.l.b16 %v58
  %v683 = vunpack.c.l.b16 %v59
  %v684 = vunpack.c.l.b16 %v60
  %v685 = vunpack.c.l.b16 %v61
  %v686 = vunpack.c.l.b16 %v62
  %v687 = vunpack.c.l.b16 %v63
  %v688 = vunpack.c.l.b16 %v64
  %v689 = vunpack.c.l.b16 %v65
  %v690 = vunpack.c.l.b16 %v66
  %v691 = vunpack.c.l.b16 %v67
  %v692 = vunpack.c.l.b16 %v68
  %v693 = vunpack.c.l.b16 %v69
  %v694 = vunpack.c.l.b16 %v70
  %v695 = vunpack.c.l.b16 %v71
  %v696 = vunpack.c.l.b16 %v72
  %v697 = vunpack.c.l.b16 %v73
  %v698 = vunpack.c.l.b16 %v74
  %v699 = vunpack.c.l.b16 %v75
  %v700 = vunpack.c.l.b16 %v76
  %v701 = vunpack.c.l.b16 %v77
  %v702 = vunpack.c.l.b16 %v78
  %v703 = vunpack.c.l.b16 %v79
  %v704 = vunpack.c.l.b16 %v80
  %v705 = vunpack.c.l.b16 %v81
  %v706 = vunpack.c.l.b16 %v82
  %v707 = vunpack.c.l.b16 %v83
  %v708 = vunpack.c.l.b16 %v84
  %v709 = vunpack.c.l.b16 %v85
  %v710 = vunpack.c.l.b16 %v86
  %v711 = vunpack.c.l.b16 %v87
  %v712 = vunpack.c.l.b16 %v88
  %v713 = vunpack.c.l.b16 %v89
  %v714 = vunpack.c.l.b16 %v90
  %v715 = vpack.c.b16 %v652, %v651
  %v716 = vpack.c.b16 %v654, %v653
  %v717 = vpack.c.b16 %v656, %v655
  %v718 = vpack.c.b16 %v658, %v657
  %v719 = vpack.c.b16 %v660, %v659
  %v720 = vpack.c.b16 %v662, %v661
  %v721 = vpack.c.b16 %v664, %v663
  %v722 = vpack.c.b16 %v666, %v665
  %v723 = vpack.c.b16 %v668, %v667
  %v724 = vpack.c.b16 %v670, %v669
  %v725 = vpack.c.b16 %v672, %v671
  %v726 = vpack.c.b16 %v674, %v673
  %v727 = vpack.c.b16 %v676, %v675
  %v728 = vpack.c.b16 %v678, %v677
  %v729 = vpack.c.b16 %v680, %v679
  %v730 = vpack.c.b16 %v682, %v681
  %v731 = vpack.c.b16 %v684, %v683
  %v732 = vpack.c.b16 %v686, %v685
  %v733 = vpack.c.b16 %v688, %v687
  %v734 = vpack.c.b16 %v690, %v689
  %v735 = vpack.c.b16 %v692, %v691
  %v736 = vpack.c.b16 %v694, %v693
  %v737 = vpack.c.b16 %v696, %v695
  %v738 = vpack.c.b16 %v698, %v697
  %v739 = vpack.c.b16 %v700, %v699
  %v740 = vpack.c.b16 %v702, %v701
  %v741 = vpack.c.b16 %v704, %v703
  %v742 = vpack.c.b16 %v706, %v705
  %v743 = vpack.c.b16 %v708, %v707
  %v744 = vpack.c.b16 %v710, %v709
  %v745 = vpack.c.b16 %v712, %v711
  %v746 = vpack.c.b16 %v714, %v713
  %v748 = vsel %vm317, %v715, 0
  %v751 = vsel %vm317, %v716, 0
  %v754 = vsel %vm317, %v717, 0
  %v757 = vsel %vm317, %v718, 0
  %v760 = vsel %vm317, %v719, 0
  %v763 = vsel %vm317, %v720, 0
  %v766 = vsel %vm317, %v721, 0
  %v769 = vsel %vm317, %v722, 0
  %v772 = vsel %vm317, %v723, 0
  %v775 = vsel %vm317, %v724, 0
  %v778 = vsel %vm317, %v725, 0
  %v781 = vsel %vm317, %v726, 0
  %v784 = vsel %vm317, %v727, 0
  %v787 = vsel %vm317, %v728, 0
  %v790 = vsel %vm317, %v729, 0
  %v793 = vsel %vm317, %v730, 0
  %v796 = vsel %vm317, %v731, 0
  %v799 = vsel %vm317, %v732, 0
  %v802 = vsel %vm317, %v733, 0
  %v805 = vsel %vm317, %v734, 0
  %v808 = vsel %vm317, %v735, 0
  %v811 = vsel %vm317, %v736, 0
  %v814 = vsel %vm317, %v737, 0
  %v817 = vsel %vm317, %v738, 0
  %v820 = vsel %vm317, %v739, 0
  %v823 = vsel %vm317, %v740, 0
  %v826 = vsel %vm317, %v741, 0
  %v829 = vsel %vm317, %v742, 0
  %v832 = vsel %vm317, %v743, 0
  %v835 = vsel %vm317, %v744, 0
  %v838 = vsel %vm317, %v745, 0
  %v841 = vsel %vm317, %v746, 0
  %v844 = vsel %vm414, %v91, 0
  %846 = vmatpush.bf16.msra.mxu0 0
  %847 = vmatpush.bf16.msra.mxu0 0
  %848 = vmatpush.bf16.msra.mxu0 0
  %849 = vmatpush.bf16.msra.mxu0 0
  %850 = vmatpush.bf16.msra.mxu0 0
  %851 = vmatpush.bf16.msra.mxu0 0
  %852 = vmatpush.bf16.msra.mxu0 0
  %853 = vmatpush.bf16.msra.mxu0 %v844
  %854 = vmatmul.bf16.gmra.mxu0 %v748
  %v855 = vpop.f32.mrf.mxu0
  %v856 = vadd.f32 %v428, %v855
  %v857 = vpop.f32.mrf.mxu0
  %v858 = vadd.f32 %v430, %v857
  %859 = vmatmul.bf16.gmra.mxu0 %v751
  %v860 = vpop.f32.mrf.mxu0
  %v861 = vadd.f32 %v433, %v860
  %v862 = vpop.f32.mrf.mxu0
  %v863 = vadd.f32 %v435, %v862
  %864 = vmatmul.bf16.gmra.mxu0 %v754
  %v865 = vpop.f32.mrf.mxu0
  %v866 = vadd.f32 %v438, %v865
  %v867 = vpop.f32.mrf.mxu0
  %v868 = vadd.f32 %v440, %v867
  %869 = vmatmul.bf16.gmra.mxu0 %v757
  %v870 = vpop.f32.mrf.mxu0
  %v871 = vadd.f32 %v443, %v870
  %v872 = vpop.f32.mrf.mxu0
  %v873 = vadd.f32 %v445, %v872
  %874 = vmatmul.bf16.gmra.mxu0 %v760
  %v875 = vpop.f32.mrf.mxu0
  %v876 = vadd.f32 %v448, %v875
  %v877 = vpop.f32.mrf.mxu0
  %v878 = vadd.f32 %v450, %v877
  %879 = vmatmul.bf16.gmra.mxu0 %v763
  %v880 = vpop.f32.mrf.mxu0
  %v881 = vadd.f32 %v453, %v880
  %v882 = vpop.f32.mrf.mxu0
  %v883 = vadd.f32 %v455, %v882
  %884 = vmatmul.bf16.gmra.mxu0 %v766
  %v885 = vpop.f32.mrf.mxu0
  %v886 = vadd.f32 %v458, %v885
  %v887 = vpop.f32.mrf.mxu0
  %v888 = vadd.f32 %v460, %v887
  %889 = vmatmul.bf16.gmra.mxu0 %v769
  %v890 = vpop.f32.mrf.mxu0
  %v891 = vadd.f32 %v463, %v890
  %v892 = vpop.f32.mrf.mxu0
  %v893 = vadd.f32 %v465, %v892
  %894 = vmatmul.bf16.gmra.mxu0 %v772
  %v895 = vpop.f32.mrf.mxu0
  %v896 = vadd.f32 %v468, %v895
  %v897 = vpop.f32.mrf.mxu0
  %v898 = vadd.f32 %v470, %v897
  %899 = vmatmul.bf16.gmra.mxu0 %v775
  %v900 = vpop.f32.mrf.mxu0
  %v901 = vadd.f32 %v473, %v900
  %v902 = vpop.f32.mrf.mxu0
  %v903 = vadd.f32 %v475, %v902
  %904 = vmatmul.bf16.gmra.mxu0 %v778
  %v905 = vpop.f32.mrf.mxu0
  %v906 = vadd.f32 %v478, %v905
  %v907 = vpop.f32.mrf.mxu0
  %v908 = vadd.f32 %v480, %v907
  %909 = vmatmul.bf16.gmra.mxu0 %v781
  %v910 = vpop.f32.mrf.mxu0
  %v911 = vadd.f32 %v483, %v910
  %v912 = vpop.f32.mrf.mxu0
  %v913 = vadd.f32 %v485, %v912
  %914 = vmatmul.bf16.gmra.mxu0 %v784
  %v915 = vpop.f32.mrf.mxu0
  %v916 = vadd.f32 %v488, %v915
  %v917 = vpop.f32.mrf.mxu0
  %v918 = vadd.f32 %v490, %v917
  %919 = vmatmul.bf16.gmra.mxu0 %v787
  %v920 = vpop.f32.mrf.mxu0
  %v921 = vadd.f32 %v493, %v920
  %v922 = vpop.f32.mrf.mxu0
  %v923 = vadd.f32 %v495, %v922
  %924 = vmatmul.bf16.gmra.mxu0 %v790
  %v925 = vpop.f32.mrf.mxu0
  %v926 = vadd.f32 %v498, %v925
  %v927 = vpop.f32.mrf.mxu0
  %v928 = vadd.f32 %v500, %v927
  %929 = vmatmul.bf16.gmra.mxu0 %v793
  %v930 = vpop.f32.mrf.mxu0
  %v931 = vadd.f32 %v503, %v930
  %v932 = vpop.f32.mrf.mxu0
  %v933 = vadd.f32 %v505, %v932
  %934 = vmatmul.bf16.gmra.mxu0 %v796
  %v935 = vpop.f32.mrf.mxu0
  %v936 = vadd.f32 %v508, %v935
  %v937 = vpop.f32.mrf.mxu0
  %v938 = vadd.f32 %v510, %v937
  %939 = vmatmul.bf16.gmra.mxu0 %v799
  %v940 = vpop.f32.mrf.mxu0
  %v941 = vadd.f32 %v513, %v940
  %v942 = vpop.f32.mrf.mxu0
  %v943 = vadd.f32 %v515, %v942
  %944 = vmatmul.bf16.gmra.mxu0 %v802
  %v945 = vpop.f32.mrf.mxu0
  %v946 = vadd.f32 %v518, %v945
  %v947 = vpop.f32.mrf.mxu0
  %v948 = vadd.f32 %v520, %v947
  %949 = vmatmul.bf16.gmra.mxu0 %v805
  %v950 = vpop.f32.mrf.mxu0
  %v951 = vadd.f32 %v523, %v950
  %v952 = vpop.f32.mrf.mxu0
  %v953 = vadd.f32 %v525, %v952
  %954 = vmatmul.bf16.gmra.mxu0 %v808
  %v955 = vpop.f32.mrf.mxu0
  %v956 = vadd.f32 %v528, %v955
  %v957 = vpop.f32.mrf.mxu0
  %v958 = vadd.f32 %v530, %v957
  %959 = vmatmul.bf16.gmra.mxu0 %v811
  %v960 = vpop.f32.mrf.mxu0
  %v961 = vadd.f32 %v533, %v960
  %v962 = vpop.f32.mrf.mxu0
  %v963 = vadd.f32 %v535, %v962
  %964 = vmatmul.bf16.gmra.mxu0 %v814
  %v965 = vpop.f32.mrf.mxu0
  %v966 = vadd.f32 %v538, %v965
  %v967 = vpop.f32.mrf.mxu0
  %v968 = vadd.f32 %v540, %v967
  %969 = vmatmul.bf16.gmra.mxu0 %v817
  %v970 = vpop.f32.mrf.mxu0
  %v971 = vadd.f32 %v543, %v970
  %v972 = vpop.f32.mrf.mxu0
  %v973 = vadd.f32 %v545, %v972
  %974 = vmatmul.bf16.gmra.mxu0 %v820
  %v975 = vpop.f32.mrf.mxu0
  %v976 = vadd.f32 %v548, %v975
  %v977 = vpop.f32.mrf.mxu0
  %v978 = vadd.f32 %v550, %v977
  %979 = vmatmul.bf16.gmra.mxu0 %v823
  %v980 = vpop.f32.mrf.mxu0
  %v981 = vadd.f32 %v553, %v980
  %v982 = vpop.f32.mrf.mxu0
  %v983 = vadd.f32 %v555, %v982
  %984 = vmatmul.bf16.gmra.mxu0 %v826
  %v985 = vpop.f32.mrf.mxu0
  %v986 = vadd.f32 %v558, %v985
  %v987 = vpop.f32.mrf.mxu0
  %v988 = vadd.f32 %v560, %v987
  %989 = vmatmul.bf16.gmra.mxu0 %v829
  %v990 = vpop.f32.mrf.mxu0
  %v991 = vadd.f32 %v563, %v990
  %v992 = vpop.f32.mrf.mxu0
  %v993 = vadd.f32 %v565, %v992
  %994 = vmatmul.bf16.gmra.mxu0 %v832
  %v995 = vpop.f32.mrf.mxu0
  %v996 = vadd.f32 %v568, %v995
  %v997 = vpop.f32.mrf.mxu0
  %v998 = vadd.f32 %v570, %v997
  %999 = vmatmul.bf16.gmra.mxu0 %v835
  %v1000 = vpop.f32.mrf.mxu0
  %v1001 = vadd.f32 %v573, %v1000
  %v1002 = vpop.f32.mrf.mxu0
  %v1003 = vadd.f32 %v575, %v1002
  %1004 = vmatmul.bf16.gmra.mxu0 %v838
  %v1005 = vpop.f32.mrf.mxu0
  %v1006 = vadd.f32 %v578, %v1005
  %v1007 = vpop.f32.mrf.mxu0
  %v1008 = vadd.f32 %v580, %v1007
  %1009 = vmatmul.bf16.gmra.mxu0 %v841
  %v1010 = vpop.f32.mrf.mxu0
  %v1011 = vadd.f32 %v583, %v1010
  %v1012 = vpop.f32.mrf.mxu0
  %v1013 = vadd.f32 %v585, %v1012
  %1014 = vdwg.mxu0
  %v1015 = vld [vmem:[%s2] sm:$0xf]
  %v1016 = vld [vmem:[%s2 + $0x4] sm:$0xf]
  %v1017 = vld [vmem:[%s2 + $0x8] sm:$0xf]
  %v1018 = vld [vmem:[%s2 + $0xc] sm:$0xf]
  %v1019 = vld [vmem:[%s2 + $0x10] sm:$0xf]
  %v1020 = vld [vmem:[%s2 + $0x14] sm:$0xf]
  %v1021 = vld [vmem:[%s2 + $0x18] sm:$0xf]
  %v1022 = vld [vmem:[%s2 + $0x1c] sm:$0xf]
  %v1023 = vld [vmem:[%s2 + $0x20] sm:$0xf]
  %v1024 = vld [vmem:[%s2 + $0x24] sm:$0xf]
  %v1025 = vld [vmem:[%s2 + $0x28] sm:$0xf]
  %v1026 = vld [vmem:[%s2 + $0x2c] sm:$0xf]
  %v1027 = vld [vmem:[%s2 + $0x30] sm:$0xf]
  %v1028 = vld [vmem:[%s2 + $0x34] sm:$0xf]
  %v1029 = vld [vmem:[%s2 + $0x38] sm:$0xf]
  %v1030 = vld [vmem:[%s2 + $0x3c] sm:$0xf]
  %v1031 = vld [vmem:[%s2 + $0x40] sm:$0xf]
  %v1032 = vld [vmem:[%s2 + $0x44] sm:$0xf]
  %v1033 = vld [vmem:[%s2 + $0x48] sm:$0xf]
  %v1034 = vld [vmem:[%s2 + $0x4c] sm:$0xf]
  %v1035 = vld [vmem:[%s2 + $0x50] sm:$0xf]
  %v1036 = vld [vmem:[%s2 + $0x54] sm:$0xf]
  %v1037 = vld [vmem:[%s2 + $0x58] sm:$0xf]
  %v1038 = vld [vmem:[%s2 + $0x5c] sm:$0xf]
  %v1039 = vld [vmem:[%s2 + $0x60] sm:$0xf]
  %v1040 = vld [vmem:[%s2 + $0x64] sm:$0xf]
  %v1041 = vld [vmem:[%s2 + $0x68] sm:$0xf]
  %v1042 = vld [vmem:[%s2 + $0x6c] sm:$0xf]
  %v1043 = vld [vmem:[%s2 + $0x70] sm:$0xf]
  %v1044 = vld [vmem:[%s2 + $0x74] sm:$0xf]
  %v1045 = vld [vmem:[%s2 + $0x78] sm:$0xf]
  %v1046 = vld [vmem:[%s2 + $0x7c] sm:$0xf]
  %v1047 = vld [vmem:[%s2 + $0x80] sm:$0xf]
  %v1048 = vld [vmem:[%s2 + $0x84] sm:$0xf]
  %v1049 = vld [vmem:[%s2 + $0x88] sm:$0xf]
  %v1050 = vld [vmem:[%s2 + $0x8c] sm:$0xf]
  %v1051 = vld [vmem:[%s2 + $0x90] sm:$0xf]
  %v1052 = vld [vmem:[%s2 + $0x94] sm:$0xf]
  %v1053 = vld [vmem:[%s2 + $0x98] sm:$0xf]
  %v1054 = vld [vmem:[%s2 + $0x9c] sm:$0xf]
  %v1055 = vld [vmem:[%s2 + $0xa0] sm:$0xf]
  %v1056 = vld [vmem:[%s2 + $0xa4] sm:$0xf]
  %v1057 = vld [vmem:[%s2 + $0xa8] sm:$0xf]
  %v1058 = vld [vmem:[%s2 + $0xac] sm:$0xf]
  %v1059 = vld [vmem:[%s2 + $0xb0] sm:$0xf]
  %v1060 = vld [vmem:[%s2 + $0xb4] sm:$0xf]
  %v1061 = vld [vmem:[%s2 + $0xb8] sm:$0xf]
  %v1062 = vld [vmem:[%s2 + $0xbc] sm:$0xf]
  %v1063 = vld [vmem:[%s2 + $0xc0] sm:$0xf]
  %v1064 = vld [vmem:[%s2 + $0xc4] sm:$0xf]
  %v1065 = vld [vmem:[%s2 + $0xc8] sm:$0xf]
  %v1066 = vld [vmem:[%s2 + $0xcc] sm:$0xf]
  %v1067 = vld [vmem:[%s2 + $0xd0] sm:$0xf]
  %v1068 = vld [vmem:[%s2 + $0xd4] sm:$0xf]
  %v1069 = vld [vmem:[%s2 + $0xd8] sm:$0xf]
  %v1070 = vld [vmem:[%s2 + $0xdc] sm:$0xf]
  %v1071 = vld [vmem:[%s2 + $0xe0] sm:$0xf]
  %v1072 = vld [vmem:[%s2 + $0xe4] sm:$0xf]
  %v1073 = vld [vmem:[%s2 + $0xe8] sm:$0xf]
  %v1074 = vld [vmem:[%s2 + $0xec] sm:$0xf]
  %v1075 = vld [vmem:[%s2 + $0xf0] sm:$0xf]
  %v1076 = vld [vmem:[%s2 + $0xf4] sm:$0xf]
  %v1077 = vld [vmem:[%s2 + $0xf8] sm:$0xf]
  %v1078 = vld [vmem:[%s2 + $0xfc] sm:$0xf]
  %v1079 = vld [vmem:[%s5] sm:$0xf]
  %v1144 = vunpack.c.l.b16 %v1015
  %v1145 = vunpack.c.l.b16 %v1016
  %v1146 = vunpack.c.l.b16 %v1017
  %v1147 = vunpack.c.l.b16 %v1018
  %v1148 = vunpack.c.l.b16 %v1019
  %v1149 = vunpack.c.l.b16 %v1020
  %v1150 = vunpack.c.l.b16 %v1021
  %v1151 = vunpack.c.l.b16 %v1022
  %v1152 = vunpack.c.l.b16 %v1023
  %v1153 = vunpack.c.l.b16 %v1024
  %v1154 = vunpack.c.l.b16 %v1025
  %v1155 = vunpack.c.l.b16 %v1026
  %v1156 = vunpack.c.l.b16 %v1027
  %v1157 = vunpack.c.l.b16 %v1028
  %v1158 = vunpack.c.l.b16 %v1029
  %v1159 = vunpack.c.l.b16 %v1030
  %v1160 = vunpack.c.l.b16 %v1031
  %v1161 = vunpack.c.l.b16 %v1032
  %v1162 = vunpack.c.l.b16 %v1033
  %v1163 = vunpack.c.l.b16 %v1034
  %v1164 = vunpack.c.l.b16 %v1035
  %v1165 = vunpack.c.l.b16 %v1036
  %v1166 = vunpack.c.l.b16 %v1037
  %v1167 = vunpack.c.l.b16 %v1038
  %v1168 = vunpack.c.l.b16 %v1039
  %v1169 = vunpack.c.l.b16 %v1040
  %v1170 = vunpack.c.l.b16 %v1041
  %v1171 = vunpack.c.l.b16 %v1042
  %v1172 = vunpack.c.l.b16 %v1043
  %v1173 = vunpack.c.l.b16 %v1044
  %v1174 = vunpack.c.l.b16 %v1045
  %v1175 = vunpack.c.l.b16 %v1046
  %v1176 = vunpack.c.l.b16 %v1047
  %v1177 = vunpack.c.l.b16 %v1048
  %v1178 = vunpack.c.l.b16 %v1049
  %v1179 = vunpack.c.l.b16 %v1050
  %v1180 = vunpack.c.l.b16 %v1051
  %v1181 = vunpack.c.l.b16 %v1052
  %v1182 = vunpack.c.l.b16 %v1053
  %v1183 = vunpack.c.l.b16 %v1054
  %v1184 = vunpack.c.l.b16 %v1055
  %v1185 = vunpack.c.l.b16 %v1056
  %v1186 = vunpack.c.l.b16 %v1057
  %v1187 = vunpack.c.l.b16 %v1058
  %v1188 = vunpack.c.l.b16 %v1059
  %v1189 = vunpack.c.l.b16 %v1060
  %v1190 = vunpack.c.l.b16 %v1061
  %v1191 = vunpack.c.l.b16 %v1062
  %v1192 = vunpack.c.l.b16 %v1063
  %v1193 = vunpack.c.l.b16 %v1064
  %v1194 = vunpack.c.l.b16 %v1065
  %v1195 = vunpack.c.l.b16 %v1066
  %v1196 = vunpack.c.l.b16 %v1067
  %v1197 = vunpack.c.l.b16 %v1068
  %v1198 = vunpack.c.l.b16 %v1069
  %v1199 = vunpack.c.l.b16 %v1070
  %v1200 = vunpack.c.l.b16 %v1071
  %v1201 = vunpack.c.l.b16 %v1072
  %v1202 = vunpack.c.l.b16 %v1073
  %v1203 = vunpack.c.l.b16 %v1074
  %v1204 = vunpack.c.l.b16 %v1075
  %v1205 = vunpack.c.l.b16 %v1076
  %v1206 = vunpack.c.l.b16 %v1077
  %v1207 = vunpack.c.l.b16 %v1078
  %v1208 = vpack.c.b16 %v1145, %v1144
  %v1209 = vpack.c.b16 %v1147, %v1146
  %v1210 = vpack.c.b16 %v1149, %v1148
  %v1211 = vpack.c.b16 %v1151, %v1150
  %v1212 = vpack.c.b16 %v1153, %v1152
  %v1213 = vpack.c.b16 %v1155, %v1154
  %v1214 = vpack.c.b16 %v1157, %v1156
  %v1215 = vpack.c.b16 %v1159, %v1158
  %v1216 = vpack.c.b16 %v1161, %v1160
  %v1217 = vpack.c.b16 %v1163, %v1162
  %v1218 = vpack.c.b16 %v1165, %v1164
  %v1219 = vpack.c.b16 %v1167, %v1166
  %v1220 = vpack.c.b16 %v1169, %v1168
  %v1221 = vpack.c.b16 %v1171, %v1170
  %v1222 = vpack.c.b16 %v1173, %v1172
  %v1223 = vpack.c.b16 %v1175, %v1174
  %v1224 = vpack.c.b16 %v1177, %v1176
  %v1225 = vpack.c.b16 %v1179, %v1178
  %v1226 = vpack.c.b16 %v1181, %v1180
  %v1227 = vpack.c.b16 %v1183, %v1182
  %v1228 = vpack.c.b16 %v1185, %v1184
  %v1229 = vpack.c.b16 %v1187, %v1186
  %v1230 = vpack.c.b16 %v1189, %v1188
  %v1231 = vpack.c.b16 %v1191, %v1190
  %v1232 = vpack.c.b16 %v1193, %v1192
  %v1233 = vpack.c.b16 %v1195, %v1194
  %v1234 = vpack.c.b16 %v1197, %v1196
  %v1235 = vpack.c.b16 %v1199, %v1198
  %v1236 = vpack.c.b16 %v1201, %v1200
  %v1237 = vpack.c.b16 %v1203, %v1202
  %v1238 = vpack.c.b16 %v1205, %v1204
  %v1239 = vpack.c.b16 %v1207, %v1206
  %v1241 = vsel %vm317, %v1208, 0
  %v1244 = vsel %vm317, %v1209, 0
  %v1247 = vsel %vm317, %v1210, 0
  %v1250 = vsel %vm317, %v1211, 0
  %v1253 = vsel %vm317, %v1212, 0
  %v1256 = vsel %vm317, %v1213, 0
  %v1259 = vsel %vm317, %v1214, 0
  %v1262 = vsel %vm317, %v1215, 0
  %v1265 = vsel %vm317, %v1216, 0
  %v1268 = vsel %vm317, %v1217, 0
  %v1271 = vsel %vm317, %v1218, 0
  %v1274 = vsel %vm317, %v1219, 0
  %v1277 = vsel %vm317, %v1220, 0
  %v1280 = vsel %vm317, %v1221, 0
  %v1283 = vsel %vm317, %v1222, 0
  %v1286 = vsel %vm317, %v1223, 0
  %v1289 = vsel %vm317, %v1224, 0
  %v1292 = vsel %vm317, %v1225, 0
  %v1295 = vsel %vm317, %v1226, 0
  %v1298 = vsel %vm317, %v1227, 0
  %v1301 = vsel %vm317, %v1228, 0
  %v1304 = vsel %vm317, %v1229, 0
  %v1307 = vsel %vm317, %v1230, 0
  %v1310 = vsel %vm317, %v1231, 0
  %v1313 = vsel %vm317, %v1232, 0
  %v1316 = vsel %vm317, %v1233, 0
  %v1319 = vsel %vm317, %v1234, 0
  %v1322 = vsel %vm317, %v1235, 0
  %v1325 = vsel %vm317, %v1236, 0
  %v1328 = vsel %vm317, %v1237, 0
  %v1331 = vsel %vm317, %v1238, 0
  %v1334 = vsel %vm317, %v1239, 0
  %v1337 = vsel %vm414, %v1079, 0
  %1339 = vmatpush.bf16.msra.mxu0 0
  %1340 = vmatpush.bf16.msra.mxu0 0
  %1341 = vmatpush.bf16.msra.mxu0 0
  %1342 = vmatpush.bf16.msra.mxu0 0
  %1343 = vmatpush.bf16.msra.mxu0 0
  %1344 = vmatpush.bf16.msra.mxu0 0
  %1345 = vmatpush.bf16.msra.mxu0 0
  %1346 = vmatpush.bf16.msra.mxu0 %v1337
  %1347 = vmatmul.bf16.gmra.mxu0 %v1241
  %v1348 = vpop.f32.mrf.mxu0
  %v1349 = vadd.f32 0.0, %v1348
  %v1350 = vpop.f32.mrf.mxu0
  %v1351 = vadd.f32 0.0, %v1350
  %1352 = vmatmul.bf16.gmra.mxu0 %v1244
  %v1353 = vpop.f32.mrf.mxu0
  %v1354 = vadd.f32 0.0, %v1353
  %v1355 = vpop.f32.mrf.mxu0
  %v1356 = vadd.f32 0.0, %v1355
  %1357 = vmatmul.bf16.gmra.mxu0 %v1247
  %v1358 = vpop.f32.mrf.mxu0
  %v1359 = vadd.f32 0.0, %v1358
  %v1360 = vpop.f32.mrf.mxu0
  %v1361 = vadd.f32 0.0, %v1360
  %1362 = vmatmul.bf16.gmra.mxu0 %v1250
  %v1363 = vpop.f32.mrf.mxu0
  %v1364 = vadd.f32 0.0, %v1363
  %v1365 = vpop.f32.mrf.mxu0
  %v1366 = vadd.f32 0.0, %v1365
  %1367 = vmatmul.bf16.gmra.mxu0 %v1253
  %v1368 = vpop.f32.mrf.mxu0
  %v1369 = vadd.f32 0.0, %v1368
  %v1370 = vpop.f32.mrf.mxu0
  %v1371 = vadd.f32 0.0, %v1370
  %1372 = vmatmul.bf16.gmra.mxu0 %v1256
  %v1373 = vpop.f32.mrf.mxu0
  %v1374 = vadd.f32 0.0, %v1373
  %v1375 = vpop.f32.mrf.mxu0
  %v1376 = vadd.f32 0.0, %v1375
  %1377 = vmatmul.bf16.gmra.mxu0 %v1259
  %v1378 = vpop.f32.mrf.mxu0
  %v1379 = vadd.f32 0.0, %v1378
  %v1380 = vpop.f32.mrf.mxu0
  %v1381 = vadd.f32 0.0, %v1380
  %1382 = vmatmul.bf16.gmra.mxu0 %v1262
  %v1383 = vpop.f32.mrf.mxu0
  %v1384 = vadd.f32 0.0, %v1383
  %v1385 = vpop.f32.mrf.mxu0
  %v1386 = vadd.f32 0.0, %v1385
  %1387 = vmatmul.bf16.gmra.mxu0 %v1265
  %v1388 = vpop.f32.mrf.mxu0
  %v1389 = vadd.f32 0.0, %v1388
  %v1390 = vpop.f32.mrf.mxu0
  %v1391 = vadd.f32 0.0, %v1390
  %1392 = vmatmul.bf16.gmra.mxu0 %v1268
  %v1393 = vpop.f32.mrf.mxu0
  %v1394 = vadd.f32 0.0, %v1393
  %v1395 = vpop.f32.mrf.mxu0
  %v1396 = vadd.f32 0.0, %v1395
  %1397 = vmatmul.bf16.gmra.mxu0 %v1271
  %v1398 = vpop.f32.mrf.mxu0
  %v1399 = vadd.f32 0.0, %v1398
  %v1400 = vpop.f32.mrf.mxu0
  %v1401 = vadd.f32 0.0, %v1400
  %1402 = vmatmul.bf16.gmra.mxu0 %v1274
  %v1403 = vpop.f32.mrf.mxu0
  %v1404 = vadd.f32 0.0, %v1403
  %v1405 = vpop.f32.mrf.mxu0
  %v1406 = vadd.f32 0.0, %v1405
  %1407 = vmatmul.bf16.gmra.mxu0 %v1277
  %v1408 = vpop.f32.mrf.mxu0
  %v1409 = vadd.f32 0.0, %v1408
  %v1410 = vpop.f32.mrf.mxu0
  %v1411 = vadd.f32 0.0, %v1410
  %1412 = vmatmul.bf16.gmra.mxu0 %v1280
  %v1413 = vpop.f32.mrf.mxu0
  %v1414 = vadd.f32 0.0, %v1413
  %v1415 = vpop.f32.mrf.mxu0
  %v1416 = vadd.f32 0.0, %v1415
  %1417 = vmatmul.bf16.gmra.mxu0 %v1283
  %v1418 = vpop.f32.mrf.mxu0
  %v1419 = vadd.f32 0.0, %v1418
  %v1420 = vpop.f32.mrf.mxu0
  %v1421 = vadd.f32 0.0, %v1420
  %1422 = vmatmul.bf16.gmra.mxu0 %v1286
  %v1423 = vpop.f32.mrf.mxu0
  %v1424 = vadd.f32 0.0, %v1423
  %v1425 = vpop.f32.mrf.mxu0
  %v1426 = vadd.f32 0.0, %v1425
  %1427 = vmatmul.bf16.gmra.mxu0 %v1289
  %v1428 = vpop.f32.mrf.mxu0
  %v1429 = vadd.f32 0.0, %v1428
  %v1430 = vpop.f32.mrf.mxu0
  %v1431 = vadd.f32 0.0, %v1430
  %1432 = vmatmul.bf16.gmra.mxu0 %v1292
  %v1433 = vpop.f32.mrf.mxu0
  %v1434 = vadd.f32 0.0, %v1433
  %v1435 = vpop.f32.mrf.mxu0
  %v1436 = vadd.f32 0.0, %v1435
  %1437 = vmatmul.bf16.gmra.mxu0 %v1295
  %v1438 = vpop.f32.mrf.mxu0
  %v1439 = vadd.f32 0.0, %v1438
  %v1440 = vpop.f32.mrf.mxu0
  %v1441 = vadd.f32 0.0, %v1440
  %1442 = vmatmul.bf16.gmra.mxu0 %v1298
  %v1443 = vpop.f32.mrf.mxu0
  %v1444 = vadd.f32 0.0, %v1443
  %v1445 = vpop.f32.mrf.mxu0
  %v1446 = vadd.f32 0.0, %v1445
  %1447 = vmatmul.bf16.gmra.mxu0 %v1301
  %v1448 = vpop.f32.mrf.mxu0
  %v1449 = vadd.f32 0.0, %v1448
  %v1450 = vpop.f32.mrf.mxu0
  %v1451 = vadd.f32 0.0, %v1450
  %1452 = vmatmul.bf16.gmra.mxu0 %v1304
  %v1453 = vpop.f32.mrf.mxu0
  %v1454 = vadd.f32 0.0, %v1453
  %v1455 = vpop.f32.mrf.mxu0
  %v1456 = vadd.f32 0.0, %v1455
  %1457 = vmatmul.bf16.gmra.mxu0 %v1307
  %v1458 = vpop.f32.mrf.mxu0
  %v1459 = vadd.f32 0.0, %v1458
  %v1460 = vpop.f32.mrf.mxu0
  %v1461 = vadd.f32 0.0, %v1460
  %1462 = vmatmul.bf16.gmra.mxu0 %v1310
  %v1463 = vpop.f32.mrf.mxu0
  %v1464 = vadd.f32 0.0, %v1463
  %v1465 = vpop.f32.mrf.mxu0
  %v1466 = vadd.f32 0.0, %v1465
  %1467 = vmatmul.bf16.gmra.mxu0 %v1313
  %v1468 = vpop.f32.mrf.mxu0
  %v1469 = vadd.f32 0.0, %v1468
  %v1470 = vpop.f32.mrf.mxu0
  %v1471 = vadd.f32 0.0, %v1470
  %1472 = vmatmul.bf16.gmra.mxu0 %v1316
  %v1473 = vpop.f32.mrf.mxu0
  %v1474 = vadd.f32 0.0, %v1473
  %v1475 = vpop.f32.mrf.mxu0
  %v1476 = vadd.f32 0.0, %v1475
  %1477 = vmatmul.bf16.gmra.mxu0 %v1319
  %v1478 = vpop.f32.mrf.mxu0
  %v1479 = vadd.f32 0.0, %v1478
  %v1480 = vpop.f32.mrf.mxu0
  %v1481 = vadd.f32 0.0, %v1480
  %1482 = vmatmul.bf16.gmra.mxu0 %v1322
  %v1483 = vpop.f32.mrf.mxu0
  %v1484 = vadd.f32 0.0, %v1483
  %v1485 = vpop.f32.mrf.mxu0
  %v1486 = vadd.f32 0.0, %v1485
  %1487 = vmatmul.bf16.gmra.mxu0 %v1325
  %v1488 = vpop.f32.mrf.mxu0
  %v1489 = vadd.f32 0.0, %v1488
  %v1490 = vpop.f32.mrf.mxu0
  %v1491 = vadd.f32 0.0, %v1490
  %1492 = vmatmul.bf16.gmra.mxu0 %v1328
  %v1493 = vpop.f32.mrf.mxu0
  %v1494 = vadd.f32 0.0, %v1493
  %v1495 = vpop.f32.mrf.mxu0
  %v1496 = vadd.f32 0.0, %v1495
  %1497 = vmatmul.bf16.gmra.mxu0 %v1331
  %v1498 = vpop.f32.mrf.mxu0
  %v1499 = vadd.f32 0.0, %v1498
  %v1500 = vpop.f32.mrf.mxu0
  %v1501 = vadd.f32 0.0, %v1500
  %1502 = vmatmul.bf16.gmra.mxu0 %v1334
  %v1503 = vpop.f32.mrf.mxu0
  %v1504 = vadd.f32 0.0, %v1503
  %v1505 = vpop.f32.mrf.mxu0
  %v1506 = vadd.f32 0.0, %v1505
  %1507 = vdwg.mxu0
  %v1508 = vadd.f32 %v856, %v1349
  %v1509 = vadd.f32 %v858, %v1351
  %v1510 = vadd.f32 %v861, %v1354
  %v1511 = vadd.f32 %v863, %v1356
  %v1512 = vadd.f32 %v866, %v1359
  %v1513 = vadd.f32 %v868, %v1361
  %v1514 = vadd.f32 %v871, %v1364
  %v1515 = vadd.f32 %v873, %v1366
  %v1516 = vadd.f32 %v876, %v1369
  %v1517 = vadd.f32 %v878, %v1371
  %v1518 = vadd.f32 %v881, %v1374
  %v1519 = vadd.f32 %v883, %v1376
  %v1520 = vadd.f32 %v886, %v1379
  %v1521 = vadd.f32 %v888, %v1381
  %v1522 = vadd.f32 %v891, %v1384
  %v1523 = vadd.f32 %v893, %v1386
  %v1524 = vadd.f32 %v896, %v1389
  %v1525 = vadd.f32 %v898, %v1391
  %v1526 = vadd.f32 %v901, %v1394
  %v1527 = vadd.f32 %v903, %v1396
  %v1528 = vadd.f32 %v906, %v1399
  %v1529 = vadd.f32 %v908, %v1401
  %v1530 = vadd.f32 %v911, %v1404
  %v1531 = vadd.f32 %v913, %v1406
  %v1532 = vadd.f32 %v916, %v1409
  %v1533 = vadd.f32 %v918, %v1411
  %v1534 = vadd.f32 %v921, %v1414
  %v1535 = vadd.f32 %v923, %v1416
  %v1536 = vadd.f32 %v926, %v1419
  %v1537 = vadd.f32 %v928, %v1421
  %v1538 = vadd.f32 %v931, %v1424
  %v1539 = vadd.f32 %v933, %v1426
  %v1540 = vadd.f32 %v936, %v1429
  %v1541 = vadd.f32 %v938, %v1431
  %v1542 = vadd.f32 %v941, %v1434
  %v1543 = vadd.f32 %v943, %v1436
  %v1544 = vadd.f32 %v946, %v1439
  %v1545 = vadd.f32 %v948, %v1441
  %v1546 = vadd.f32 %v951, %v1444
  %v1547 = vadd.f32 %v953, %v1446
  %v1548 = vadd.f32 %v956, %v1449
  %v1549 = vadd.f32 %v958, %v1451
  %v1550 = vadd.f32 %v961, %v1454
  %v1551 = vadd.f32 %v963, %v1456
  %v1552 = vadd.f32 %v966, %v1459
  %v1553 = vadd.f32 %v968, %v1461
  %v1554 = vadd.f32 %v971, %v1464
  %v1555 = vadd.f32 %v973, %v1466
  %v1556 = vadd.f32 %v976, %v1469
  %v1557 = vadd.f32 %v978, %v1471
  %v1558 = vadd.f32 %v981, %v1474
  %v1559 = vadd.f32 %v983, %v1476
  %v1560 = vadd.f32 %v986, %v1479
  %v1561 = vadd.f32 %v988, %v1481
  %v1562 = vadd.f32 %v991, %v1484
  %v1563 = vadd.f32 %v993, %v1486
  %v1564 = vadd.f32 %v996, %v1489
  %v1565 = vadd.f32 %v998, %v1491
  %v1566 = vadd.f32 %v1001, %v1494
  %v1567 = vadd.f32 %v1003, %v1496
  %v1568 = vadd.f32 %v1006, %v1499
  %v1569 = vadd.f32 %v1008, %v1501
  %v1570 = vadd.f32 %v1011, %v1504
  %v1571 = vadd.f32 %v1013, %v1506
  %v1572 = vld [vmem:[%s6] sm:$0x3]
  %v1573 = vperm.slane %v1572, 0
  %v1574 = vmul.f32 %v1508, %v1573
  %v1575 = vmul.f32 %v1509, %v1573
  %v1576 = vmul.f32 %v1510, %v1573
  %v1577 = vmul.f32 %v1511, %v1573
  %v1578 = vmul.f32 %v1512, %v1573
  %v1579 = vmul.f32 %v1513, %v1573
  %v1580 = vmul.f32 %v1514, %v1573
  %v1581 = vmul.f32 %v1515, %v1573
  %v1582 = vmul.f32 %v1516, %v1573
  %v1583 = vmul.f32 %v1517, %v1573
  %v1584 = vmul.f32 %v1518, %v1573
  %v1585 = vmul.f32 %v1519, %v1573
  %v1586 = vmul.f32 %v1520, %v1573
  %v1587 = vmul.f32 %v1521, %v1573
  %v1588 = vmul.f32 %v1522, %v1573
  %v1589 = vmul.f32 %v1523, %v1573
  %v1590 = vmul.f32 %v1524, %v1573
  %v1591 = vmul.f32 %v1525, %v1573
  %v1592 = vmul.f32 %v1526, %v1573
  %v1593 = vmul.f32 %v1527, %v1573
  %v1594 = vmul.f32 %v1528, %v1573
  %v1595 = vmul.f32 %v1529, %v1573
  %v1596 = vmul.f32 %v1530, %v1573
  %v1597 = vmul.f32 %v1531, %v1573
  %v1598 = vmul.f32 %v1532, %v1573
  %v1599 = vmul.f32 %v1533, %v1573
  %v1600 = vmul.f32 %v1534, %v1573
  %v1601 = vmul.f32 %v1535, %v1573
  %v1602 = vmul.f32 %v1536, %v1573
  %v1603 = vmul.f32 %v1537, %v1573
  %v1604 = vmul.f32 %v1538, %v1573
  %v1605 = vmul.f32 %v1539, %v1573
  %v1606 = vmul.f32 %v1540, %v1573
  %v1607 = vmul.f32 %v1541, %v1573
  %v1608 = vmul.f32 %v1542, %v1573
  %v1609 = vmul.f32 %v1543, %v1573
  %v1610 = vmul.f32 %v1544, %v1573
  %v1611 = vmul.f32 %v1545, %v1573
  %v1612 = vmul.f32 %v1546, %v1573
  %v1613 = vmul.f32 %v1547, %v1573
  %v1614 = vmul.f32 %v1548, %v1573
  %v1615 = vmul.f32 %v1549, %v1573
  %v1616 = vmul.f32 %v1550, %v1573
  %v1617 = vmul.f32 %v1551, %v1573
  %v1618 = vmul.f32 %v1552, %v1573
  %v1619 = vmul.f32 %v1553, %v1573
  %v1620 = vmul.f32 %v1554, %v1573
  %v1621 = vmul.f32 %v1555, %v1573
  %v1622 = vmul.f32 %v1556, %v1573
  %v1623 = vmul.f32 %v1557, %v1573
  %v1624 = vmul.f32 %v1558, %v1573
  %v1625 = vmul.f32 %v1559, %v1573
  %v1626 = vmul.f32 %v1560, %v1573
  %v1627 = vmul.f32 %v1561, %v1573
  %v1628 = vmul.f32 %v1562, %v1573
  %v1629 = vmul.f32 %v1563, %v1573
  %v1630 = vmul.f32 %v1564, %v1573
  %v1631 = vmul.f32 %v1565, %v1573
  %v1632 = vmul.f32 %v1566, %v1573
  %v1633 = vmul.f32 %v1567, %v1573
  %v1634 = vmul.f32 %v1568, %v1573
  %v1635 = vmul.f32 %v1569, %v1573
  %v1636 = vmul.f32 %v1570, %v1573
  %v1637 = vmul.f32 %v1571, %v1573
  %v1638 = vperm.slane %v1572, 1
  %v1639 = vadd.f32 %v1574, %v1638
  %v1640 = vadd.f32 %v1575, %v1638
  %v1641 = vadd.f32 %v1576, %v1638
  %v1642 = vadd.f32 %v1577, %v1638
  %v1643 = vadd.f32 %v1578, %v1638
  %v1644 = vadd.f32 %v1579, %v1638
  %v1645 = vadd.f32 %v1580, %v1638
  %v1646 = vadd.f32 %v1581, %v1638
  %v1647 = vadd.f32 %v1582, %v1638
  %v1648 = vadd.f32 %v1583, %v1638
  %v1649 = vadd.f32 %v1584, %v1638
  %v1650 = vadd.f32 %v1585, %v1638
  %v1651 = vadd.f32 %v1586, %v1638
  %v1652 = vadd.f32 %v1587, %v1638
  %v1653 = vadd.f32 %v1588, %v1638
  %v1654 = vadd.f32 %v1589, %v1638
  %v1655 = vadd.f32 %v1590, %v1638
  %v1656 = vadd.f32 %v1591, %v1638
  %v1657 = vadd.f32 %v1592, %v1638
  %v1658 = vadd.f32 %v1593, %v1638
  %v1659 = vadd.f32 %v1594, %v1638
  %v1660 = vadd.f32 %v1595, %v1638
  %v1661 = vadd.f32 %v1596, %v1638
  %v1662 = vadd.f32 %v1597, %v1638
  %v1663 = vadd.f32 %v1598, %v1638
  %v1664 = vadd.f32 %v1599, %v1638
  %v1665 = vadd.f32 %v1600, %v1638
  %v1666 = vadd.f32 %v1601, %v1638
  %v1667 = vadd.f32 %v1602, %v1638
  %v1668 = vadd.f32 %v1603, %v1638
  %v1669 = vadd.f32 %v1604, %v1638
  %v1670 = vadd.f32 %v1605, %v1638
  %v1671 = vadd.f32 %v1606, %v1638
  %v1672 = vadd.f32 %v1607, %v1638
  %v1673 = vadd.f32 %v1608, %v1638
  %v1674 = vadd.f32 %v1609, %v1638
  %v1675 = vadd.f32 %v1610, %v1638
  %v1676 = vadd.f32 %v1611, %v1638
  %v1677 = vadd.f32 %v1612, %v1638
  %v1678 = vadd.f32 %v1613, %v1638
  %v1679 = vadd.f32 %v1614, %v1638
  %v1680 = vadd.f32 %v1615, %v1638
  %v1681 = vadd.f32 %v1616, %v1638
  %v1682 = vadd.f32 %v1617, %v1638
  %v1683 = vadd.f32 %v1618, %v1638
  %v1684 = vadd.f32 %v1619, %v1638
  %v1685 = vadd.f32 %v1620, %v1638
  %v1686 = vadd.f32 %v1621, %v1638
  %v1687 = vadd.f32 %v1622, %v1638
  %v1688 = vadd.f32 %v1623, %v1638
  %v1689 = vadd.f32 %v1624, %v1638
  %v1690 = vadd.f32 %v1625, %v1638
  %v1691 = vadd.f32 %v1626, %v1638
  %v1692 = vadd.f32 %v1627, %v1638
  %v1693 = vadd.f32 %v1628, %v1638
  %v1694 = vadd.f32 %v1629, %v1638
  %v1695 = vadd.f32 %v1630, %v1638
  %v1696 = vadd.f32 %v1631, %v1638
  %v1697 = vadd.f32 %v1632, %v1638
  %v1698 = vadd.f32 %v1633, %v1638
  %v1699 = vadd.f32 %v1634, %v1638
  %v1700 = vadd.f32 %v1635, %v1638
  %v1701 = vadd.f32 %v1636, %v1638
  %v1702 = vadd.f32 %v1637, %v1638
  %v1703 = vsub.f32 0.0, %v1639
  %v1704 = vsub.f32 0.0, %v1640
  %v1705 = vsub.f32 0.0, %v1641
  %v1706 = vsub.f32 0.0, %v1642
  %v1707 = vsub.f32 0.0, %v1643
  %v1708 = vsub.f32 0.0, %v1644
  %v1709 = vsub.f32 0.0, %v1645
  %v1710 = vsub.f32 0.0, %v1646
  %v1711 = vsub.f32 0.0, %v1647
  %v1712 = vsub.f32 0.0, %v1648
  %v1713 = vsub.f32 0.0, %v1649
  %v1714 = vsub.f32 0.0, %v1650
  %v1715 = vsub.f32 0.0, %v1651
  %v1716 = vsub.f32 0.0, %v1652
  %v1717 = vsub.f32 0.0, %v1653
  %v1718 = vsub.f32 0.0, %v1654
  %v1719 = vsub.f32 0.0, %v1655
  %v1720 = vsub.f32 0.0, %v1656
  %v1721 = vsub.f32 0.0, %v1657
  %v1722 = vsub.f32 0.0, %v1658
  %v1723 = vsub.f32 0.0, %v1659
  %v1724 = vsub.f32 0.0, %v1660
  %v1725 = vsub.f32 0.0, %v1661
  %v1726 = vsub.f32 0.0, %v1662
  %v1727 = vsub.f32 0.0, %v1663
  %v1728 = vsub.f32 0.0, %v1664
  %v1729 = vsub.f32 0.0, %v1665
  %v1730 = vsub.f32 0.0, %v1666
  %v1731 = vsub.f32 0.0, %v1667
  %v1732 = vsub.f32 0.0, %v1668
  %v1733 = vsub.f32 0.0, %v1669
  %v1734 = vsub.f32 0.0, %v1670
  %v1735 = vsub.f32 0.0, %v1671
  %v1736 = vsub.f32 0.0, %v1672
  %v1737 = vsub.f32 0.0, %v1673
  %v1738 = vsub.f32 0.0, %v1674
  %v1739 = vsub.f32 0.0, %v1675
  %v1740 = vsub.f32 0.0, %v1676
  %v1741 = vsub.f32 0.0, %v1677
  %v1742 = vsub.f32 0.0, %v1678
  %v1743 = vsub.f32 0.0, %v1679
  %v1744 = vsub.f32 0.0, %v1680
  %v1745 = vsub.f32 0.0, %v1681
  %v1746 = vsub.f32 0.0, %v1682
  %v1747 = vsub.f32 0.0, %v1683
  %v1748 = vsub.f32 0.0, %v1684
  %v1749 = vsub.f32 0.0, %v1685
  %v1750 = vsub.f32 0.0, %v1686
  %v1751 = vsub.f32 0.0, %v1687
  %v1752 = vsub.f32 0.0, %v1688
  %v1753 = vsub.f32 0.0, %v1689
  %v1754 = vsub.f32 0.0, %v1690
  %v1755 = vsub.f32 0.0, %v1691
  %v1756 = vsub.f32 0.0, %v1692
  %v1757 = vsub.f32 0.0, %v1693
  %v1758 = vsub.f32 0.0, %v1694
  %v1759 = vsub.f32 0.0, %v1695
  %v1760 = vsub.f32 0.0, %v1696
  %v1761 = vsub.f32 0.0, %v1697
  %v1762 = vsub.f32 0.0, %v1698
  %v1763 = vsub.f32 0.0, %v1699
  %v1764 = vsub.f32 0.0, %v1700
  %v1765 = vsub.f32 0.0, %v1701
  %v1766 = vsub.f32 0.0, %v1702
  %v1767 = vmul.f32 %v1703, 1.442695
  %v1768 = vpow.pop %v1767
  %v1769 = vmul.f32 %v1704, 1.442695
  %v1770 = vpow.pop %v1769
  %v1771 = vmul.f32 %v1705, 1.442695
  %v1772 = vpow.pop %v1771
  %v1773 = vmul.f32 %v1706, 1.442695
  %v1774 = vpow.pop %v1773
  %v1775 = vmul.f32 %v1707, 1.442695
  %v1776 = vpow.pop %v1775
  %v1777 = vmul.f32 %v1708, 1.442695
  %v1778 = vpow.pop %v1777
  %v1779 = vmul.f32 %v1709, 1.442695
  %v1780 = vpow.pop %v1779
  %v1781 = vmul.f32 %v1710, 1.442695
  %v1782 = vpow.pop %v1781
  %v1783 = vmul.f32 %v1711, 1.442695
  %v1784 = vpow.pop %v1783
  %v1785 = vmul.f32 %v1712, 1.442695
  %v1786 = vpow.pop %v1785
  %v1787 = vmul.f32 %v1713, 1.442695
  %v1788 = vpow.pop %v1787
  %v1789 = vmul.f32 %v1714, 1.442695
  %v1790 = vpow.pop %v1789
  %v1791 = vmul.f32 %v1715, 1.442695
  %v1792 = vpow.pop %v1791
  %v1793 = vmul.f32 %v1716, 1.442695
  %v1794 = vpow.pop %v1793
  %v1795 = vmul.f32 %v1717, 1.442695
  %v1796 = vpow.pop %v1795
  %v1797 = vmul.f32 %v1718, 1.442695
  %v1798 = vpow.pop %v1797
  %v1799 = vmul.f32 %v1719, 1.442695
  %v1800 = vpow.pop %v1799
  %v1801 = vmul.f32 %v1720, 1.442695
  %v1802 = vpow.pop %v1801
  %v1803 = vmul.f32 %v1721, 1.442695
  %v1804 = vpow.pop %v1803
  %v1805 = vmul.f32 %v1722, 1.442695
  %v1806 = vpow.pop %v1805
  %v1807 = vmul.f32 %v1723, 1.442695
  %v1808 = vpow.pop %v1807
  %v1809 = vmul.f32 %v1724, 1.442695
  %v1810 = vpow.pop %v1809
  %v1811 = vmul.f32 %v1725, 1.442695
  %v1812 = vpow.pop %v1811
  %v1813 = vmul.f32 %v1726, 1.442695
  %v1814 = vpow.pop %v1813
  %v1815 = vmul.f32 %v1727, 1.442695
  %v1816 = vpow.pop %v1815
  %v1817 = vmul.f32 %v1728, 1.442695
  %v1818 = vpow.pop %v1817
  %v1819 = vmul.f32 %v1729, 1.442695
  %v1820 = vpow.pop %v1819
  %v1821 = vmul.f32 %v1730, 1.442695
  %v1822 = vpow.pop %v1821
  %v1823 = vmul.f32 %v1731, 1.442695
  %v1824 = vpow.pop %v1823
  %v1825 = vmul.f32 %v1732, 1.442695
  %v1826 = vpow.pop %v1825
  %v1827 = vmul.f32 %v1733, 1.442695
  %v1828 = vpow.pop %v1827
  %v1829 = vmul.f32 %v1734, 1.442695
  %v1830 = vpow.pop %v1829
  %v1831 = vmul.f32 %v1735, 1.442695
  %v1832 = vpow.pop %v1831
  %v1833 = vmul.f32 %v1736, 1.442695
  %v1834 = vpow.pop %v1833
  %v1835 = vmul.f32 %v1737, 1.442695
  %v1836 = vpow.pop %v1835
  %v1837 = vmul.f32 %v1738, 1.442695
  %v1838 = vpow.pop %v1837
  %v1839 = vmul.f32 %v1739, 1.442695
  %v1840 = vpow.pop %v1839
  %v1841 = vmul.f32 %v1740, 1.442695
  %v1842 = vpow.pop %v1841
  %v1843 = vmul.f32 %v1741, 1.442695
  %v1844 = vpow.pop %v1843
  %v1845 = vmul.f32 %v1742, 1.442695
  %v1846 = vpow.pop %v1845
  %v1847 = vmul.f32 %v1743, 1.442695
  %v1848 = vpow.pop %v1847
  %v1849 = vmul.f32 %v1744, 1.442695
  %v1850 = vpow.pop %v1849
  %v1851 = vmul.f32 %v1745, 1.442695
  %v1852 = vpow.pop %v1851
  %v1853 = vmul.f32 %v1746, 1.442695
  %v1854 = vpow.pop %v1853
  %v1855 = vmul.f32 %v1747, 1.442695
  %v1856 = vpow.pop %v1855
  %v1857 = vmul.f32 %v1748, 1.442695
  %v1858 = vpow.pop %v1857
  %v1859 = vmul.f32 %v1749, 1.442695
  %v1860 = vpow.pop %v1859
  %v1861 = vmul.f32 %v1750, 1.442695
  %v1862 = vpow.pop %v1861
  %v1863 = vmul.f32 %v1751, 1.442695
  %v1864 = vpow.pop %v1863
  %v1865 = vmul.f32 %v1752, 1.442695
  %v1866 = vpow.pop %v1865
  %v1867 = vmul.f32 %v1753, 1.442695
  %v1868 = vpow.pop %v1867
  %v1869 = vmul.f32 %v1754, 1.442695
  %v1870 = vpow.pop %v1869
  %v1871 = vmul.f32 %v1755, 1.442695
  %v1872 = vpow.pop %v1871
  %v1873 = vmul.f32 %v1756, 1.442695
  %v1874 = vpow.pop %v1873
  %v1875 = vmul.f32 %v1757, 1.442695
  %v1876 = vpow.pop %v1875
  %v1877 = vmul.f32 %v1758, 1.442695
  %v1878 = vpow.pop %v1877
  %v1879 = vmul.f32 %v1759, 1.442695
  %v1880 = vpow.pop %v1879
  %v1881 = vmul.f32 %v1760, 1.442695
  %v1882 = vpow.pop %v1881
  %v1883 = vmul.f32 %v1761, 1.442695
  %v1884 = vpow.pop %v1883
  %v1885 = vmul.f32 %v1762, 1.442695
  %v1886 = vpow.pop %v1885
  %v1887 = vmul.f32 %v1763, 1.442695
  %v1888 = vpow.pop %v1887
  %v1889 = vmul.f32 %v1764, 1.442695
  %v1890 = vpow.pop %v1889
  %v1891 = vmul.f32 %v1765, 1.442695
  %v1892 = vpow.pop %v1891
  %v1893 = vmul.f32 %v1766, 1.442695
  %v1894 = vpow.pop %v1893
  %v1895 = vadd.f32 %v1768, 1.0
  %v1896 = vadd.f32 %v1770, 1.0
  %v1897 = vadd.f32 %v1772, 1.0
  %v1898 = vadd.f32 %v1774, 1.0
  %v1899 = vadd.f32 %v1776, 1.0
  %v1900 = vadd.f32 %v1778, 1.0
  %v1901 = vadd.f32 %v1780, 1.0
  %v1902 = vadd.f32 %v1782, 1.0
  %v1903 = vadd.f32 %v1784, 1.0
  %v1904 = vadd.f32 %v1786, 1.0
  %v1905 = vadd.f32 %v1788, 1.0
  %v1906 = vadd.f32 %v1790, 1.0
  %v1907 = vadd.f32 %v1792, 1.0
  %v1908 = vadd.f32 %v1794, 1.0
  %v1909 = vadd.f32 %v1796, 1.0
  %v1910 = vadd.f32 %v1798, 1.0
  %v1911 = vadd.f32 %v1800, 1.0
  %v1912 = vadd.f32 %v1802, 1.0
  %v1913 = vadd.f32 %v1804, 1.0
  %v1914 = vadd.f32 %v1806, 1.0
  %v1915 = vadd.f32 %v1808, 1.0
  %v1916 = vadd.f32 %v1810, 1.0
  %v1917 = vadd.f32 %v1812, 1.0
  %v1918 = vadd.f32 %v1814, 1.0
  %v1919 = vadd.f32 %v1816, 1.0
  %v1920 = vadd.f32 %v1818, 1.0
  %v1921 = vadd.f32 %v1820, 1.0
  %v1922 = vadd.f32 %v1822, 1.0
  %v1923 = vadd.f32 %v1824, 1.0
  %v1924 = vadd.f32 %v1826, 1.0
  %v1925 = vadd.f32 %v1828, 1.0
  %v1926 = vadd.f32 %v1830, 1.0
  %v1927 = vadd.f32 %v1832, 1.0
  %v1928 = vadd.f32 %v1834, 1.0
  %v1929 = vadd.f32 %v1836, 1.0
  %v1930 = vadd.f32 %v1838, 1.0
  %v1931 = vadd.f32 %v1840, 1.0
  %v1932 = vadd.f32 %v1842, 1.0
  %v1933 = vadd.f32 %v1844, 1.0
  %v1934 = vadd.f32 %v1846, 1.0
  %v1935 = vadd.f32 %v1848, 1.0
  %v1936 = vadd.f32 %v1850, 1.0
  %v1937 = vadd.f32 %v1852, 1.0
  %v1938 = vadd.f32 %v1854, 1.0
  %v1939 = vadd.f32 %v1856, 1.0
  %v1940 = vadd.f32 %v1858, 1.0
  %v1941 = vadd.f32 %v1860, 1.0
  %v1942 = vadd.f32 %v1862, 1.0
  %v1943 = vadd.f32 %v1864, 1.0
  %v1944 = vadd.f32 %v1866, 1.0
  %v1945 = vadd.f32 %v1868, 1.0
  %v1946 = vadd.f32 %v1870, 1.0
  %v1947 = vadd.f32 %v1872, 1.0
  %v1948 = vadd.f32 %v1874, 1.0
  %v1949 = vadd.f32 %v1876, 1.0
  %v1950 = vadd.f32 %v1878, 1.0
  %v1951 = vadd.f32 %v1880, 1.0
  %v1952 = vadd.f32 %v1882, 1.0
  %v1953 = vadd.f32 %v1884, 1.0
  %v1954 = vadd.f32 %v1886, 1.0
  %v1955 = vadd.f32 %v1888, 1.0
  %v1956 = vadd.f32 %v1890, 1.0
  %v1957 = vadd.f32 %v1892, 1.0
  %v1958 = vadd.f32 %v1894, 1.0
  %v1959 = vrcp.pop %v1895
  %v1960 = vrcp.pop %v1896
  %v1961 = vrcp.pop %v1897
  %v1962 = vrcp.pop %v1898
  %v1963 = vrcp.pop %v1899
  %v1964 = vrcp.pop %v1900
  %v1965 = vrcp.pop %v1901
  %v1966 = vrcp.pop %v1902
  %v1967 = vrcp.pop %v1903
  %v1968 = vrcp.pop %v1904
  %v1969 = vrcp.pop %v1905
  %v1970 = vrcp.pop %v1906
  %v1971 = vrcp.pop %v1907
  %v1972 = vrcp.pop %v1908
  %v1973 = vrcp.pop %v1909
  %v1974 = vrcp.pop %v1910
  %v1975 = vrcp.pop %v1911
  %v1976 = vrcp.pop %v1912
  %v1977 = vrcp.pop %v1913
  %v1978 = vrcp.pop %v1914
  %v1979 = vrcp.pop %v1915
  %v1980 = vrcp.pop %v1916
  %v1981 = vrcp.pop %v1917
  %v1982 = vrcp.pop %v1918
  %v1983 = vrcp.pop %v1919
  %v1984 = vrcp.pop %v1920
  %v1985 = vrcp.pop %v1921
  %v1986 = vrcp.pop %v1922
  %v1987 = vrcp.pop %v1923
  %v1988 = vrcp.pop %v1924
  %v1989 = vrcp.pop %v1925
  %v1990 = vrcp.pop %v1926
  %v1991 = vrcp.pop %v1927
  %v1992 = vrcp.pop %v1928
  %v1993 = vrcp.pop %v1929
  %v1994 = vrcp.pop %v1930
  %v1995 = vrcp.pop %v1931
  %v1996 = vrcp.pop %v1932
  %v1997 = vrcp.pop %v1933
  %v1998 = vrcp.pop %v1934
  %v1999 = vrcp.pop %v1935
  %v2000 = vrcp.pop %v1936
  %v2001 = vrcp.pop %v1937
  %v2002 = vrcp.pop %v1938
  %v2003 = vrcp.pop %v1939
  %v2004 = vrcp.pop %v1940
  %v2005 = vrcp.pop %v1941
  %v2006 = vrcp.pop %v1942
  %v2007 = vrcp.pop %v1943
  %v2008 = vrcp.pop %v1944
  %v2009 = vrcp.pop %v1945
  %v2010 = vrcp.pop %v1946
  %v2011 = vrcp.pop %v1947
  %v2012 = vrcp.pop %v1948
  %v2013 = vrcp.pop %v1949
  %v2014 = vrcp.pop %v1950
  %v2015 = vrcp.pop %v1951
  %v2016 = vrcp.pop %v1952
  %v2017 = vrcp.pop %v1953
  %v2018 = vrcp.pop %v1954
  %v2019 = vrcp.pop %v1955
  %v2020 = vrcp.pop %v1956
  %v2021 = vrcp.pop %v1957
  %v2022 = vrcp.pop %v1958
  %v2023 = vmul.f32 %v1639, %v1959
  %v2024 = vmul.f32 %v1640, %v1960
  %v2025 = vmul.f32 %v1641, %v1961
  %v2026 = vmul.f32 %v1642, %v1962
  %v2027 = vmul.f32 %v1643, %v1963
  %v2028 = vmul.f32 %v1644, %v1964
  %v2029 = vmul.f32 %v1645, %v1965
  %v2030 = vmul.f32 %v1646, %v1966
  %v2031 = vmul.f32 %v1647, %v1967
  %v2032 = vmul.f32 %v1648, %v1968
  %v2033 = vmul.f32 %v1649, %v1969
  %v2034 = vmul.f32 %v1650, %v1970
  %v2035 = vmul.f32 %v1651, %v1971
  %v2036 = vmul.f32 %v1652, %v1972
  %v2037 = vmul.f32 %v1653, %v1973
  %v2038 = vmul.f32 %v1654, %v1974
  %v2039 = vmul.f32 %v1655, %v1975
  %v2040 = vmul.f32 %v1656, %v1976
  %v2041 = vmul.f32 %v1657, %v1977
  %v2042 = vmul.f32 %v1658, %v1978
  %v2043 = vmul.f32 %v1659, %v1979
  %v2044 = vmul.f32 %v1660, %v1980
  %v2045 = vmul.f32 %v1661, %v1981
  %v2046 = vmul.f32 %v1662, %v1982
  %v2047 = vmul.f32 %v1663, %v1983
  %v2048 = vmul.f32 %v1664, %v1984
  %v2049 = vmul.f32 %v1665, %v1985
  %v2050 = vmul.f32 %v1666, %v1986
  %v2051 = vmul.f32 %v1667, %v1987
  %v2052 = vmul.f32 %v1668, %v1988
  %v2053 = vmul.f32 %v1669, %v1989
  %v2054 = vmul.f32 %v1670, %v1990
  %v2055 = vmul.f32 %v1671, %v1991
  %v2056 = vmul.f32 %v1672, %v1992
  %v2057 = vmul.f32 %v1673, %v1993
  %v2058 = vmul.f32 %v1674, %v1994
  %v2059 = vmul.f32 %v1675, %v1995
  %v2060 = vmul.f32 %v1676, %v1996
  %v2061 = vmul.f32 %v1677, %v1997
  %v2062 = vmul.f32 %v1678, %v1998
  %v2063 = vmul.f32 %v1679, %v1999
  %v2064 = vmul.f32 %v1680, %v2000
  %v2065 = vmul.f32 %v1681, %v2001
  %v2066 = vmul.f32 %v1682, %v2002
  %v2067 = vmul.f32 %v1683, %v2003
  %v2068 = vmul.f32 %v1684, %v2004
  %v2069 = vmul.f32 %v1685, %v2005
  %v2070 = vmul.f32 %v1686, %v2006
  %v2071 = vmul.f32 %v1687, %v2007
  %v2072 = vmul.f32 %v1688, %v2008
  %v2073 = vmul.f32 %v1689, %v2009
  %v2074 = vmul.f32 %v1690, %v2010
  %v2075 = vmul.f32 %v1691, %v2011
  %v2076 = vmul.f32 %v1692, %v2012
  %v2077 = vmul.f32 %v1693, %v2013
  %v2078 = vmul.f32 %v1694, %v2014
  %v2079 = vmul.f32 %v1695, %v2015
  %v2080 = vmul.f32 %v1696, %v2016
  %v2081 = vmul.f32 %v1697, %v2017
  %v2082 = vmul.f32 %v1698, %v2018
  %v2083 = vmul.f32 %v1699, %v2019
  %v2084 = vmul.f32 %v1700, %v2020
  %v2085 = vmul.f32 %v1701, %v2021
  %v2086 = vmul.f32 %v1702, %v2022
  %vm2087 = vcmask 130048
  %2088 = vst.msk [vmem:[%s7] sm:$0xff] %vm2087, %v2023
  %2089 = vst.msk [vmem:[%s7 + $0x8] sm:$0xff] %vm2087, %v2024
  %2090 = vst.msk [vmem:[%s7 + $0x10] sm:$0xff] %vm2087, %v2025
  %2091 = vst.msk [vmem:[%s7 + $0x18] sm:$0xff] %vm2087, %v2026
  %2092 = vst.msk [vmem:[%s7 + $0x20] sm:$0xff] %vm2087, %v2027
  %2093 = vst.msk [vmem:[%s7 + $0x28] sm:$0xff] %vm2087, %v2028
  %2094 = vst.msk [vmem:[%s7 + $0x30] sm:$0xff] %vm2087, %v2029
  %2095 = vst.msk [vmem:[%s7 + $0x38] sm:$0xff] %vm2087, %v2030
  %2096 = vst.msk [vmem:[%s7 + $0x40] sm:$0xff] %vm2087, %v2031
  %2097 = vst.msk [vmem:[%s7 + $0x48] sm:$0xff] %vm2087, %v2032
  %2098 = vst.msk [vmem:[%s7 + $0x50] sm:$0xff] %vm2087, %v2033
  %2099 = vst.msk [vmem:[%s7 + $0x58] sm:$0xff] %vm2087, %v2034
  %2100 = vst.msk [vmem:[%s7 + $0x60] sm:$0xff] %vm2087, %v2035
  %2101 = vst.msk [vmem:[%s7 + $0x68] sm:$0xff] %vm2087, %v2036
  %2102 = vst.msk [vmem:[%s7 + $0x70] sm:$0xff] %vm2087, %v2037
  %2103 = vst.msk [vmem:[%s7 + $0x78] sm:$0xff] %vm2087, %v2038
  %2104 = vst.msk [vmem:[%s7 + $0x80] sm:$0xff] %vm2087, %v2039
  %2105 = vst.msk [vmem:[%s7 + $0x88] sm:$0xff] %vm2087, %v2040
  %2106 = vst.msk [vmem:[%s7 + $0x90] sm:$0xff] %vm2087, %v2041
  %2107 = vst.msk [vmem:[%s7 + $0x98] sm:$0xff] %vm2087, %v2042
  %2108 = vst.msk [vmem:[%s7 + $0xa0] sm:$0xff] %vm2087, %v2043
  %2109 = vst.msk [vmem:[%s7 + $0xa8] sm:$0xff] %vm2087, %v2044
  %2110 = vst.msk [vmem:[%s7 + $0xb0] sm:$0xff] %vm2087, %v2045
  %2111 = vst.msk [vmem:[%s7 + $0xb8] sm:$0xff] %vm2087, %v2046
  %2112 = vst.msk [vmem:[%s7 + $0xc0] sm:$0xff] %vm2087, %v2047
  %2113 = vst.msk [vmem:[%s7 + $0xc8] sm:$0xff] %vm2087, %v2048
  %2114 = vst.msk [vmem:[%s7 + $0xd0] sm:$0xff] %vm2087, %v2049
  %2115 = vst.msk [vmem:[%s7 + $0xd8] sm:$0xff] %vm2087, %v2050
  %2116 = vst.msk [vmem:[%s7 + $0xe0] sm:$0xff] %vm2087, %v2051
  %2117 = vst.msk [vmem:[%s7 + $0xe8] sm:$0xff] %vm2087, %v2052
  %2118 = vst.msk [vmem:[%s7 + $0xf0] sm:$0xff] %vm2087, %v2053
  %2119 = vst.msk [vmem:[%s7 + $0xf8] sm:$0xff] %vm2087, %v2054
  %2120 = vst.msk [vmem:[%s7 + $0x100] sm:$0xff] %vm2087, %v2055
  %2121 = vst.msk [vmem:[%s7 + $0x108] sm:$0xff] %vm2087, %v2056
  %2122 = vst.msk [vmem:[%s7 + $0x110] sm:$0xff] %vm2087, %v2057
  %2123 = vst.msk [vmem:[%s7 + $0x118] sm:$0xff] %vm2087, %v2058
  %2124 = vst.msk [vmem:[%s7 + $0x120] sm:$0xff] %vm2087, %v2059
  %2125 = vst.msk [vmem:[%s7 + $0x128] sm:$0xff] %vm2087, %v2060
  %2126 = vst.msk [vmem:[%s7 + $0x130] sm:$0xff] %vm2087, %v2061
  %2127 = vst.msk [vmem:[%s7 + $0x138] sm:$0xff] %vm2087, %v2062
  %2128 = vst.msk [vmem:[%s7 + $0x140] sm:$0xff] %vm2087, %v2063
  %2129 = vst.msk [vmem:[%s7 + $0x148] sm:$0xff] %vm2087, %v2064
  %2130 = vst.msk [vmem:[%s7 + $0x150] sm:$0xff] %vm2087, %v2065
  %2131 = vst.msk [vmem:[%s7 + $0x158] sm:$0xff] %vm2087, %v2066
  %2132 = vst.msk [vmem:[%s7 + $0x160] sm:$0xff] %vm2087, %v2067
  %2133 = vst.msk [vmem:[%s7 + $0x168] sm:$0xff] %vm2087, %v2068
  %2134 = vst.msk [vmem:[%s7 + $0x170] sm:$0xff] %vm2087, %v2069
  %2135 = vst.msk [vmem:[%s7 + $0x178] sm:$0xff] %vm2087, %v2070
  %2136 = vst.msk [vmem:[%s7 + $0x180] sm:$0xff] %vm2087, %v2071
  %2137 = vst.msk [vmem:[%s7 + $0x188] sm:$0xff] %vm2087, %v2072
  %2138 = vst.msk [vmem:[%s7 + $0x190] sm:$0xff] %vm2087, %v2073
  %2139 = vst.msk [vmem:[%s7 + $0x198] sm:$0xff] %vm2087, %v2074
  %2140 = vst.msk [vmem:[%s7 + $0x1a0] sm:$0xff] %vm2087, %v2075
  %2141 = vst.msk [vmem:[%s7 + $0x1a8] sm:$0xff] %vm2087, %v2076
  %2142 = vst.msk [vmem:[%s7 + $0x1b0] sm:$0xff] %vm2087, %v2077
  %2143 = vst.msk [vmem:[%s7 + $0x1b8] sm:$0xff] %vm2087, %v2078
  %2144 = vst.msk [vmem:[%s7 + $0x1c0] sm:$0xff] %vm2087, %v2079
  %2145 = vst.msk [vmem:[%s7 + $0x1c8] sm:$0xff] %vm2087, %v2080
  %2146 = vst.msk [vmem:[%s7 + $0x1d0] sm:$0xff] %vm2087, %v2081
  %2147 = vst.msk [vmem:[%s7 + $0x1d8] sm:$0xff] %vm2087, %v2082
  %2148 = vst.msk [vmem:[%s7 + $0x1e0] sm:$0xff] %vm2087, %v2083
  %2149 = vst.msk [vmem:[%s7 + $0x1e8] sm:$0xff] %vm2087, %v2084
  %2150 = vst.msk [vmem:[%s7 + $0x1f0] sm:$0xff] %vm2087, %v2085
  %2151 = vst.msk [vmem:[%s7 + $0x1f8] sm:$0xff] %vm2087, %v2086
  // Predicated region
  $region30: #{c2f_cot_attention_forward.15} parent=0 // pred_check
    _
  $region31: #{c2f_cot_attention_forward.15} parent=0 // pred_check_branch
    %2153 = sbr.rel (0) target = $region33
  $region32: #{c2f_cot_attention_forward.15} parent=0 // pred_region
    _
  $region33: #{c2f_cot_attention_forward.15} parent=0 // pred_fallthru
    _
  // Predicated region
  $region34: #{c2f_cot_attention_forward.15} parent=0 // pred_check
    _
  $region35: #{c2f_cot_attention_forward.15} parent=0 // pred_check_branch
    %2155 = sbr.rel (0) target = $region37
  $region36: #{c2f_cot_attention_forward.15} parent=0 // pred_region
    _
  $region37: #{c2f_cot_attention_forward.15} parent=0 // pred_fallthru
    _

</llo_original>
